<compile_context>
chip_gen: v6e
topology: v6e:2x2x1
jax: 0.10.0
libtpu: 0.0.40
codegen_flags: <defaults>
</compile_context>

<pallas_src>
import jax
import jax.numpy as jnp
import numpy as np
from jax import lax
from jax.experimental import pallas as pl
from jax.experimental.pallas import tpu as pltpu

H = W = 28
C1_IN, C1_OUT = 1, 8
C2_IN, C2_OUT = 8, 8
NUM_CLASSES = 10
LANES = W * C2_OUT            # 224 : lane-dense (w, c) activation row
K1 = 3 * (W + 2)              # 90  : conv1 row-matmul contraction (3 dy x 30 padded cols)
PAD_CLASSES = 128             # classifier output padded to a full lane width


# ---------------------------------------------------------------------------
# Kernels
# ---------------------------------------------------------------------------
def conv_block_kernel(x3m_ref, x3c_ref, x3p_ref, m1_ref, b1_ref,
                      m2_ref, b2_ref, mtop_ref, mbot_ref, out_ref):
    """Fused conv1 -> relu -> conv2 -> relu -> + conv1(pre-relu), all on the MXU.

    x3{m,c,p}_ref: (tile_n*28, 90)   h-im2col of the zero-padded input, evaluated
                                     at rows h-1 / h / h+1 of every sample
    m1_ref:        (90, 224)         structured conv1 weights (dx, cout folded in)
    b1_ref:        (1, 224)          conv1 bias tiled over w
    m2_ref:        (3, 224, 224)     structured conv2 weights, one per kernel row dy
    b2_ref:        (1, 224)          conv2 bias tiled over w
    mtop_ref:      (tile_n*28, 1)    0.0 on the first row of each sample, else 1.0
    mbot_ref:      (tile_n*28, 1)    0.0 on the last  row of each sample, else 1.0
    out_ref:       (tile_n*28, 224)  relu(conv2) + conv1 (lane-dense NHWC rows)
    """
    m1 = m1_ref[...]                       # hoist weights once
    b1 = b1_ref[...]

    # conv1 (pre-relu) at rows h, h-1, h+1 of every sample: one MXU matmul each.
    acc1_c = jnp.dot(x3c_ref[...], m1, preferred_element_type=jnp.float32) + b1
    acc1_m = jnp.dot(x3m_ref[...], m1, preferred_element_type=jnp.float32) + b1
    acc1_p = jnp.dot(x3p_ref[...], m1, preferred_element_type=jnp.float32) + b1

    r1_c = jnp.maximum(acc1_c, 0.0)
    # masks implement conv2's SAME zero padding in h at the sample boundaries
    r1_m = jnp.maximum(acc1_m, 0.0) * mtop_ref[...]
    r1_p = jnp.maximum(acc1_p, 0.0) * mbot_ref[...]

    # conv2: three accumulating MXU matmuls, K = 224 each.
    acc2 = (jnp.dot(r1_m, m2_ref[0], preferred_element_type=jnp.float32)
            + jnp.dot(r1_c, m2_ref[1], preferred_element_type=jnp.float32)
            + jnp.dot(r1_p, m2_ref[2], preferred_element_type=jnp.float32)
            + b2_ref[...])

    # residual adds the *pre-relu* conv1 output (xout in the PyTorch code)
    out_ref[...] = jnp.maximum(acc2, 0.0) + acc1_c


def linear_kernel(a_ref, w_ref, b_ref, o_ref):
    """Classifier: (tile_n, 6272) @ (6272, 128) + (1, 128); cols 10..127 are zero."""
    o_ref[...] = jnp.dot(a_ref[...], w_ref[...],
                         preferred_element_type=jnp.float32) + b_ref[...]


# ---------------------------------------------------------------------------
# Wrapper-side weight restructuring (runs once per call under jit / XLA)
# ---------------------------------------------------------------------------
def _conv1_row_matrix(w1, b1):
    """M1[dy*30+j, w*8+c] = w1[dy, j-w, 0, c] for j-w in {0,1,2}, else 0."""
    j_ids = jnp.arange(W + 2)
    w_ids = jnp.arange(W)
    dxs = jnp.arange(3)
    ind = (j_ids[None, :, None] ==
           (w_ids[None, None, :] + dxs[:, None, None])).astype(jnp.float32)
    m1 = jnp.einsum('xjw,yxic->yjwc', ind, w1.astype(jnp.float32),
                    precision=lax.Precision.HIGHEST)          # (3, 30, 28, 8)
    m1 = m1.reshape(3 * (W + 2), LANES)                       # (90, 224)
    b1l = jnp.tile(b1.reshape(1, C1_OUT).astype(jnp.float32), (1, W))  # (1, 224)
    return m1, b1l


def _conv2_row_matrices(w2, b2):
    """M2[dy][j*8+ci, w*8+co] = w2[dy, j-w+1, ci, co] for j-w+1 in {0,1,2}, else 0."""
    j_ids = jnp.arange(W)
    w_ids = jnp.arange(W)
    dxs = jnp.arange(3)
    ind = (j_ids[None, :, None] ==
           (w_ids[None, None, :] + dxs[:, None, None] - 1)).astype(jnp.float32)
    m2 = jnp.einsum('xjw,yxio->yjiwo', ind, w2.astype(jnp.float32),
                    precision=lax.Precision.HIGHEST)          # (3, 28, 8, 28, 8)
    m2 = m2.reshape(3, LANES, LANES)                          # (3, 224, 224)
    b2l = jnp.tile(b2.reshape(1, C2_OUT).astype(jnp.float32), (1, W))  # (1, 224)
    return m2, b2l


# ---------------------------------------------------------------------------
# Forward pass
# ---------------------------------------------------------------------------
def residual_net_forward(x_nchw, params, *, tile_n=8):
    assert tile_n % 8 == 0, "tile_n must be a multiple of 8 (sublane tiling)"
    w1, b1, w2, b2, wc, bc = params
    n = x_nchw.shape[0]
    n_pad = ((n + tile_n - 1) // tile_n) * tile_n
    rows = tile_n * H

    # ---- glue: NCHW (C=1) -> zero-padded rows -> h-im2col (K=90) -------------
    x = x_nchw[:, 0, :, :].astype(jnp.float32)                 # (n, 28, 28)
    x = jnp.pad(x, ((0, n_pad - n), (1, 1), (1, 1)))           # (n_pad, 30, 30)
    x3 = jnp.concatenate([x[:, dy:dy + H, :] for dy in range(3)],
                         axis=-1)                              # (n_pad, 28, 90)
    zrow = jnp.zeros((n_pad, 1, K1), jnp.float32)
    x3m = jnp.concatenate([zrow, x3[:, :H - 1, :]], axis=1)    # row h <- row h-1
    x3p = jnp.concatenate([x3[:, 1:, :], zrow], axis=1)        # row h <- row h+1
    x3c = x3.reshape(n_pad * H, K1)
    x3m = x3m.reshape(n_pad * H, K1)
    x3p = x3p.reshape(n_pad * H, K1)

    # ---- structured conv weights / biases / per-row boundary masks ----------
    m1, b1l = _conv1_row_matrix(w1, b1)
    m2, b2l = _conv2_row_matrices(w2, b2)
    rr = np.arange(rows)
    mask_top = jnp.asarray((rr % H != 0).astype(np.float32).reshape(rows, 1))
    mask_bot = jnp.asarray((rr % H != H - 1).astype(np.float32).reshape(rows, 1))

    grid = (n_pad // tile_n,)
    cparams = pltpu.CompilerParams(dimension_semantics=("parallel",),
                                   vmem_limit_bytes=32 * 1024 * 1024)

    # ---- kernel 1: fused conv block, batch-tiled, lane-dense output ---------
    feat = pl.pallas_call(
        conv_block_kernel,
        out_shape=jax.ShapeDtypeStruct((n_pad * H, LANES), jnp.float32),
        grid=grid,
        in_specs=[
            pl.BlockSpec((rows, K1), lambda i: (i, 0)),
            pl.BlockSpec((rows, K1), lambda i: (i, 0)),
            pl.BlockSpec((rows, K1), lambda i: (i, 0)),
            pl.BlockSpec((K1, LANES), lambda i: (0, 0)),
            pl.BlockSpec((1, LANES), lambda i: (0, 0)),
            pl.BlockSpec((3, LANES, LANES), lambda i: (0, 0, 0)),
            pl.BlockSpec((1, LANES), lambda i: (0, 0)),
            pl.BlockSpec((rows, 1), lambda i: (0, 0)),
            pl.BlockSpec((rows, 1), lambda i: (0, 0)),
        ],
        out_specs=pl.BlockSpec((rows, LANES), lambda i: (i, 0)),
        compiler_params=cparams,
    )(x3m, x3c, x3p, m1, b1l, m2, b2l, mask_top, mask_bot)

    # (n_pad*28, 224) -> (n_pad, 6272): contiguous merge, NHWC flatten order.
    flat = feat.reshape(n_pad, H * LANES)

    wc_pad = jnp.zeros((H * LANES, PAD_CLASSES),
                       jnp.float32).at[:, :NUM_CLASSES].set(wc.astype(jnp.float32))
    bc_pad = jnp.zeros((1, PAD_CLASSES),
                       jnp.float32).at[:, :NUM_CLASSES].set(bc.astype(jnp.float32))

    # ---- kernel 2: classifier matmul, 128-lane (unmasked) output ------------
    logits = pl.pallas_call(
        linear_kernel,
        out_shape=jax.ShapeDtypeStruct((n_pad, PAD_CLASSES), jnp.float32),
        grid=grid,
        in_specs=[
            pl.BlockSpec((tile_n, H * LANES), lambda i: (i, 0)),
            pl.BlockSpec((H * LANES, PAD_CLASSES), lambda i: (0, 0)),
            pl.BlockSpec((1, PAD_CLASSES), lambda i: (0, 0)),
        ],
        out_specs=pl.BlockSpec((tile_n, PAD_CLASSES), lambda i: (i, 0)),
        compiler_params=cparams,
    )(flat, wc_pad, bc_pad)

    return logits[:n, :NUM_CLASSES]


# ---------------------------------------------------------------------------
# Parameters + pure-JAX reference (mirrors the PyTorch forward)
# ---------------------------------------------------------------------------
def init_params(key):
    """Deterministic synthetic parameters (PyTorch-default-style uniform)."""
    k1, k2, k3, k4, k5, k6 = jax.random.split(key, 6)

    def u(k, shape, fan_in):
        bound = 1.0 / float(np.sqrt(fan_in))
        return jax.random.uniform(k, shape, jnp.float32, -bound, bound)

    w1 = u(k1, (3, 3, C1_IN, C1_OUT), 3 * 3 * C1_IN)
    b1 = u(k2, (1, 1, 1, C1_OUT), 3 * 3 * C1_IN)
    w2 = u(k3, (3, 3, C2_IN, C2_OUT), 3 * 3 * C2_IN)
    b2 = u(k4, (1, 1, 1, C2_OUT), 3 * 3 * C2_IN)
    wc = u(k5, (H * W * C2_OUT, NUM_CLASSES), H * W * C2_OUT)
    bc = u(k6, (1, NUM_CLASSES), H * W * C2_OUT)
    return (w1, b1, w2, b2, wc, bc)


def reference_forward(x_nchw, params):
    """Pure-JAX reference replicating the PyTorch forward (f32, HIGHEST precision)."""
    w1, b1, w2, b2, wc, bc = params
    x = jnp.transpose(x_nchw, (0, 2, 3, 1)).astype(jnp.float32)
    dn = ('NHWC', 'HWIO', 'NHWC')
    hi = lax.Precision.HIGHEST
    xout = lax.conv_general_dilated(x, w1, (1, 1), 'SAME',
                                    dimension_numbers=dn, precision=hi) + b1
    out = jax.nn.relu(xout)
    out = lax.conv_general_dilated(out, w2, (1, 1), 'SAME',
                                   dimension_numbers=dn, precision=hi) + b2
    out = jax.nn.relu(out) + xout
    flat = out.reshape(out.shape[0], -1)
    return jnp.dot(flat, wc, precision=hi) + bc


if __name__ == "__main__":
    key = jax.random.PRNGKey(0)
    pkey, xkey = jax.random.split(key)
    params = init_params(pkey)

    # MNIST-like input: batch=16 (-> 2 grid steps at tile_n=8), 1 channel, 28x28.
    x = jax.random.normal(xkey, (16, 1, 28, 28), jnp.float32)

    fwd = jax.jit(residual_net_forward)
    out = jax.block_until_ready(fwd(x, params))
    ref = jax.block_until_ready(reference_forward(x, params))

    assert out.shape == (16, NUM_CLASSES)
    np.testing.assert_allclose(np.asarray(out), np.asarray(ref),
                               rtol=2e-3, atol=2e-3)
    print("KERNEL_OK")
</pallas_src>

<mosaic_0001>
module attributes {stable_mosaic.version = 11 : i64} {
  func.func @conv_block_kernel(%arg0: i32, %arg1: memref<224x90xf32, #tpu.memory_space<vmem>>, %arg2: memref<224x90xf32, #tpu.memory_space<vmem>>, %arg3: memref<224x90xf32, #tpu.memory_space<vmem>>, %arg4: memref<90x224xf32, #tpu.memory_space<vmem>>, %arg5: memref<1x224xf32, #tpu.memory_space<vmem>>, %arg6: memref<3x224x224xf32, #tpu.memory_space<vmem>>, %arg7: memref<1x224xf32, #tpu.memory_space<vmem>>, %arg8: memref<224x1xf32, #tpu.memory_space<vmem>>, %arg9: memref<224x1xf32, #tpu.memory_space<vmem>>, %arg10: memref<224x224xf32, #tpu.memory_space<vmem>>) attributes {dimension_semantics = [#tpu.dimension_semantics<parallel>], iteration_bounds = array<i64: 2>, scalar_prefetch = 0 : i64, scratch_operands = 0 : i64, tpu.core_type = #tpu.core_type<tc>, window_params = [{transform_indices = @transform_0, window_bounds = array<i64: 224, 90>}, {transform_indices = @transform_1, window_bounds = array<i64: 224, 90>}, {transform_indices = @transform_2, window_bounds = array<i64: 224, 90>}, {pipeline_mode = #tpu.pipeline_mode<synchronous>, transform_indices = @transform_3, window_bounds = array<i64: 90, 224>}, {pipeline_mode = #tpu.pipeline_mode<synchronous>, transform_indices = @transform_4, window_bounds = array<i64: 1, 224>}, {pipeline_mode = #tpu.pipeline_mode<synchronous>, transform_indices = @transform_5, window_bounds = array<i64: 3, 224, 224>}, {pipeline_mode = #tpu.pipeline_mode<synchronous>, transform_indices = @transform_6, window_bounds = array<i64: 1, 224>}, {pipeline_mode = #tpu.pipeline_mode<synchronous>, transform_indices = @transform_7, window_bounds = array<i64: 224, 1>}, {pipeline_mode = #tpu.pipeline_mode<synchronous>, transform_indices = @transform_8, window_bounds = array<i64: 224, 1>}, {transform_indices = @transform_9, window_bounds = array<i64: 224, 224>}]} {
    %c0 = arith.constant 0 : index
    %c0_0 = arith.constant 0 : index
    %0 = vector.load %arg4[%c0, %c0_0] : memref<90x224xf32, #tpu.memory_space<vmem>>, vector<90x224xf32>
    %c0_1 = arith.constant 0 : index
    %c0_2 = arith.constant 0 : index
    %1 = vector.load %arg5[%c0_1, %c0_2] : memref<1x224xf32, #tpu.memory_space<vmem>>, vector<1x224xf32>
    %c0_3 = arith.constant 0 : index
    %c0_4 = arith.constant 0 : index
    %2 = vector.load %arg2[%c0_3, %c0_4] : memref<224x90xf32, #tpu.memory_space<vmem>>, vector<224x90xf32>
    %cst = arith.constant dense<0.000000e+00> : vector<224x224xf32>
    %3 = tpu.matmul %2, %0, %cst {dimension_numbers = #tpu.dot_dimension_numbers<[1], [0], [0], [1], [0, 0, 1, 1], [], []>} : vector<224x90xf32>, vector<90x224xf32>, vector<224x224xf32> -> vector<224x224xf32>
    %4 = vector.broadcast %1 : vector<1x224xf32> to vector<224x224xf32>
    %5 = arith.addf %3, %4 : vector<224x224xf32>
    %c0_5 = arith.constant 0 : index
    %c0_6 = arith.constant 0 : index
    %6 = vector.load %arg1[%c0_5, %c0_6] : memref<224x90xf32, #tpu.memory_space<vmem>>, vector<224x90xf32>
    %cst_7 = arith.constant dense<0.000000e+00> : vector<224x224xf32>
    %7 = tpu.matmul %6, %0, %cst_7 {dimension_numbers = #tpu.dot_dimension_numbers<[1], [0], [0], [1], [0, 0, 1, 1], [], []>} : vector<224x90xf32>, vector<90x224xf32>, vector<224x224xf32> -> vector<224x224xf32>
    %8 = vector.broadcast %1 : vector<1x224xf32> to vector<224x224xf32>
    %9 = arith.addf %7, %8 : vector<224x224xf32>
    %c0_8 = arith.constant 0 : index
    %c0_9 = arith.constant 0 : index
    %10 = vector.load %arg3[%c0_8, %c0_9] : memref<224x90xf32, #tpu.memory_space<vmem>>, vector<224x90xf32>
    %cst_10 = arith.constant dense<0.000000e+00> : vector<224x224xf32>
    %11 = tpu.matmul %10, %0, %cst_10 {dimension_numbers = #tpu.dot_dimension_numbers<[1], [0], [0], [1], [0, 0, 1, 1], [], []>} : vector<224x90xf32>, vector<90x224xf32>, vector<224x224xf32> -> vector<224x224xf32>
    %12 = vector.broadcast %1 : vector<1x224xf32> to vector<224x224xf32>
    %13 = arith.addf %11, %12 : vector<224x224xf32>
    %cst_11 = arith.constant 0.000000e+00 : f32
    %14 = vector.broadcast %cst_11 : f32 to vector<224x224xf32>
    %15 = arith.maximumf %5, %14 : vector<224x224xf32>
    %cst_12 = arith.constant 0.000000e+00 : f32
    %16 = vector.broadcast %cst_12 : f32 to vector<224x224xf32>
    %17 = arith.maximumf %9, %16 : vector<224x224xf32>
    %c0_13 = arith.constant 0 : index
    %c0_14 = arith.constant 0 : index
    %18 = vector.load %arg8[%c0_13, %c0_14] : memref<224x1xf32, #tpu.memory_space<vmem>>, vector<224x1xf32>
    %19 = vector.broadcast %18 : vector<224x1xf32> to vector<224x224xf32>
    %20 = arith.mulf %17, %19 : vector<224x224xf32>
    %cst_15 = arith.constant 0.000000e+00 : f32
    %21 = vector.broadcast %cst_15 : f32 to vector<224x224xf32>
    %22 = arith.maximumf %13, %21 : vector<224x224xf32>
    %c0_16 = arith.constant 0 : index
    %c0_17 = arith.constant 0 : index
    %23 = vector.load %arg9[%c0_16, %c0_17] : memref<224x1xf32, #tpu.memory_space<vmem>>, vector<224x1xf32>
    %24 = vector.broadcast %23 : vector<224x1xf32> to vector<224x224xf32>
    %25 = arith.mulf %22, %24 : vector<224x224xf32>
    %c0_18 = arith.constant 0 : index
    %c0_19 = arith.constant 0 : index
    %c0_20 = arith.constant 0 : index
    %26 = vector.load %arg6[%c0_18, %c0_19, %c0_20] : memref<3x224x224xf32, #tpu.memory_space<vmem>>, vector<1x224x224xf32>
    %27 = vector.shape_cast %26 : vector<1x224x224xf32> to vector<224x224xf32>
    %cst_21 = arith.constant dense<0.000000e+00> : vector<224x224xf32>
    %28 = tpu.matmul %20, %27, %cst_21 {dimension_numbers = #tpu.dot_dimension_numbers<[1], [0], [0], [1], [0, 0, 1, 1], [], []>} : vector<224x224xf32>, vector<224x224xf32>, vector<224x224xf32> -> vector<224x224xf32>
    %c1 = arith.constant 1 : index
    %c0_22 = arith.constant 0 : index
    %c0_23 = arith.constant 0 : index
    %29 = vector.load %arg6[%c1, %c0_22, %c0_23] : memref<3x224x224xf32, #tpu.memory_space<vmem>>, vector<1x224x224xf32>
    %30 = vector.shape_cast %29 : vector<1x224x224xf32> to vector<224x224xf32>
    %cst_24 = arith.constant dense<0.000000e+00> : vector<224x224xf32>
    %31 = tpu.matmul %15, %30, %cst_24 {dimension_numbers = #tpu.dot_dimension_numbers<[1], [0], [0], [1], [0, 0, 1, 1], [], []>} : vector<224x224xf32>, vector<224x224xf32>, vector<224x224xf32> -> vector<224x224xf32>
    %32 = arith.addf %28, %31 : vector<224x224xf32>
    %c2 = arith.constant 2 : index
    %c0_25 = arith.constant 0 : index
    %c0_26 = arith.constant 0 : index
    %33 = vector.load %arg6[%c2, %c0_25, %c0_26] : memref<3x224x224xf32, #tpu.memory_space<vmem>>, vector<1x224x224xf32>
    %34 = vector.shape_cast %33 : vector<1x224x224xf32> to vector<224x224xf32>
    %cst_27 = arith.constant dense<0.000000e+00> : vector<224x224xf32>
    %35 = tpu.matmul %25, %34, %cst_27 {dimension_numbers = #tpu.dot_dimension_numbers<[1], [0], [0], [1], [0, 0, 1, 1], [], []>} : vector<224x224xf32>, vector<224x224xf32>, vector<224x224xf32> -> vector<224x224xf32>
    %36 = arith.addf %32, %35 : vector<224x224xf32>
    %c0_28 = arith.constant 0 : index
    %c0_29 = arith.constant 0 : index
    %37 = vector.load %arg7[%c0_28, %c0_29] : memref<1x224xf32, #tpu.memory_space<vmem>>, vector<1x224xf32>
    %38 = vector.broadcast %37 : vector<1x224xf32> to vector<224x224xf32>
    %39 = arith.addf %36, %38 : vector<224x224xf32>
    %cst_30 = arith.constant 0.000000e+00 : f32
    %40 = vector.broadcast %cst_30 : f32 to vector<224x224xf32>
    %41 = arith.maximumf %39, %40 : vector<224x224xf32>
    %42 = arith.addf %41, %5 : vector<224x224xf32>
    %c0_31 = arith.constant 0 : index
    %c0_32 = arith.constant 0 : index
    %43 = vector.load %arg10[%c0_31, %c0_32] : memref<224x224xf32, #tpu.memory_space<vmem>>, vector<224x224xf32>
    tpu.vector_store %arg10[%c0_31, %c0_32], %42 {strides = array<i32>} : memref<224x224xf32, #tpu.memory_space<vmem>>, vector<224x224xf32>,
    return
  }
  func.func @transform_0(%arg0: i32) -> (i32, i32) {
    %c0_i32 = arith.constant 0 : i32
    %c0_i32_0 = arith.constant 0 : i32
    return %arg0, %c0_i32 : i32, i32
  }
  func.func @transform_1(%arg0: i32) -> (i32, i32) {
    %c0_i32 = arith.constant 0 : i32
    %c0_i32_0 = arith.constant 0 : i32
    return %arg0, %c0_i32 : i32, i32
  }
  func.func @transform_2(%arg0: i32) -> (i32, i32) {
    %c0_i32 = arith.constant 0 : i32
    %c0_i32_0 = arith.constant 0 : i32
    return %arg0, %c0_i32 : i32, i32
  }
  func.func @transform_3(%arg0: i32) -> (i32, i32) {
    %c0_i32 = arith.constant 0 : i32
    %c0_i32_0 = arith.constant 0 : i32
    %c0_i32_1 = arith.constant 0 : i32
    return %c0_i32, %c0_i32_0 : i32, i32
  }
  func.func @transform_4(%arg0: i32) -> (i32, i32) {
    %c0_i32 = arith.constant 0 : i32
    %c0_i32_0 = arith.constant 0 : i32
    %c0_i32_1 = arith.constant 0 : i32
    return %c0_i32, %c0_i32_0 : i32, i32
  }
  func.func @transform_5(%arg0: i32) -> (i32, i32, i32) {
    %c0_i32 = arith.constant 0 : i32
    %c0_i32_0 = arith.constant 0 : i32
    %c0_i32_1 = arith.constant 0 : i32
    %c0_i32_2 = arith.constant 0 : i32
    return %c0_i32, %c0_i32_0, %c0_i32_1 : i32, i32, i32
  }
  func.func @transform_6(%arg0: i32) -> (i32, i32) {
    %c0_i32 = arith.constant 0 : i32
    %c0_i32_0 = arith.constant 0 : i32
    %c0_i32_1 = arith.constant 0 : i32
    return %c0_i32, %c0_i32_0 : i32, i32
  }
  func.func @transform_7(%arg0: i32) -> (i32, i32) {
    %c0_i32 = arith.constant 0 : i32
    %c0_i32_0 = arith.constant 0 : i32
    %c0_i32_1 = arith.constant 0 : i32
    return %c0_i32, %c0_i32_0 : i32, i32
  }
  func.func @transform_8(%arg0: i32) -> (i32, i32) {
    %c0_i32 = arith.constant 0 : i32
    %c0_i32_0 = arith.constant 0 : i32
    %c0_i32_1 = arith.constant 0 : i32
    return %c0_i32, %c0_i32_0 : i32, i32
  }
  func.func @transform_9(%arg0: i32) -> (i32, i32) {
    %c0_i32 = arith.constant 0 : i32
    %c0_i32_0 = arith.constant 0 : i32
    return %arg0, %c0_i32 : i32, i32
  }
}

module attributes {stable_mosaic.version = 11 : i64} {
  func.func @linear_kernel(%arg0: i32, %arg1: memref<8x6272xf32, #tpu.memory_space<vmem>>, %arg2: memref<6272x128xf32, #tpu.memory_space<vmem>>, %arg3: memref<1x128xf32, #tpu.memory_space<vmem>>, %arg4: memref<8x128xf32, #tpu.memory_space<vmem>>) attributes {dimension_semantics = [#tpu.dimension_semantics<parallel>], iteration_bounds = array<i64: 2>, scalar_prefetch = 0 : i64, scratch_operands = 0 : i64, tpu.core_type = #tpu.core_type<tc>, window_params = [{transform_indices = @transform_0, window_bounds = array<i64: 8, 6272>}, {pipeline_mode = #tpu.pipeline_mode<synchronous>, transform_indices = @transform_1, window_bounds = array<i64: 6272, 128>}, {pipeline_mode = #tpu.pipeline_mode<synchronous>, transform_indices = @transform_2, window_bounds = array<i64: 1, 128>}, {transform_indices = @transform_3, window_bounds = array<i64: 8, 128>}]} {
    %c0 = arith.constant 0 : index
    %c0_0 = arith.constant 0 : index
    %0 = vector.load %arg1[%c0, %c0_0] : memref<8x6272xf32, #tpu.memory_space<vmem>>, vector<8x6272xf32>
    %c0_1 = arith.constant 0 : index
    %c0_2 = arith.constant 0 : index
    %1 = vector.load %arg2[%c0_1, %c0_2] : memref<6272x128xf32, #tpu.memory_space<vmem>>, vector<6272x128xf32>
    %cst = arith.constant dense<0.000000e+00> : vector<8x128xf32>
    %2 = tpu.matmul %0, %1, %cst {dimension_numbers = #tpu.dot_dimension_numbers<[1], [0], [0], [1], [0, 0, 1, 1], [], []>} : vector<8x6272xf32>, vector<6272x128xf32>, vector<8x128xf32> -> vector<8x128xf32>
    %c0_3 = arith.constant 0 : index
    %c0_4 = arith.constant 0 : index
    %3 = vector.load %arg3[%c0_3, %c0_4] : memref<1x128xf32, #tpu.memory_space<vmem>>, vector<1x128xf32>
    %4 = vector.broadcast %3 : vector<1x128xf32> to vector<8x128xf32>
    %5 = arith.addf %2, %4 : vector<8x128xf32>
    %c0_5 = arith.constant 0 : index
    %c0_6 = arith.constant 0 : index
    %6 = vector.load %arg4[%c0_5, %c0_6] : memref<8x128xf32, #tpu.memory_space<vmem>>, vector<8x128xf32>
    tpu.vector_store %arg4[%c0_5, %c0_6], %5 {strides = array<i32>} : memref<8x128xf32, #tpu.memory_space<vmem>>, vector<8x128xf32>,
    return
  }
  func.func @transform_0(%arg0: i32) -> (i32, i32) {
    %c0_i32 = arith.constant 0 : i32
    %c0_i32_0 = arith.constant 0 : i32
    return %arg0, %c0_i32 : i32, i32
  }
  func.func @transform_1(%arg0: i32) -> (i32, i32) {
    %c0_i32 = arith.constant 0 : i32
    %c0_i32_0 = arith.constant 0 : i32
    %c0_i32_1 = arith.constant 0 : i32
    return %c0_i32, %c0_i32_0 : i32, i32
  }
  func.func @transform_2(%arg0: i32) -> (i32, i32) {
    %c0_i32 = arith.constant 0 : i32
    %c0_i32_0 = arith.constant 0 : i32
    %c0_i32_1 = arith.constant 0 : i32
    return %c0_i32, %c0_i32_0 : i32, i32
  }
  func.func @transform_3(%arg0: i32) -> (i32, i32) {
    %c0_i32 = arith.constant 0 : i32
    %c0_i32_0 = arith.constant 0 : i32
    return %arg0, %c0_i32 : i32, i32
  }
}

</mosaic_0001>

<llo_original>
// kernel: residual_net_forward.2
$region0: #{residual_net_forward.2}
  #allocation0 [shape = 'u32[]', space=smem, size = 0x4, offset = 0x4, fixed_abs, tag = 'smem constant byte address 0x4 - core index']
  #allocation1 [shape = 'u32[144,128]{1,0:T(1,128)}', space=vmem, size = 0x12000, scoped, tag = 'internal scratch']
  %s0 = inlined_call_operand.vmem [shape: f32[448,90], index: 0, kind: input, shape index: {}]
  %s1 = inlined_call_operand.vmem [shape: f32[448,90], index: 1, kind: input, shape index: {}]
  %s2 = inlined_call_operand.vmem [shape: f32[448,90], index: 2, kind: input, shape index: {}]
  %s3 = inlined_call_operand.vmem [shape: f32[90,224], index: 3, kind: input, shape index: {}]
  %s4 = inlined_call_operand.vmem [shape: f32[1,224], index: 4, kind: input, shape index: {}]
  %s5 = inlined_call_operand.vmem [shape: f32[3,224,224], index: 5, kind: input, shape index: {}]
  %s6 = inlined_call_operand.vmem [shape: f32[1,224], index: 6, kind: input, shape index: {}]
  %s7 = inlined_call_operand.vmem [shape: f32[224,1], index: 7, kind: input, shape index: {}]
  %s8 = inlined_call_operand.vmem [shape: f32[224,1], index: 8, kind: input, shape index: {}]
  %s9 = inlined_call_operand.vmem [shape: f32[448,224], index: 9, kind: output, shape index: {}]
  %s10 = sld [smem:[#allocation0]]
  $region69: #{residual_net_forward.2} parent=0
    _
  %s12 = ssub.s32 1, %s10
  %s13 = scalar_select 0, %s12, %s10
  loop: start=0, step=1, limit=4
  $region2: #{residual_net_forward.2} parent=0 // loop_pre_header
    _
  $region3: #{residual_net_forward.2} parent=0 // loop_header
    %s15 = sphi 0, %s19
    %p16 = scmp.ge.s32.totalorder %s15, 4
    %s25 = sphi 0, %s27
    %s28 = sphi 0, %s25
    %s29 = sphi 0, %s28
    %s45 = sphi 0, %s29
    %s51 = sphi 0, %s53
    %s54 = sphi 0, %s51
    %s55 = sphi 0, %s54
    %s71 = sphi 0, %s55
    %s77 = sphi 0, %s79
    %s80 = sphi 0, %s77
    %s81 = sphi 0, %s80
    %s97 = sphi 0, %s81
    %s101 = sphi 0, %s101
    %s103 = sphi 0, %s101
    %s104 = sphi 0, %s103
    %s118 = sphi 0, %s104
    %s122 = sphi 0, %s122
    %s124 = sphi 0, %s122
    %s125 = sphi 0, %s124
    %s139 = sphi 0, %s125
    %s143 = sphi 0, %s143
    %s145 = sphi 0, %s143
    %s146 = sphi 0, %s145
    %s160 = sphi 0, %s146
    %s164 = sphi 0, %s164
    %s166 = sphi 0, %s164
    %s167 = sphi 0, %s166
    %s181 = sphi 0, %s167
    %s185 = sphi 0, %s185
    %s187 = sphi 0, %s185
    %s188 = sphi 0, %s187
    %s202 = sphi 0, %s188
    %s206 = sphi 0, %s206
    %s208 = sphi 0, %s206
    %s209 = sphi 0, %s208
    %s223 = sphi 0, %s209
    %s229 = sphi 0, %s231
    %s232 = sphi 0, %s229
    %s233 = sphi 0, %s232
    %s249 = sphi 0, %s233
  $region4: #{residual_net_forward.2} parent=0 // loop_header_branch
    %18 = sbr.rel (%p16) target = $region8
  $region5: #{residual_net_forward.2} parent=0 // loop_body
    %s20 = ssub.s32 %s15, 1
    %s21 = ssub.s32 %s15, 2
    %s22 = sadd.s32 %s15, 1
    %s23 = ssub.s32 %s15, %s22
    %p24 = scmp.eq.s32.totalorder %s23, 0
    %s26 = sadd.s32 %s25, 1
    %s27 = scalar_select %p24, %s25, %s26
    %p30 = pneg %p24
    %p31 = scmp.eq.s32.totalorder %s15, 1
    %p32 = por %p30, %p31
    %p33 = scmp.ne.s32.totalorder %s25, %s28
    %p34 = scmp.eq.s32.totalorder %s15, 0
    %p35 = por %p33, %p34
    %p36 = scmp.ne.s32.totalorder %s25, %s28
    %p37 = scmp.eq.s32.totalorder %s20, 1
    %p38 = por %p36, %p37
    %p39 = scmp.ne.s32.totalorder %s28, %s29
    %p40 = scmp.eq.s32.totalorder %s20, 0
    %p41 = por %p39, %p40
    %p42 = scmp.ne.s32.totalorder %s28, %s29
    %p43 = scmp.eq.s32.totalorder %s21, 1
    %p44 = por %p42, %p43
    %p46 = scmp.ne.s32.totalorder %s29, %s45
    %p47 = scmp.eq.s32.totalorder %s21, 0
    %p48 = por %p46, %p47
    %s49 = ssub.s32 %s15, %s22
    %p50 = scmp.eq.s32.totalorder %s49, 0
    %s52 = sadd.s32 %s51, 1
    %s53 = scalar_select %p50, %s51, %s52
    %p56 = pneg %p50
    %p57 = scmp.eq.s32.totalorder %s15, 1
    %p58 = por %p56, %p57
    %p59 = scmp.ne.s32.totalorder %s51, %s54
    %p60 = scmp.eq.s32.totalorder %s15, 0
    %p61 = por %p59, %p60
    %p62 = scmp.ne.s32.totalorder %s51, %s54
    %p63 = scmp.eq.s32.totalorder %s20, 1
    %p64 = por %p62, %p63
    %p65 = scmp.ne.s32.totalorder %s54, %s55
    %p66 = scmp.eq.s32.totalorder %s20, 0
    %p67 = por %p65, %p66
    %p68 = scmp.ne.s32.totalorder %s54, %s55
    %p69 = scmp.eq.s32.totalorder %s21, 1
    %p70 = por %p68, %p69
    %p72 = scmp.ne.s32.totalorder %s55, %s71
    %p73 = scmp.eq.s32.totalorder %s21, 0
    %p74 = por %p72, %p73
    %s75 = ssub.s32 %s15, %s22
    %p76 = scmp.eq.s32.totalorder %s75, 0
    %s78 = sadd.s32 %s77, 1
    %s79 = scalar_select %p76, %s77, %s78
    %p82 = pneg %p76
    %p83 = scmp.eq.s32.totalorder %s15, 1
    %p84 = por %p82, %p83
    %p85 = scmp.ne.s32.totalorder %s77, %s80
    %p86 = scmp.eq.s32.totalorder %s15, 0
    %p87 = por %p85, %p86
    %p88 = scmp.ne.s32.totalorder %s77, %s80
    %p89 = scmp.eq.s32.totalorder %s20, 1
    %p90 = por %p88, %p89
    %p91 = scmp.ne.s32.totalorder %s80, %s81
    %p92 = scmp.eq.s32.totalorder %s20, 0
    %p93 = por %p91, %p92
    %p94 = scmp.ne.s32.totalorder %s80, %s81
    %p95 = scmp.eq.s32.totalorder %s21, 1
    %p96 = por %p94, %p95
    %p98 = scmp.ne.s32.totalorder %s81, %s97
    %p99 = scmp.eq.s32.totalorder %s21, 0
    %p100 = por %p98, %p99
    %s102 = sadd.s32 %s101, 1
    %p105 = scmp.eq.s32.totalorder %s15, 1
    %p106 = scmp.ne.s32.totalorder %s101, %s103
    %p107 = scmp.eq.s32.totalorder %s15, 0
    %p108 = por %p106, %p107
    %p109 = scmp.ne.s32.totalorder %s101, %s103
    %p110 = scmp.eq.s32.totalorder %s20, 1
    %p111 = por %p109, %p110
    %p112 = scmp.ne.s32.totalorder %s103, %s104
    %p113 = scmp.eq.s32.totalorder %s20, 0
    %p114 = por %p112, %p113
    %p115 = scmp.ne.s32.totalorder %s103, %s104
    %p116 = scmp.eq.s32.totalorder %s21, 1
    %p117 = por %p115, %p116
    %p119 = scmp.ne.s32.totalorder %s104, %s118
    %p120 = scmp.eq.s32.totalorder %s21, 0
    %p121 = por %p119, %p120
    %s123 = sadd.s32 %s122, 1
    %p126 = scmp.eq.s32.totalorder %s15, 1
    %p127 = scmp.ne.s32.totalorder %s122, %s124
    %p128 = scmp.eq.s32.totalorder %s15, 0
    %p129 = por %p127, %p128
    %p130 = scmp.ne.s32.totalorder %s122, %s124
    %p131 = scmp.eq.s32.totalorder %s20, 1
    %p132 = por %p130, %p131
    %p133 = scmp.ne.s32.totalorder %s124, %s125
    %p134 = scmp.eq.s32.totalorder %s20, 0
    %p135 = por %p133, %p134
    %p136 = scmp.ne.s32.totalorder %s124, %s125
    %p137 = scmp.eq.s32.totalorder %s21, 1
    %p138 = por %p136, %p137
    %p140 = scmp.ne.s32.totalorder %s125, %s139
    %p141 = scmp.eq.s32.totalorder %s21, 0
    %p142 = por %p140, %p141
    %s144 = sadd.s32 %s143, 1
    %p147 = scmp.eq.s32.totalorder %s15, 1
    %p148 = scmp.ne.s32.totalorder %s143, %s145
    %p149 = scmp.eq.s32.totalorder %s15, 0
    %p150 = por %p148, %p149
    %p151 = scmp.ne.s32.totalorder %s143, %s145
    %p152 = scmp.eq.s32.totalorder %s20, 1
    %p153 = por %p151, %p152
    %p154 = scmp.ne.s32.totalorder %s145, %s146
    %p155 = scmp.eq.s32.totalorder %s20, 0
    %p156 = por %p154, %p155
    %p157 = scmp.ne.s32.totalorder %s145, %s146
    %p158 = scmp.eq.s32.totalorder %s21, 1
    %p159 = por %p157, %p158
    %p161 = scmp.ne.s32.totalorder %s146, %s160
    %p162 = scmp.eq.s32.totalorder %s21, 0
    %p163 = por %p161, %p162
    %s165 = sadd.s32 %s164, 1
    %p168 = scmp.eq.s32.totalorder %s15, 1
    %p169 = scmp.ne.s32.totalorder %s164, %s166
    %p170 = scmp.eq.s32.totalorder %s15, 0
    %p171 = por %p169, %p170
    %p172 = scmp.ne.s32.totalorder %s164, %s166
    %p173 = scmp.eq.s32.totalorder %s20, 1
    %p174 = por %p172, %p173
    %p175 = scmp.ne.s32.totalorder %s166, %s167
    %p176 = scmp.eq.s32.totalorder %s20, 0
    %p177 = por %p175, %p176
    %p178 = scmp.ne.s32.totalorder %s166, %s167
    %p179 = scmp.eq.s32.totalorder %s21, 1
    %p180 = por %p178, %p179
    %p182 = scmp.ne.s32.totalorder %s167, %s181
    %p183 = scmp.eq.s32.totalorder %s21, 0
    %p184 = por %p182, %p183
    %s186 = sadd.s32 %s185, 1
    %p189 = scmp.eq.s32.totalorder %s15, 1
    %p190 = scmp.ne.s32.totalorder %s185, %s187
    %p191 = scmp.eq.s32.totalorder %s15, 0
    %p192 = por %p190, %p191
    %p193 = scmp.ne.s32.totalorder %s185, %s187
    %p194 = scmp.eq.s32.totalorder %s20, 1
    %p195 = por %p193, %p194
    %p196 = scmp.ne.s32.totalorder %s187, %s188
    %p197 = scmp.eq.s32.totalorder %s20, 0
    %p198 = por %p196, %p197
    %p199 = scmp.ne.s32.totalorder %s187, %s188
    %p200 = scmp.eq.s32.totalorder %s21, 1
    %p201 = por %p199, %p200
    %p203 = scmp.ne.s32.totalorder %s188, %s202
    %p204 = scmp.eq.s32.totalorder %s21, 0
    %p205 = por %p203, %p204
    %s207 = sadd.s32 %s206, 1
    %p210 = scmp.eq.s32.totalorder %s15, 1
    %p211 = scmp.ne.s32.totalorder %s206, %s208
    %p212 = scmp.eq.s32.totalorder %s15, 0
    %p213 = por %p211, %p212
    %p214 = scmp.ne.s32.totalorder %s206, %s208
    %p215 = scmp.eq.s32.totalorder %s20, 1
    %p216 = por %p214, %p215
    %p217 = scmp.ne.s32.totalorder %s208, %s209
    %p218 = scmp.eq.s32.totalorder %s20, 0
    %p219 = por %p217, %p218
    %p220 = scmp.ne.s32.totalorder %s208, %s209
    %p221 = scmp.eq.s32.totalorder %s21, 1
    %p222 = por %p220, %p221
    %p224 = scmp.ne.s32.totalorder %s209, %s223
    %p225 = scmp.eq.s32.totalorder %s21, 0
    %p226 = por %p224, %p225
    %s227 = ssub.s32 %s15, %s22
    %p228 = scmp.eq.s32.totalorder %s227, 0
    %s230 = sadd.s32 %s229, 1
    %s231 = scalar_select %p228, %s229, %s230
    %p234 = pneg %p228
    %p235 = scmp.eq.s32.totalorder %s15, 1
    %p236 = por %p234, %p235
    %p237 = scmp.ne.s32.totalorder %s229, %s232
    %p238 = scmp.eq.s32.totalorder %s15, 0
    %p239 = por %p237, %p238
    %p240 = scmp.ne.s32.totalorder %s229, %s232
    %p241 = scmp.eq.s32.totalorder %s20, 1
    %p242 = por %p240, %p241
    %p243 = scmp.ne.s32.totalorder %s232, %s233
    %p244 = scmp.eq.s32.totalorder %s20, 0
    %p245 = por %p243, %p244
    %p246 = scmp.ne.s32.totalorder %s232, %s233
    %p247 = scmp.eq.s32.totalorder %s21, 1
    %p248 = por %p246, %p247
    %p250 = scmp.ne.s32.totalorder %s233, %s249
    %p251 = scmp.eq.s32.totalorder %s21, 0
    %p252 = por %p250, %p251
    %p253 = scmp.le.s32.totalorder 1, %s15
    %p254 = scmp.lt.s32.totalorder %s15, 3
    %p255 = pnand %p253, %p254
    %p256 = pneg %p255
    // Predicated region
    $region9: #{residual_net_forward.2} parent=5 // pred_check
      _
    $region10: #{residual_net_forward.2} parent=5 // pred_check_branch
      %258 = sbr.rel (%p255) target = $region12
    $region11: #{residual_net_forward.2} parent=5 // pred_region
      %s259 = ssub.s32 %s15, 1
      // Predicated region
      $region13: #{residual_net_forward.2} parent=11 // pred_check
        %p260 = pneg %p114
      $region14: #{residual_net_forward.2} parent=11 // pred_check_branch
        %262 = sbr.rel (%p260) target = $region16
      $region15: #{residual_net_forward.2} parent=11 // pred_region
        _
      $region16: #{residual_net_forward.2} parent=11 // pred_fallthru
        _
      // Predicated region
      $region17: #{residual_net_forward.2} parent=11 // pred_check
        %p263 = pneg %p135
      $region18: #{residual_net_forward.2} parent=11 // pred_check_branch
        %265 = sbr.rel (%p263) target = $region20
      $region19: #{residual_net_forward.2} parent=11 // pred_region
        _
      $region20: #{residual_net_forward.2} parent=11 // pred_fallthru
        _
      // Predicated region
      $region21: #{residual_net_forward.2} parent=11 // pred_check
        %p266 = pneg %p156
      $region22: #{residual_net_forward.2} parent=11 // pred_check_branch
        %268 = sbr.rel (%p266) target = $region24
      $region23: #{residual_net_forward.2} parent=11 // pred_region
        _
      $region24: #{residual_net_forward.2} parent=11 // pred_fallthru
        _
      // Predicated region
      $region25: #{residual_net_forward.2} parent=11 // pred_check
        %p269 = pneg %p177
      $region26: #{residual_net_forward.2} parent=11 // pred_check_branch
        %271 = sbr.rel (%p269) target = $region28
      $region27: #{residual_net_forward.2} parent=11 // pred_region
        _
      $region28: #{residual_net_forward.2} parent=11 // pred_fallthru
        _
      // Predicated region
      $region29: #{residual_net_forward.2} parent=11 // pred_check
        %p272 = pneg %p198
      $region30: #{residual_net_forward.2} parent=11 // pred_check_branch
        %274 = sbr.rel (%p272) target = $region32
      $region31: #{residual_net_forward.2} parent=11 // pred_region
        _
      $region32: #{residual_net_forward.2} parent=11 // pred_fallthru
        _
      // Predicated region
      $region33: #{residual_net_forward.2} parent=11 // pred_check
        %p275 = pneg %p219
      $region34: #{residual_net_forward.2} parent=11 // pred_check_branch
        %277 = sbr.rel (%p275) target = $region36
      $region35: #{residual_net_forward.2} parent=11 // pred_region
        _
      $region36: #{residual_net_forward.2} parent=11 // pred_fallthru
        _
    $region12: #{residual_net_forward.2} parent=5 // pred_fallthru
      _
    %p278 = scmp.lt.s32.totalorder %s15, 2
    // Predicated region
    $region37: #{residual_net_forward.2} parent=5 // pred_check
      %p279 = pneg %p278
    $region38: #{residual_net_forward.2} parent=5 // pred_check_branch
      %281 = sbr.rel (%p279) target = $region40
    $region39: #{residual_net_forward.2} parent=5 // pred_region
      // Predicated region
      $region41: #{residual_net_forward.2} parent=39 // pred_check
        %p282 = pneg %p35
      $region42: #{residual_net_forward.2} parent=39 // pred_check_branch
        %284 = sbr.rel (%p282) target = $region44
      $region43: #{residual_net_forward.2} parent=39 // pred_region
        %s285 = smul.u32 28, %s15
        %p286 = scmp.lt.s32.totalorder %s285, 55
        %s287 = scalar_select %p286, %s285, 55
        %s288 = smul.addr %s287, 8
        %s289 = scalar_lea.vmem %s0, %s288
        %s290 = smul.u32 28, %s15
      $region44: #{residual_net_forward.2} parent=39 // pred_fallthru
        _
      // Predicated region
      $region45: #{residual_net_forward.2} parent=39 // pred_check
        %p291 = pneg %p61
      $region46: #{residual_net_forward.2} parent=39 // pred_check_branch
        %293 = sbr.rel (%p291) target = $region48
      $region47: #{residual_net_forward.2} parent=39 // pred_region
        %s294 = smul.u32 28, %s15
        %p295 = scmp.lt.s32.totalorder %s294, 55
        %s296 = scalar_select %p295, %s294, 55
        %s297 = smul.addr %s296, 8
        %s298 = scalar_lea.vmem %s1, %s297
        %s299 = smul.u32 28, %s15
      $region48: #{residual_net_forward.2} parent=39 // pred_fallthru
        _
      // Predicated region
      $region49: #{residual_net_forward.2} parent=39 // pred_check
        %p300 = pneg %p87
      $region50: #{residual_net_forward.2} parent=39 // pred_check_branch
        %302 = sbr.rel (%p300) target = $region52
      $region51: #{residual_net_forward.2} parent=39 // pred_region
        %s303 = smul.u32 28, %s15
        %p304 = scmp.lt.s32.totalorder %s303, 55
        %s305 = scalar_select %p304, %s303, 55
        %s306 = smul.addr %s305, 8
        %s307 = scalar_lea.vmem %s2, %s306
        %s308 = smul.u32 28, %s15
      $region52: #{residual_net_forward.2} parent=39 // pred_fallthru
        _
    $region40: #{residual_net_forward.2} parent=5 // pred_fallthru
      _
    %p309 = scmp.le.s32.totalorder 1, %s15
    %p310 = scmp.lt.s32.totalorder %s15, 3
    %p311 = pnand %p309, %p310
    %p312 = pneg %p311
    // Predicated region
    $region53: #{residual_net_forward.2} parent=5 // pred_check
      _
    $region54: #{residual_net_forward.2} parent=5 // pred_check_branch
      %314 = sbr.rel (%p311) target = $region56
    $region55: #{residual_net_forward.2} parent=5 // pred_region
      %s315 = ssub.s32 %s15, 1
      %s316 = smul.u32 28, %s20
      %p317 = scmp.lt.s32.totalorder %s316, 55
      %s318 = scalar_select %p317, %s316, 55
      %s319 = smul.addr %s318, 8
      %s320 = scalar_lea.vmem %s0, %s319
      %p321 = pneg %p41
      %p322 = pneg %p38
      %s323 = smul.u32 28, %s20
      %p324 = scmp.lt.s32.totalorder %s323, 55
      %s325 = scalar_select %p324, %s323, 55
      %s326 = smul.addr %s325, 8
      %s327 = scalar_lea.vmem %s1, %s326
      %p328 = pneg %p67
      %p329 = pneg %p64
      %s330 = smul.u32 28, %s20
      %p331 = scmp.lt.s32.totalorder %s330, 55
      %s332 = scalar_select %p331, %s330, 55
      %s333 = smul.addr %s332, 8
      %s334 = scalar_lea.vmem %s2, %s333
      %p335 = pneg %p93
      %p336 = pneg %p90
      %p337 = pneg %p114
      %p338 = pneg %p111
      %p339 = pneg %p135
      %p340 = pneg %p132
      %p341 = pneg %p156
      %p342 = pneg %p153
      %p343 = pneg %p177
      %p344 = pneg %p174
      %p345 = pneg %p198
      %p346 = pneg %p195
      %p347 = pneg %p219
      %p348 = pneg %p216
      %p349 = pneg %p245
      %p350 = pneg %p242
      %s351 = smul.u32 28, %s20
      %p352 = scmp.lt.s32.totalorder %s351, 55
      %s353 = scalar_select %p352, %s351, 55
      %s354 = smul.addr %s353, 2
      %s355 = smul.addr %s354, 8
      %s356 = scalar_lea.vmem %s9, %s355
      %s357 = smul.u32 28, %s20
      %p358 = scmp.lt.s32.totalorder %s357, 55
      %s359 = scalar_select %p358, %s357, 55
      %s360 = smul.addr %s359, 8
      %s361 = scalar_lea.vmem %s0, %s360
      %s362 = smul.u32 28, %s20
      %s363 = smul.u32 28, %s20
      %p364 = scmp.lt.s32.totalorder %s363, 55
      %s365 = scalar_select %p364, %s363, 55
      %s366 = smul.addr %s365, 8
      %s367 = scalar_lea.vmem %s1, %s366
      %s368 = smul.u32 28, %s20
      %s369 = smul.u32 28, %s20
      %p370 = scmp.lt.s32.totalorder %s369, 55
      %s371 = scalar_select %p370, %s369, 55
      %s372 = smul.addr %s371, 8
      %s373 = scalar_lea.vmem %s2, %s372
      %s374 = smul.u32 28, %s20
      %s375 = smul.u32 28, %s20
      %p376 = scmp.lt.s32.totalorder %s375, 55
      %s377 = scalar_select %p376, %s375, 55
      %s378 = smul.addr %s377, 2
      %s379 = smul.addr %s378, 8
      %s380 = scalar_lea.vmem %s9, %s379
      %s381 = smul.u32 28, %s20
      %v382 = vld [vmem:[%s3] sm:$0xff]
      %v383 = vld [vmem:[%s3 + $0x8] sm:$0xff]
      %v384 = vld [vmem:[%s3 + $0x10] sm:$0xff]
      %v385 = vld [vmem:[%s3 + $0x18] sm:$0xff]
      %v386 = vld [vmem:[%s3 + $0x20] sm:$0xff]
      %v387 = vld [vmem:[%s3 + $0x28] sm:$0xff]
      %v388 = vld [vmem:[%s3 + $0x30] sm:$0xff]
      %v389 = vld [vmem:[%s3 + $0x38] sm:$0xff]
      %v390 = vld [vmem:[%s3 + $0x40] sm:$0xff]
      %v391 = vld [vmem:[%s3 + $0x48] sm:$0xff]
      %v392 = vld [vmem:[%s3 + $0x50] sm:$0xff]
      %v393 = vld [vmem:[%s3 + $0x58] sm:$0xff]
      %v394 = vld [vmem:[%s3 + $0x60] sm:$0xff]
      %v395 = vld [vmem:[%s3 + $0x68] sm:$0xff]
      %v396 = vld [vmem:[%s3 + $0x70] sm:$0xff]
      %v397 = vld [vmem:[%s3 + $0x78] sm:$0xff]
      %v398 = vld [vmem:[%s3 + $0x80] sm:$0xff]
      %v399 = vld [vmem:[%s3 + $0x88] sm:$0xff]
      %v400 = vld [vmem:[%s3 + $0x90] sm:$0xff]
      %v401 = vld [vmem:[%s3 + $0x98] sm:$0xff]
      %v402 = vld [vmem:[%s3 + $0xa0] sm:$0xff]
      %v403 = vld [vmem:[%s3 + $0xa8] sm:$0xff]
      %v404 = vld [vmem:[%s3 + $0xb0] sm:$0x3]
      %v405 = vld [vmem:[%s3 + $0xb8] sm:$0x3]
      %v406 = vld [vmem:[%s4] sm:$0x3]
      %v407 = vld [vmem:[%s367] sm:$0xff]
      %v408 = vld [vmem:[%s367 + $0x8] sm:$0xff]
      %v409 = vld [vmem:[%s367 + $0x10] sm:$0xff]
      %v410 = vld [vmem:[%s367 + $0x18] sm:$0xff]
      %v411 = vld [vmem:[%s367 + $0x20] sm:$0xff]
      %v412 = vld [vmem:[%s367 + $0x28] sm:$0xff]
      %v413 = vld [vmem:[%s367 + $0x30] sm:$0xff]
      %v414 = vld [vmem:[%s367 + $0x38] sm:$0xff]
      %v415 = vld [vmem:[%s367 + $0x40] sm:$0xff]
      %v416 = vld [vmem:[%s367 + $0x48] sm:$0xff]
      %v417 = vld [vmem:[%s367 + $0x50] sm:$0xff]
      %v418 = vld [vmem:[%s367 + $0x58] sm:$0xff]
      %v419 = vld [vmem:[%s367 + $0x60] sm:$0xff]
      %v420 = vld [vmem:[%s367 + $0x68] sm:$0xff]
      %v421 = vld [vmem:[%s367 + $0x70] sm:$0xff]
      %v422 = vld [vmem:[%s367 + $0x78] sm:$0xff]
      %v423 = vld [vmem:[%s367 + $0x80] sm:$0xff]
      %v424 = vld [vmem:[%s367 + $0x88] sm:$0xff]
      %v425 = vld [vmem:[%s367 + $0x90] sm:$0xff]
      %v426 = vld [vmem:[%s367 + $0x98] sm:$0xff]
      %v427 = vld [vmem:[%s367 + $0xa0] sm:$0xff]
      %v428 = vld [vmem:[%s367 + $0xa8] sm:$0xff]
      %v429 = vld [vmem:[%s367 + $0xb0] sm:$0xff]
      %v430 = vld [vmem:[%s367 + $0xb8] sm:$0xff]
      %v431 = vld [vmem:[%s367 + $0xc0] sm:$0xff]
      %v432 = vld [vmem:[%s367 + $0xc8] sm:$0xff]
      %v433 = vld [vmem:[%s367 + $0xd0] sm:$0xff]
      %v434 = vld [vmem:[%s367 + $0xd8] sm:$0xff]
      %v436 = vlaneseq
      %v437 = vshrl.u32 %v436, 7
      %v438 = vsub.s32 0, %v437
      %v439 = vrot.slane %v406, %v438
      %v440 = vlaneseq
      %v441 = vshrl.u32 %v440, 7
      %v442 = vsub.s32 1, %v441
      %v443 = vrot.slane %v406, %v442
      %vm446 = vcmask 736256
      %v448 = vsel %vm446, %v407, 0
      %v451 = vsel %vm446, %v408, 0
      %v454 = vsel %vm446, %v409, 0
      %v457 = vsel %vm446, %v410, 0
      %v460 = vsel %vm446, %v411, 0
      %v463 = vsel %vm446, %v412, 0
      %v466 = vsel %vm446, %v413, 0
      %v469 = vsel %vm446, %v414, 0
      %v472 = vsel %vm446, %v415, 0
      %v475 = vsel %vm446, %v416, 0
      %v478 = vsel %vm446, %v417, 0
      %v481 = vsel %vm446, %v418, 0
      %v484 = vsel %vm446, %v419, 0
      %v487 = vsel %vm446, %v420, 0
      %v490 = vsel %vm446, %v421, 0
      %v493 = vsel %vm446, %v422, 0
      %v496 = vsel %vm446, %v423, 0
      %v499 = vsel %vm446, %v424, 0
      %v502 = vsel %vm446, %v425, 0
      %v505 = vsel %vm446, %v426, 0
      %v508 = vsel %vm446, %v427, 0
      %v511 = vsel %vm446, %v428, 0
      %v514 = vsel %vm446, %v429, 0
      %v517 = vsel %vm446, %v430, 0
      %v520 = vsel %vm446, %v431, 0
      %v523 = vsel %vm446, %v432, 0
      %v526 = vsel %vm446, %v433, 0
      %v529 = vsel %vm446, %v434, 0
      %vm531 = vcmask 1041408
      %v533 = vsel %vm531, %v404, 0
      %v536 = vsel %vm531, %v405, 0
      %538 = vmatprep.subr.mxu0 0.0
      %539 = vmatpush1.msra.mxu0 0.0
      %540 = vmatprep.subr.mxu0 0.0
      %541 = vmatpush1.msra.mxu0 0.0
      %542 = vmatprep.subr.mxu0 0.0
      %543 = vmatpush1.msra.mxu0 0.0
      %544 = vmatprep.subr.mxu0 0.0
      %545 = vmatpush1.msra.mxu0 0.0
      %546 = vmatprep.subr.mxu0 %v536
      %547 = vmatpush1.msra.mxu0 %v533
      %548 = vmatprep.subr.mxu0 %v403
      %549 = vmatpush1.msra.mxu0 %v402
      %550 = vmatprep.subr.mxu0 %v401
      %551 = vmatpush1.msra.mxu0 %v400
      %552 = vmatprep.subr.mxu0 %v399
      %553 = vmatpush1.msra.mxu0 %v398
      %554 = vmatprep.subr.mxu0 %v397
      %555 = vmatpush1.msra.mxu0 %v396
      %556 = vmatprep.subr.mxu0 %v395
      %557 = vmatpush1.msra.mxu0 %v394
      %558 = vmatprep.subr.mxu0 %v393
      %559 = vmatpush1.msra.mxu0 %v392
      %560 = vmatprep.subr.mxu0 %v391
      %561 = vmatpush1.msra.mxu0 %v390
      %562 = vmatprep.subr.mxu0 %v389
      %563 = vmatpush1.msra.mxu0 %v388
      %564 = vmatprep.subr.mxu0 %v387
      %565 = vmatpush1.msra.mxu0 %v386
      %566 = vmatprep.subr.mxu0 %v385
      %567 = vmatpush1.msra.mxu0 %v384
      %568 = vmatprep.subr.mxu0 %v383
      %569 = vmatpush1.msra.mxu0 %v382
      %570 = vmatprep.subr.mxu0 0.0
      %571 = vmatpush2.msra.mxu0 0.0
      %572 = vmatprep.subr.mxu0 0.0
      %573 = vmatpush2.msra.mxu0 0.0
      %574 = vmatprep.subr.mxu0 0.0
      %575 = vmatpush2.msra.mxu0 0.0
      %576 = vmatprep.subr.mxu0 0.0
      %577 = vmatpush2.msra.mxu0 0.0
      %578 = vmatprep.subr.mxu0 0.0
      %579 = vmatpush2.msra.mxu0 0.0
      %580 = vmatprep.subr.mxu0 0.0
      %581 = vmatpush2.msra.mxu0 0.0
      %582 = vmatprep.subr.mxu0 0.0
      %583 = vmatpush2.msra.mxu0 0.0
      %584 = vmatprep.subr.mxu0 0.0
      %585 = vmatpush2.msra.mxu0 0.0
      %586 = vmatprep.subr.mxu0 0.0
      %587 = vmatpush2.msra.mxu0 0.0
      %588 = vmatprep.subr.mxu0 0.0
      %589 = vmatpush2.msra.mxu0 0.0
      %590 = vmatprep.subr.mxu0 0.0
      %591 = vmatpush2.msra.mxu0 0.0
      %592 = vmatprep.subr.mxu0 0.0
      %593 = vmatpush2.msra.mxu0 0.0
      %594 = vmatprep.subr.mxu0 0.0
      %595 = vmatpush2.msra.mxu0 0.0
      %596 = vmatprep.subr.mxu0 0.0
      %597 = vmatpush2.msra.mxu0 0.0
      %598 = vmatprep.subr.mxu0 0.0
      %599 = vmatpush2.msra.mxu0 0.0
      %600 = vmatprep.subr.mxu0 0.0
      %601 = vmatpush2.msra.mxu0 0.0
      %602 = vmatprep.mubr.f32.mxu0 0.0
      %603 = vmatmul.mubr.f32.gmra.mxu0 %v448
      %v604 = vpop.f32.mrf.mxu0
      %v605 = vadd.f32 %v439, %v604
      %v606 = vpop.f32.mrf.mxu0
      %v607 = vadd.f32 %v443, %v606
      %608 = vmatprep.mubr.f32.mxu0 0.0
      %609 = vmatmul.mubr.f32.gmra.mxu0 %v451
      %v610 = vpop.f32.mrf.mxu0
      %v611 = vadd.f32 %v439, %v610
      %v612 = vpop.f32.mrf.mxu0
      %v613 = vadd.f32 %v443, %v612
      %614 = vmatprep.mubr.f32.mxu0 0.0
      %615 = vmatmul.mubr.f32.gmra.mxu0 %v454
      %v616 = vpop.f32.mrf.mxu0
      %v617 = vadd.f32 %v439, %v616
      %v618 = vpop.f32.mrf.mxu0
      %v619 = vadd.f32 %v443, %v618
      %620 = vmatprep.mubr.f32.mxu0 0.0
      %621 = vmatmul.mubr.f32.gmra.mxu0 %v457
      %v622 = vpop.f32.mrf.mxu0
      %v623 = vadd.f32 %v439, %v622
      %v624 = vpop.f32.mrf.mxu0
      %v625 = vadd.f32 %v443, %v624
      %626 = vmatprep.mubr.f32.mxu0 0.0
      %627 = vmatmul.mubr.f32.gmra.mxu0 %v460
      %v628 = vpop.f32.mrf.mxu0
      %v629 = vadd.f32 %v439, %v628
      %v630 = vpop.f32.mrf.mxu0
      %v631 = vadd.f32 %v443, %v630
      %632 = vmatprep.mubr.f32.mxu0 0.0
      %633 = vmatmul.mubr.f32.gmra.mxu0 %v463
      %v634 = vpop.f32.mrf.mxu0
      %v635 = vadd.f32 %v439, %v634
      %v636 = vpop.f32.mrf.mxu0
      %v637 = vadd.f32 %v443, %v636
      %638 = vmatprep.mubr.f32.mxu0 0.0
      %639 = vmatmul.mubr.f32.gmra.mxu0 %v466
      %v640 = vpop.f32.mrf.mxu0
      %v641 = vadd.f32 %v439, %v640
      %v642 = vpop.f32.mrf.mxu0
      %v643 = vadd.f32 %v443, %v642
      %644 = vmatprep.mubr.f32.mxu0 0.0
      %645 = vmatmul.mubr.f32.gmra.mxu0 %v469
      %v646 = vpop.f32.mrf.mxu0
      %v647 = vadd.f32 %v439, %v646
      %v648 = vpop.f32.mrf.mxu0
      %v649 = vadd.f32 %v443, %v648
      %650 = vmatprep.mubr.f32.mxu0 0.0
      %651 = vmatmul.mubr.f32.gmra.mxu0 %v472
      %v652 = vpop.f32.mrf.mxu0
      %v653 = vadd.f32 %v439, %v652
      %v654 = vpop.f32.mrf.mxu0
      %v655 = vadd.f32 %v443, %v654
      %656 = vmatprep.mubr.f32.mxu0 0.0
      %657 = vmatmul.mubr.f32.gmra.mxu0 %v475
      %v658 = vpop.f32.mrf.mxu0
      %v659 = vadd.f32 %v439, %v658
      %v660 = vpop.f32.mrf.mxu0
      %v661 = vadd.f32 %v443, %v660
      %662 = vmatprep.mubr.f32.mxu0 0.0
      %663 = vmatmul.mubr.f32.gmra.mxu0 %v478
      %v664 = vpop.f32.mrf.mxu0
      %v665 = vadd.f32 %v439, %v664
      %v666 = vpop.f32.mrf.mxu0
      %v667 = vadd.f32 %v443, %v666
      %668 = vmatprep.mubr.f32.mxu0 0.0
      %669 = vmatmul.mubr.f32.gmra.mxu0 %v481
      %v670 = vpop.f32.mrf.mxu0
      %v671 = vadd.f32 %v439, %v670
      %v672 = vpop.f32.mrf.mxu0
      %v673 = vadd.f32 %v443, %v672
      %674 = vmatprep.mubr.f32.mxu0 0.0
      %675 = vmatmul.mubr.f32.gmra.mxu0 %v484
      %v676 = vpop.f32.mrf.mxu0
      %v677 = vadd.f32 %v439, %v676
      %v678 = vpop.f32.mrf.mxu0
      %v679 = vadd.f32 %v443, %v678
      %680 = vmatprep.mubr.f32.mxu0 0.0
      %681 = vmatmul.mubr.f32.gmra.mxu0 %v487
      %v682 = vpop.f32.mrf.mxu0
      %v683 = vadd.f32 %v439, %v682
      %v684 = vpop.f32.mrf.mxu0
      %v685 = vadd.f32 %v443, %v684
      %686 = vmatprep.mubr.f32.mxu0 0.0
      %687 = vmatmul.mubr.f32.gmra.mxu0 %v490
      %v688 = vpop.f32.mrf.mxu0
      %v689 = vadd.f32 %v439, %v688
      %v690 = vpop.f32.mrf.mxu0
      %v691 = vadd.f32 %v443, %v690
      %692 = vmatprep.mubr.f32.mxu0 0.0
      %693 = vmatmul.mubr.f32.gmra.mxu0 %v493
      %v694 = vpop.f32.mrf.mxu0
      %v695 = vadd.f32 %v439, %v694
      %v696 = vpop.f32.mrf.mxu0
      %v697 = vadd.f32 %v443, %v696
      %698 = vmatprep.mubr.f32.mxu0 0.0
      %699 = vmatmul.mubr.f32.gmra.mxu0 %v496
      %v700 = vpop.f32.mrf.mxu0
      %v701 = vadd.f32 %v439, %v700
      %v702 = vpop.f32.mrf.mxu0
      %v703 = vadd.f32 %v443, %v702
      %704 = vmatprep.mubr.f32.mxu0 0.0
      %705 = vmatmul.mubr.f32.gmra.mxu0 %v499
      %v706 = vpop.f32.mrf.mxu0
      %v707 = vadd.f32 %v439, %v706
      %v708 = vpop.f32.mrf.mxu0
      %v709 = vadd.f32 %v443, %v708
      %710 = vmatprep.mubr.f32.mxu0 0.0
      %711 = vmatmul.mubr.f32.gmra.mxu0 %v502
      %v712 = vpop.f32.mrf.mxu0
      %v713 = vadd.f32 %v439, %v712
      %v714 = vpop.f32.mrf.mxu0
      %v715 = vadd.f32 %v443, %v714
      %716 = vmatprep.mubr.f32.mxu0 0.0
      %717 = vmatmul.mubr.f32.gmra.mxu0 %v505
      %v718 = vpop.f32.mrf.mxu0
      %v719 = vadd.f32 %v439, %v718
      %v720 = vpop.f32.mrf.mxu0
      %v721 = vadd.f32 %v443, %v720
      %722 = vmatprep.mubr.f32.mxu0 0.0
      %723 = vmatmul.mubr.f32.gmra.mxu0 %v508
      %v724 = vpop.f32.mrf.mxu0
      %v725 = vadd.f32 %v439, %v724
      %v726 = vpop.f32.mrf.mxu0
      %v727 = vadd.f32 %v443, %v726
      %728 = vmatprep.mubr.f32.mxu0 0.0
      %729 = vmatmul.mubr.f32.gmra.mxu0 %v511
      %v730 = vpop.f32.mrf.mxu0
      %v731 = vadd.f32 %v439, %v730
      %v732 = vpop.f32.mrf.mxu0
      %v733 = vadd.f32 %v443, %v732
      %734 = vmatprep.mubr.f32.mxu0 0.0
      %735 = vmatmul.mubr.f32.gmra.mxu0 %v514
      %v736 = vpop.f32.mrf.mxu0
      %v737 = vadd.f32 %v439, %v736
      %v738 = vpop.f32.mrf.mxu0
      %v739 = vadd.f32 %v443, %v738
      %740 = vmatprep.mubr.f32.mxu0 0.0
      %741 = vmatmul.mubr.f32.gmra.mxu0 %v517
      %v742 = vpop.f32.mrf.mxu0
      %v743 = vadd.f32 %v439, %v742
      %v744 = vpop.f32.mrf.mxu0
      %v745 = vadd.f32 %v443, %v744
      %746 = vmatprep.mubr.f32.mxu0 0.0
      %747 = vmatmul.mubr.f32.gmra.mxu0 %v520
      %v748 = vpop.f32.mrf.mxu0
      %v749 = vadd.f32 %v439, %v748
      %v750 = vpop.f32.mrf.mxu0
      %v751 = vadd.f32 %v443, %v750
      %752 = vmatprep.mubr.f32.mxu0 0.0
      %753 = vmatmul.mubr.f32.gmra.mxu0 %v523
      %v754 = vpop.f32.mrf.mxu0
      %v755 = vadd.f32 %v439, %v754
      %v756 = vpop.f32.mrf.mxu0
      %v757 = vadd.f32 %v443, %v756
      %758 = vmatprep.mubr.f32.mxu0 0.0
      %759 = vmatmul.mubr.f32.gmra.mxu0 %v526
      %v760 = vpop.f32.mrf.mxu0
      %v761 = vadd.f32 %v439, %v760
      %v762 = vpop.f32.mrf.mxu0
      %v763 = vadd.f32 %v443, %v762
      %764 = vmatprep.mubr.f32.mxu0 0.0
      %765 = vmatmul.mubr.f32.gmra.mxu0 %v529
      %v766 = vpop.f32.mrf.mxu0
      %v767 = vadd.f32 %v439, %v766
      %v768 = vpop.f32.mrf.mxu0
      %v769 = vadd.f32 %v443, %v768
      %770 = vdwg.mxu0
      %v771 = vld [vmem:[%s361] sm:$0xff]
      %v772 = vld [vmem:[%s361 + $0x8] sm:$0xff]
      %v773 = vld [vmem:[%s361 + $0x10] sm:$0xff]
      %v774 = vld [vmem:[%s361 + $0x18] sm:$0xff]
      %v775 = vld [vmem:[%s361 + $0x20] sm:$0xff]
      %v776 = vld [vmem:[%s361 + $0x28] sm:$0xff]
      %v777 = vld [vmem:[%s361 + $0x30] sm:$0xff]
      %v778 = vld [vmem:[%s361 + $0x38] sm:$0xff]
      %v779 = vld [vmem:[%s361 + $0x40] sm:$0xff]
      %v780 = vld [vmem:[%s361 + $0x48] sm:$0xff]
      %v781 = vld [vmem:[%s361 + $0x50] sm:$0xff]
      %v782 = vld [vmem:[%s361 + $0x58] sm:$0xff]
      %v783 = vld [vmem:[%s361 + $0x60] sm:$0xff]
      %v784 = vld [vmem:[%s361 + $0x68] sm:$0xff]
      %v785 = vld [vmem:[%s361 + $0x70] sm:$0xff]
      %v786 = vld [vmem:[%s361 + $0x78] sm:$0xff]
      %v787 = vld [vmem:[%s361 + $0x80] sm:$0xff]
      %v788 = vld [vmem:[%s361 + $0x88] sm:$0xff]
      %v789 = vld [vmem:[%s361 + $0x90] sm:$0xff]
      %v790 = vld [vmem:[%s361 + $0x98] sm:$0xff]
      %v791 = vld [vmem:[%s361 + $0xa0] sm:$0xff]
      %v792 = vld [vmem:[%s361 + $0xa8] sm:$0xff]
      %v793 = vld [vmem:[%s361 + $0xb0] sm:$0xff]
      %v794 = vld [vmem:[%s361 + $0xb8] sm:$0xff]
      %v795 = vld [vmem:[%s361 + $0xc0] sm:$0xff]
      %v796 = vld [vmem:[%s361 + $0xc8] sm:$0xff]
      %v797 = vld [vmem:[%s361 + $0xd0] sm:$0xff]
      %v798 = vld [vmem:[%s361 + $0xd8] sm:$0xff]
      %v800 = vsel %vm446, %v771, 0
      %v803 = vsel %vm446, %v772, 0
      %v806 = vsel %vm446, %v773, 0
      %v809 = vsel %vm446, %v774, 0
      %v812 = vsel %vm446, %v775, 0
      %v815 = vsel %vm446, %v776, 0
      %v818 = vsel %vm446, %v777, 0
      %v821 = vsel %vm446, %v778, 0
      %v824 = vsel %vm446, %v779, 0
      %v827 = vsel %vm446, %v780, 0
      %v830 = vsel %vm446, %v781, 0
      %v833 = vsel %vm446, %v782, 0
      %v836 = vsel %vm446, %v783, 0
      %v839 = vsel %vm446, %v784, 0
      %v842 = vsel %vm446, %v785, 0
      %v845 = vsel %vm446, %v786, 0
      %v848 = vsel %vm446, %v787, 0
      %v851 = vsel %vm446, %v788, 0
      %v854 = vsel %vm446, %v789, 0
      %v857 = vsel %vm446, %v790, 0
      %v860 = vsel %vm446, %v791, 0
      %v863 = vsel %vm446, %v792, 0
      %v866 = vsel %vm446, %v793, 0
      %v869 = vsel %vm446, %v794, 0
      %v872 = vsel %vm446, %v795, 0
      %v875 = vsel %vm446, %v796, 0
      %v878 = vsel %vm446, %v797, 0
      %v881 = vsel %vm446, %v798, 0
      %883 = vmatprep.subr.mxu0 0.0
      %884 = vmatpush1.msra.mxu0 0.0
      %885 = vmatprep.subr.mxu0 0.0
      %886 = vmatpush1.msra.mxu0 0.0
      %887 = vmatprep.subr.mxu0 0.0
      %888 = vmatpush1.msra.mxu0 0.0
      %889 = vmatprep.subr.mxu0 0.0
      %890 = vmatpush1.msra.mxu0 0.0
      %891 = vmatprep.subr.mxu0 %v536
      %892 = vmatpush1.msra.mxu0 %v533
      %893 = vmatprep.subr.mxu0 %v403
      %894 = vmatpush1.msra.mxu0 %v402
      %895 = vmatprep.subr.mxu0 %v401
      %896 = vmatpush1.msra.mxu0 %v400
      %897 = vmatprep.subr.mxu0 %v399
      %898 = vmatpush1.msra.mxu0 %v398
      %899 = vmatprep.subr.mxu0 %v397
      %900 = vmatpush1.msra.mxu0 %v396
      %901 = vmatprep.subr.mxu0 %v395
      %902 = vmatpush1.msra.mxu0 %v394
      %903 = vmatprep.subr.mxu0 %v393
      %904 = vmatpush1.msra.mxu0 %v392
      %905 = vmatprep.subr.mxu0 %v391
      %906 = vmatpush1.msra.mxu0 %v390
      %907 = vmatprep.subr.mxu0 %v389
      %908 = vmatpush1.msra.mxu0 %v388
      %909 = vmatprep.subr.mxu0 %v387
      %910 = vmatpush1.msra.mxu0 %v386
      %911 = vmatprep.subr.mxu0 %v385
      %912 = vmatpush1.msra.mxu0 %v384
      %913 = vmatprep.subr.mxu0 %v383
      %914 = vmatpush1.msra.mxu0 %v382
      %915 = vmatprep.subr.mxu0 0.0
      %916 = vmatpush2.msra.mxu0 0.0
      %917 = vmatprep.subr.mxu0 0.0
      %918 = vmatpush2.msra.mxu0 0.0
      %919 = vmatprep.subr.mxu0 0.0
      %920 = vmatpush2.msra.mxu0 0.0
      %921 = vmatprep.subr.mxu0 0.0
      %922 = vmatpush2.msra.mxu0 0.0
      %923 = vmatprep.subr.mxu0 0.0
      %924 = vmatpush2.msra.mxu0 0.0
      %925 = vmatprep.subr.mxu0 0.0
      %926 = vmatpush2.msra.mxu0 0.0
      %927 = vmatprep.subr.mxu0 0.0
      %928 = vmatpush2.msra.mxu0 0.0
      %929 = vmatprep.subr.mxu0 0.0
      %930 = vmatpush2.msra.mxu0 0.0
      %931 = vmatprep.subr.mxu0 0.0
      %932 = vmatpush2.msra.mxu0 0.0
      %933 = vmatprep.subr.mxu0 0.0
      %934 = vmatpush2.msra.mxu0 0.0
      %935 = vmatprep.subr.mxu0 0.0
      %936 = vmatpush2.msra.mxu0 0.0
      %937 = vmatprep.subr.mxu0 0.0
      %938 = vmatpush2.msra.mxu0 0.0
      %939 = vmatprep.subr.mxu0 0.0
      %940 = vmatpush2.msra.mxu0 0.0
      %941 = vmatprep.subr.mxu0 0.0
      %942 = vmatpush2.msra.mxu0 0.0
      %943 = vmatprep.subr.mxu0 0.0
      %944 = vmatpush2.msra.mxu0 0.0
      %945 = vmatprep.subr.mxu0 0.0
      %946 = vmatpush2.msra.mxu0 0.0
      %947 = vmatprep.mubr.f32.mxu0 0.0
      %948 = vmatmul.mubr.f32.gmra.mxu0 %v800
      %v949 = vpop.f32.mrf.mxu0
      %v950 = vadd.f32 %v439, %v949
      %v951 = vpop.f32.mrf.mxu0
      %v952 = vadd.f32 %v443, %v951
      %953 = vmatprep.mubr.f32.mxu0 0.0
      %954 = vmatmul.mubr.f32.gmra.mxu0 %v803
      %v955 = vpop.f32.mrf.mxu0
      %v956 = vadd.f32 %v439, %v955
      %v957 = vpop.f32.mrf.mxu0
      %v958 = vadd.f32 %v443, %v957
      %959 = vmatprep.mubr.f32.mxu0 0.0
      %960 = vmatmul.mubr.f32.gmra.mxu0 %v806
      %v961 = vpop.f32.mrf.mxu0
      %v962 = vadd.f32 %v439, %v961
      %v963 = vpop.f32.mrf.mxu0
      %v964 = vadd.f32 %v443, %v963
      %965 = vmatprep.mubr.f32.mxu0 0.0
      %966 = vmatmul.mubr.f32.gmra.mxu0 %v809
      %v967 = vpop.f32.mrf.mxu0
      %v968 = vadd.f32 %v439, %v967
      %v969 = vpop.f32.mrf.mxu0
      %v970 = vadd.f32 %v443, %v969
      %971 = vmatprep.mubr.f32.mxu0 0.0
      %972 = vmatmul.mubr.f32.gmra.mxu0 %v812
      %v973 = vpop.f32.mrf.mxu0
      %v974 = vadd.f32 %v439, %v973
      %v975 = vpop.f32.mrf.mxu0
      %v976 = vadd.f32 %v443, %v975
      %977 = vmatprep.mubr.f32.mxu0 0.0
      %978 = vmatmul.mubr.f32.gmra.mxu0 %v815
      %v979 = vpop.f32.mrf.mxu0
      %v980 = vadd.f32 %v439, %v979
      %v981 = vpop.f32.mrf.mxu0
      %v982 = vadd.f32 %v443, %v981
      %983 = vmatprep.mubr.f32.mxu0 0.0
      %984 = vmatmul.mubr.f32.gmra.mxu0 %v818
      %v985 = vpop.f32.mrf.mxu0
      %v986 = vadd.f32 %v439, %v985
      %v987 = vpop.f32.mrf.mxu0
      %v988 = vadd.f32 %v443, %v987
      %989 = vmatprep.mubr.f32.mxu0 0.0
      %990 = vmatmul.mubr.f32.gmra.mxu0 %v821
      %v991 = vpop.f32.mrf.mxu0
      %v992 = vadd.f32 %v439, %v991
      %v993 = vpop.f32.mrf.mxu0
      %v994 = vadd.f32 %v443, %v993
      %995 = vmatprep.mubr.f32.mxu0 0.0
      %996 = vmatmul.mubr.f32.gmra.mxu0 %v824
      %v997 = vpop.f32.mrf.mxu0
      %v998 = vadd.f32 %v439, %v997
      %v999 = vpop.f32.mrf.mxu0
      %v1000 = vadd.f32 %v443, %v999
      %1001 = vmatprep.mubr.f32.mxu0 0.0
      %1002 = vmatmul.mubr.f32.gmra.mxu0 %v827
      %v1003 = vpop.f32.mrf.mxu0
      %v1004 = vadd.f32 %v439, %v1003
      %v1005 = vpop.f32.mrf.mxu0
      %v1006 = vadd.f32 %v443, %v1005
      %1007 = vmatprep.mubr.f32.mxu0 0.0
      %1008 = vmatmul.mubr.f32.gmra.mxu0 %v830
      %v1009 = vpop.f32.mrf.mxu0
      %v1010 = vadd.f32 %v439, %v1009
      %v1011 = vpop.f32.mrf.mxu0
      %v1012 = vadd.f32 %v443, %v1011
      %1013 = vmatprep.mubr.f32.mxu0 0.0
      %1014 = vmatmul.mubr.f32.gmra.mxu0 %v833
      %v1015 = vpop.f32.mrf.mxu0
      %v1016 = vadd.f32 %v439, %v1015
      %v1017 = vpop.f32.mrf.mxu0
      %v1018 = vadd.f32 %v443, %v1017
      %1019 = vmatprep.mubr.f32.mxu0 0.0
      %1020 = vmatmul.mubr.f32.gmra.mxu0 %v836
      %v1021 = vpop.f32.mrf.mxu0
      %v1022 = vadd.f32 %v439, %v1021
      %v1023 = vpop.f32.mrf.mxu0
      %v1024 = vadd.f32 %v443, %v1023
      %1025 = vmatprep.mubr.f32.mxu0 0.0
      %1026 = vmatmul.mubr.f32.gmra.mxu0 %v839
      %v1027 = vpop.f32.mrf.mxu0
      %v1028 = vadd.f32 %v439, %v1027
      %v1029 = vpop.f32.mrf.mxu0
      %v1030 = vadd.f32 %v443, %v1029
      %1031 = vmatprep.mubr.f32.mxu0 0.0
      %1032 = vmatmul.mubr.f32.gmra.mxu0 %v842
      %v1033 = vpop.f32.mrf.mxu0
      %v1034 = vadd.f32 %v439, %v1033
      %v1035 = vpop.f32.mrf.mxu0
      %v1036 = vadd.f32 %v443, %v1035
      %1037 = vmatprep.mubr.f32.mxu0 0.0
      %1038 = vmatmul.mubr.f32.gmra.mxu0 %v845
      %v1039 = vpop.f32.mrf.mxu0
      %v1040 = vadd.f32 %v439, %v1039
      %v1041 = vpop.f32.mrf.mxu0
      %v1042 = vadd.f32 %v443, %v1041
      %1043 = vmatprep.mubr.f32.mxu0 0.0
      %1044 = vmatmul.mubr.f32.gmra.mxu0 %v848
      %v1045 = vpop.f32.mrf.mxu0
      %v1046 = vadd.f32 %v439, %v1045
      %v1047 = vpop.f32.mrf.mxu0
      %v1048 = vadd.f32 %v443, %v1047
      %1049 = vmatprep.mubr.f32.mxu0 0.0
      %1050 = vmatmul.mubr.f32.gmra.mxu0 %v851
      %v1051 = vpop.f32.mrf.mxu0
      %v1052 = vadd.f32 %v439, %v1051
      %v1053 = vpop.f32.mrf.mxu0
      %v1054 = vadd.f32 %v443, %v1053
      %1055 = vmatprep.mubr.f32.mxu0 0.0
      %1056 = vmatmul.mubr.f32.gmra.mxu0 %v854
      %v1057 = vpop.f32.mrf.mxu0
      %v1058 = vadd.f32 %v439, %v1057
      %v1059 = vpop.f32.mrf.mxu0
      %v1060 = vadd.f32 %v443, %v1059
      %1061 = vmatprep.mubr.f32.mxu0 0.0
      %1062 = vmatmul.mubr.f32.gmra.mxu0 %v857
      %v1063 = vpop.f32.mrf.mxu0
      %v1064 = vadd.f32 %v439, %v1063
      %v1065 = vpop.f32.mrf.mxu0
      %v1066 = vadd.f32 %v443, %v1065
      %1067 = vmatprep.mubr.f32.mxu0 0.0
      %1068 = vmatmul.mubr.f32.gmra.mxu0 %v860
      %v1069 = vpop.f32.mrf.mxu0
      %v1070 = vadd.f32 %v439, %v1069
      %v1071 = vpop.f32.mrf.mxu0
      %v1072 = vadd.f32 %v443, %v1071
      %1073 = vmatprep.mubr.f32.mxu0 0.0
      %1074 = vmatmul.mubr.f32.gmra.mxu0 %v863
      %v1075 = vpop.f32.mrf.mxu0
      %v1076 = vadd.f32 %v439, %v1075
      %v1077 = vpop.f32.mrf.mxu0
      %v1078 = vadd.f32 %v443, %v1077
      %1079 = vmatprep.mubr.f32.mxu0 0.0
      %1080 = vmatmul.mubr.f32.gmra.mxu0 %v866
      %v1081 = vpop.f32.mrf.mxu0
      %v1082 = vadd.f32 %v439, %v1081
      %v1083 = vpop.f32.mrf.mxu0
      %v1084 = vadd.f32 %v443, %v1083
      %1085 = vmatprep.mubr.f32.mxu0 0.0
      %1086 = vmatmul.mubr.f32.gmra.mxu0 %v869
      %v1087 = vpop.f32.mrf.mxu0
      %v1088 = vadd.f32 %v439, %v1087
      %v1089 = vpop.f32.mrf.mxu0
      %v1090 = vadd.f32 %v443, %v1089
      %1091 = vmatprep.mubr.f32.mxu0 0.0
      %1092 = vmatmul.mubr.f32.gmra.mxu0 %v872
      %v1093 = vpop.f32.mrf.mxu0
      %v1094 = vadd.f32 %v439, %v1093
      %v1095 = vpop.f32.mrf.mxu0
      %v1096 = vadd.f32 %v443, %v1095
      %1097 = vmatprep.mubr.f32.mxu0 0.0
      %1098 = vmatmul.mubr.f32.gmra.mxu0 %v875
      %v1099 = vpop.f32.mrf.mxu0
      %v1100 = vadd.f32 %v439, %v1099
      %v1101 = vpop.f32.mrf.mxu0
      %v1102 = vadd.f32 %v443, %v1101
      %1103 = vmatprep.mubr.f32.mxu0 0.0
      %1104 = vmatmul.mubr.f32.gmra.mxu0 %v878
      %v1105 = vpop.f32.mrf.mxu0
      %v1106 = vadd.f32 %v439, %v1105
      %v1107 = vpop.f32.mrf.mxu0
      %v1108 = vadd.f32 %v443, %v1107
      %1109 = vmatprep.mubr.f32.mxu0 0.0
      %1110 = vmatmul.mubr.f32.gmra.mxu0 %v881
      %v1111 = vpop.f32.mrf.mxu0
      %v1112 = vadd.f32 %v439, %v1111
      %v1113 = vpop.f32.mrf.mxu0
      %v1114 = vadd.f32 %v443, %v1113
      %1115 = vdwg.mxu0
      %v1116 = vld [vmem:[%s373] sm:$0xff]
      %v1117 = vld [vmem:[%s373 + $0x8] sm:$0xff]
      %v1118 = vld [vmem:[%s373 + $0x10] sm:$0xff]
      %v1119 = vld [vmem:[%s373 + $0x18] sm:$0xff]
      %v1120 = vld [vmem:[%s373 + $0x20] sm:$0xff]
      %v1121 = vld [vmem:[%s373 + $0x28] sm:$0xff]
      %v1122 = vld [vmem:[%s373 + $0x30] sm:$0xff]
      %v1123 = vld [vmem:[%s373 + $0x38] sm:$0xff]
      %v1124 = vld [vmem:[%s373 + $0x40] sm:$0xff]
      %v1125 = vld [vmem:[%s373 + $0x48] sm:$0xff]
      %v1126 = vld [vmem:[%s373 + $0x50] sm:$0xff]
      %v1127 = vld [vmem:[%s373 + $0x58] sm:$0xff]
      %v1128 = vld [vmem:[%s373 + $0x60] sm:$0xff]
      %v1129 = vld [vmem:[%s373 + $0x68] sm:$0xff]
      %v1130 = vld [vmem:[%s373 + $0x70] sm:$0xff]
      %v1131 = vld [vmem:[%s373 + $0x78] sm:$0xff]
      %v1132 = vld [vmem:[%s373 + $0x80] sm:$0xff]
      %v1133 = vld [vmem:[%s373 + $0x88] sm:$0xff]
      %v1134 = vld [vmem:[%s373 + $0x90] sm:$0xff]
      %v1135 = vld [vmem:[%s373 + $0x98] sm:$0xff]
      %v1136 = vld [vmem:[%s373 + $0xa0] sm:$0xff]
      %v1137 = vld [vmem:[%s373 + $0xa8] sm:$0xff]
      %v1138 = vld [vmem:[%s373 + $0xb0] sm:$0xff]
      %v1139 = vld [vmem:[%s373 + $0xb8] sm:$0xff]
      %v1140 = vld [vmem:[%s373 + $0xc0] sm:$0xff]
      %v1141 = vld [vmem:[%s373 + $0xc8] sm:$0xff]
      %v1142 = vld [vmem:[%s373 + $0xd0] sm:$0xff]
      %v1143 = vld [vmem:[%s373 + $0xd8] sm:$0xff]
      %v1145 = vsel %vm446, %v1116, 0
      %v1148 = vsel %vm446, %v1117, 0
      %v1151 = vsel %vm446, %v1118, 0
      %v1154 = vsel %vm446, %v1119, 0
      %v1157 = vsel %vm446, %v1120, 0
      %v1160 = vsel %vm446, %v1121, 0
      %v1163 = vsel %vm446, %v1122, 0
      %v1166 = vsel %vm446, %v1123, 0
      %v1169 = vsel %vm446, %v1124, 0
      %v1172 = vsel %vm446, %v1125, 0
      %v1175 = vsel %vm446, %v1126, 0
      %v1178 = vsel %vm446, %v1127, 0
      %v1181 = vsel %vm446, %v1128, 0
      %v1184 = vsel %vm446, %v1129, 0
      %v1187 = vsel %vm446, %v1130, 0
      %v1190 = vsel %vm446, %v1131, 0
      %v1193 = vsel %vm446, %v1132, 0
      %v1196 = vsel %vm446, %v1133, 0
      %v1199 = vsel %vm446, %v1134, 0
      %v1202 = vsel %vm446, %v1135, 0
      %v1205 = vsel %vm446, %v1136, 0
      %v1208 = vsel %vm446, %v1137, 0
      %v1211 = vsel %vm446, %v1138, 0
      %v1214 = vsel %vm446, %v1139, 0
      %v1217 = vsel %vm446, %v1140, 0
      %v1220 = vsel %vm446, %v1141, 0
      %v1223 = vsel %vm446, %v1142, 0
      %v1226 = vsel %vm446, %v1143, 0
      %1228 = vmatprep.subr.mxu0 0.0
      %1229 = vmatpush1.msra.mxu0 0.0
      %1230 = vmatprep.subr.mxu0 0.0
      %1231 = vmatpush1.msra.mxu0 0.0
      %1232 = vmatprep.subr.mxu0 0.0
      %1233 = vmatpush1.msra.mxu0 0.0
      %1234 = vmatprep.subr.mxu0 0.0
      %1235 = vmatpush1.msra.mxu0 0.0
      %1236 = vmatprep.subr.mxu0 %v536
      %1237 = vmatpush1.msra.mxu0 %v533
      %1238 = vmatprep.subr.mxu0 %v403
      %1239 = vmatpush1.msra.mxu0 %v402
      %1240 = vmatprep.subr.mxu0 %v401
      %1241 = vmatpush1.msra.mxu0 %v400
      %1242 = vmatprep.subr.mxu0 %v399
      %1243 = vmatpush1.msra.mxu0 %v398
      %1244 = vmatprep.subr.mxu0 %v397
      %1245 = vmatpush1.msra.mxu0 %v396
      %1246 = vmatprep.subr.mxu0 %v395
      %1247 = vmatpush1.msra.mxu0 %v394
      %1248 = vmatprep.subr.mxu0 %v393
      %1249 = vmatpush1.msra.mxu0 %v392
      %1250 = vmatprep.subr.mxu0 %v391
      %1251 = vmatpush1.msra.mxu0 %v390
      %1252 = vmatprep.subr.mxu0 %v389
      %1253 = vmatpush1.msra.mxu0 %v388
      %1254 = vmatprep.subr.mxu0 %v387
      %1255 = vmatpush1.msra.mxu0 %v386
      %1256 = vmatprep.subr.mxu0 %v385
      %1257 = vmatpush1.msra.mxu0 %v384
      %1258 = vmatprep.subr.mxu0 %v383
      %1259 = vmatpush1.msra.mxu0 %v382
      %1260 = vmatprep.subr.mxu0 0.0
      %1261 = vmatpush2.msra.mxu0 0.0
      %1262 = vmatprep.subr.mxu0 0.0
      %1263 = vmatpush2.msra.mxu0 0.0
      %1264 = vmatprep.subr.mxu0 0.0
      %1265 = vmatpush2.msra.mxu0 0.0
      %1266 = vmatprep.subr.mxu0 0.0
      %1267 = vmatpush2.msra.mxu0 0.0
      %1268 = vmatprep.subr.mxu0 0.0
      %1269 = vmatpush2.msra.mxu0 0.0
      %1270 = vmatprep.subr.mxu0 0.0
      %1271 = vmatpush2.msra.mxu0 0.0
      %1272 = vmatprep.subr.mxu0 0.0
      %1273 = vmatpush2.msra.mxu0 0.0
      %1274 = vmatprep.subr.mxu0 0.0
      %1275 = vmatpush2.msra.mxu0 0.0
      %1276 = vmatprep.subr.mxu0 0.0
      %1277 = vmatpush2.msra.mxu0 0.0
      %1278 = vmatprep.subr.mxu0 0.0
      %1279 = vmatpush2.msra.mxu0 0.0
      %1280 = vmatprep.subr.mxu0 0.0
      %1281 = vmatpush2.msra.mxu0 0.0
      %1282 = vmatprep.subr.mxu0 0.0
      %1283 = vmatpush2.msra.mxu0 0.0
      %1284 = vmatprep.subr.mxu0 0.0
      %1285 = vmatpush2.msra.mxu0 0.0
      %1286 = vmatprep.subr.mxu0 0.0
      %1287 = vmatpush2.msra.mxu0 0.0
      %1288 = vmatprep.subr.mxu0 0.0
      %1289 = vmatpush2.msra.mxu0 0.0
      %1290 = vmatprep.subr.mxu0 0.0
      %1291 = vmatpush2.msra.mxu0 0.0
      %1292 = vmatprep.mubr.f32.mxu0 0.0
      %1293 = vmatmul.mubr.f32.gmra.mxu0 %v1145
      %v1294 = vpop.f32.mrf.mxu0
      %v1295 = vadd.f32 %v439, %v1294
      %v1296 = vpop.f32.mrf.mxu0
      %v1297 = vadd.f32 %v443, %v1296
      %1298 = vmatprep.mubr.f32.mxu0 0.0
      %1299 = vmatmul.mubr.f32.gmra.mxu0 %v1148
      %v1300 = vpop.f32.mrf.mxu0
      %v1301 = vadd.f32 %v439, %v1300
      %v1302 = vpop.f32.mrf.mxu0
      %v1303 = vadd.f32 %v443, %v1302
      %1304 = vmatprep.mubr.f32.mxu0 0.0
      %1305 = vmatmul.mubr.f32.gmra.mxu0 %v1151
      %v1306 = vpop.f32.mrf.mxu0
      %v1307 = vadd.f32 %v439, %v1306
      %v1308 = vpop.f32.mrf.mxu0
      %v1309 = vadd.f32 %v443, %v1308
      %1310 = vmatprep.mubr.f32.mxu0 0.0
      %1311 = vmatmul.mubr.f32.gmra.mxu0 %v1154
      %v1312 = vpop.f32.mrf.mxu0
      %v1313 = vadd.f32 %v439, %v1312
      %v1314 = vpop.f32.mrf.mxu0
      %v1315 = vadd.f32 %v443, %v1314
      %1316 = vmatprep.mubr.f32.mxu0 0.0
      %1317 = vmatmul.mubr.f32.gmra.mxu0 %v1157
      %v1318 = vpop.f32.mrf.mxu0
      %v1319 = vadd.f32 %v439, %v1318
      %v1320 = vpop.f32.mrf.mxu0
      %v1321 = vadd.f32 %v443, %v1320
      %1322 = vmatprep.mubr.f32.mxu0 0.0
      %1323 = vmatmul.mubr.f32.gmra.mxu0 %v1160
      %v1324 = vpop.f32.mrf.mxu0
      %v1325 = vadd.f32 %v439, %v1324
      %v1326 = vpop.f32.mrf.mxu0
      %v1327 = vadd.f32 %v443, %v1326
      %1328 = vmatprep.mubr.f32.mxu0 0.0
      %1329 = vmatmul.mubr.f32.gmra.mxu0 %v1163
      %v1330 = vpop.f32.mrf.mxu0
      %v1331 = vadd.f32 %v439, %v1330
      %v1332 = vpop.f32.mrf.mxu0
      %v1333 = vadd.f32 %v443, %v1332
      %1334 = vmatprep.mubr.f32.mxu0 0.0
      %1335 = vmatmul.mubr.f32.gmra.mxu0 %v1166
      %v1336 = vpop.f32.mrf.mxu0
      %v1337 = vadd.f32 %v439, %v1336
      %v1338 = vpop.f32.mrf.mxu0
      %v1339 = vadd.f32 %v443, %v1338
      %1340 = vmatprep.mubr.f32.mxu0 0.0
      %1341 = vmatmul.mubr.f32.gmra.mxu0 %v1169
      %v1342 = vpop.f32.mrf.mxu0
      %v1343 = vadd.f32 %v439, %v1342
      %v1344 = vpop.f32.mrf.mxu0
      %v1345 = vadd.f32 %v443, %v1344
      %1346 = vmatprep.mubr.f32.mxu0 0.0
      %1347 = vmatmul.mubr.f32.gmra.mxu0 %v1172
      %v1348 = vpop.f32.mrf.mxu0
      %v1349 = vadd.f32 %v439, %v1348
      %v1350 = vpop.f32.mrf.mxu0
      %v1351 = vadd.f32 %v443, %v1350
      %1352 = vmatprep.mubr.f32.mxu0 0.0
      %1353 = vmatmul.mubr.f32.gmra.mxu0 %v1175
      %v1354 = vpop.f32.mrf.mxu0
      %v1355 = vadd.f32 %v439, %v1354
      %v1356 = vpop.f32.mrf.mxu0
      %v1357 = vadd.f32 %v443, %v1356
      %1358 = vmatprep.mubr.f32.mxu0 0.0
      %1359 = vmatmul.mubr.f32.gmra.mxu0 %v1178
      %v1360 = vpop.f32.mrf.mxu0
      %v1361 = vadd.f32 %v439, %v1360
      %v1362 = vpop.f32.mrf.mxu0
      %v1363 = vadd.f32 %v443, %v1362
      %1364 = vmatprep.mubr.f32.mxu0 0.0
      %1365 = vmatmul.mubr.f32.gmra.mxu0 %v1181
      %v1366 = vpop.f32.mrf.mxu0
      %v1367 = vadd.f32 %v439, %v1366
      %v1368 = vpop.f32.mrf.mxu0
      %v1369 = vadd.f32 %v443, %v1368
      %1370 = vmatprep.mubr.f32.mxu0 0.0
      %1371 = vmatmul.mubr.f32.gmra.mxu0 %v1184
      %v1372 = vpop.f32.mrf.mxu0
      %v1373 = vadd.f32 %v439, %v1372
      %v1374 = vpop.f32.mrf.mxu0
      %v1375 = vadd.f32 %v443, %v1374
      %1376 = vmatprep.mubr.f32.mxu0 0.0
      %1377 = vmatmul.mubr.f32.gmra.mxu0 %v1187
      %v1378 = vpop.f32.mrf.mxu0
      %v1379 = vadd.f32 %v439, %v1378
      %v1380 = vpop.f32.mrf.mxu0
      %v1381 = vadd.f32 %v443, %v1380
      %1382 = vmatprep.mubr.f32.mxu0 0.0
      %1383 = vmatmul.mubr.f32.gmra.mxu0 %v1190
      %v1384 = vpop.f32.mrf.mxu0
      %v1385 = vadd.f32 %v439, %v1384
      %v1386 = vpop.f32.mrf.mxu0
      %v1387 = vadd.f32 %v443, %v1386
      %1388 = vmatprep.mubr.f32.mxu0 0.0
      %1389 = vmatmul.mubr.f32.gmra.mxu0 %v1193
      %v1390 = vpop.f32.mrf.mxu0
      %v1391 = vadd.f32 %v439, %v1390
      %v1392 = vpop.f32.mrf.mxu0
      %v1393 = vadd.f32 %v443, %v1392
      %1394 = vmatprep.mubr.f32.mxu0 0.0
      %1395 = vmatmul.mubr.f32.gmra.mxu0 %v1196
      %v1396 = vpop.f32.mrf.mxu0
      %v1397 = vadd.f32 %v439, %v1396
      %v1398 = vpop.f32.mrf.mxu0
      %v1399 = vadd.f32 %v443, %v1398
      %1400 = vmatprep.mubr.f32.mxu0 0.0
      %1401 = vmatmul.mubr.f32.gmra.mxu0 %v1199
      %v1402 = vpop.f32.mrf.mxu0
      %v1403 = vadd.f32 %v439, %v1402
      %v1404 = vpop.f32.mrf.mxu0
      %v1405 = vadd.f32 %v443, %v1404
      %1406 = vmatprep.mubr.f32.mxu0 0.0
      %1407 = vmatmul.mubr.f32.gmra.mxu0 %v1202
      %v1408 = vpop.f32.mrf.mxu0
      %v1409 = vadd.f32 %v439, %v1408
      %v1410 = vpop.f32.mrf.mxu0
      %v1411 = vadd.f32 %v443, %v1410
      %1412 = vmatprep.mubr.f32.mxu0 0.0
      %1413 = vmatmul.mubr.f32.gmra.mxu0 %v1205
      %v1414 = vpop.f32.mrf.mxu0
      %v1415 = vadd.f32 %v439, %v1414
      %v1416 = vpop.f32.mrf.mxu0
      %v1417 = vadd.f32 %v443, %v1416
      %1418 = vmatprep.mubr.f32.mxu0 0.0
      %1419 = vmatmul.mubr.f32.gmra.mxu0 %v1208
      %v1420 = vpop.f32.mrf.mxu0
      %v1421 = vadd.f32 %v439, %v1420
      %v1422 = vpop.f32.mrf.mxu0
      %v1423 = vadd.f32 %v443, %v1422
      %1424 = vmatprep.mubr.f32.mxu0 0.0
      %1425 = vmatmul.mubr.f32.gmra.mxu0 %v1211
      %v1426 = vpop.f32.mrf.mxu0
      %v1427 = vadd.f32 %v439, %v1426
      %v1428 = vpop.f32.mrf.mxu0
      %v1429 = vadd.f32 %v443, %v1428
      %1430 = vmatprep.mubr.f32.mxu0 0.0
      %1431 = vmatmul.mubr.f32.gmra.mxu0 %v1214
      %v1432 = vpop.f32.mrf.mxu0
      %v1433 = vadd.f32 %v439, %v1432
      %v1434 = vpop.f32.mrf.mxu0
      %v1435 = vadd.f32 %v443, %v1434
      %1436 = vmatprep.mubr.f32.mxu0 0.0
      %1437 = vmatmul.mubr.f32.gmra.mxu0 %v1217
      %v1438 = vpop.f32.mrf.mxu0
      %v1439 = vadd.f32 %v439, %v1438
      %v1440 = vpop.f32.mrf.mxu0
      %v1441 = vadd.f32 %v443, %v1440
      %1442 = vmatprep.mubr.f32.mxu0 0.0
      %1443 = vmatmul.mubr.f32.gmra.mxu0 %v1220
      %v1444 = vpop.f32.mrf.mxu0
      %v1445 = vadd.f32 %v439, %v1444
      %v1446 = vpop.f32.mrf.mxu0
      %v1447 = vadd.f32 %v443, %v1446
      %1448 = vmatprep.mubr.f32.mxu0 0.0
      %1449 = vmatmul.mubr.f32.gmra.mxu0 %v1223
      %v1450 = vpop.f32.mrf.mxu0
      %v1451 = vadd.f32 %v439, %v1450
      %v1452 = vpop.f32.mrf.mxu0
      %v1453 = vadd.f32 %v443, %v1452
      %1454 = vmatprep.mubr.f32.mxu0 0.0
      %1455 = vmatmul.mubr.f32.gmra.mxu0 %v1226
      %v1456 = vpop.f32.mrf.mxu0
      %v1457 = vadd.f32 %v439, %v1456
      %v1458 = vpop.f32.mrf.mxu0
      %v1459 = vadd.f32 %v443, %v1458
      %1460 = vdwg.mxu0
      %v1461 = vmax.f32 %v605, 0.0
      %v1462 = vmax.f32 %v607, 0.0
      %v1463 = vmax.f32 %v611, 0.0
      %v1464 = vmax.f32 %v613, 0.0
      %v1465 = vmax.f32 %v617, 0.0
      %v1466 = vmax.f32 %v619, 0.0
      %v1467 = vmax.f32 %v623, 0.0
      %v1468 = vmax.f32 %v625, 0.0
      %v1469 = vmax.f32 %v629, 0.0
      %v1470 = vmax.f32 %v631, 0.0
      %v1471 = vmax.f32 %v635, 0.0
      %v1472 = vmax.f32 %v637, 0.0
      %v1473 = vmax.f32 %v641, 0.0
      %v1474 = vmax.f32 %v643, 0.0
      %v1475 = vmax.f32 %v647, 0.0
      %v1476 = vmax.f32 %v649, 0.0
      %v1477 = vmax.f32 %v653, 0.0
      %v1478 = vmax.f32 %v655, 0.0
      %v1479 = vmax.f32 %v659, 0.0
      %v1480 = vmax.f32 %v661, 0.0
      %v1481 = vmax.f32 %v665, 0.0
      %v1482 = vmax.f32 %v667, 0.0
      %v1483 = vmax.f32 %v671, 0.0
      %v1484 = vmax.f32 %v673, 0.0
      %v1485 = vmax.f32 %v677, 0.0
      %v1486 = vmax.f32 %v679, 0.0
      %v1487 = vmax.f32 %v683, 0.0
      %v1488 = vmax.f32 %v685, 0.0
      %v1489 = vmax.f32 %v689, 0.0
      %v1490 = vmax.f32 %v691, 0.0
      %v1491 = vmax.f32 %v695, 0.0
      %v1492 = vmax.f32 %v697, 0.0
      %v1493 = vmax.f32 %v701, 0.0
      %v1494 = vmax.f32 %v703, 0.0
      %v1495 = vmax.f32 %v707, 0.0
      %v1496 = vmax.f32 %v709, 0.0
      %v1497 = vmax.f32 %v713, 0.0
      %v1498 = vmax.f32 %v715, 0.0
      %v1499 = vmax.f32 %v719, 0.0
      %v1500 = vmax.f32 %v721, 0.0
      %v1501 = vmax.f32 %v725, 0.0
      %v1502 = vmax.f32 %v727, 0.0
      %v1503 = vmax.f32 %v731, 0.0
      %v1504 = vmax.f32 %v733, 0.0
      %v1505 = vmax.f32 %v737, 0.0
      %v1506 = vmax.f32 %v739, 0.0
      %v1507 = vmax.f32 %v743, 0.0
      %v1508 = vmax.f32 %v745, 0.0
      %v1509 = vmax.f32 %v749, 0.0
      %v1510 = vmax.f32 %v751, 0.0
      %v1511 = vmax.f32 %v755, 0.0
      %v1512 = vmax.f32 %v757, 0.0
      %v1513 = vmax.f32 %v761, 0.0
      %v1514 = vmax.f32 %v763, 0.0
      %v1515 = vmax.f32 %v767, 0.0
      %v1516 = vmax.f32 %v769, 0.0
      %v1517 = vmax.f32 %v950, 0.0
      %v1518 = vmax.f32 %v952, 0.0
      %v1519 = vmax.f32 %v956, 0.0
      %v1520 = vmax.f32 %v958, 0.0
      %v1521 = vmax.f32 %v962, 0.0
      %v1522 = vmax.f32 %v964, 0.0
      %v1523 = vmax.f32 %v968, 0.0
      %v1524 = vmax.f32 %v970, 0.0
      %v1525 = vmax.f32 %v974, 0.0
      %v1526 = vmax.f32 %v976, 0.0
      %v1527 = vmax.f32 %v980, 0.0
      %v1528 = vmax.f32 %v982, 0.0
      %v1529 = vmax.f32 %v986, 0.0
      %v1530 = vmax.f32 %v988, 0.0
      %v1531 = vmax.f32 %v992, 0.0
      %v1532 = vmax.f32 %v994, 0.0
      %v1533 = vmax.f32 %v998, 0.0
      %v1534 = vmax.f32 %v1000, 0.0
      %v1535 = vmax.f32 %v1004, 0.0
      %v1536 = vmax.f32 %v1006, 0.0
      %v1537 = vmax.f32 %v1010, 0.0
      %v1538 = vmax.f32 %v1012, 0.0
      %v1539 = vmax.f32 %v1016, 0.0
      %v1540 = vmax.f32 %v1018, 0.0
      %v1541 = vmax.f32 %v1022, 0.0
      %v1542 = vmax.f32 %v1024, 0.0
      %v1543 = vmax.f32 %v1028, 0.0
      %v1544 = vmax.f32 %v1030, 0.0
      %v1545 = vmax.f32 %v1034, 0.0
      %v1546 = vmax.f32 %v1036, 0.0
      %v1547 = vmax.f32 %v1040, 0.0
      %v1548 = vmax.f32 %v1042, 0.0
      %v1549 = vmax.f32 %v1046, 0.0
      %v1550 = vmax.f32 %v1048, 0.0
      %v1551 = vmax.f32 %v1052, 0.0
      %v1552 = vmax.f32 %v1054, 0.0
      %v1553 = vmax.f32 %v1058, 0.0
      %v1554 = vmax.f32 %v1060, 0.0
      %v1555 = vmax.f32 %v1064, 0.0
      %v1556 = vmax.f32 %v1066, 0.0
      %v1557 = vmax.f32 %v1070, 0.0
      %v1558 = vmax.f32 %v1072, 0.0
      %v1559 = vmax.f32 %v1076, 0.0
      %v1560 = vmax.f32 %v1078, 0.0
      %v1561 = vmax.f32 %v1082, 0.0
      %v1562 = vmax.f32 %v1084, 0.0
      %v1563 = vmax.f32 %v1088, 0.0
      %v1564 = vmax.f32 %v1090, 0.0
      %v1565 = vmax.f32 %v1094, 0.0
      %v1566 = vmax.f32 %v1096, 0.0
      %v1567 = vmax.f32 %v1100, 0.0
      %v1568 = vmax.f32 %v1102, 0.0
      %v1569 = vmax.f32 %v1106, 0.0
      %v1570 = vmax.f32 %v1108, 0.0
      %v1571 = vmax.f32 %v1112, 0.0
      %v1572 = vmax.f32 %v1114, 0.0
      %v1573 = vld [vmem:[%s7] sm:$0xff]
      %v1574 = vld [vmem:[%s7 + $0x8] sm:$0xff]
      %v1575 = vld [vmem:[%s7 + $0x10] sm:$0xff]
      %v1576 = vld [vmem:[%s7 + $0x18] sm:$0xff]
      %v1577 = vld [vmem:[%s7 + $0x20] sm:$0xff]
      %v1578 = vld [vmem:[%s7 + $0x28] sm:$0xff]
      %v1579 = vld [vmem:[%s7 + $0x30] sm:$0xff]
      %v1580 = vld [vmem:[%s7 + $0x38] sm:$0xff]
      %v1581 = vld [vmem:[%s7 + $0x40] sm:$0xff]
      %v1582 = vld [vmem:[%s7 + $0x48] sm:$0xff]
      %v1583 = vld [vmem:[%s7 + $0x50] sm:$0xff]
      %v1584 = vld [vmem:[%s7 + $0x58] sm:$0xff]
      %v1585 = vld [vmem:[%s7 + $0x60] sm:$0xff]
      %v1586 = vld [vmem:[%s7 + $0x68] sm:$0xff]
      %v1587 = vld [vmem:[%s7 + $0x70] sm:$0xff]
      %v1588 = vld [vmem:[%s7 + $0x78] sm:$0xff]
      %v1589 = vld [vmem:[%s7 + $0x80] sm:$0xff]
      %v1590 = vld [vmem:[%s7 + $0x88] sm:$0xff]
      %v1591 = vld [vmem:[%s7 + $0x90] sm:$0xff]
      %v1592 = vld [vmem:[%s7 + $0x98] sm:$0xff]
      %v1593 = vld [vmem:[%s7 + $0xa0] sm:$0xff]
      %v1594 = vld [vmem:[%s7 + $0xa8] sm:$0xff]
      %v1595 = vld [vmem:[%s7 + $0xb0] sm:$0xff]
      %v1596 = vld [vmem:[%s7 + $0xb8] sm:$0xff]
      %v1597 = vld [vmem:[%s7 + $0xc0] sm:$0xff]
      %v1598 = vld [vmem:[%s7 + $0xc8] sm:$0xff]
      %v1599 = vld [vmem:[%s7 + $0xd0] sm:$0xff]
      %v1600 = vld [vmem:[%s7 + $0xd8] sm:$0xff]
      %1602 = vset.pattern.permute.xlu0 0
      %1603 = vperm.xlu0 %1602, %v1573
      %v1604 = vpop.permute.xlu0 %1603
      %1607 = vset.pattern.permute.xlu0 0
      %1608 = vperm.xlu0 %1607, %v1574
      %v1609 = vpop.permute.xlu0 %1608
      %1612 = vset.pattern.permute.xlu0 0
      %1613 = vperm.xlu0 %1612, %v1575
      %v1614 = vpop.permute.xlu0 %1613
      %1617 = vset.pattern.permute.xlu0 0
      %1618 = vperm.xlu0 %1617, %v1576
      %v1619 = vpop.permute.xlu0 %1618
      %1622 = vset.pattern.permute.xlu0 0
      %1623 = vperm.xlu0 %1622, %v1577
      %v1624 = vpop.permute.xlu0 %1623
      %1627 = vset.pattern.permute.xlu0 0
      %1628 = vperm.xlu0 %1627, %v1578
      %v1629 = vpop.permute.xlu0 %1628
      %1632 = vset.pattern.permute.xlu0 0
      %1633 = vperm.xlu0 %1632, %v1579
      %v1634 = vpop.permute.xlu0 %1633
      %1637 = vset.pattern.permute.xlu0 0
      %1638 = vperm.xlu0 %1637, %v1580
      %v1639 = vpop.permute.xlu0 %1638
      %1642 = vset.pattern.permute.xlu0 0
      %1643 = vperm.xlu0 %1642, %v1581
      %v1644 = vpop.permute.xlu0 %1643
      %1647 = vset.pattern.permute.xlu0 0
      %1648 = vperm.xlu0 %1647, %v1582
      %v1649 = vpop.permute.xlu0 %1648
      %1652 = vset.pattern.permute.xlu0 0
      %1653 = vperm.xlu0 %1652, %v1583
      %v1654 = vpop.permute.xlu0 %1653
      %1657 = vset.pattern.permute.xlu0 0
      %1658 = vperm.xlu0 %1657, %v1584
      %v1659 = vpop.permute.xlu0 %1658
      %1662 = vset.pattern.permute.xlu0 0
      %1663 = vperm.xlu0 %1662, %v1585
      %v1664 = vpop.permute.xlu0 %1663
      %1667 = vset.pattern.permute.xlu0 0
      %1668 = vperm.xlu0 %1667, %v1586
      %v1669 = vpop.permute.xlu0 %1668
      %1672 = vset.pattern.permute.xlu0 0
      %1673 = vperm.xlu0 %1672, %v1587
      %v1674 = vpop.permute.xlu0 %1673
      %1677 = vset.pattern.permute.xlu0 0
      %1678 = vperm.xlu0 %1677, %v1588
      %v1679 = vpop.permute.xlu0 %1678
      %1682 = vset.pattern.permute.xlu0 0
      %1683 = vperm.xlu0 %1682, %v1589
      %v1684 = vpop.permute.xlu0 %1683
      %1687 = vset.pattern.permute.xlu0 0
      %1688 = vperm.xlu0 %1687, %v1590
      %v1689 = vpop.permute.xlu0 %1688
      %1692 = vset.pattern.permute.xlu0 0
      %1693 = vperm.xlu0 %1692, %v1591
      %v1694 = vpop.permute.xlu0 %1693
      %1697 = vset.pattern.permute.xlu0 0
      %1698 = vperm.xlu0 %1697, %v1592
      %v1699 = vpop.permute.xlu0 %1698
      %1702 = vset.pattern.permute.xlu0 0
      %1703 = vperm.xlu0 %1702, %v1593
      %v1704 = vpop.permute.xlu0 %1703
      %1707 = vset.pattern.permute.xlu0 0
      %1708 = vperm.xlu0 %1707, %v1594
      %v1709 = vpop.permute.xlu0 %1708
      %1712 = vset.pattern.permute.xlu0 0
      %1713 = vperm.xlu0 %1712, %v1595
      %v1714 = vpop.permute.xlu0 %1713
      %1717 = vset.pattern.permute.xlu0 0
      %1718 = vperm.xlu0 %1717, %v1596
      %v1719 = vpop.permute.xlu0 %1718
      %1722 = vset.pattern.permute.xlu0 0
      %1723 = vperm.xlu0 %1722, %v1597
      %v1724 = vpop.permute.xlu0 %1723
      %1727 = vset.pattern.permute.xlu0 0
      %1728 = vperm.xlu0 %1727, %v1598
      %v1729 = vpop.permute.xlu0 %1728
      %1732 = vset.pattern.permute.xlu0 0
      %1733 = vperm.xlu0 %1732, %v1599
      %v1734 = vpop.permute.xlu0 %1733
      %1737 = vset.pattern.permute.xlu0 0
      %1738 = vperm.xlu0 %1737, %v1600
      %v1739 = vpop.permute.xlu0 %1738
      %v1741 = vmul.f32 %v1517, %v1604
      %v1742 = vmul.f32 %v1518, %v1604
      %v1743 = vmul.f32 %v1519, %v1609
      %v1744 = vmul.f32 %v1520, %v1609
      %v1745 = vmul.f32 %v1521, %v1614
      %v1746 = vmul.f32 %v1522, %v1614
      %v1747 = vmul.f32 %v1523, %v1619
      %v1748 = vmul.f32 %v1524, %v1619
      %v1749 = vmul.f32 %v1525, %v1624
      %v1750 = vmul.f32 %v1526, %v1624
      %v1751 = vmul.f32 %v1527, %v1629
      %v1752 = vmul.f32 %v1528, %v1629
      %v1753 = vmul.f32 %v1529, %v1634
      %v1754 = vmul.f32 %v1530, %v1634
      %v1755 = vmul.f32 %v1531, %v1639
      %v1756 = vmul.f32 %v1532, %v1639
      %v1757 = vmul.f32 %v1533, %v1644
      %v1758 = vmul.f32 %v1534, %v1644
      %v1759 = vmul.f32 %v1535, %v1649
      %v1760 = vmul.f32 %v1536, %v1649
      %v1761 = vmul.f32 %v1537, %v1654
      %v1762 = vmul.f32 %v1538, %v1654
      %v1763 = vmul.f32 %v1539, %v1659
      %v1764 = vmul.f32 %v1540, %v1659
      %v1765 = vmul.f32 %v1541, %v1664
      %v1766 = vmul.f32 %v1542, %v1664
      %v1767 = vmul.f32 %v1543, %v1669
      %v1768 = vmul.f32 %v1544, %v1669
      %v1769 = vmul.f32 %v1545, %v1674
      %v1770 = vmul.f32 %v1546, %v1674
      %v1771 = vmul.f32 %v1547, %v1679
      %v1772 = vmul.f32 %v1548, %v1679
      %v1773 = vmul.f32 %v1549, %v1684
      %v1774 = vmul.f32 %v1550, %v1684
      %v1775 = vmul.f32 %v1551, %v1689
      %v1776 = vmul.f32 %v1552, %v1689
      %v1777 = vmul.f32 %v1553, %v1694
      %v1778 = vmul.f32 %v1554, %v1694
      %v1779 = vmul.f32 %v1555, %v1699
      %v1780 = vmul.f32 %v1556, %v1699
      %v1781 = vmul.f32 %v1557, %v1704
      %v1782 = vmul.f32 %v1558, %v1704
      %v1783 = vmul.f32 %v1559, %v1709
      %v1784 = vmul.f32 %v1560, %v1709
      %v1785 = vmul.f32 %v1561, %v1714
      %v1786 = vmul.f32 %v1562, %v1714
      %v1787 = vmul.f32 %v1563, %v1719
      %v1788 = vmul.f32 %v1564, %v1719
      %v1789 = vmul.f32 %v1565, %v1724
      %v1790 = vmul.f32 %v1566, %v1724
      %v1791 = vmul.f32 %v1567, %v1729
      %v1792 = vmul.f32 %v1568, %v1729
      %v1793 = vmul.f32 %v1569, %v1734
      %v1794 = vmul.f32 %v1570, %v1734
      %v1795 = vmul.f32 %v1571, %v1739
      %v1796 = vmul.f32 %v1572, %v1739
      %v1797 = vmax.f32 %v1295, 0.0
      %v1798 = vmax.f32 %v1297, 0.0
      %v1799 = vmax.f32 %v1301, 0.0
      %v1800 = vmax.f32 %v1303, 0.0
      %v1801 = vmax.f32 %v1307, 0.0
      %v1802 = vmax.f32 %v1309, 0.0
      %v1803 = vmax.f32 %v1313, 0.0
      %v1804 = vmax.f32 %v1315, 0.0
      %v1805 = vmax.f32 %v1319, 0.0
      %v1806 = vmax.f32 %v1321, 0.0
      %v1807 = vmax.f32 %v1325, 0.0
      %v1808 = vmax.f32 %v1327, 0.0
      %v1809 = vmax.f32 %v1331, 0.0
      %v1810 = vmax.f32 %v1333, 0.0
      %v1811 = vmax.f32 %v1337, 0.0
      %v1812 = vmax.f32 %v1339, 0.0
      %v1813 = vmax.f32 %v1343, 0.0
      %v1814 = vmax.f32 %v1345, 0.0
      %v1815 = vmax.f32 %v1349, 0.0
      %v1816 = vmax.f32 %v1351, 0.0
      %v1817 = vmax.f32 %v1355, 0.0
      %v1818 = vmax.f32 %v1357, 0.0
      %v1819 = vmax.f32 %v1361, 0.0
      %v1820 = vmax.f32 %v1363, 0.0
      %v1821 = vmax.f32 %v1367, 0.0
      %v1822 = vmax.f32 %v1369, 0.0
      %v1823 = vmax.f32 %v1373, 0.0
      %v1824 = vmax.f32 %v1375, 0.0
      %v1825 = vmax.f32 %v1379, 0.0
      %v1826 = vmax.f32 %v1381, 0.0
      %v1827 = vmax.f32 %v1385, 0.0
      %v1828 = vmax.f32 %v1387, 0.0
      %v1829 = vmax.f32 %v1391, 0.0
      %v1830 = vmax.f32 %v1393, 0.0
      %v1831 = vmax.f32 %v1397, 0.0
      %v1832 = vmax.f32 %v1399, 0.0
      %v1833 = vmax.f32 %v1403, 0.0
      %v1834 = vmax.f32 %v1405, 0.0
      %v1835 = vmax.f32 %v1409, 0.0
      %v1836 = vmax.f32 %v1411, 0.0
      %v1837 = vmax.f32 %v1415, 0.0
      %v1838 = vmax.f32 %v1417, 0.0
      %v1839 = vmax.f32 %v1421, 0.0
      %v1840 = vmax.f32 %v1423, 0.0
      %v1841 = vmax.f32 %v1427, 0.0
      %v1842 = vmax.f32 %v1429, 0.0
      %v1843 = vmax.f32 %v1433, 0.0
      %v1844 = vmax.f32 %v1435, 0.0
      %v1845 = vmax.f32 %v1439, 0.0
      %v1846 = vmax.f32 %v1441, 0.0
      %v1847 = vmax.f32 %v1445, 0.0
      %v1848 = vmax.f32 %v1447, 0.0
      %v1849 = vmax.f32 %v1451, 0.0
      %v1850 = vmax.f32 %v1453, 0.0
      %v1851 = vmax.f32 %v1457, 0.0
      %v1852 = vmax.f32 %v1459, 0.0
      %v1853 = vld [vmem:[%s8] sm:$0xff]
      %v1854 = vld [vmem:[%s8 + $0x8] sm:$0xff]
      %v1855 = vld [vmem:[%s8 + $0x10] sm:$0xff]
      %v1856 = vld [vmem:[%s8 + $0x18] sm:$0xff]
      %v1857 = vld [vmem:[%s8 + $0x20] sm:$0xff]
      %v1858 = vld [vmem:[%s8 + $0x28] sm:$0xff]
      %v1859 = vld [vmem:[%s8 + $0x30] sm:$0xff]
      %v1860 = vld [vmem:[%s8 + $0x38] sm:$0xff]
      %v1861 = vld [vmem:[%s8 + $0x40] sm:$0xff]
      %v1862 = vld [vmem:[%s8 + $0x48] sm:$0xff]
      %v1863 = vld [vmem:[%s8 + $0x50] sm:$0xff]
      %v1864 = vld [vmem:[%s8 + $0x58] sm:$0xff]
      %v1865 = vld [vmem:[%s8 + $0x60] sm:$0xff]
      %v1866 = vld [vmem:[%s8 + $0x68] sm:$0xff]
      %v1867 = vld [vmem:[%s8 + $0x70] sm:$0xff]
      %v1868 = vld [vmem:[%s8 + $0x78] sm:$0xff]
      %v1869 = vld [vmem:[%s8 + $0x80] sm:$0xff]
      %v1870 = vld [vmem:[%s8 + $0x88] sm:$0xff]
      %v1871 = vld [vmem:[%s8 + $0x90] sm:$0xff]
      %v1872 = vld [vmem:[%s8 + $0x98] sm:$0xff]
      %v1873 = vld [vmem:[%s8 + $0xa0] sm:$0xff]
      %v1874 = vld [vmem:[%s8 + $0xa8] sm:$0xff]
      %v1875 = vld [vmem:[%s8 + $0xb0] sm:$0xff]
      %v1876 = vld [vmem:[%s8 + $0xb8] sm:$0xff]
      %v1877 = vld [vmem:[%s8 + $0xc0] sm:$0xff]
      %v1878 = vld [vmem:[%s8 + $0xc8] sm:$0xff]
      %v1879 = vld [vmem:[%s8 + $0xd0] sm:$0xff]
      %v1880 = vld [vmem:[%s8 + $0xd8] sm:$0xff]
      %1882 = vset.pattern.permute.xlu0 0
      %1883 = vperm.xlu0 %1882, %v1853
      %v1884 = vpop.permute.xlu0 %1883
      %1887 = vset.pattern.permute.xlu0 0
      %1888 = vperm.xlu0 %1887, %v1854
      %v1889 = vpop.permute.xlu0 %1888
      %1892 = vset.pattern.permute.xlu0 0
      %1893 = vperm.xlu0 %1892, %v1855
      %v1894 = vpop.permute.xlu0 %1893
      %1897 = vset.pattern.permute.xlu0 0
      %1898 = vperm.xlu0 %1897, %v1856
      %v1899 = vpop.permute.xlu0 %1898
      %1902 = vset.pattern.permute.xlu0 0
      %1903 = vperm.xlu0 %1902, %v1857
      %v1904 = vpop.permute.xlu0 %1903
      %1907 = vset.pattern.permute.xlu0 0
      %1908 = vperm.xlu0 %1907, %v1858
      %v1909 = vpop.permute.xlu0 %1908
      %1912 = vset.pattern.permute.xlu0 0
      %1913 = vperm.xlu0 %1912, %v1859
      %v1914 = vpop.permute.xlu0 %1913
      %1917 = vset.pattern.permute.xlu0 0
      %1918 = vperm.xlu0 %1917, %v1860
      %v1919 = vpop.permute.xlu0 %1918
      %1922 = vset.pattern.permute.xlu0 0
      %1923 = vperm.xlu0 %1922, %v1861
      %v1924 = vpop.permute.xlu0 %1923
      %1927 = vset.pattern.permute.xlu0 0
      %1928 = vperm.xlu0 %1927, %v1862
      %v1929 = vpop.permute.xlu0 %1928
      %1932 = vset.pattern.permute.xlu0 0
      %1933 = vperm.xlu0 %1932, %v1863
      %v1934 = vpop.permute.xlu0 %1933
      %1937 = vset.pattern.permute.xlu0 0
      %1938 = vperm.xlu0 %1937, %v1864
      %v1939 = vpop.permute.xlu0 %1938
      %1942 = vset.pattern.permute.xlu0 0
      %1943 = vperm.xlu0 %1942, %v1865
      %v1944 = vpop.permute.xlu0 %1943
      %1947 = vset.pattern.permute.xlu0 0
      %1948 = vperm.xlu0 %1947, %v1866
      %v1949 = vpop.permute.xlu0 %1948
      %1952 = vset.pattern.permute.xlu0 0
      %1953 = vperm.xlu0 %1952, %v1867
      %v1954 = vpop.permute.xlu0 %1953
      %1957 = vset.pattern.permute.xlu0 0
      %1958 = vperm.xlu0 %1957, %v1868
      %v1959 = vpop.permute.xlu0 %1958
      %1962 = vset.pattern.permute.xlu0 0
      %1963 = vperm.xlu0 %1962, %v1869
      %v1964 = vpop.permute.xlu0 %1963
      %1967 = vset.pattern.permute.xlu0 0
      %1968 = vperm.xlu0 %1967, %v1870
      %v1969 = vpop.permute.xlu0 %1968
      %1972 = vset.pattern.permute.xlu0 0
      %1973 = vperm.xlu0 %1972, %v1871
      %v1974 = vpop.permute.xlu0 %1973
      %1977 = vset.pattern.permute.xlu0 0
      %1978 = vperm.xlu0 %1977, %v1872
      %v1979 = vpop.permute.xlu0 %1978
      %1982 = vset.pattern.permute.xlu0 0
      %1983 = vperm.xlu0 %1982, %v1873
      %v1984 = vpop.permute.xlu0 %1983
      %1987 = vset.pattern.permute.xlu0 0
      %1988 = vperm.xlu0 %1987, %v1874
      %v1989 = vpop.permute.xlu0 %1988
      %1992 = vset.pattern.permute.xlu0 0
      %1993 = vperm.xlu0 %1992, %v1875
      %v1994 = vpop.permute.xlu0 %1993
      %1997 = vset.pattern.permute.xlu0 0
      %1998 = vperm.xlu0 %1997, %v1876
      %v1999 = vpop.permute.xlu0 %1998
      %2002 = vset.pattern.permute.xlu0 0
      %2003 = vperm.xlu0 %2002, %v1877
      %v2004 = vpop.permute.xlu0 %2003
      %2007 = vset.pattern.permute.xlu0 0
      %2008 = vperm.xlu0 %2007, %v1878
      %v2009 = vpop.permute.xlu0 %2008
      %2012 = vset.pattern.permute.xlu0 0
      %2013 = vperm.xlu0 %2012, %v1879
      %v2014 = vpop.permute.xlu0 %2013
      %2017 = vset.pattern.permute.xlu0 0
      %2018 = vperm.xlu0 %2017, %v1880
      %v2019 = vpop.permute.xlu0 %2018
      %v2021 = vmul.f32 %v1797, %v1884
      %v2022 = vmul.f32 %v1798, %v1884
      %v2023 = vmul.f32 %v1799, %v1889
      %v2024 = vmul.f32 %v1800, %v1889
      %v2025 = vmul.f32 %v1801, %v1894
      %v2026 = vmul.f32 %v1802, %v1894
      %v2027 = vmul.f32 %v1803, %v1899
      %v2028 = vmul.f32 %v1804, %v1899
      %v2029 = vmul.f32 %v1805, %v1904
      %v2030 = vmul.f32 %v1806, %v1904
      %v2031 = vmul.f32 %v1807, %v1909
      %v2032 = vmul.f32 %v1808, %v1909
      %v2033 = vmul.f32 %v1809, %v1914
      %v2034 = vmul.f32 %v1810, %v1914
      %v2035 = vmul.f32 %v1811, %v1919
      %v2036 = vmul.f32 %v1812, %v1919
      %v2037 = vmul.f32 %v1813, %v1924
      %v2038 = vmul.f32 %v1814, %v1924
      %v2039 = vmul.f32 %v1815, %v1929
      %v2040 = vmul.f32 %v1816, %v1929
      %v2041 = vmul.f32 %v1817, %v1934
      %v2042 = vmul.f32 %v1818, %v1934
      %v2043 = vmul.f32 %v1819, %v1939
      %v2044 = vmul.f32 %v1820, %v1939
      %v2045 = vmul.f32 %v1821, %v1944
      %v2046 = vmul.f32 %v1822, %v1944
      %v2047 = vmul.f32 %v1823, %v1949
      %v2048 = vmul.f32 %v1824, %v1949
      %v2049 = vmul.f32 %v1825, %v1954
      %v2050 = vmul.f32 %v1826, %v1954
      %v2051 = vmul.f32 %v1827, %v1959
      %v2052 = vmul.f32 %v1828, %v1959
      %v2053 = vmul.f32 %v1829, %v1964
      %v2054 = vmul.f32 %v1830, %v1964
      %v2055 = vmul.f32 %v1831, %v1969
      %v2056 = vmul.f32 %v1832, %v1969
      %v2057 = vmul.f32 %v1833, %v1974
      %v2058 = vmul.f32 %v1834, %v1974
      %v2059 = vmul.f32 %v1835, %v1979
      %v2060 = vmul.f32 %v1836, %v1979
      %v2061 = vmul.f32 %v1837, %v1984
      %v2062 = vmul.f32 %v1838, %v1984
      %v2063 = vmul.f32 %v1839, %v1989
      %v2064 = vmul.f32 %v1840, %v1989
      %v2065 = vmul.f32 %v1841, %v1994
      %v2066 = vmul.f32 %v1842, %v1994
      %v2067 = vmul.f32 %v1843, %v1999
      %v2068 = vmul.f32 %v1844, %v1999
      %v2069 = vmul.f32 %v1845, %v2004
      %v2070 = vmul.f32 %v1846, %v2004
      %v2071 = vmul.f32 %v1847, %v2009
      %v2072 = vmul.f32 %v1848, %v2009
      %v2073 = vmul.f32 %v1849, %v2014
      %v2074 = vmul.f32 %v1850, %v2014
      %v2075 = vmul.f32 %v1851, %v2019
      %v2076 = vmul.f32 %v1852, %v2019
      %v2077 = vld [vmem:[%s5] sm:$0xff]
      %v2078 = vld [vmem:[%s5 + $0x8] sm:$0xff]
      %v2079 = vld [vmem:[%s5 + $0x10] sm:$0xff]
      %v2080 = vld [vmem:[%s5 + $0x18] sm:$0xff]
      %v2081 = vld [vmem:[%s5 + $0x20] sm:$0xff]
      %v2082 = vld [vmem:[%s5 + $0x28] sm:$0xff]
      %v2083 = vld [vmem:[%s5 + $0x30] sm:$0xff]
      %v2084 = vld [vmem:[%s5 + $0x38] sm:$0xff]
      %v2085 = vld [vmem:[%s5 + $0x40] sm:$0xff]
      %v2086 = vld [vmem:[%s5 + $0x48] sm:$0xff]
      %v2087 = vld [vmem:[%s5 + $0x50] sm:$0xff]
      %v2088 = vld [vmem:[%s5 + $0x58] sm:$0xff]
      %v2089 = vld [vmem:[%s5 + $0x60] sm:$0xff]
      %v2090 = vld [vmem:[%s5 + $0x68] sm:$0xff]
      %v2091 = vld [vmem:[%s5 + $0x70] sm:$0xff]
      %v2092 = vld [vmem:[%s5 + $0x78] sm:$0xff]
      %v2093 = vld [vmem:[%s5 + $0x80] sm:$0xff]
      %v2094 = vld [vmem:[%s5 + $0x88] sm:$0xff]
      %v2095 = vld [vmem:[%s5 + $0x90] sm:$0xff]
      %v2096 = vld [vmem:[%s5 + $0x98] sm:$0xff]
      %v2097 = vld [vmem:[%s5 + $0xa0] sm:$0xff]
      %v2098 = vld [vmem:[%s5 + $0xa8] sm:$0xff]
      %v2099 = vld [vmem:[%s5 + $0xb0] sm:$0xff]
      %v2100 = vld [vmem:[%s5 + $0xb8] sm:$0xff]
      %v2101 = vld [vmem:[%s5 + $0xc0] sm:$0xff]
      %v2102 = vld [vmem:[%s5 + $0xc8] sm:$0xff]
      %v2103 = vld [vmem:[%s5 + $0xd0] sm:$0xff]
      %v2104 = vld [vmem:[%s5 + $0xd8] sm:$0xff]
      %v2105 = vld [vmem:[%s5 + $0xe0] sm:$0xff]
      %v2106 = vld [vmem:[%s5 + $0xe8] sm:$0xff]
      %v2107 = vld [vmem:[%s5 + $0xf0] sm:$0xff]
      %v2108 = vld [vmem:[%s5 + $0xf8] sm:$0xff]
      %v2109 = vld [vmem:[%s5 + $0x100] sm:$0xff]
      %v2110 = vld [vmem:[%s5 + $0x108] sm:$0xff]
      %v2111 = vld [vmem:[%s5 + $0x110] sm:$0xff]
      %v2112 = vld [vmem:[%s5 + $0x118] sm:$0xff]
      %v2113 = vld [vmem:[%s5 + $0x120] sm:$0xff]
      %v2114 = vld [vmem:[%s5 + $0x128] sm:$0xff]
      %v2115 = vld [vmem:[%s5 + $0x130] sm:$0xff]
      %v2116 = vld [vmem:[%s5 + $0x138] sm:$0xff]
      %v2117 = vld [vmem:[%s5 + $0x140] sm:$0xff]
      %v2118 = vld [vmem:[%s5 + $0x148] sm:$0xff]
      %v2119 = vld [vmem:[%s5 + $0x150] sm:$0xff]
      %v2120 = vld [vmem:[%s5 + $0x158] sm:$0xff]
      %v2121 = vld [vmem:[%s5 + $0x160] sm:$0xff]
      %v2122 = vld [vmem:[%s5 + $0x168] sm:$0xff]
      %v2123 = vld [vmem:[%s5 + $0x170] sm:$0xff]
      %v2124 = vld [vmem:[%s5 + $0x178] sm:$0xff]
      %v2125 = vld [vmem:[%s5 + $0x180] sm:$0xff]
      %v2126 = vld [vmem:[%s5 + $0x188] sm:$0xff]
      %v2127 = vld [vmem:[%s5 + $0x190] sm:$0xff]
      %v2128 = vld [vmem:[%s5 + $0x198] sm:$0xff]
      %v2129 = vld [vmem:[%s5 + $0x1a0] sm:$0xff]
      %v2130 = vld [vmem:[%s5 + $0x1a8] sm:$0xff]
      %v2131 = vld [vmem:[%s5 + $0x1b0] sm:$0xff]
      %v2132 = vld [vmem:[%s5 + $0x1b8] sm:$0xff]
      %s2133 = scalar_lea.vmem %s5, 448
      %v2134 = vld [vmem:[%s2133] sm:$0xff]
      %v2135 = vld [vmem:[%s2133 + $0x8] sm:$0xff]
      %v2136 = vld [vmem:[%s2133 + $0x10] sm:$0xff]
      %v2137 = vld [vmem:[%s2133 + $0x18] sm:$0xff]
      %v2138 = vld [vmem:[%s2133 + $0x20] sm:$0xff]
      %v2139 = vld [vmem:[%s2133 + $0x28] sm:$0xff]
      %v2140 = vld [vmem:[%s2133 + $0x30] sm:$0xff]
      %v2141 = vld [vmem:[%s2133 + $0x38] sm:$0xff]
      %v2142 = vld [vmem:[%s2133 + $0x40] sm:$0xff]
      %v2143 = vld [vmem:[%s2133 + $0x48] sm:$0xff]
      %v2144 = vld [vmem:[%s2133 + $0x50] sm:$0xff]
      %v2145 = vld [vmem:[%s2133 + $0x58] sm:$0xff]
      %v2146 = vld [vmem:[%s2133 + $0x60] sm:$0xff]
      %v2147 = vld [vmem:[%s2133 + $0x68] sm:$0xff]
      %v2148 = vld [vmem:[%s2133 + $0x70] sm:$0xff]
      %v2149 = vld [vmem:[%s2133 + $0x78] sm:$0xff]
      %v2150 = vld [vmem:[%s2133 + $0x80] sm:$0xff]
      %v2151 = vld [vmem:[%s2133 + $0x88] sm:$0xff]
      %v2152 = vld [vmem:[%s2133 + $0x90] sm:$0xff]
      %v2153 = vld [vmem:[%s2133 + $0x98] sm:$0xff]
      %v2154 = vld [vmem:[%s2133 + $0xa0] sm:$0xff]
      %v2155 = vld [vmem:[%s2133 + $0xa8] sm:$0xff]
      %v2156 = vld [vmem:[%s2133 + $0xb0] sm:$0xff]
      %v2157 = vld [vmem:[%s2133 + $0xb8] sm:$0xff]
      %v2158 = vld [vmem:[%s2133 + $0xc0] sm:$0xff]
      %v2159 = vld [vmem:[%s2133 + $0xc8] sm:$0xff]
      %v2160 = vld [vmem:[%s2133 + $0xd0] sm:$0xff]
      %v2161 = vld [vmem:[%s2133 + $0xd8] sm:$0xff]
      %v2162 = vld [vmem:[%s2133 + $0xe0] sm:$0xff]
      %v2163 = vld [vmem:[%s2133 + $0xe8] sm:$0xff]
      %v2164 = vld [vmem:[%s2133 + $0xf0] sm:$0xff]
      %v2165 = vld [vmem:[%s2133 + $0xf8] sm:$0xff]
      %v2166 = vld [vmem:[%s2133 + $0x100] sm:$0xff]
      %v2167 = vld [vmem:[%s2133 + $0x108] sm:$0xff]
      %v2168 = vld [vmem:[%s2133 + $0x110] sm:$0xff]
      %v2169 = vld [vmem:[%s2133 + $0x118] sm:$0xff]
      %v2170 = vld [vmem:[%s2133 + $0x120] sm:$0xff]
      %v2171 = vld [vmem:[%s2133 + $0x128] sm:$0xff]
      %v2172 = vld [vmem:[%s2133 + $0x130] sm:$0xff]
      %v2173 = vld [vmem:[%s2133 + $0x138] sm:$0xff]
      %v2174 = vld [vmem:[%s2133 + $0x140] sm:$0xff]
      %v2175 = vld [vmem:[%s2133 + $0x148] sm:$0xff]
      %v2176 = vld [vmem:[%s2133 + $0x150] sm:$0xff]
      %v2177 = vld [vmem:[%s2133 + $0x158] sm:$0xff]
      %v2178 = vld [vmem:[%s2133 + $0x160] sm:$0xff]
      %v2179 = vld [vmem:[%s2133 + $0x168] sm:$0xff]
      %v2180 = vld [vmem:[%s2133 + $0x170] sm:$0xff]
      %v2181 = vld [vmem:[%s2133 + $0x178] sm:$0xff]
      %v2182 = vld [vmem:[%s2133 + $0x180] sm:$0xff]
      %v2183 = vld [vmem:[%s2133 + $0x188] sm:$0xff]
      %v2184 = vld [vmem:[%s2133 + $0x190] sm:$0xff]
      %v2185 = vld [vmem:[%s2133 + $0x198] sm:$0xff]
      %v2186 = vld [vmem:[%s2133 + $0x1a0] sm:$0xff]
      %v2187 = vld [vmem:[%s2133 + $0x1a8] sm:$0xff]
      %v2188 = vld [vmem:[%s2133 + $0x1b0] sm:$0xff]
      %v2189 = vld [vmem:[%s2133 + $0x1b8] sm:$0xff]
      %vm2190 = vcmask 785408
      %v2192 = vsel %vm2190, %v1462, 0
      %v2195 = vsel %vm2190, %v1464, 0
      %v2198 = vsel %vm2190, %v1466, 0
      %v2201 = vsel %vm2190, %v1468, 0
      %v2204 = vsel %vm2190, %v1470, 0
      %v2207 = vsel %vm2190, %v1472, 0
      %v2210 = vsel %vm2190, %v1474, 0
      %v2213 = vsel %vm2190, %v1476, 0
      %v2216 = vsel %vm2190, %v1478, 0
      %v2219 = vsel %vm2190, %v1480, 0
      %v2222 = vsel %vm2190, %v1482, 0
      %v2225 = vsel %vm2190, %v1484, 0
      %v2228 = vsel %vm2190, %v1486, 0
      %v2231 = vsel %vm2190, %v1488, 0
      %v2234 = vsel %vm2190, %v1490, 0
      %v2237 = vsel %vm2190, %v1492, 0
      %v2240 = vsel %vm2190, %v1494, 0
      %v2243 = vsel %vm2190, %v1496, 0
      %v2246 = vsel %vm2190, %v1498, 0
      %v2249 = vsel %vm2190, %v1500, 0
      %v2252 = vsel %vm2190, %v1502, 0
      %v2255 = vsel %vm2190, %v1504, 0
      %v2258 = vsel %vm2190, %v1506, 0
      %v2261 = vsel %vm2190, %v1508, 0
      %v2264 = vsel %vm2190, %v1510, 0
      %v2267 = vsel %vm2190, %v1512, 0
      %v2270 = vsel %vm2190, %v1514, 0
      %v2273 = vsel %vm2190, %v1516, 0
      %2275 = vmatprep.subr.mxu0 %v2165
      %2276 = vmatpush1.msra.mxu0 %v2164
      %2277 = vmatprep.subr.mxu0 %v2163
      %2278 = vmatpush1.msra.mxu0 %v2162
      %2279 = vmatprep.subr.mxu0 %v2161
      %2280 = vmatpush1.msra.mxu0 %v2160
      %2281 = vmatprep.subr.mxu0 %v2159
      %2282 = vmatpush1.msra.mxu0 %v2158
      %2283 = vmatprep.subr.mxu0 %v2157
      %2284 = vmatpush1.msra.mxu0 %v2156
      %2285 = vmatprep.subr.mxu0 %v2155
      %2286 = vmatpush1.msra.mxu0 %v2154
      %2287 = vmatprep.subr.mxu0 %v2153
      %2288 = vmatpush1.msra.mxu0 %v2152
      %2289 = vmatprep.subr.mxu0 %v2151
      %2290 = vmatpush1.msra.mxu0 %v2150
      %2291 = vmatprep.subr.mxu0 %v2149
      %2292 = vmatpush1.msra.mxu0 %v2148
      %2293 = vmatprep.subr.mxu0 %v2147
      %2294 = vmatpush1.msra.mxu0 %v2146
      %2295 = vmatprep.subr.mxu0 %v2145
      %2296 = vmatpush1.msra.mxu0 %v2144
      %2297 = vmatprep.subr.mxu0 %v2143
      %2298 = vmatpush1.msra.mxu0 %v2142
      %2299 = vmatprep.subr.mxu0 %v2141
      %2300 = vmatpush1.msra.mxu0 %v2140
      %2301 = vmatprep.subr.mxu0 %v2139
      %2302 = vmatpush1.msra.mxu0 %v2138
      %2303 = vmatprep.subr.mxu0 %v2137
      %2304 = vmatpush1.msra.mxu0 %v2136
      %2305 = vmatprep.subr.mxu0 %v2135
      %2306 = vmatpush1.msra.mxu0 %v2134
      %2307 = vmatprep.subr.mxu0 0.0
      %2308 = vmatpush2.msra.mxu0 0.0
      %2309 = vmatprep.subr.mxu0 0.0
      %2310 = vmatpush2.msra.mxu0 0.0
      %2311 = vmatprep.subr.mxu0 0.0
      %2312 = vmatpush2.msra.mxu0 0.0
      %2313 = vmatprep.subr.mxu0 0.0
      %2314 = vmatpush2.msra.mxu0 0.0
      %2315 = vmatprep.subr.mxu0 %v2189
      %2316 = vmatpush2.msra.mxu0 %v2188
      %2317 = vmatprep.subr.mxu0 %v2187
      %2318 = vmatpush2.msra.mxu0 %v2186
      %2319 = vmatprep.subr.mxu0 %v2185
      %2320 = vmatpush2.msra.mxu0 %v2184
      %2321 = vmatprep.subr.mxu0 %v2183
      %2322 = vmatpush2.msra.mxu0 %v2182
      %2323 = vmatprep.subr.mxu0 %v2181
      %2324 = vmatpush2.msra.mxu0 %v2180
      %2325 = vmatprep.subr.mxu0 %v2179
      %2326 = vmatpush2.msra.mxu0 %v2178
      %2327 = vmatprep.subr.mxu0 %v2177
      %2328 = vmatpush2.msra.mxu0 %v2176
      %2329 = vmatprep.subr.mxu0 %v2175
      %2330 = vmatpush2.msra.mxu0 %v2174
      %2331 = vmatprep.subr.mxu0 %v2173
      %2332 = vmatpush2.msra.mxu0 %v2172
      %2333 = vmatprep.subr.mxu0 %v2171
      %2334 = vmatpush2.msra.mxu0 %v2170
      %2335 = vmatprep.subr.mxu0 %v2169
      %2336 = vmatpush2.msra.mxu0 %v2168
      %2337 = vmatprep.subr.mxu0 %v2167
      %2338 = vmatpush2.msra.mxu0 %v2166
      %2339 = vmatprep.mubr.f32.mxu0 %v2192
      %2340 = vmatmul.mubr.f32.gmra.mxu0 %v1461
      %v2341 = vpop.f32.mrf.mxu0
      %v2342 = vadd.f32 0.0, %v2341
      %v2343 = vpop.f32.mrf.mxu0
      %v2344 = vadd.f32 0.0, %v2343
      %2345 = vmatprep.mubr.f32.mxu0 %v2195
      %2346 = vmatmul.mubr.f32.gmra.mxu0 %v1463
      %v2347 = vpop.f32.mrf.mxu0
      %v2348 = vadd.f32 0.0, %v2347
      %v2349 = vpop.f32.mrf.mxu0
      %v2350 = vadd.f32 0.0, %v2349
      %2351 = vmatprep.mubr.f32.mxu0 %v2198
      %2352 = vmatmul.mubr.f32.gmra.mxu0 %v1465
      %v2353 = vpop.f32.mrf.mxu0
      %v2354 = vadd.f32 0.0, %v2353
      %v2355 = vpop.f32.mrf.mxu0
      %v2356 = vadd.f32 0.0, %v2355
      %2357 = vmatprep.mubr.f32.mxu0 %v2201
      %2358 = vmatmul.mubr.f32.gmra.mxu0 %v1467
      %v2359 = vpop.f32.mrf.mxu0
      %v2360 = vadd.f32 0.0, %v2359
      %v2361 = vpop.f32.mrf.mxu0
      %v2362 = vadd.f32 0.0, %v2361
      %2363 = vmatprep.mubr.f32.mxu0 %v2204
      %2364 = vmatmul.mubr.f32.gmra.mxu0 %v1469
      %v2365 = vpop.f32.mrf.mxu0
      %v2366 = vadd.f32 0.0, %v2365
      %v2367 = vpop.f32.mrf.mxu0
      %v2368 = vadd.f32 0.0, %v2367
      %2369 = vmatprep.mubr.f32.mxu0 %v2207
      %2370 = vmatmul.mubr.f32.gmra.mxu0 %v1471
      %v2371 = vpop.f32.mrf.mxu0
      %v2372 = vadd.f32 0.0, %v2371
      %v2373 = vpop.f32.mrf.mxu0
      %v2374 = vadd.f32 0.0, %v2373
      %2375 = vmatprep.mubr.f32.mxu0 %v2210
      %2376 = vmatmul.mubr.f32.gmra.mxu0 %v1473
      %v2377 = vpop.f32.mrf.mxu0
      %v2378 = vadd.f32 0.0, %v2377
      %v2379 = vpop.f32.mrf.mxu0
      %v2380 = vadd.f32 0.0, %v2379
      %2381 = vmatprep.mubr.f32.mxu0 %v2213
      %2382 = vmatmul.mubr.f32.gmra.mxu0 %v1475
      %v2383 = vpop.f32.mrf.mxu0
      %v2384 = vadd.f32 0.0, %v2383
      %v2385 = vpop.f32.mrf.mxu0
      %v2386 = vadd.f32 0.0, %v2385
      %2387 = vmatprep.mubr.f32.mxu0 %v2216
      %2388 = vmatmul.mubr.f32.gmra.mxu0 %v1477
      %v2389 = vpop.f32.mrf.mxu0
      %v2390 = vadd.f32 0.0, %v2389
      %v2391 = vpop.f32.mrf.mxu0
      %v2392 = vadd.f32 0.0, %v2391
      %2393 = vmatprep.mubr.f32.mxu0 %v2219
      %2394 = vmatmul.mubr.f32.gmra.mxu0 %v1479
      %v2395 = vpop.f32.mrf.mxu0
      %v2396 = vadd.f32 0.0, %v2395
      %v2397 = vpop.f32.mrf.mxu0
      %v2398 = vadd.f32 0.0, %v2397
      %2399 = vmatprep.mubr.f32.mxu0 %v2222
      %2400 = vmatmul.mubr.f32.gmra.mxu0 %v1481
      %v2401 = vpop.f32.mrf.mxu0
      %v2402 = vadd.f32 0.0, %v2401
      %v2403 = vpop.f32.mrf.mxu0
      %v2404 = vadd.f32 0.0, %v2403
      %2405 = vmatprep.mubr.f32.mxu0 %v2225
      %2406 = vmatmul.mubr.f32.gmra.mxu0 %v1483
      %v2407 = vpop.f32.mrf.mxu0
      %v2408 = vadd.f32 0.0, %v2407
      %v2409 = vpop.f32.mrf.mxu0
      %v2410 = vadd.f32 0.0, %v2409
      %2411 = vmatprep.mubr.f32.mxu0 %v2228
      %2412 = vmatmul.mubr.f32.gmra.mxu0 %v1485
      %v2413 = vpop.f32.mrf.mxu0
      %v2414 = vadd.f32 0.0, %v2413
      %v2415 = vpop.f32.mrf.mxu0
      %v2416 = vadd.f32 0.0, %v2415
      %2417 = vmatprep.mubr.f32.mxu0 %v2231
      %2418 = vmatmul.mubr.f32.gmra.mxu0 %v1487
      %v2419 = vpop.f32.mrf.mxu0
      %v2420 = vadd.f32 0.0, %v2419
      %v2421 = vpop.f32.mrf.mxu0
      %v2422 = vadd.f32 0.0, %v2421
      %2423 = vmatprep.mubr.f32.mxu0 %v2234
      %2424 = vmatmul.mubr.f32.gmra.mxu0 %v1489
      %v2425 = vpop.f32.mrf.mxu0
      %v2426 = vadd.f32 0.0, %v2425
      %v2427 = vpop.f32.mrf.mxu0
      %v2428 = vadd.f32 0.0, %v2427
      %2429 = vmatprep.mubr.f32.mxu0 %v2237
      %2430 = vmatmul.mubr.f32.gmra.mxu0 %v1491
      %v2431 = vpop.f32.mrf.mxu0
      %v2432 = vadd.f32 0.0, %v2431
      %v2433 = vpop.f32.mrf.mxu0
      %v2434 = vadd.f32 0.0, %v2433
      %2435 = vmatprep.mubr.f32.mxu0 %v2240
      %2436 = vmatmul.mubr.f32.gmra.mxu0 %v1493
      %v2437 = vpop.f32.mrf.mxu0
      %v2438 = vadd.f32 0.0, %v2437
      %v2439 = vpop.f32.mrf.mxu0
      %v2440 = vadd.f32 0.0, %v2439
      %2441 = vmatprep.mubr.f32.mxu0 %v2243
      %2442 = vmatmul.mubr.f32.gmra.mxu0 %v1495
      %v2443 = vpop.f32.mrf.mxu0
      %v2444 = vadd.f32 0.0, %v2443
      %v2445 = vpop.f32.mrf.mxu0
      %v2446 = vadd.f32 0.0, %v2445
      %2447 = vmatprep.mubr.f32.mxu0 %v2246
      %2448 = vmatmul.mubr.f32.gmra.mxu0 %v1497
      %v2449 = vpop.f32.mrf.mxu0
      %v2450 = vadd.f32 0.0, %v2449
      %v2451 = vpop.f32.mrf.mxu0
      %v2452 = vadd.f32 0.0, %v2451
      %2453 = vmatprep.mubr.f32.mxu0 %v2249
      %2454 = vmatmul.mubr.f32.gmra.mxu0 %v1499
      %v2455 = vpop.f32.mrf.mxu0
      %v2456 = vadd.f32 0.0, %v2455
      %v2457 = vpop.f32.mrf.mxu0
      %v2458 = vadd.f32 0.0, %v2457
      %2459 = vmatprep.mubr.f32.mxu0 %v2252
      %2460 = vmatmul.mubr.f32.gmra.mxu0 %v1501
      %v2461 = vpop.f32.mrf.mxu0
      %v2462 = vadd.f32 0.0, %v2461
      %v2463 = vpop.f32.mrf.mxu0
      %v2464 = vadd.f32 0.0, %v2463
      %2465 = vmatprep.mubr.f32.mxu0 %v2255
      %2466 = vmatmul.mubr.f32.gmra.mxu0 %v1503
      %v2467 = vpop.f32.mrf.mxu0
      %v2468 = vadd.f32 0.0, %v2467
      %v2469 = vpop.f32.mrf.mxu0
      %v2470 = vadd.f32 0.0, %v2469
      %2471 = vmatprep.mubr.f32.mxu0 %v2258
      %2472 = vmatmul.mubr.f32.gmra.mxu0 %v1505
      %v2473 = vpop.f32.mrf.mxu0
      %v2474 = vadd.f32 0.0, %v2473
      %v2475 = vpop.f32.mrf.mxu0
      %v2476 = vadd.f32 0.0, %v2475
      %2477 = vmatprep.mubr.f32.mxu0 %v2261
      %2478 = vmatmul.mubr.f32.gmra.mxu0 %v1507
      %v2479 = vpop.f32.mrf.mxu0
      %v2480 = vadd.f32 0.0, %v2479
      %v2481 = vpop.f32.mrf.mxu0
      %v2482 = vadd.f32 0.0, %v2481
      %2483 = vmatprep.mubr.f32.mxu0 %v2264
      %2484 = vmatmul.mubr.f32.gmra.mxu0 %v1509
      %v2485 = vpop.f32.mrf.mxu0
      %v2486 = vadd.f32 0.0, %v2485
      %v2487 = vpop.f32.mrf.mxu0
      %v2488 = vadd.f32 0.0, %v2487
      %2489 = vmatprep.mubr.f32.mxu0 %v2267
      %2490 = vmatmul.mubr.f32.gmra.mxu0 %v1511
      %v2491 = vpop.f32.mrf.mxu0
      %v2492 = vadd.f32 0.0, %v2491
      %v2493 = vpop.f32.mrf.mxu0
      %v2494 = vadd.f32 0.0, %v2493
      %2495 = vmatprep.mubr.f32.mxu0 %v2270
      %2496 = vmatmul.mubr.f32.gmra.mxu0 %v1513
      %v2497 = vpop.f32.mrf.mxu0
      %v2498 = vadd.f32 0.0, %v2497
      %v2499 = vpop.f32.mrf.mxu0
      %v2500 = vadd.f32 0.0, %v2499
      %2501 = vmatprep.mubr.f32.mxu0 %v2273
      %2502 = vmatmul.mubr.f32.gmra.mxu0 %v1515
      %v2503 = vpop.f32.mrf.mxu0
      %v2504 = vadd.f32 0.0, %v2503
      %v2505 = vpop.f32.mrf.mxu0
      %v2506 = vadd.f32 0.0, %v2505
      %2507 = vdwg.mxu0
      %v2509 = vsel %vm2190, %v1742, 0
      %v2512 = vsel %vm2190, %v1744, 0
      %v2515 = vsel %vm2190, %v1746, 0
      %v2518 = vsel %vm2190, %v1748, 0
      %v2521 = vsel %vm2190, %v1750, 0
      %v2524 = vsel %vm2190, %v1752, 0
      %v2527 = vsel %vm2190, %v1754, 0
      %v2530 = vsel %vm2190, %v1756, 0
      %v2533 = vsel %vm2190, %v1758, 0
      %v2536 = vsel %vm2190, %v1760, 0
      %v2539 = vsel %vm2190, %v1762, 0
      %v2542 = vsel %vm2190, %v1764, 0
      %v2545 = vsel %vm2190, %v1766, 0
      %v2548 = vsel %vm2190, %v1768, 0
      %v2551 = vsel %vm2190, %v1770, 0
      %v2554 = vsel %vm2190, %v1772, 0
      %v2557 = vsel %vm2190, %v1774, 0
      %v2560 = vsel %vm2190, %v1776, 0
      %v2563 = vsel %vm2190, %v1778, 0
      %v2566 = vsel %vm2190, %v1780, 0
      %v2569 = vsel %vm2190, %v1782, 0
      %v2572 = vsel %vm2190, %v1784, 0
      %v2575 = vsel %vm2190, %v1786, 0
      %v2578 = vsel %vm2190, %v1788, 0
      %v2581 = vsel %vm2190, %v1790, 0
      %v2584 = vsel %vm2190, %v1792, 0
      %v2587 = vsel %vm2190, %v1794, 0
      %v2590 = vsel %vm2190, %v1796, 0
      %2592 = vmatprep.subr.mxu0 %v2108
      %2593 = vmatpush1.msra.mxu0 %v2107
      %2594 = vmatprep.subr.mxu0 %v2106
      %2595 = vmatpush1.msra.mxu0 %v2105
      %2596 = vmatprep.subr.mxu0 %v2104
      %2597 = vmatpush1.msra.mxu0 %v2103
      %2598 = vmatprep.subr.mxu0 %v2102
      %2599 = vmatpush1.msra.mxu0 %v2101
      %2600 = vmatprep.subr.mxu0 %v2100
      %2601 = vmatpush1.msra.mxu0 %v2099
      %2602 = vmatprep.subr.mxu0 %v2098
      %2603 = vmatpush1.msra.mxu0 %v2097
      %2604 = vmatprep.subr.mxu0 %v2096
      %2605 = vmatpush1.msra.mxu0 %v2095
      %2606 = vmatprep.subr.mxu0 %v2094
      %2607 = vmatpush1.msra.mxu0 %v2093
      %2608 = vmatprep.subr.mxu0 %v2092
      %2609 = vmatpush1.msra.mxu0 %v2091
      %2610 = vmatprep.subr.mxu0 %v2090
      %2611 = vmatpush1.msra.mxu0 %v2089
      %2612 = vmatprep.subr.mxu0 %v2088
      %2613 = vmatpush1.msra.mxu0 %v2087
      %2614 = vmatprep.subr.mxu0 %v2086
      %2615 = vmatpush1.msra.mxu0 %v2085
      %2616 = vmatprep.subr.mxu0 %v2084
      %2617 = vmatpush1.msra.mxu0 %v2083
      %2618 = vmatprep.subr.mxu0 %v2082
      %2619 = vmatpush1.msra.mxu0 %v2081
      %2620 = vmatprep.subr.mxu0 %v2080
      %2621 = vmatpush1.msra.mxu0 %v2079
      %2622 = vmatprep.subr.mxu0 %v2078
      %2623 = vmatpush1.msra.mxu0 %v2077
      %2624 = vmatprep.subr.mxu0 0.0
      %2625 = vmatpush2.msra.mxu0 0.0
      %2626 = vmatprep.subr.mxu0 0.0
      %2627 = vmatpush2.msra.mxu0 0.0
      %2628 = vmatprep.subr.mxu0 0.0
      %2629 = vmatpush2.msra.mxu0 0.0
      %2630 = vmatprep.subr.mxu0 0.0
      %2631 = vmatpush2.msra.mxu0 0.0
      %2632 = vmatprep.subr.mxu0 %v2132
      %2633 = vmatpush2.msra.mxu0 %v2131
      %2634 = vmatprep.subr.mxu0 %v2130
      %2635 = vmatpush2.msra.mxu0 %v2129
      %2636 = vmatprep.subr.mxu0 %v2128
      %2637 = vmatpush2.msra.mxu0 %v2127
      %2638 = vmatprep.subr.mxu0 %v2126
      %2639 = vmatpush2.msra.mxu0 %v2125
      %2640 = vmatprep.subr.mxu0 %v2124
      %2641 = vmatpush2.msra.mxu0 %v2123
      %2642 = vmatprep.subr.mxu0 %v2122
      %2643 = vmatpush2.msra.mxu0 %v2121
      %2644 = vmatprep.subr.mxu0 %v2120
      %2645 = vmatpush2.msra.mxu0 %v2119
      %2646 = vmatprep.subr.mxu0 %v2118
      %2647 = vmatpush2.msra.mxu0 %v2117
      %2648 = vmatprep.subr.mxu0 %v2116
      %2649 = vmatpush2.msra.mxu0 %v2115
      %2650 = vmatprep.subr.mxu0 %v2114
      %2651 = vmatpush2.msra.mxu0 %v2113
      %2652 = vmatprep.subr.mxu0 %v2112
      %2653 = vmatpush2.msra.mxu0 %v2111
      %2654 = vmatprep.subr.mxu0 %v2110
      %2655 = vmatpush2.msra.mxu0 %v2109
      %2656 = vmatprep.mubr.f32.mxu0 %v2509
      %2657 = vmatmul.mubr.f32.gmra.mxu0 %v1741
      %v2658 = vpop.f32.mrf.mxu0
      %v2659 = vadd.f32 %v2342, %v2658
      %v2660 = vpop.f32.mrf.mxu0
      %v2661 = vadd.f32 %v2344, %v2660
      %2662 = vmatprep.mubr.f32.mxu0 %v2512
      %2663 = vmatmul.mubr.f32.gmra.mxu0 %v1743
      %v2664 = vpop.f32.mrf.mxu0
      %v2665 = vadd.f32 %v2348, %v2664
      %v2666 = vpop.f32.mrf.mxu0
      %v2667 = vadd.f32 %v2350, %v2666
      %2668 = vmatprep.mubr.f32.mxu0 %v2515
      %2669 = vmatmul.mubr.f32.gmra.mxu0 %v1745
      %v2670 = vpop.f32.mrf.mxu0
      %v2671 = vadd.f32 %v2354, %v2670
      %v2672 = vpop.f32.mrf.mxu0
      %v2673 = vadd.f32 %v2356, %v2672
      %2674 = vmatprep.mubr.f32.mxu0 %v2518
      %2675 = vmatmul.mubr.f32.gmra.mxu0 %v1747
      %v2676 = vpop.f32.mrf.mxu0
      %v2677 = vadd.f32 %v2360, %v2676
      %v2678 = vpop.f32.mrf.mxu0
      %v2679 = vadd.f32 %v2362, %v2678
      %2680 = vmatprep.mubr.f32.mxu0 %v2521
      %2681 = vmatmul.mubr.f32.gmra.mxu0 %v1749
      %v2682 = vpop.f32.mrf.mxu0
      %v2683 = vadd.f32 %v2366, %v2682
      %v2684 = vpop.f32.mrf.mxu0
      %v2685 = vadd.f32 %v2368, %v2684
      %2686 = vmatprep.mubr.f32.mxu0 %v2524
      %2687 = vmatmul.mubr.f32.gmra.mxu0 %v1751
      %v2688 = vpop.f32.mrf.mxu0
      %v2689 = vadd.f32 %v2372, %v2688
      %v2690 = vpop.f32.mrf.mxu0
      %v2691 = vadd.f32 %v2374, %v2690
      %2692 = vmatprep.mubr.f32.mxu0 %v2527
      %2693 = vmatmul.mubr.f32.gmra.mxu0 %v1753
      %v2694 = vpop.f32.mrf.mxu0
      %v2695 = vadd.f32 %v2378, %v2694
      %v2696 = vpop.f32.mrf.mxu0
      %v2697 = vadd.f32 %v2380, %v2696
      %2698 = vmatprep.mubr.f32.mxu0 %v2530
      %2699 = vmatmul.mubr.f32.gmra.mxu0 %v1755
      %v2700 = vpop.f32.mrf.mxu0
      %v2701 = vadd.f32 %v2384, %v2700
      %v2702 = vpop.f32.mrf.mxu0
      %v2703 = vadd.f32 %v2386, %v2702
      %2704 = vmatprep.mubr.f32.mxu0 %v2533
      %2705 = vmatmul.mubr.f32.gmra.mxu0 %v1757
      %v2706 = vpop.f32.mrf.mxu0
      %v2707 = vadd.f32 %v2390, %v2706
      %v2708 = vpop.f32.mrf.mxu0
      %v2709 = vadd.f32 %v2392, %v2708
      %2710 = vmatprep.mubr.f32.mxu0 %v2536
      %2711 = vmatmul.mubr.f32.gmra.mxu0 %v1759
      %v2712 = vpop.f32.mrf.mxu0
      %v2713 = vadd.f32 %v2396, %v2712
      %v2714 = vpop.f32.mrf.mxu0
      %v2715 = vadd.f32 %v2398, %v2714
      %2716 = vmatprep.mubr.f32.mxu0 %v2539
      %2717 = vmatmul.mubr.f32.gmra.mxu0 %v1761
      %v2718 = vpop.f32.mrf.mxu0
      %v2719 = vadd.f32 %v2402, %v2718
      %v2720 = vpop.f32.mrf.mxu0
      %v2721 = vadd.f32 %v2404, %v2720
      %2722 = vmatprep.mubr.f32.mxu0 %v2542
      %2723 = vmatmul.mubr.f32.gmra.mxu0 %v1763
      %v2724 = vpop.f32.mrf.mxu0
      %v2725 = vadd.f32 %v2408, %v2724
      %v2726 = vpop.f32.mrf.mxu0
      %v2727 = vadd.f32 %v2410, %v2726
      %2728 = vmatprep.mubr.f32.mxu0 %v2545
      %2729 = vmatmul.mubr.f32.gmra.mxu0 %v1765
      %v2730 = vpop.f32.mrf.mxu0
      %v2731 = vadd.f32 %v2414, %v2730
      %v2732 = vpop.f32.mrf.mxu0
      %v2733 = vadd.f32 %v2416, %v2732
      %2734 = vmatprep.mubr.f32.mxu0 %v2548
      %2735 = vmatmul.mubr.f32.gmra.mxu0 %v1767
      %v2736 = vpop.f32.mrf.mxu0
      %v2737 = vadd.f32 %v2420, %v2736
      %v2738 = vpop.f32.mrf.mxu0
      %v2739 = vadd.f32 %v2422, %v2738
      %2740 = vmatprep.mubr.f32.mxu0 %v2551
      %2741 = vmatmul.mubr.f32.gmra.mxu0 %v1769
      %v2742 = vpop.f32.mrf.mxu0
      %v2743 = vadd.f32 %v2426, %v2742
      %v2744 = vpop.f32.mrf.mxu0
      %v2745 = vadd.f32 %v2428, %v2744
      %2746 = vmatprep.mubr.f32.mxu0 %v2554
      %2747 = vmatmul.mubr.f32.gmra.mxu0 %v1771
      %v2748 = vpop.f32.mrf.mxu0
      %v2749 = vadd.f32 %v2432, %v2748
      %v2750 = vpop.f32.mrf.mxu0
      %v2751 = vadd.f32 %v2434, %v2750
      %2752 = vmatprep.mubr.f32.mxu0 %v2557
      %2753 = vmatmul.mubr.f32.gmra.mxu0 %v1773
      %v2754 = vpop.f32.mrf.mxu0
      %v2755 = vadd.f32 %v2438, %v2754
      %v2756 = vpop.f32.mrf.mxu0
      %v2757 = vadd.f32 %v2440, %v2756
      %2758 = vmatprep.mubr.f32.mxu0 %v2560
      %2759 = vmatmul.mubr.f32.gmra.mxu0 %v1775
      %v2760 = vpop.f32.mrf.mxu0
      %v2761 = vadd.f32 %v2444, %v2760
      %v2762 = vpop.f32.mrf.mxu0
      %v2763 = vadd.f32 %v2446, %v2762
      %2764 = vmatprep.mubr.f32.mxu0 %v2563
      %2765 = vmatmul.mubr.f32.gmra.mxu0 %v1777
      %v2766 = vpop.f32.mrf.mxu0
      %v2767 = vadd.f32 %v2450, %v2766
      %v2768 = vpop.f32.mrf.mxu0
      %v2769 = vadd.f32 %v2452, %v2768
      %2770 = vmatprep.mubr.f32.mxu0 %v2566
      %2771 = vmatmul.mubr.f32.gmra.mxu0 %v1779
      %v2772 = vpop.f32.mrf.mxu0
      %v2773 = vadd.f32 %v2456, %v2772
      %v2774 = vpop.f32.mrf.mxu0
      %v2775 = vadd.f32 %v2458, %v2774
      %2776 = vmatprep.mubr.f32.mxu0 %v2569
      %2777 = vmatmul.mubr.f32.gmra.mxu0 %v1781
      %v2778 = vpop.f32.mrf.mxu0
      %v2779 = vadd.f32 %v2462, %v2778
      %v2780 = vpop.f32.mrf.mxu0
      %v2781 = vadd.f32 %v2464, %v2780
      %2782 = vmatprep.mubr.f32.mxu0 %v2572
      %2783 = vmatmul.mubr.f32.gmra.mxu0 %v1783
      %v2784 = vpop.f32.mrf.mxu0
      %v2785 = vadd.f32 %v2468, %v2784
      %v2786 = vpop.f32.mrf.mxu0
      %v2787 = vadd.f32 %v2470, %v2786
      %2788 = vmatprep.mubr.f32.mxu0 %v2575
      %2789 = vmatmul.mubr.f32.gmra.mxu0 %v1785
      %v2790 = vpop.f32.mrf.mxu0
      %v2791 = vadd.f32 %v2474, %v2790
      %v2792 = vpop.f32.mrf.mxu0
      %v2793 = vadd.f32 %v2476, %v2792
      %2794 = vmatprep.mubr.f32.mxu0 %v2578
      %2795 = vmatmul.mubr.f32.gmra.mxu0 %v1787
      %v2796 = vpop.f32.mrf.mxu0
      %v2797 = vadd.f32 %v2480, %v2796
      %v2798 = vpop.f32.mrf.mxu0
      %v2799 = vadd.f32 %v2482, %v2798
      %2800 = vmatprep.mubr.f32.mxu0 %v2581
      %2801 = vmatmul.mubr.f32.gmra.mxu0 %v1789
      %v2802 = vpop.f32.mrf.mxu0
      %v2803 = vadd.f32 %v2486, %v2802
      %v2804 = vpop.f32.mrf.mxu0
      %v2805 = vadd.f32 %v2488, %v2804
      %2806 = vmatprep.mubr.f32.mxu0 %v2584
      %2807 = vmatmul.mubr.f32.gmra.mxu0 %v1791
      %v2808 = vpop.f32.mrf.mxu0
      %v2809 = vadd.f32 %v2492, %v2808
      %v2810 = vpop.f32.mrf.mxu0
      %v2811 = vadd.f32 %v2494, %v2810
      %2812 = vmatprep.mubr.f32.mxu0 %v2587
      %2813 = vmatmul.mubr.f32.gmra.mxu0 %v1793
      %v2814 = vpop.f32.mrf.mxu0
      %v2815 = vadd.f32 %v2498, %v2814
      %v2816 = vpop.f32.mrf.mxu0
      %v2817 = vadd.f32 %v2500, %v2816
      %2818 = vmatprep.mubr.f32.mxu0 %v2590
      %2819 = vmatmul.mubr.f32.gmra.mxu0 %v1795
      %v2820 = vpop.f32.mrf.mxu0
      %v2821 = vadd.f32 %v2504, %v2820
      %v2822 = vpop.f32.mrf.mxu0
      %v2823 = vadd.f32 %v2506, %v2822
      %2824 = vdwg.mxu0
      %s2825 = scalar_lea.vmem %s5, 896
      %v2826 = vld [vmem:[%s2825] sm:$0xff]
      %v2827 = vld [vmem:[%s2825 + $0x8] sm:$0xff]
      %v2828 = vld [vmem:[%s2825 + $0x10] sm:$0xff]
      %v2829 = vld [vmem:[%s2825 + $0x18] sm:$0xff]
      %v2830 = vld [vmem:[%s2825 + $0x20] sm:$0xff]
      %v2831 = vld [vmem:[%s2825 + $0x28] sm:$0xff]
      %v2832 = vld [vmem:[%s2825 + $0x30] sm:$0xff]
      %v2833 = vld [vmem:[%s2825 + $0x38] sm:$0xff]
      %v2834 = vld [vmem:[%s2825 + $0x40] sm:$0xff]
      %v2835 = vld [vmem:[%s2825 + $0x48] sm:$0xff]
      %v2836 = vld [vmem:[%s2825 + $0x50] sm:$0xff]
      %v2837 = vld [vmem:[%s2825 + $0x58] sm:$0xff]
      %v2838 = vld [vmem:[%s2825 + $0x60] sm:$0xff]
      %v2839 = vld [vmem:[%s2825 + $0x68] sm:$0xff]
      %v2840 = vld [vmem:[%s2825 + $0x70] sm:$0xff]
      %v2841 = vld [vmem:[%s2825 + $0x78] sm:$0xff]
      %v2842 = vld [vmem:[%s2825 + $0x80] sm:$0xff]
      %v2843 = vld [vmem:[%s2825 + $0x88] sm:$0xff]
      %v2844 = vld [vmem:[%s2825 + $0x90] sm:$0xff]
      %v2845 = vld [vmem:[%s2825 + $0x98] sm:$0xff]
      %v2846 = vld [vmem:[%s2825 + $0xa0] sm:$0xff]
      %v2847 = vld [vmem:[%s2825 + $0xa8] sm:$0xff]
      %v2848 = vld [vmem:[%s2825 + $0xb0] sm:$0xff]
      %v2849 = vld [vmem:[%s2825 + $0xb8] sm:$0xff]
      %v2850 = vld [vmem:[%s2825 + $0xc0] sm:$0xff]
      %v2851 = vld [vmem:[%s2825 + $0xc8] sm:$0xff]
      %v2852 = vld [vmem:[%s2825 + $0xd0] sm:$0xff]
      %v2853 = vld [vmem:[%s2825 + $0xd8] sm:$0xff]
      %v2854 = vld [vmem:[%s2825 + $0xe0] sm:$0xff]
      %v2855 = vld [vmem:[%s2825 + $0xe8] sm:$0xff]
      %v2856 = vld [vmem:[%s2825 + $0xf0] sm:$0xff]
      %v2857 = vld [vmem:[%s2825 + $0xf8] sm:$0xff]
      %v2858 = vld [vmem:[%s2825 + $0x100] sm:$0xff]
      %v2859 = vld [vmem:[%s2825 + $0x108] sm:$0xff]
      %v2860 = vld [vmem:[%s2825 + $0x110] sm:$0xff]
      %v2861 = vld [vmem:[%s2825 + $0x118] sm:$0xff]
      %v2862 = vld [vmem:[%s2825 + $0x120] sm:$0xff]
      %v2863 = vld [vmem:[%s2825 + $0x128] sm:$0xff]
      %v2864 = vld [vmem:[%s2825 + $0x130] sm:$0xff]
      %v2865 = vld [vmem:[%s2825 + $0x138] sm:$0xff]
      %v2866 = vld [vmem:[%s2825 + $0x140] sm:$0xff]
      %v2867 = vld [vmem:[%s2825 + $0x148] sm:$0xff]
      %v2868 = vld [vmem:[%s2825 + $0x150] sm:$0xff]
      %v2869 = vld [vmem:[%s2825 + $0x158] sm:$0xff]
      %v2870 = vld [vmem:[%s2825 + $0x160] sm:$0xff]
      %v2871 = vld [vmem:[%s2825 + $0x168] sm:$0xff]
      %v2872 = vld [vmem:[%s2825 + $0x170] sm:$0xff]
      %v2873 = vld [vmem:[%s2825 + $0x178] sm:$0xff]
      %v2874 = vld [vmem:[%s2825 + $0x180] sm:$0xff]
      %v2875 = vld [vmem:[%s2825 + $0x188] sm:$0xff]
      %v2876 = vld [vmem:[%s2825 + $0x190] sm:$0xff]
      %v2877 = vld [vmem:[%s2825 + $0x198] sm:$0xff]
      %v2878 = vld [vmem:[%s2825 + $0x1a0] sm:$0xff]
      %v2879 = vld [vmem:[%s2825 + $0x1a8] sm:$0xff]
      %v2880 = vld [vmem:[%s2825 + $0x1b0] sm:$0xff]
      %v2881 = vld [vmem:[%s2825 + $0x1b8] sm:$0xff]
      %v2883 = vsel %vm2190, %v2022, 0
      %v2886 = vsel %vm2190, %v2024, 0
      %v2889 = vsel %vm2190, %v2026, 0
      %v2892 = vsel %vm2190, %v2028, 0
      %v2895 = vsel %vm2190, %v2030, 0
      %v2898 = vsel %vm2190, %v2032, 0
      %v2901 = vsel %vm2190, %v2034, 0
      %v2904 = vsel %vm2190, %v2036, 0
      %v2907 = vsel %vm2190, %v2038, 0
      %v2910 = vsel %vm2190, %v2040, 0
      %v2913 = vsel %vm2190, %v2042, 0
      %v2916 = vsel %vm2190, %v2044, 0
      %v2919 = vsel %vm2190, %v2046, 0
      %v2922 = vsel %vm2190, %v2048, 0
      %v2925 = vsel %vm2190, %v2050, 0
      %v2928 = vsel %vm2190, %v2052, 0
      %v2931 = vsel %vm2190, %v2054, 0
      %v2934 = vsel %vm2190, %v2056, 0
      %v2937 = vsel %vm2190, %v2058, 0
      %v2940 = vsel %vm2190, %v2060, 0
      %v2943 = vsel %vm2190, %v2062, 0
      %v2946 = vsel %vm2190, %v2064, 0
      %v2949 = vsel %vm2190, %v2066, 0
      %v2952 = vsel %vm2190, %v2068, 0
      %v2955 = vsel %vm2190, %v2070, 0
      %v2958 = vsel %vm2190, %v2072, 0
      %v2961 = vsel %vm2190, %v2074, 0
      %v2964 = vsel %vm2190, %v2076, 0
      %2966 = vmatprep.subr.mxu0 %v2857
      %2967 = vmatpush1.msra.mxu0 %v2856
      %2968 = vmatprep.subr.mxu0 %v2855
      %2969 = vmatpush1.msra.mxu0 %v2854
      %2970 = vmatprep.subr.mxu0 %v2853
      %2971 = vmatpush1.msra.mxu0 %v2852
      %2972 = vmatprep.subr.mxu0 %v2851
      %2973 = vmatpush1.msra.mxu0 %v2850
      %2974 = vmatprep.subr.mxu0 %v2849
      %2975 = vmatpush1.msra.mxu0 %v2848
      %2976 = vmatprep.subr.mxu0 %v2847
      %2977 = vmatpush1.msra.mxu0 %v2846
      %2978 = vmatprep.subr.mxu0 %v2845
      %2979 = vmatpush1.msra.mxu0 %v2844
      %2980 = vmatprep.subr.mxu0 %v2843
      %2981 = vmatpush1.msra.mxu0 %v2842
      %2982 = vmatprep.subr.mxu0 %v2841
      %2983 = vmatpush1.msra.mxu0 %v2840
      %2984 = vmatprep.subr.mxu0 %v2839
      %2985 = vmatpush1.msra.mxu0 %v2838
      %2986 = vmatprep.subr.mxu0 %v2837
      %2987 = vmatpush1.msra.mxu0 %v2836
      %2988 = vmatprep.subr.mxu0 %v2835
      %2989 = vmatpush1.msra.mxu0 %v2834
      %2990 = vmatprep.subr.mxu0 %v2833
      %2991 = vmatpush1.msra.mxu0 %v2832
      %2992 = vmatprep.subr.mxu0 %v2831
      %2993 = vmatpush1.msra.mxu0 %v2830
      %2994 = vmatprep.subr.mxu0 %v2829
      %2995 = vmatpush1.msra.mxu0 %v2828
      %2996 = vmatprep.subr.mxu0 %v2827
      %2997 = vmatpush1.msra.mxu0 %v2826
      %2998 = vmatprep.subr.mxu0 0.0
      %2999 = vmatpush2.msra.mxu0 0.0
      %3000 = vmatprep.subr.mxu0 0.0
      %3001 = vmatpush2.msra.mxu0 0.0
      %3002 = vmatprep.subr.mxu0 0.0
      %3003 = vmatpush2.msra.mxu0 0.0
      %3004 = vmatprep.subr.mxu0 0.0
      %3005 = vmatpush2.msra.mxu0 0.0
      %3006 = vmatprep.subr.mxu0 %v2881
      %3007 = vmatpush2.msra.mxu0 %v2880
      %3008 = vmatprep.subr.mxu0 %v2879
      %3009 = vmatpush2.msra.mxu0 %v2878
      %3010 = vmatprep.subr.mxu0 %v2877
      %3011 = vmatpush2.msra.mxu0 %v2876
      %3012 = vmatprep.subr.mxu0 %v2875
      %3013 = vmatpush2.msra.mxu0 %v2874
      %3014 = vmatprep.subr.mxu0 %v2873
      %3015 = vmatpush2.msra.mxu0 %v2872
      %3016 = vmatprep.subr.mxu0 %v2871
      %3017 = vmatpush2.msra.mxu0 %v2870
      %3018 = vmatprep.subr.mxu0 %v2869
      %3019 = vmatpush2.msra.mxu0 %v2868
      %3020 = vmatprep.subr.mxu0 %v2867
      %3021 = vmatpush2.msra.mxu0 %v2866
      %3022 = vmatprep.subr.mxu0 %v2865
      %3023 = vmatpush2.msra.mxu0 %v2864
      %3024 = vmatprep.subr.mxu0 %v2863
      %3025 = vmatpush2.msra.mxu0 %v2862
      %3026 = vmatprep.subr.mxu0 %v2861
      %3027 = vmatpush2.msra.mxu0 %v2860
      %3028 = vmatprep.subr.mxu0 %v2859
      %3029 = vmatpush2.msra.mxu0 %v2858
      %3030 = vmatprep.mubr.f32.mxu0 %v2883
      %3031 = vmatmul.mubr.f32.gmra.mxu0 %v2021
      %v3032 = vpop.f32.mrf.mxu0
      %v3033 = vadd.f32 0.0, %v3032
      %v3034 = vpop.f32.mrf.mxu0
      %v3035 = vadd.f32 0.0, %v3034
      %3036 = vmatprep.mubr.f32.mxu0 %v2886
      %3037 = vmatmul.mubr.f32.gmra.mxu0 %v2023
      %v3038 = vpop.f32.mrf.mxu0
      %v3039 = vadd.f32 0.0, %v3038
      %v3040 = vpop.f32.mrf.mxu0
      %v3041 = vadd.f32 0.0, %v3040
      %3042 = vmatprep.mubr.f32.mxu0 %v2889
      %3043 = vmatmul.mubr.f32.gmra.mxu0 %v2025
      %v3044 = vpop.f32.mrf.mxu0
      %v3045 = vadd.f32 0.0, %v3044
      %v3046 = vpop.f32.mrf.mxu0
      %v3047 = vadd.f32 0.0, %v3046
      %3048 = vmatprep.mubr.f32.mxu0 %v2892
      %3049 = vmatmul.mubr.f32.gmra.mxu0 %v2027
      %v3050 = vpop.f32.mrf.mxu0
      %v3051 = vadd.f32 0.0, %v3050
      %v3052 = vpop.f32.mrf.mxu0
      %v3053 = vadd.f32 0.0, %v3052
      %3054 = vmatprep.mubr.f32.mxu0 %v2895
      %3055 = vmatmul.mubr.f32.gmra.mxu0 %v2029
      %v3056 = vpop.f32.mrf.mxu0
      %v3057 = vadd.f32 0.0, %v3056
      %v3058 = vpop.f32.mrf.mxu0
      %v3059 = vadd.f32 0.0, %v3058
      %3060 = vmatprep.mubr.f32.mxu0 %v2898
      %3061 = vmatmul.mubr.f32.gmra.mxu0 %v2031
      %v3062 = vpop.f32.mrf.mxu0
      %v3063 = vadd.f32 0.0, %v3062
      %v3064 = vpop.f32.mrf.mxu0
      %v3065 = vadd.f32 0.0, %v3064
      %3066 = vmatprep.mubr.f32.mxu0 %v2901
      %3067 = vmatmul.mubr.f32.gmra.mxu0 %v2033
      %v3068 = vpop.f32.mrf.mxu0
      %v3069 = vadd.f32 0.0, %v3068
      %v3070 = vpop.f32.mrf.mxu0
      %v3071 = vadd.f32 0.0, %v3070
      %3072 = vmatprep.mubr.f32.mxu0 %v2904
      %3073 = vmatmul.mubr.f32.gmra.mxu0 %v2035
      %v3074 = vpop.f32.mrf.mxu0
      %v3075 = vadd.f32 0.0, %v3074
      %v3076 = vpop.f32.mrf.mxu0
      %v3077 = vadd.f32 0.0, %v3076
      %3078 = vmatprep.mubr.f32.mxu0 %v2907
      %3079 = vmatmul.mubr.f32.gmra.mxu0 %v2037
      %v3080 = vpop.f32.mrf.mxu0
      %v3081 = vadd.f32 0.0, %v3080
      %v3082 = vpop.f32.mrf.mxu0
      %v3083 = vadd.f32 0.0, %v3082
      %3084 = vmatprep.mubr.f32.mxu0 %v2910
      %3085 = vmatmul.mubr.f32.gmra.mxu0 %v2039
      %v3086 = vpop.f32.mrf.mxu0
      %v3087 = vadd.f32 0.0, %v3086
      %v3088 = vpop.f32.mrf.mxu0
      %v3089 = vadd.f32 0.0, %v3088
      %3090 = vmatprep.mubr.f32.mxu0 %v2913
      %3091 = vmatmul.mubr.f32.gmra.mxu0 %v2041
      %v3092 = vpop.f32.mrf.mxu0
      %v3093 = vadd.f32 0.0, %v3092
      %v3094 = vpop.f32.mrf.mxu0
      %v3095 = vadd.f32 0.0, %v3094
      %3096 = vmatprep.mubr.f32.mxu0 %v2916
      %3097 = vmatmul.mubr.f32.gmra.mxu0 %v2043
      %v3098 = vpop.f32.mrf.mxu0
      %v3099 = vadd.f32 0.0, %v3098
      %v3100 = vpop.f32.mrf.mxu0
      %v3101 = vadd.f32 0.0, %v3100
      %3102 = vmatprep.mubr.f32.mxu0 %v2919
      %3103 = vmatmul.mubr.f32.gmra.mxu0 %v2045
      %v3104 = vpop.f32.mrf.mxu0
      %v3105 = vadd.f32 0.0, %v3104
      %v3106 = vpop.f32.mrf.mxu0
      %v3107 = vadd.f32 0.0, %v3106
      %3108 = vmatprep.mubr.f32.mxu0 %v2922
      %3109 = vmatmul.mubr.f32.gmra.mxu0 %v2047
      %v3110 = vpop.f32.mrf.mxu0
      %v3111 = vadd.f32 0.0, %v3110
      %v3112 = vpop.f32.mrf.mxu0
      %v3113 = vadd.f32 0.0, %v3112
      %3114 = vmatprep.mubr.f32.mxu0 %v2925
      %3115 = vmatmul.mubr.f32.gmra.mxu0 %v2049
      %v3116 = vpop.f32.mrf.mxu0
      %v3117 = vadd.f32 0.0, %v3116
      %v3118 = vpop.f32.mrf.mxu0
      %v3119 = vadd.f32 0.0, %v3118
      %3120 = vmatprep.mubr.f32.mxu0 %v2928
      %3121 = vmatmul.mubr.f32.gmra.mxu0 %v2051
      %v3122 = vpop.f32.mrf.mxu0
      %v3123 = vadd.f32 0.0, %v3122
      %v3124 = vpop.f32.mrf.mxu0
      %v3125 = vadd.f32 0.0, %v3124
      %3126 = vmatprep.mubr.f32.mxu0 %v2931
      %3127 = vmatmul.mubr.f32.gmra.mxu0 %v2053
      %v3128 = vpop.f32.mrf.mxu0
      %v3129 = vadd.f32 0.0, %v3128
      %v3130 = vpop.f32.mrf.mxu0
      %v3131 = vadd.f32 0.0, %v3130
      %3132 = vmatprep.mubr.f32.mxu0 %v2934
      %3133 = vmatmul.mubr.f32.gmra.mxu0 %v2055
      %v3134 = vpop.f32.mrf.mxu0
      %v3135 = vadd.f32 0.0, %v3134
      %v3136 = vpop.f32.mrf.mxu0
      %v3137 = vadd.f32 0.0, %v3136
      %3138 = vmatprep.mubr.f32.mxu0 %v2937
      %3139 = vmatmul.mubr.f32.gmra.mxu0 %v2057
      %v3140 = vpop.f32.mrf.mxu0
      %v3141 = vadd.f32 0.0, %v3140
      %v3142 = vpop.f32.mrf.mxu0
      %v3143 = vadd.f32 0.0, %v3142
      %3144 = vmatprep.mubr.f32.mxu0 %v2940
      %3145 = vmatmul.mubr.f32.gmra.mxu0 %v2059
      %v3146 = vpop.f32.mrf.mxu0
      %v3147 = vadd.f32 0.0, %v3146
      %v3148 = vpop.f32.mrf.mxu0
      %v3149 = vadd.f32 0.0, %v3148
      %3150 = vmatprep.mubr.f32.mxu0 %v2943
      %3151 = vmatmul.mubr.f32.gmra.mxu0 %v2061
      %v3152 = vpop.f32.mrf.mxu0
      %v3153 = vadd.f32 0.0, %v3152
      %v3154 = vpop.f32.mrf.mxu0
      %v3155 = vadd.f32 0.0, %v3154
      %3156 = vmatprep.mubr.f32.mxu0 %v2946
      %3157 = vmatmul.mubr.f32.gmra.mxu0 %v2063
      %v3158 = vpop.f32.mrf.mxu0
      %v3159 = vadd.f32 0.0, %v3158
      %v3160 = vpop.f32.mrf.mxu0
      %v3161 = vadd.f32 0.0, %v3160
      %3162 = vmatprep.mubr.f32.mxu0 %v2949
      %3163 = vmatmul.mubr.f32.gmra.mxu0 %v2065
      %v3164 = vpop.f32.mrf.mxu0
      %v3165 = vadd.f32 0.0, %v3164
      %v3166 = vpop.f32.mrf.mxu0
      %v3167 = vadd.f32 0.0, %v3166
      %3168 = vmatprep.mubr.f32.mxu0 %v2952
      %3169 = vmatmul.mubr.f32.gmra.mxu0 %v2067
      %v3170 = vpop.f32.mrf.mxu0
      %v3171 = vadd.f32 0.0, %v3170
      %v3172 = vpop.f32.mrf.mxu0
      %v3173 = vadd.f32 0.0, %v3172
      %3174 = vmatprep.mubr.f32.mxu0 %v2955
      %3175 = vmatmul.mubr.f32.gmra.mxu0 %v2069
      %v3176 = vpop.f32.mrf.mxu0
      %v3177 = vadd.f32 0.0, %v3176
      %v3178 = vpop.f32.mrf.mxu0
      %v3179 = vadd.f32 0.0, %v3178
      %3180 = vmatprep.mubr.f32.mxu0 %v2958
      %3181 = vmatmul.mubr.f32.gmra.mxu0 %v2071
      %v3182 = vpop.f32.mrf.mxu0
      %v3183 = vadd.f32 0.0, %v3182
      %v3184 = vpop.f32.mrf.mxu0
      %v3185 = vadd.f32 0.0, %v3184
      %3186 = vmatprep.mubr.f32.mxu0 %v2961
      %3187 = vmatmul.mubr.f32.gmra.mxu0 %v2073
      %v3188 = vpop.f32.mrf.mxu0
      %v3189 = vadd.f32 0.0, %v3188
      %v3190 = vpop.f32.mrf.mxu0
      %v3191 = vadd.f32 0.0, %v3190
      %3192 = vmatprep.mubr.f32.mxu0 %v2964
      %3193 = vmatmul.mubr.f32.gmra.mxu0 %v2075
      %v3194 = vpop.f32.mrf.mxu0
      %v3195 = vadd.f32 0.0, %v3194
      %v3196 = vpop.f32.mrf.mxu0
      %v3197 = vadd.f32 0.0, %v3196
      %3198 = vdwg.mxu0
      %v3199 = vadd.f32 %v2659, %v3033
      %v3200 = vadd.f32 %v2661, %v3035
      %v3201 = vadd.f32 %v2665, %v3039
      %v3202 = vadd.f32 %v2667, %v3041
      %v3203 = vadd.f32 %v2671, %v3045
      %v3204 = vadd.f32 %v2673, %v3047
      %v3205 = vadd.f32 %v2677, %v3051
      %v3206 = vadd.f32 %v2679, %v3053
      %v3207 = vadd.f32 %v2683, %v3057
      %v3208 = vadd.f32 %v2685, %v3059
      %v3209 = vadd.f32 %v2689, %v3063
      %v3210 = vadd.f32 %v2691, %v3065
      %v3211 = vadd.f32 %v2695, %v3069
      %v3212 = vadd.f32 %v2697, %v3071
      %v3213 = vadd.f32 %v2701, %v3075
      %v3214 = vadd.f32 %v2703, %v3077
      %v3215 = vadd.f32 %v2707, %v3081
      %v3216 = vadd.f32 %v2709, %v3083
      %v3217 = vadd.f32 %v2713, %v3087
      %v3218 = vadd.f32 %v2715, %v3089
      %v3219 = vadd.f32 %v2719, %v3093
      %v3220 = vadd.f32 %v2721, %v3095
      %v3221 = vadd.f32 %v2725, %v3099
      %v3222 = vadd.f32 %v2727, %v3101
      %v3223 = vadd.f32 %v2731, %v3105
      %v3224 = vadd.f32 %v2733, %v3107
      %v3225 = vadd.f32 %v2737, %v3111
      %v3226 = vadd.f32 %v2739, %v3113
      %v3227 = vadd.f32 %v2743, %v3117
      %v3228 = vadd.f32 %v2745, %v3119
      %v3229 = vadd.f32 %v2749, %v3123
      %v3230 = vadd.f32 %v2751, %v3125
      %v3231 = vadd.f32 %v2755, %v3129
      %v3232 = vadd.f32 %v2757, %v3131
      %v3233 = vadd.f32 %v2761, %v3135
      %v3234 = vadd.f32 %v2763, %v3137
      %v3235 = vadd.f32 %v2767, %v3141
      %v3236 = vadd.f32 %v2769, %v3143
      %v3237 = vadd.f32 %v2773, %v3147
      %v3238 = vadd.f32 %v2775, %v3149
      %v3239 = vadd.f32 %v2779, %v3153
      %v3240 = vadd.f32 %v2781, %v3155
      %v3241 = vadd.f32 %v2785, %v3159
      %v3242 = vadd.f32 %v2787, %v3161
      %v3243 = vadd.f32 %v2791, %v3165
      %v3244 = vadd.f32 %v2793, %v3167
      %v3245 = vadd.f32 %v2797, %v3171
      %v3246 = vadd.f32 %v2799, %v3173
      %v3247 = vadd.f32 %v2803, %v3177
      %v3248 = vadd.f32 %v2805, %v3179
      %v3249 = vadd.f32 %v2809, %v3183
      %v3250 = vadd.f32 %v2811, %v3185
      %v3251 = vadd.f32 %v2815, %v3189
      %v3252 = vadd.f32 %v2817, %v3191
      %v3253 = vadd.f32 %v2821, %v3195
      %v3254 = vadd.f32 %v2823, %v3197
      %v3255 = vld [vmem:[%s6] sm:$0x3]
      %v3257 = vlaneseq
      %v3258 = vshrl.u32 %v3257, 7
      %v3259 = vsub.s32 0, %v3258
      %v3260 = vrot.slane %v3255, %v3259
      %v3261 = vlaneseq
      %v3262 = vshrl.u32 %v3261, 7
      %v3263 = vsub.s32 1, %v3262
      %v3264 = vrot.slane %v3255, %v3263
      %v3267 = vadd.f32 %v3199, %v3260
      %v3268 = vadd.f32 %v3200, %v3264
      %v3269 = vadd.f32 %v3201, %v3260
      %v3270 = vadd.f32 %v3202, %v3264
      %v3271 = vadd.f32 %v3203, %v3260
      %v3272 = vadd.f32 %v3204, %v3264
      %v3273 = vadd.f32 %v3205, %v3260
      %v3274 = vadd.f32 %v3206, %v3264
      %v3275 = vadd.f32 %v3207, %v3260
      %v3276 = vadd.f32 %v3208, %v3264
      %v3277 = vadd.f32 %v3209, %v3260
      %v3278 = vadd.f32 %v3210, %v3264
      %v3279 = vadd.f32 %v3211, %v3260
      %v3280 = vadd.f32 %v3212, %v3264
      %v3281 = vadd.f32 %v3213, %v3260
      %v3282 = vadd.f32 %v3214, %v3264
      %v3283 = vadd.f32 %v3215, %v3260
      %v3284 = vadd.f32 %v3216, %v3264
      %v3285 = vadd.f32 %v3217, %v3260
      %v3286 = vadd.f32 %v3218, %v3264
      %v3287 = vadd.f32 %v3219, %v3260
      %v3288 = vadd.f32 %v3220, %v3264
      %v3289 = vadd.f32 %v3221, %v3260
      %v3290 = vadd.f32 %v3222, %v3264
      %v3291 = vadd.f32 %v3223, %v3260
      %v3292 = vadd.f32 %v3224, %v3264
      %v3293 = vadd.f32 %v3225, %v3260
      %v3294 = vadd.f32 %v3226, %v3264
      %v3295 = vadd.f32 %v3227, %v3260
      %v3296 = vadd.f32 %v3228, %v3264
      %v3297 = vadd.f32 %v3229, %v3260
      %v3298 = vadd.f32 %v3230, %v3264
      %v3299 = vadd.f32 %v3231, %v3260
      %v3300 = vadd.f32 %v3232, %v3264
      %v3301 = vadd.f32 %v3233, %v3260
      %v3302 = vadd.f32 %v3234, %v3264
      %v3303 = vadd.f32 %v3235, %v3260
      %v3304 = vadd.f32 %v3236, %v3264
      %v3305 = vadd.f32 %v3237, %v3260
      %v3306 = vadd.f32 %v3238, %v3264
      %v3307 = vadd.f32 %v3239, %v3260
      %v3308 = vadd.f32 %v3240, %v3264
      %v3309 = vadd.f32 %v3241, %v3260
      %v3310 = vadd.f32 %v3242, %v3264
      %v3311 = vadd.f32 %v3243, %v3260
      %v3312 = vadd.f32 %v3244, %v3264
      %v3313 = vadd.f32 %v3245, %v3260
      %v3314 = vadd.f32 %v3246, %v3264
      %v3315 = vadd.f32 %v3247, %v3260
      %v3316 = vadd.f32 %v3248, %v3264
      %v3317 = vadd.f32 %v3249, %v3260
      %v3318 = vadd.f32 %v3250, %v3264
      %v3319 = vadd.f32 %v3251, %v3260
      %v3320 = vadd.f32 %v3252, %v3264
      %v3321 = vadd.f32 %v3253, %v3260
      %v3322 = vadd.f32 %v3254, %v3264
      %v3323 = vmax.f32 %v3267, 0.0
      %v3324 = vmax.f32 %v3268, 0.0
      %v3325 = vmax.f32 %v3269, 0.0
      %v3326 = vmax.f32 %v3270, 0.0
      %v3327 = vmax.f32 %v3271, 0.0
      %v3328 = vmax.f32 %v3272, 0.0
      %v3329 = vmax.f32 %v3273, 0.0
      %v3330 = vmax.f32 %v3274, 0.0
      %v3331 = vmax.f32 %v3275, 0.0
      %v3332 = vmax.f32 %v3276, 0.0
      %v3333 = vmax.f32 %v3277, 0.0
      %v3334 = vmax.f32 %v3278, 0.0
      %v3335 = vmax.f32 %v3279, 0.0
      %v3336 = vmax.f32 %v3280, 0.0
      %v3337 = vmax.f32 %v3281, 0.0
      %v3338 = vmax.f32 %v3282, 0.0
      %v3339 = vmax.f32 %v3283, 0.0
      %v3340 = vmax.f32 %v3284, 0.0
      %v3341 = vmax.f32 %v3285, 0.0
      %v3342 = vmax.f32 %v3286, 0.0
      %v3343 = vmax.f32 %v3287, 0.0
      %v3344 = vmax.f32 %v3288, 0.0
      %v3345 = vmax.f32 %v3289, 0.0
      %v3346 = vmax.f32 %v3290, 0.0
      %v3347 = vmax.f32 %v3291, 0.0
      %v3348 = vmax.f32 %v3292, 0.0
      %v3349 = vmax.f32 %v3293, 0.0
      %v3350 = vmax.f32 %v3294, 0.0
      %v3351 = vmax.f32 %v3295, 0.0
      %v3352 = vmax.f32 %v3296, 0.0
      %v3353 = vmax.f32 %v3297, 0.0
      %v3354 = vmax.f32 %v3298, 0.0
      %v3355 = vmax.f32 %v3299, 0.0
      %v3356 = vmax.f32 %v3300, 0.0
      %v3357 = vmax.f32 %v3301, 0.0
      %v3358 = vmax.f32 %v3302, 0.0
      %v3359 = vmax.f32 %v3303, 0.0
      %v3360 = vmax.f32 %v3304, 0.0
      %v3361 = vmax.f32 %v3305, 0.0
      %v3362 = vmax.f32 %v3306, 0.0
      %v3363 = vmax.f32 %v3307, 0.0
      %v3364 = vmax.f32 %v3308, 0.0
      %v3365 = vmax.f32 %v3309, 0.0
      %v3366 = vmax.f32 %v3310, 0.0
      %v3367 = vmax.f32 %v3311, 0.0
      %v3368 = vmax.f32 %v3312, 0.0
      %v3369 = vmax.f32 %v3313, 0.0
      %v3370 = vmax.f32 %v3314, 0.0
      %v3371 = vmax.f32 %v3315, 0.0
      %v3372 = vmax.f32 %v3316, 0.0
      %v3373 = vmax.f32 %v3317, 0.0
      %v3374 = vmax.f32 %v3318, 0.0
      %v3375 = vmax.f32 %v3319, 0.0
      %v3376 = vmax.f32 %v3320, 0.0
      %v3377 = vmax.f32 %v3321, 0.0
      %v3378 = vmax.f32 %v3322, 0.0
      %v3379 = vadd.f32 %v3323, %v605
      %v3380 = vadd.f32 %v3324, %v607
      %v3381 = vadd.f32 %v3325, %v611
      %v3382 = vadd.f32 %v3326, %v613
      %v3383 = vadd.f32 %v3327, %v617
      %v3384 = vadd.f32 %v3328, %v619
      %v3385 = vadd.f32 %v3329, %v623
      %v3386 = vadd.f32 %v3330, %v625
      %v3387 = vadd.f32 %v3331, %v629
      %v3388 = vadd.f32 %v3332, %v631
      %v3389 = vadd.f32 %v3333, %v635
      %v3390 = vadd.f32 %v3334, %v637
      %v3391 = vadd.f32 %v3335, %v641
      %v3392 = vadd.f32 %v3336, %v643
      %v3393 = vadd.f32 %v3337, %v647
      %v3394 = vadd.f32 %v3338, %v649
      %v3395 = vadd.f32 %v3339, %v653
      %v3396 = vadd.f32 %v3340, %v655
      %v3397 = vadd.f32 %v3341, %v659
      %v3398 = vadd.f32 %v3342, %v661
      %v3399 = vadd.f32 %v3343, %v665
      %v3400 = vadd.f32 %v3344, %v667
      %v3401 = vadd.f32 %v3345, %v671
      %v3402 = vadd.f32 %v3346, %v673
      %v3403 = vadd.f32 %v3347, %v677
      %v3404 = vadd.f32 %v3348, %v679
      %v3405 = vadd.f32 %v3349, %v683
      %v3406 = vadd.f32 %v3350, %v685
      %v3407 = vadd.f32 %v3351, %v689
      %v3408 = vadd.f32 %v3352, %v691
      %v3409 = vadd.f32 %v3353, %v695
      %v3410 = vadd.f32 %v3354, %v697
      %v3411 = vadd.f32 %v3355, %v701
      %v3412 = vadd.f32 %v3356, %v703
      %v3413 = vadd.f32 %v3357, %v707
      %v3414 = vadd.f32 %v3358, %v709
      %v3415 = vadd.f32 %v3359, %v713
      %v3416 = vadd.f32 %v3360, %v715
      %v3417 = vadd.f32 %v3361, %v719
      %v3418 = vadd.f32 %v3362, %v721
      %v3419 = vadd.f32 %v3363, %v725
      %v3420 = vadd.f32 %v3364, %v727
      %v3421 = vadd.f32 %v3365, %v731
      %v3422 = vadd.f32 %v3366, %v733
      %v3423 = vadd.f32 %v3367, %v737
      %v3424 = vadd.f32 %v3368, %v739
      %v3425 = vadd.f32 %v3369, %v743
      %v3426 = vadd.f32 %v3370, %v745
      %v3427 = vadd.f32 %v3371, %v749
      %v3428 = vadd.f32 %v3372, %v751
      %v3429 = vadd.f32 %v3373, %v755
      %v3430 = vadd.f32 %v3374, %v757
      %v3431 = vadd.f32 %v3375, %v761
      %v3432 = vadd.f32 %v3376, %v763
      %v3433 = vadd.f32 %v3377, %v767
      %v3434 = vadd.f32 %v3378, %v769
      %3435 = vst [vmem:[%s380] sm:$0xff] %v3379
      %3436 = vst.msk [vmem:[%s380 + $0x8] sm:$0xff] %vm2190, %v3380
      %3437 = vst [vmem:[%s380 + $0x10] sm:$0xff] %v3381
      %3438 = vst.msk [vmem:[%s380 + $0x18] sm:$0xff] %vm2190, %v3382
      %3439 = vst [vmem:[%s380 + $0x20] sm:$0xff] %v3383
      %3440 = vst.msk [vmem:[%s380 + $0x28] sm:$0xff] %vm2190, %v3384
      %3441 = vst [vmem:[%s380 + $0x30] sm:$0xff] %v3385
      %3442 = vst.msk [vmem:[%s380 + $0x38] sm:$0xff] %vm2190, %v3386
      %3443 = vst [vmem:[%s380 + $0x40] sm:$0xff] %v3387
      %3444 = vst.msk [vmem:[%s380 + $0x48] sm:$0xff] %vm2190, %v3388
      %3445 = vst [vmem:[%s380 + $0x50] sm:$0xff] %v3389
      %3446 = vst.msk [vmem:[%s380 + $0x58] sm:$0xff] %vm2190, %v3390
      %3447 = vst [vmem:[%s380 + $0x60] sm:$0xff] %v3391
      %3448 = vst.msk [vmem:[%s380 + $0x68] sm:$0xff] %vm2190, %v3392
      %3449 = vst [vmem:[%s380 + $0x70] sm:$0xff] %v3393
      %3450 = vst.msk [vmem:[%s380 + $0x78] sm:$0xff] %vm2190, %v3394
      %3451 = vst [vmem:[%s380 + $0x80] sm:$0xff] %v3395
      %3452 = vst.msk [vmem:[%s380 + $0x88] sm:$0xff] %vm2190, %v3396
      %3453 = vst [vmem:[%s380 + $0x90] sm:$0xff] %v3397
      %3454 = vst.msk [vmem:[%s380 + $0x98] sm:$0xff] %vm2190, %v3398
      %3455 = vst [vmem:[%s380 + $0xa0] sm:$0xff] %v3399
      %3456 = vst.msk [vmem:[%s380 + $0xa8] sm:$0xff] %vm2190, %v3400
      %3457 = vst [vmem:[%s380 + $0xb0] sm:$0xff] %v3401
      %3458 = vst.msk [vmem:[%s380 + $0xb8] sm:$0xff] %vm2190, %v3402
      %3459 = vst [vmem:[%s380 + $0xc0] sm:$0xff] %v3403
      %3460 = vst.msk [vmem:[%s380 + $0xc8] sm:$0xff] %vm2190, %v3404
      %3461 = vst [vmem:[%s380 + $0xd0] sm:$0xff] %v3405
      %3462 = vst.msk [vmem:[%s380 + $0xd8] sm:$0xff] %vm2190, %v3406
      %3463 = vst [vmem:[%s380 + $0xe0] sm:$0xff] %v3407
      %3464 = vst.msk [vmem:[%s380 + $0xe8] sm:$0xff] %vm2190, %v3408
      %3465 = vst [vmem:[%s380 + $0xf0] sm:$0xff] %v3409
      %3466 = vst.msk [vmem:[%s380 + $0xf8] sm:$0xff] %vm2190, %v3410
      %3467 = vst [vmem:[%s380 + $0x100] sm:$0xff] %v3411
      %3468 = vst.msk [vmem:[%s380 + $0x108] sm:$0xff] %vm2190, %v3412
      %3469 = vst [vmem:[%s380 + $0x110] sm:$0xff] %v3413
      %3470 = vst.msk [vmem:[%s380 + $0x118] sm:$0xff] %vm2190, %v3414
      %3471 = vst [vmem:[%s380 + $0x120] sm:$0xff] %v3415
      %3472 = vst.msk [vmem:[%s380 + $0x128] sm:$0xff] %vm2190, %v3416
      %3473 = vst [vmem:[%s380 + $0x130] sm:$0xff] %v3417
      %3474 = vst.msk [vmem:[%s380 + $0x138] sm:$0xff] %vm2190, %v3418
      %3475 = vst [vmem:[%s380 + $0x140] sm:$0xff] %v3419
      %3476 = vst.msk [vmem:[%s380 + $0x148] sm:$0xff] %vm2190, %v3420
      %3477 = vst [vmem:[%s380 + $0x150] sm:$0xff] %v3421
      %3478 = vst.msk [vmem:[%s380 + $0x158] sm:$0xff] %vm2190, %v3422
      %3479 = vst [vmem:[%s380 + $0x160] sm:$0xff] %v3423
      %3480 = vst.msk [vmem:[%s380 + $0x168] sm:$0xff] %vm2190, %v3424
      %3481 = vst [vmem:[%s380 + $0x170] sm:$0xff] %v3425
      %3482 = vst.msk [vmem:[%s380 + $0x178] sm:$0xff] %vm2190, %v3426
      %3483 = vst [vmem:[%s380 + $0x180] sm:$0xff] %v3427
      %3484 = vst.msk [vmem:[%s380 + $0x188] sm:$0xff] %vm2190, %v3428
      %3485 = vst [vmem:[%s380 + $0x190] sm:$0xff] %v3429
      %3486 = vst.msk [vmem:[%s380 + $0x198] sm:$0xff] %vm2190, %v3430
      %3487 = vst [vmem:[%s380 + $0x1a0] sm:$0xff] %v3431
      %3488 = vst.msk [vmem:[%s380 + $0x1a8] sm:$0xff] %vm2190, %v3432
      %3489 = vst [vmem:[%s380 + $0x1b0] sm:$0xff] %v3433
      %3490 = vst.msk [vmem:[%s380 + $0x1b8] sm:$0xff] %vm2190, %v3434
      %s3491 = smul.u32 28, %s20
      %p3492 = scmp.lt.s32.totalorder %s3491, 55
      %s3493 = scalar_select %p3492, %s3491, 55
      %s3494 = smul.addr %s3493, 2
      %s3495 = smul.addr %s3494, 8
      %s3496 = scalar_lea.vmem %s9, %s3495
      // Predicated region
      $region57: #{residual_net_forward.2} parent=55 // pred_check
        %p3497 = pneg %p242
      $region58: #{residual_net_forward.2} parent=55 // pred_check_branch
        %3499 = sbr.rel (%p3497) target = $region60
      $region59: #{residual_net_forward.2} parent=55 // pred_region
        %s3500 = smul.u32 28, %s20
      $region60: #{residual_net_forward.2} parent=55 // pred_fallthru
        _
    $region56: #{residual_net_forward.2} parent=5 // pred_fallthru
      _
    %p3501 = scmp.le.s32.totalorder 2, %s15
    // Predicated region
    $region61: #{residual_net_forward.2} parent=5 // pred_check
      %p3502 = pneg %p3501
    $region62: #{residual_net_forward.2} parent=5 // pred_check_branch
      %3504 = sbr.rel (%p3502) target = $region64
    $region63: #{residual_net_forward.2} parent=5 // pred_region
      %s3505 = ssub.s32 %s15, 2
      // Predicated region
      $region65: #{residual_net_forward.2} parent=63 // pred_check
        %p3506 = pneg %p248
      $region66: #{residual_net_forward.2} parent=63 // pred_check_branch
        %3508 = sbr.rel (%p3506) target = $region68
      $region67: #{residual_net_forward.2} parent=63 // pred_region
        %s3509 = smul.u32 28, %s21
        %p3510 = scmp.lt.s32.totalorder %s3509, 55
        %s3511 = scalar_select %p3510, %s3509, 55
        %s3512 = smul.addr %s3511, 2
        %s3513 = smul.addr %s3512, 8
        %s3514 = scalar_lea.vmem %s9, %s3513
      $region68: #{residual_net_forward.2} parent=63 // pred_fallthru
        _
    $region64: #{residual_net_forward.2} parent=5 // pred_fallthru
      _
  $region6: #{residual_net_forward.2} parent=0 // loop_footer
    %s19 = sadd.s32 1, %s15
  $region7: #{residual_net_forward.2} parent=0 // loop_footer_branch
    %14 = sbr.rel target = $region3
  $region8: #{residual_net_forward.2} parent=0 // loop_exit
    _

// kernel: residual_net_forward.3
$region0: #{residual_net_forward.3}
  #allocation0 [shape = 'u32[]', space=smem, size = 0x4, offset = 0x4, fixed_abs, tag = 'smem constant byte address 0x4 - core index']
  #allocation1 [shape = 'u32[144,128]{1,0:T(1,128)}', space=vmem, size = 0x12000, scoped, tag = 'internal scratch']
  %s0 = inlined_call_operand.vmem [shape: f32[16,6272], index: 0, kind: input, shape index: {}]
  %s1 = inlined_call_operand.vmem [shape: f32[6272,128], index: 1, kind: input, shape index: {}]
  %s2 = inlined_call_operand.vmem [shape: f32[1,128], index: 2, kind: input, shape index: {}]
  %s3 = inlined_call_operand.hbm [shape: f32[16,128], index: 3, kind: output, shape index: {}]
  %s4 = sld [smem:[#allocation0]]
  $region45: #{residual_net_forward.3} parent=0
    _
  %s6 = ssub.s32 1, %s4
  %s7 = scalar_select 0, %s6, %s4
  $region1: #{residual_net_forward.3} parent=0
    #allocation2 [shape = 'u8[8192]{0}', space=vmem, size = 0x2000, scoped, tag = 'output window, operand 0']
    #allocation3 [shape = 's32[2]{0}', space=sflag, size = 0x8, scoped, tag = 'scoped memory for residual_net_forward.3']
    %8 = vsyncpa [#allocation3], 0
    %s9 = scalar_lea.sflag [#allocation3], 1
    %10 = vsyncpa %s9, 0
    loop: start=0, step=1, limit=4
    $region2: #{residual_net_forward.3} parent=1 // loop_pre_header
      _
    $region3: #{residual_net_forward.3} parent=1 // loop_header
      %s12 = sphi 0, %s16
      %p13 = scmp.ge.s32.totalorder %s12, 4
      %s22 = sphi 0, %s24
      %s25 = sphi 0, %s22
      %s26 = sphi 0, %s25
      %s42 = sphi 0, %s26
      %s46 = sphi 0, %s46
      %s48 = sphi 0, %s46
      %s49 = sphi 0, %s48
      %s63 = sphi 0, %s49
      %s67 = sphi 0, %s67
      %s69 = sphi 0, %s67
      %s70 = sphi 0, %s69
      %s84 = sphi 0, %s70
      %s90 = sphi 0, %s92
      %s93 = sphi 0, %s90
      %s94 = sphi 0, %s93
      %s110 = sphi 0, %s94
    $region4: #{residual_net_forward.3} parent=1 // loop_header_branch
      %15 = sbr.rel (%p13) target = $region8
    $region5: #{residual_net_forward.3} parent=1 // loop_body
      %s17 = ssub.s32 %s12, 1
      %s18 = ssub.s32 %s12, 2
      %s19 = sadd.s32 %s12, 1
      %s20 = ssub.s32 %s12, %s19
      %p21 = scmp.eq.s32.totalorder %s20, 0
      %s23 = sadd.s32 %s22, 1
      %s24 = scalar_select %p21, %s22, %s23
      %p27 = pneg %p21
      %p28 = scmp.eq.s32.totalorder %s12, 1
      %p29 = por %p27, %p28
      %p30 = scmp.ne.s32.totalorder %s22, %s25
      %p31 = scmp.eq.s32.totalorder %s12, 0
      %p32 = por %p30, %p31
      %p33 = scmp.ne.s32.totalorder %s22, %s25
      %p34 = scmp.eq.s32.totalorder %s17, 1
      %p35 = por %p33, %p34
      %p36 = scmp.ne.s32.totalorder %s25, %s26
      %p37 = scmp.eq.s32.totalorder %s17, 0
      %p38 = por %p36, %p37
      %p39 = scmp.ne.s32.totalorder %s25, %s26
      %p40 = scmp.eq.s32.totalorder %s18, 1
      %p41 = por %p39, %p40
      %p43 = scmp.ne.s32.totalorder %s26, %s42
      %p44 = scmp.eq.s32.totalorder %s18, 0
      %p45 = por %p43, %p44
      %s47 = sadd.s32 %s46, 1
      %p50 = scmp.eq.s32.totalorder %s12, 1
      %p51 = scmp.ne.s32.totalorder %s46, %s48
      %p52 = scmp.eq.s32.totalorder %s12, 0
      %p53 = por %p51, %p52
      %p54 = scmp.ne.s32.totalorder %s46, %s48
      %p55 = scmp.eq.s32.totalorder %s17, 1
      %p56 = por %p54, %p55
      %p57 = scmp.ne.s32.totalorder %s48, %s49
      %p58 = scmp.eq.s32.totalorder %s17, 0
      %p59 = por %p57, %p58
      %p60 = scmp.ne.s32.totalorder %s48, %s49
      %p61 = scmp.eq.s32.totalorder %s18, 1
      %p62 = por %p60, %p61
      %p64 = scmp.ne.s32.totalorder %s49, %s63
      %p65 = scmp.eq.s32.totalorder %s18, 0
      %p66 = por %p64, %p65
      %s68 = sadd.s32 %s67, 1
      %p71 = scmp.eq.s32.totalorder %s12, 1
      %p72 = scmp.ne.s32.totalorder %s67, %s69
      %p73 = scmp.eq.s32.totalorder %s12, 0
      %p74 = por %p72, %p73
      %p75 = scmp.ne.s32.totalorder %s67, %s69
      %p76 = scmp.eq.s32.totalorder %s17, 1
      %p77 = por %p75, %p76
      %p78 = scmp.ne.s32.totalorder %s69, %s70
      %p79 = scmp.eq.s32.totalorder %s17, 0
      %p80 = por %p78, %p79
      %p81 = scmp.ne.s32.totalorder %s69, %s70
      %p82 = scmp.eq.s32.totalorder %s18, 1
      %p83 = por %p81, %p82
      %p85 = scmp.ne.s32.totalorder %s70, %s84
      %p86 = scmp.eq.s32.totalorder %s18, 0
      %p87 = por %p85, %p86
      %s88 = ssub.s32 %s12, %s19
      %p89 = scmp.eq.s32.totalorder %s88, 0
      %s91 = sadd.s32 %s90, 1
      %s92 = scalar_select %p89, %s90, %s91
      %p95 = pneg %p89
      %p96 = scmp.eq.s32.totalorder %s12, 1
      %p97 = por %p95, %p96
      %p98 = scmp.ne.s32.totalorder %s90, %s93
      %p99 = scmp.eq.s32.totalorder %s12, 0
      %p100 = por %p98, %p99
      %p101 = scmp.ne.s32.totalorder %s90, %s93
      %p102 = scmp.eq.s32.totalorder %s17, 1
      %p103 = por %p101, %p102
      %p104 = scmp.ne.s32.totalorder %s93, %s94
      %p105 = scmp.eq.s32.totalorder %s17, 0
      %p106 = por %p104, %p105
      %p107 = scmp.ne.s32.totalorder %s93, %s94
      %p108 = scmp.eq.s32.totalorder %s18, 1
      %p109 = por %p107, %p108
      %p111 = scmp.ne.s32.totalorder %s94, %s110
      %p112 = scmp.eq.s32.totalorder %s18, 0
      %p113 = por %p111, %p112
      %p114 = scmp.le.s32.totalorder 1, %s12
      %p115 = scmp.lt.s32.totalorder %s12, 3
      %p116 = pnand %p114, %p115
      %p117 = pneg %p116
      // Predicated region
      $region9: #{residual_net_forward.3} parent=5 // pred_check
        _
      $region10: #{residual_net_forward.3} parent=5 // pred_check_branch
        %119 = sbr.rel (%p116) target = $region12
      $region11: #{residual_net_forward.3} parent=5 // pred_region
        %s120 = ssub.s32 %s12, 1
        // Predicated region
        $region13: #{residual_net_forward.3} parent=11 // pred_check
          %p121 = pneg %p59
        $region14: #{residual_net_forward.3} parent=11 // pred_check_branch
          %123 = sbr.rel (%p121) target = $region16
        $region15: #{residual_net_forward.3} parent=11 // pred_region
          _
        $region16: #{residual_net_forward.3} parent=11 // pred_fallthru
          _
        // Predicated region
        $region17: #{residual_net_forward.3} parent=11 // pred_check
          %p124 = pneg %p80
        $region18: #{residual_net_forward.3} parent=11 // pred_check_branch
          %126 = sbr.rel (%p124) target = $region20
        $region19: #{residual_net_forward.3} parent=11 // pred_region
          _
        $region20: #{residual_net_forward.3} parent=11 // pred_fallthru
          _
      $region12: #{residual_net_forward.3} parent=5 // pred_fallthru
        _
      %p127 = scmp.lt.s32.totalorder %s12, 2
      // Predicated region
      $region21: #{residual_net_forward.3} parent=5 // pred_check
        %p128 = pneg %p127
      $region22: #{residual_net_forward.3} parent=5 // pred_check_branch
        %130 = sbr.rel (%p128) target = $region24
      $region23: #{residual_net_forward.3} parent=5 // pred_region
        // Predicated region
        $region25: #{residual_net_forward.3} parent=23 // pred_check
          %p131 = pneg %p32
        $region26: #{residual_net_forward.3} parent=23 // pred_check_branch
          %133 = sbr.rel (%p131) target = $region28
        $region27: #{residual_net_forward.3} parent=23 // pred_region
          %p134 = scmp.lt.s32.totalorder %s12, 1
          %s135 = scalar_select %p134, %s12, 1
          %s136 = smul.addr %s135, 49
          %s137 = smul.addr %s136, 8
          %s138 = scalar_lea.vmem %s0, %s137
        $region28: #{residual_net_forward.3} parent=23 // pred_fallthru
          _
      $region24: #{residual_net_forward.3} parent=5 // pred_fallthru
        _
      %p139 = scmp.le.s32.totalorder 1, %s12
      %p140 = scmp.lt.s32.totalorder %s12, 3
      %p141 = pnand %p139, %p140
      %p142 = pneg %p141
      // Predicated region
      $region29: #{residual_net_forward.3} parent=5 // pred_check
        _
      $region30: #{residual_net_forward.3} parent=5 // pred_check_branch
        %144 = sbr.rel (%p141) target = $region32
      $region31: #{residual_net_forward.3} parent=5 // pred_region
        %s145 = ssub.s32 %s12, 1
        %p146 = scmp.lt.s32.totalorder %s17, 1
        %s147 = scalar_select %p146, %s17, 1
        %s148 = smul.addr %s147, 49
        %s149 = smul.addr %s148, 8
        %s150 = scalar_lea.vmem %s0, %s149
        %p151 = pneg %p38
        %p152 = pneg %p35
        %p153 = pneg %p59
        %p154 = pneg %p56
        %p155 = pneg %p80
        %p156 = pneg %p77
        %p157 = pneg %p106
        %p158 = pneg %p103
        %s159 = sand.u32 %s93, 1
        %s160 = scalar_lea.sflag [#allocation3], %s159
        %s161 = sand.u32 %s93, 1
        %s162 = smul.addr %s161, 8
        %s163 = scalar_lea.vmem [#allocation2], %s162
        %p164 = scmp.lt.s32.totalorder %s17, 1
        %s165 = scalar_select %p164, %s17, 1
        %s166 = smul.addr %s165, 49
        %s167 = smul.addr %s166, 8
        %s168 = scalar_lea.vmem %s0, %s167
        %v169 = vld [vmem:[%s168] sm:$0xff]
        %v170 = vld [vmem:[%s168 + $0x8] sm:$0xff]
        %v171 = vld [vmem:[%s168 + $0x10] sm:$0xff]
        %v172 = vld [vmem:[%s168 + $0x18] sm:$0xff]
        %v173 = vld [vmem:[%s168 + $0x20] sm:$0xff]
        %v174 = vld [vmem:[%s168 + $0x28] sm:$0xff]
        %v175 = vld [vmem:[%s168 + $0x30] sm:$0xff]
        %v176 = vld [vmem:[%s168 + $0x38] sm:$0xff]
        %v177 = vld [vmem:[%s168 + $0x40] sm:$0xff]
        %v178 = vld [vmem:[%s168 + $0x48] sm:$0xff]
        %v179 = vld [vmem:[%s168 + $0x50] sm:$0xff]
        %v180 = vld [vmem:[%s168 + $0x58] sm:$0xff]
        %v181 = vld [vmem:[%s168 + $0x60] sm:$0xff]
        %v182 = vld [vmem:[%s168 + $0x68] sm:$0xff]
        %v183 = vld [vmem:[%s168 + $0x70] sm:$0xff]
        %v184 = vld [vmem:[%s168 + $0x78] sm:$0xff]
        %v185 = vld [vmem:[%s168 + $0x80] sm:$0xff]
        %v186 = vld [vmem:[%s168 + $0x88] sm:$0xff]
        %v187 = vld [vmem:[%s168 + $0x90] sm:$0xff]
        %v188 = vld [vmem:[%s168 + $0x98] sm:$0xff]
        %v189 = vld [vmem:[%s168 + $0xa0] sm:$0xff]
        %v190 = vld [vmem:[%s168 + $0xa8] sm:$0xff]
        %v191 = vld [vmem:[%s168 + $0xb0] sm:$0xff]
        %v192 = vld [vmem:[%s168 + $0xb8] sm:$0xff]
        %v193 = vld [vmem:[%s168 + $0xc0] sm:$0xff]
        %v194 = vld [vmem:[%s168 + $0xc8] sm:$0xff]
        %v195 = vld [vmem:[%s168 + $0xd0] sm:$0xff]
        %v196 = vld [vmem:[%s168 + $0xd8] sm:$0xff]
        %v197 = vld [vmem:[%s168 + $0xe0] sm:$0xff]
        %v198 = vld [vmem:[%s168 + $0xe8] sm:$0xff]
        %v199 = vld [vmem:[%s168 + $0xf0] sm:$0xff]
        %v200 = vld [vmem:[%s168 + $0xf8] sm:$0xff]
        %v201 = vld [vmem:[%s168 + $0x100] sm:$0xff]
        %v202 = vld [vmem:[%s168 + $0x108] sm:$0xff]
        %v203 = vld [vmem:[%s168 + $0x110] sm:$0xff]
        %v204 = vld [vmem:[%s168 + $0x118] sm:$0xff]
        %v205 = vld [vmem:[%s168 + $0x120] sm:$0xff]
        %v206 = vld [vmem:[%s168 + $0x128] sm:$0xff]
        %v207 = vld [vmem:[%s168 + $0x130] sm:$0xff]
        %v208 = vld [vmem:[%s168 + $0x138] sm:$0xff]
        %v209 = vld [vmem:[%s168 + $0x140] sm:$0xff]
        %v210 = vld [vmem:[%s168 + $0x148] sm:$0xff]
        %v211 = vld [vmem:[%s168 + $0x150] sm:$0xff]
        %v212 = vld [vmem:[%s168 + $0x158] sm:$0xff]
        %v213 = vld [vmem:[%s168 + $0x160] sm:$0xff]
        %v214 = vld [vmem:[%s168 + $0x168] sm:$0xff]
        %v215 = vld [vmem:[%s168 + $0x170] sm:$0xff]
        %v216 = vld [vmem:[%s168 + $0x178] sm:$0xff]
        %v217 = vld [vmem:[%s168 + $0x180] sm:$0xff]
        %v218 = vld [vmem:[%s1] sm:$0xff]
        %v219 = vld [vmem:[%s1 + $0x8] sm:$0xff]
        %v220 = vld [vmem:[%s1 + $0x10] sm:$0xff]
        %v221 = vld [vmem:[%s1 + $0x18] sm:$0xff]
        %v222 = vld [vmem:[%s1 + $0x20] sm:$0xff]
        %v223 = vld [vmem:[%s1 + $0x28] sm:$0xff]
        %v224 = vld [vmem:[%s1 + $0x30] sm:$0xff]
        %v225 = vld [vmem:[%s1 + $0x38] sm:$0xff]
        %v226 = vld [vmem:[%s1 + $0x40] sm:$0xff]
        %v227 = vld [vmem:[%s1 + $0x48] sm:$0xff]
        %v228 = vld [vmem:[%s1 + $0x50] sm:$0xff]
        %v229 = vld [vmem:[%s1 + $0x58] sm:$0xff]
        %v230 = vld [vmem:[%s1 + $0x60] sm:$0xff]
        %v231 = vld [vmem:[%s1 + $0x68] sm:$0xff]
        %v232 = vld [vmem:[%s1 + $0x70] sm:$0xff]
        %v233 = vld [vmem:[%s1 + $0x78] sm:$0xff]
        %v234 = vld [vmem:[%s1 + $0x80] sm:$0xff]
        %v235 = vld [vmem:[%s1 + $0x88] sm:$0xff]
        %v236 = vld [vmem:[%s1 + $0x90] sm:$0xff]
        %v237 = vld [vmem:[%s1 + $0x98] sm:$0xff]
        %v238 = vld [vmem:[%s1 + $0xa0] sm:$0xff]
        %v239 = vld [vmem:[%s1 + $0xa8] sm:$0xff]
        %v240 = vld [vmem:[%s1 + $0xb0] sm:$0xff]
        %v241 = vld [vmem:[%s1 + $0xb8] sm:$0xff]
        %v242 = vld [vmem:[%s1 + $0xc0] sm:$0xff]
        %v243 = vld [vmem:[%s1 + $0xc8] sm:$0xff]
        %v244 = vld [vmem:[%s1 + $0xd0] sm:$0xff]
        %v245 = vld [vmem:[%s1 + $0xd8] sm:$0xff]
        %v246 = vld [vmem:[%s1 + $0xe0] sm:$0xff]
        %v247 = vld [vmem:[%s1 + $0xe8] sm:$0xff]
        %v248 = vld [vmem:[%s1 + $0xf0] sm:$0xff]
        %v249 = vld [vmem:[%s1 + $0xf8] sm:$0xff]
        %v250 = vld [vmem:[%s1 + $0x100] sm:$0xff]
        %v251 = vld [vmem:[%s1 + $0x108] sm:$0xff]
        %v252 = vld [vmem:[%s1 + $0x110] sm:$0xff]
        %v253 = vld [vmem:[%s1 + $0x118] sm:$0xff]
        %v254 = vld [vmem:[%s1 + $0x120] sm:$0xff]
        %v255 = vld [vmem:[%s1 + $0x128] sm:$0xff]
        %v256 = vld [vmem:[%s1 + $0x130] sm:$0xff]
        %v257 = vld [vmem:[%s1 + $0x138] sm:$0xff]
        %v258 = vld [vmem:[%s1 + $0x140] sm:$0xff]
        %v259 = vld [vmem:[%s1 + $0x148] sm:$0xff]
        %v260 = vld [vmem:[%s1 + $0x150] sm:$0xff]
        %v261 = vld [vmem:[%s1 + $0x158] sm:$0xff]
        %v262 = vld [vmem:[%s1 + $0x160] sm:$0xff]
        %v263 = vld [vmem:[%s1 + $0x168] sm:$0xff]
        %v264 = vld [vmem:[%s1 + $0x170] sm:$0xff]
        %v265 = vld [vmem:[%s1 + $0x178] sm:$0xff]
        %v266 = vld [vmem:[%s1 + $0x180] sm:$0xff]
        %v267 = vld [vmem:[%s1 + $0x188] sm:$0xff]
        %v268 = vld [vmem:[%s1 + $0x190] sm:$0xff]
        %v269 = vld [vmem:[%s1 + $0x198] sm:$0xff]
        %v270 = vld [vmem:[%s1 + $0x1a0] sm:$0xff]
        %v271 = vld [vmem:[%s1 + $0x1a8] sm:$0xff]
        %v272 = vld [vmem:[%s1 + $0x1b0] sm:$0xff]
        %v273 = vld [vmem:[%s1 + $0x1b8] sm:$0xff]
        %v274 = vld [vmem:[%s1 + $0x1c0] sm:$0xff]
        %v275 = vld [vmem:[%s1 + $0x1c8] sm:$0xff]
        %v276 = vld [vmem:[%s1 + $0x1d0] sm:$0xff]
        %v277 = vld [vmem:[%s1 + $0x1d8] sm:$0xff]
        %v278 = vld [vmem:[%s1 + $0x1e0] sm:$0xff]
        %v279 = vld [vmem:[%s1 + $0x1e8] sm:$0xff]
        %v280 = vld [vmem:[%s1 + $0x1f0] sm:$0xff]
        %v281 = vld [vmem:[%s1 + $0x1f8] sm:$0xff]
        %v282 = vld [vmem:[%s1 + $0x200] sm:$0xff]
        %v283 = vld [vmem:[%s1 + $0x208] sm:$0xff]
        %v284 = vld [vmem:[%s1 + $0x210] sm:$0xff]
        %v285 = vld [vmem:[%s1 + $0x218] sm:$0xff]
        %v286 = vld [vmem:[%s1 + $0x220] sm:$0xff]
        %v287 = vld [vmem:[%s1 + $0x228] sm:$0xff]
        %v288 = vld [vmem:[%s1 + $0x230] sm:$0xff]
        %v289 = vld [vmem:[%s1 + $0x238] sm:$0xff]
        %v290 = vld [vmem:[%s1 + $0x240] sm:$0xff]
        %v291 = vld [vmem:[%s1 + $0x248] sm:$0xff]
        %v292 = vld [vmem:[%s1 + $0x250] sm:$0xff]
        %v293 = vld [vmem:[%s1 + $0x258] sm:$0xff]
        %v294 = vld [vmem:[%s1 + $0x260] sm:$0xff]
        %v295 = vld [vmem:[%s1 + $0x268] sm:$0xff]
        %v296 = vld [vmem:[%s1 + $0x270] sm:$0xff]
        %v297 = vld [vmem:[%s1 + $0x278] sm:$0xff]
        %v298 = vld [vmem:[%s1 + $0x280] sm:$0xff]
        %v299 = vld [vmem:[%s1 + $0x288] sm:$0xff]
        %v300 = vld [vmem:[%s1 + $0x290] sm:$0xff]
        %v301 = vld [vmem:[%s1 + $0x298] sm:$0xff]
        %v302 = vld [vmem:[%s1 + $0x2a0] sm:$0xff]
        %v303 = vld [vmem:[%s1 + $0x2a8] sm:$0xff]
        %v304 = vld [vmem:[%s1 + $0x2b0] sm:$0xff]
        %v305 = vld [vmem:[%s1 + $0x2b8] sm:$0xff]
        %v306 = vld [vmem:[%s1 + $0x2c0] sm:$0xff]
        %v307 = vld [vmem:[%s1 + $0x2c8] sm:$0xff]
        %v308 = vld [vmem:[%s1 + $0x2d0] sm:$0xff]
        %v309 = vld [vmem:[%s1 + $0x2d8] sm:$0xff]
        %v310 = vld [vmem:[%s1 + $0x2e0] sm:$0xff]
        %v311 = vld [vmem:[%s1 + $0x2e8] sm:$0xff]
        %v312 = vld [vmem:[%s1 + $0x2f0] sm:$0xff]
        %v313 = vld [vmem:[%s1 + $0x2f8] sm:$0xff]
        %v314 = vld [vmem:[%s1 + $0x300] sm:$0xff]
        %v315 = vld [vmem:[%s1 + $0x308] sm:$0xff]
        %v316 = vld [vmem:[%s1 + $0x310] sm:$0xff]
        %v317 = vld [vmem:[%s1 + $0x318] sm:$0xff]
        %v318 = vld [vmem:[%s1 + $0x320] sm:$0xff]
        %v319 = vld [vmem:[%s1 + $0x328] sm:$0xff]
        %v320 = vld [vmem:[%s1 + $0x330] sm:$0xff]
        %v321 = vld [vmem:[%s1 + $0x338] sm:$0xff]
        %v322 = vld [vmem:[%s1 + $0x340] sm:$0xff]
        %v323 = vld [vmem:[%s1 + $0x348] sm:$0xff]
        %v324 = vld [vmem:[%s1 + $0x350] sm:$0xff]
        %v325 = vld [vmem:[%s1 + $0x358] sm:$0xff]
        %v326 = vld [vmem:[%s1 + $0x360] sm:$0xff]
        %v327 = vld [vmem:[%s1 + $0x368] sm:$0xff]
        %v328 = vld [vmem:[%s1 + $0x370] sm:$0xff]
        %v329 = vld [vmem:[%s1 + $0x378] sm:$0xff]
        %v330 = vld [vmem:[%s1 + $0x380] sm:$0xff]
        %v331 = vld [vmem:[%s1 + $0x388] sm:$0xff]
        %v332 = vld [vmem:[%s1 + $0x390] sm:$0xff]
        %v333 = vld [vmem:[%s1 + $0x398] sm:$0xff]
        %v334 = vld [vmem:[%s1 + $0x3a0] sm:$0xff]
        %v335 = vld [vmem:[%s1 + $0x3a8] sm:$0xff]
        %v336 = vld [vmem:[%s1 + $0x3b0] sm:$0xff]
        %v337 = vld [vmem:[%s1 + $0x3b8] sm:$0xff]
        %v338 = vld [vmem:[%s1 + $0x3c0] sm:$0xff]
        %v339 = vld [vmem:[%s1 + $0x3c8] sm:$0xff]
        %v340 = vld [vmem:[%s1 + $0x3d0] sm:$0xff]
        %v341 = vld [vmem:[%s1 + $0x3d8] sm:$0xff]
        %v342 = vld [vmem:[%s1 + $0x3e0] sm:$0xff]
        %v343 = vld [vmem:[%s1 + $0x3e8] sm:$0xff]
        %v344 = vld [vmem:[%s1 + $0x3f0] sm:$0xff]
        %v345 = vld [vmem:[%s1 + $0x3f8] sm:$0xff]
        %v346 = vld [vmem:[%s1 + $0x400] sm:$0xff]
        %v347 = vld [vmem:[%s1 + $0x408] sm:$0xff]
        %v348 = vld [vmem:[%s1 + $0x410] sm:$0xff]
        %v349 = vld [vmem:[%s1 + $0x418] sm:$0xff]
        %v350 = vld [vmem:[%s1 + $0x420] sm:$0xff]
        %v351 = vld [vmem:[%s1 + $0x428] sm:$0xff]
        %v352 = vld [vmem:[%s1 + $0x430] sm:$0xff]
        %v353 = vld [vmem:[%s1 + $0x438] sm:$0xff]
        %v354 = vld [vmem:[%s1 + $0x440] sm:$0xff]
        %v355 = vld [vmem:[%s1 + $0x448] sm:$0xff]
        %v356 = vld [vmem:[%s1 + $0x450] sm:$0xff]
        %v357 = vld [vmem:[%s1 + $0x458] sm:$0xff]
        %v358 = vld [vmem:[%s1 + $0x460] sm:$0xff]
        %v359 = vld [vmem:[%s1 + $0x468] sm:$0xff]
        %v360 = vld [vmem:[%s1 + $0x470] sm:$0xff]
        %v361 = vld [vmem:[%s1 + $0x478] sm:$0xff]
        %v362 = vld [vmem:[%s1 + $0x480] sm:$0xff]
        %v363 = vld [vmem:[%s1 + $0x488] sm:$0xff]
        %v364 = vld [vmem:[%s1 + $0x490] sm:$0xff]
        %v365 = vld [vmem:[%s1 + $0x498] sm:$0xff]
        %v366 = vld [vmem:[%s1 + $0x4a0] sm:$0xff]
        %v367 = vld [vmem:[%s1 + $0x4a8] sm:$0xff]
        %v368 = vld [vmem:[%s1 + $0x4b0] sm:$0xff]
        %v369 = vld [vmem:[%s1 + $0x4b8] sm:$0xff]
        %v370 = vld [vmem:[%s1 + $0x4c0] sm:$0xff]
        %v371 = vld [vmem:[%s1 + $0x4c8] sm:$0xff]
        %v372 = vld [vmem:[%s1 + $0x4d0] sm:$0xff]
        %v373 = vld [vmem:[%s1 + $0x4d8] sm:$0xff]
        %v374 = vld [vmem:[%s1 + $0x4e0] sm:$0xff]
        %v375 = vld [vmem:[%s1 + $0x4e8] sm:$0xff]
        %v376 = vld [vmem:[%s1 + $0x4f0] sm:$0xff]
        %v377 = vld [vmem:[%s1 + $0x4f8] sm:$0xff]
        %v378 = vld [vmem:[%s1 + $0x500] sm:$0xff]
        %v379 = vld [vmem:[%s1 + $0x508] sm:$0xff]
        %v380 = vld [vmem:[%s1 + $0x510] sm:$0xff]
        %v381 = vld [vmem:[%s1 + $0x518] sm:$0xff]
        %v382 = vld [vmem:[%s1 + $0x520] sm:$0xff]
        %v383 = vld [vmem:[%s1 + $0x528] sm:$0xff]
        %v384 = vld [vmem:[%s1 + $0x530] sm:$0xff]
        %v385 = vld [vmem:[%s1 + $0x538] sm:$0xff]
        %v386 = vld [vmem:[%s1 + $0x540] sm:$0xff]
        %v387 = vld [vmem:[%s1 + $0x548] sm:$0xff]
        %v388 = vld [vmem:[%s1 + $0x550] sm:$0xff]
        %v389 = vld [vmem:[%s1 + $0x558] sm:$0xff]
        %v390 = vld [vmem:[%s1 + $0x560] sm:$0xff]
        %v391 = vld [vmem:[%s1 + $0x568] sm:$0xff]
        %v392 = vld [vmem:[%s1 + $0x570] sm:$0xff]
        %v393 = vld [vmem:[%s1 + $0x578] sm:$0xff]
        %v394 = vld [vmem:[%s1 + $0x580] sm:$0xff]
        %v395 = vld [vmem:[%s1 + $0x588] sm:$0xff]
        %v396 = vld [vmem:[%s1 + $0x590] sm:$0xff]
        %v397 = vld [vmem:[%s1 + $0x598] sm:$0xff]
        %v398 = vld [vmem:[%s1 + $0x5a0] sm:$0xff]
        %v399 = vld [vmem:[%s1 + $0x5a8] sm:$0xff]
        %v400 = vld [vmem:[%s1 + $0x5b0] sm:$0xff]
        %v401 = vld [vmem:[%s1 + $0x5b8] sm:$0xff]
        %v402 = vld [vmem:[%s1 + $0x5c0] sm:$0xff]
        %v403 = vld [vmem:[%s1 + $0x5c8] sm:$0xff]
        %v404 = vld [vmem:[%s1 + $0x5d0] sm:$0xff]
        %v405 = vld [vmem:[%s1 + $0x5d8] sm:$0xff]
        %v406 = vld [vmem:[%s1 + $0x5e0] sm:$0xff]
        %v407 = vld [vmem:[%s1 + $0x5e8] sm:$0xff]
        %v408 = vld [vmem:[%s1 + $0x5f0] sm:$0xff]
        %v409 = vld [vmem:[%s1 + $0x5f8] sm:$0xff]
        %v410 = vld [vmem:[%s1 + $0x600] sm:$0xff]
        %v411 = vld [vmem:[%s1 + $0x608] sm:$0xff]
        %v412 = vld [vmem:[%s1 + $0x610] sm:$0xff]
        %v413 = vld [vmem:[%s1 + $0x618] sm:$0xff]
        %v414 = vld [vmem:[%s1 + $0x620] sm:$0xff]
        %v415 = vld [vmem:[%s1 + $0x628] sm:$0xff]
        %v416 = vld [vmem:[%s1 + $0x630] sm:$0xff]
        %v417 = vld [vmem:[%s1 + $0x638] sm:$0xff]
        %v418 = vld [vmem:[%s1 + $0x640] sm:$0xff]
        %v419 = vld [vmem:[%s1 + $0x648] sm:$0xff]
        %v420 = vld [vmem:[%s1 + $0x650] sm:$0xff]
        %v421 = vld [vmem:[%s1 + $0x658] sm:$0xff]
        %v422 = vld [vmem:[%s1 + $0x660] sm:$0xff]
        %v423 = vld [vmem:[%s1 + $0x668] sm:$0xff]
        %v424 = vld [vmem:[%s1 + $0x670] sm:$0xff]
        %v425 = vld [vmem:[%s1 + $0x678] sm:$0xff]
        %v426 = vld [vmem:[%s1 + $0x680] sm:$0xff]
        %v427 = vld [vmem:[%s1 + $0x688] sm:$0xff]
        %v428 = vld [vmem:[%s1 + $0x690] sm:$0xff]
        %v429 = vld [vmem:[%s1 + $0x698] sm:$0xff]
        %v430 = vld [vmem:[%s1 + $0x6a0] sm:$0xff]
        %v431 = vld [vmem:[%s1 + $0x6a8] sm:$0xff]
        %v432 = vld [vmem:[%s1 + $0x6b0] sm:$0xff]
        %v433 = vld [vmem:[%s1 + $0x6b8] sm:$0xff]
        %v434 = vld [vmem:[%s1 + $0x6c0] sm:$0xff]
        %v435 = vld [vmem:[%s1 + $0x6c8] sm:$0xff]
        %v436 = vld [vmem:[%s1 + $0x6d0] sm:$0xff]
        %v437 = vld [vmem:[%s1 + $0x6d8] sm:$0xff]
        %v438 = vld [vmem:[%s1 + $0x6e0] sm:$0xff]
        %v439 = vld [vmem:[%s1 + $0x6e8] sm:$0xff]
        %v440 = vld [vmem:[%s1 + $0x6f0] sm:$0xff]
        %v441 = vld [vmem:[%s1 + $0x6f8] sm:$0xff]
        %v442 = vld [vmem:[%s1 + $0x700] sm:$0xff]
        %v443 = vld [vmem:[%s1 + $0x708] sm:$0xff]
        %v444 = vld [vmem:[%s1 + $0x710] sm:$0xff]
        %v445 = vld [vmem:[%s1 + $0x718] sm:$0xff]
        %v446 = vld [vmem:[%s1 + $0x720] sm:$0xff]
        %v447 = vld [vmem:[%s1 + $0x728] sm:$0xff]
        %v448 = vld [vmem:[%s1 + $0x730] sm:$0xff]
        %v449 = vld [vmem:[%s1 + $0x738] sm:$0xff]
        %v450 = vld [vmem:[%s1 + $0x740] sm:$0xff]
        %v451 = vld [vmem:[%s1 + $0x748] sm:$0xff]
        %v452 = vld [vmem:[%s1 + $0x750] sm:$0xff]
        %v453 = vld [vmem:[%s1 + $0x758] sm:$0xff]
        %v454 = vld [vmem:[%s1 + $0x760] sm:$0xff]
        %v455 = vld [vmem:[%s1 + $0x768] sm:$0xff]
        %v456 = vld [vmem:[%s1 + $0x770] sm:$0xff]
        %v457 = vld [vmem:[%s1 + $0x778] sm:$0xff]
        %v458 = vld [vmem:[%s1 + $0x780] sm:$0xff]
        %v459 = vld [vmem:[%s1 + $0x788] sm:$0xff]
        %v460 = vld [vmem:[%s1 + $0x790] sm:$0xff]
        %v461 = vld [vmem:[%s1 + $0x798] sm:$0xff]
        %v462 = vld [vmem:[%s1 + $0x7a0] sm:$0xff]
        %v463 = vld [vmem:[%s1 + $0x7a8] sm:$0xff]
        %v464 = vld [vmem:[%s1 + $0x7b0] sm:$0xff]
        %v465 = vld [vmem:[%s1 + $0x7b8] sm:$0xff]
        %v466 = vld [vmem:[%s1 + $0x7c0] sm:$0xff]
        %v467 = vld [vmem:[%s1 + $0x7c8] sm:$0xff]
        %v468 = vld [vmem:[%s1 + $0x7d0] sm:$0xff]
        %v469 = vld [vmem:[%s1 + $0x7d8] sm:$0xff]
        %v470 = vld [vmem:[%s1 + $0x7e0] sm:$0xff]
        %v471 = vld [vmem:[%s1 + $0x7e8] sm:$0xff]
        %v472 = vld [vmem:[%s1 + $0x7f0] sm:$0xff]
        %v473 = vld [vmem:[%s1 + $0x7f8] sm:$0xff]
        %v474 = vld [vmem:[%s1 + $0x800] sm:$0xff]
        %v475 = vld [vmem:[%s1 + $0x808] sm:$0xff]
        %v476 = vld [vmem:[%s1 + $0x810] sm:$0xff]
        %v477 = vld [vmem:[%s1 + $0x818] sm:$0xff]
        %v478 = vld [vmem:[%s1 + $0x820] sm:$0xff]
        %v479 = vld [vmem:[%s1 + $0x828] sm:$0xff]
        %v480 = vld [vmem:[%s1 + $0x830] sm:$0xff]
        %v481 = vld [vmem:[%s1 + $0x838] sm:$0xff]
        %v482 = vld [vmem:[%s1 + $0x840] sm:$0xff]
        %v483 = vld [vmem:[%s1 + $0x848] sm:$0xff]
        %v484 = vld [vmem:[%s1 + $0x850] sm:$0xff]
        %v485 = vld [vmem:[%s1 + $0x858] sm:$0xff]
        %v486 = vld [vmem:[%s1 + $0x860] sm:$0xff]
        %v487 = vld [vmem:[%s1 + $0x868] sm:$0xff]
        %v488 = vld [vmem:[%s1 + $0x870] sm:$0xff]
        %v489 = vld [vmem:[%s1 + $0x878] sm:$0xff]
        %v490 = vld [vmem:[%s1 + $0x880] sm:$0xff]
        %v491 = vld [vmem:[%s1 + $0x888] sm:$0xff]
        %v492 = vld [vmem:[%s1 + $0x890] sm:$0xff]
        %v493 = vld [vmem:[%s1 + $0x898] sm:$0xff]
        %v494 = vld [vmem:[%s1 + $0x8a0] sm:$0xff]
        %v495 = vld [vmem:[%s1 + $0x8a8] sm:$0xff]
        %v496 = vld [vmem:[%s1 + $0x8b0] sm:$0xff]
        %v497 = vld [vmem:[%s1 + $0x8b8] sm:$0xff]
        %v498 = vld [vmem:[%s1 + $0x8c0] sm:$0xff]
        %v499 = vld [vmem:[%s1 + $0x8c8] sm:$0xff]
        %v500 = vld [vmem:[%s1 + $0x8d0] sm:$0xff]
        %v501 = vld [vmem:[%s1 + $0x8d8] sm:$0xff]
        %v502 = vld [vmem:[%s1 + $0x8e0] sm:$0xff]
        %v503 = vld [vmem:[%s1 + $0x8e8] sm:$0xff]
        %v504 = vld [vmem:[%s1 + $0x8f0] sm:$0xff]
        %v505 = vld [vmem:[%s1 + $0x8f8] sm:$0xff]
        %v506 = vld [vmem:[%s1 + $0x900] sm:$0xff]
        %v507 = vld [vmem:[%s1 + $0x908] sm:$0xff]
        %v508 = vld [vmem:[%s1 + $0x910] sm:$0xff]
        %v509 = vld [vmem:[%s1 + $0x918] sm:$0xff]
        %v510 = vld [vmem:[%s1 + $0x920] sm:$0xff]
        %v511 = vld [vmem:[%s1 + $0x928] sm:$0xff]
        %v512 = vld [vmem:[%s1 + $0x930] sm:$0xff]
        %v513 = vld [vmem:[%s1 + $0x938] sm:$0xff]
        %v514 = vld [vmem:[%s1 + $0x940] sm:$0xff]
        %v515 = vld [vmem:[%s1 + $0x948] sm:$0xff]
        %v516 = vld [vmem:[%s1 + $0x950] sm:$0xff]
        %v517 = vld [vmem:[%s1 + $0x958] sm:$0xff]
        %v518 = vld [vmem:[%s1 + $0x960] sm:$0xff]
        %v519 = vld [vmem:[%s1 + $0x968] sm:$0xff]
        %v520 = vld [vmem:[%s1 + $0x970] sm:$0xff]
        %v521 = vld [vmem:[%s1 + $0x978] sm:$0xff]
        %v522 = vld [vmem:[%s1 + $0x980] sm:$0xff]
        %v523 = vld [vmem:[%s1 + $0x988] sm:$0xff]
        %v524 = vld [vmem:[%s1 + $0x990] sm:$0xff]
        %v525 = vld [vmem:[%s1 + $0x998] sm:$0xff]
        %v526 = vld [vmem:[%s1 + $0x9a0] sm:$0xff]
        %v527 = vld [vmem:[%s1 + $0x9a8] sm:$0xff]
        %v528 = vld [vmem:[%s1 + $0x9b0] sm:$0xff]
        %v529 = vld [vmem:[%s1 + $0x9b8] sm:$0xff]
        %v530 = vld [vmem:[%s1 + $0x9c0] sm:$0xff]
        %v531 = vld [vmem:[%s1 + $0x9c8] sm:$0xff]
        %v532 = vld [vmem:[%s1 + $0x9d0] sm:$0xff]
        %v533 = vld [vmem:[%s1 + $0x9d8] sm:$0xff]
        %v534 = vld [vmem:[%s1 + $0x9e0] sm:$0xff]
        %v535 = vld [vmem:[%s1 + $0x9e8] sm:$0xff]
        %v536 = vld [vmem:[%s1 + $0x9f0] sm:$0xff]
        %v537 = vld [vmem:[%s1 + $0x9f8] sm:$0xff]
        %v538 = vld [vmem:[%s1 + $0xa00] sm:$0xff]
        %v539 = vld [vmem:[%s1 + $0xa08] sm:$0xff]
        %v540 = vld [vmem:[%s1 + $0xa10] sm:$0xff]
        %v541 = vld [vmem:[%s1 + $0xa18] sm:$0xff]
        %v542 = vld [vmem:[%s1 + $0xa20] sm:$0xff]
        %v543 = vld [vmem:[%s1 + $0xa28] sm:$0xff]
        %v544 = vld [vmem:[%s1 + $0xa30] sm:$0xff]
        %v545 = vld [vmem:[%s1 + $0xa38] sm:$0xff]
        %v546 = vld [vmem:[%s1 + $0xa40] sm:$0xff]
        %v547 = vld [vmem:[%s1 + $0xa48] sm:$0xff]
        %v548 = vld [vmem:[%s1 + $0xa50] sm:$0xff]
        %v549 = vld [vmem:[%s1 + $0xa58] sm:$0xff]
        %v550 = vld [vmem:[%s1 + $0xa60] sm:$0xff]
        %v551 = vld [vmem:[%s1 + $0xa68] sm:$0xff]
        %v552 = vld [vmem:[%s1 + $0xa70] sm:$0xff]
        %v553 = vld [vmem:[%s1 + $0xa78] sm:$0xff]
        %v554 = vld [vmem:[%s1 + $0xa80] sm:$0xff]
        %v555 = vld [vmem:[%s1 + $0xa88] sm:$0xff]
        %v556 = vld [vmem:[%s1 + $0xa90] sm:$0xff]
        %v557 = vld [vmem:[%s1 + $0xa98] sm:$0xff]
        %v558 = vld [vmem:[%s1 + $0xaa0] sm:$0xff]
        %v559 = vld [vmem:[%s1 + $0xaa8] sm:$0xff]
        %v560 = vld [vmem:[%s1 + $0xab0] sm:$0xff]
        %v561 = vld [vmem:[%s1 + $0xab8] sm:$0xff]
        %v562 = vld [vmem:[%s1 + $0xac0] sm:$0xff]
        %v563 = vld [vmem:[%s1 + $0xac8] sm:$0xff]
        %v564 = vld [vmem:[%s1 + $0xad0] sm:$0xff]
        %v565 = vld [vmem:[%s1 + $0xad8] sm:$0xff]
        %v566 = vld [vmem:[%s1 + $0xae0] sm:$0xff]
        %v567 = vld [vmem:[%s1 + $0xae8] sm:$0xff]
        %v568 = vld [vmem:[%s1 + $0xaf0] sm:$0xff]
        %v569 = vld [vmem:[%s1 + $0xaf8] sm:$0xff]
        %v570 = vld [vmem:[%s1 + $0xb00] sm:$0xff]
        %v571 = vld [vmem:[%s1 + $0xb08] sm:$0xff]
        %v572 = vld [vmem:[%s1 + $0xb10] sm:$0xff]
        %v573 = vld [vmem:[%s1 + $0xb18] sm:$0xff]
        %v574 = vld [vmem:[%s1 + $0xb20] sm:$0xff]
        %v575 = vld [vmem:[%s1 + $0xb28] sm:$0xff]
        %v576 = vld [vmem:[%s1 + $0xb30] sm:$0xff]
        %v577 = vld [vmem:[%s1 + $0xb38] sm:$0xff]
        %v578 = vld [vmem:[%s1 + $0xb40] sm:$0xff]
        %v579 = vld [vmem:[%s1 + $0xb48] sm:$0xff]
        %v580 = vld [vmem:[%s1 + $0xb50] sm:$0xff]
        %v581 = vld [vmem:[%s1 + $0xb58] sm:$0xff]
        %v582 = vld [vmem:[%s1 + $0xb60] sm:$0xff]
        %v583 = vld [vmem:[%s1 + $0xb68] sm:$0xff]
        %v584 = vld [vmem:[%s1 + $0xb70] sm:$0xff]
        %v585 = vld [vmem:[%s1 + $0xb78] sm:$0xff]
        %v586 = vld [vmem:[%s1 + $0xb80] sm:$0xff]
        %v587 = vld [vmem:[%s1 + $0xb88] sm:$0xff]
        %v588 = vld [vmem:[%s1 + $0xb90] sm:$0xff]
        %v589 = vld [vmem:[%s1 + $0xb98] sm:$0xff]
        %v590 = vld [vmem:[%s1 + $0xba0] sm:$0xff]
        %v591 = vld [vmem:[%s1 + $0xba8] sm:$0xff]
        %v592 = vld [vmem:[%s1 + $0xbb0] sm:$0xff]
        %v593 = vld [vmem:[%s1 + $0xbb8] sm:$0xff]
        %v594 = vld [vmem:[%s1 + $0xbc0] sm:$0xff]
        %v595 = vld [vmem:[%s1 + $0xbc8] sm:$0xff]
        %v596 = vld [vmem:[%s1 + $0xbd0] sm:$0xff]
        %v597 = vld [vmem:[%s1 + $0xbd8] sm:$0xff]
        %v598 = vld [vmem:[%s1 + $0xbe0] sm:$0xff]
        %v599 = vld [vmem:[%s1 + $0xbe8] sm:$0xff]
        %v600 = vld [vmem:[%s1 + $0xbf0] sm:$0xff]
        %v601 = vld [vmem:[%s1 + $0xbf8] sm:$0xff]
        %v602 = vld [vmem:[%s1 + $0xc00] sm:$0xff]
        %v603 = vld [vmem:[%s1 + $0xc08] sm:$0xff]
        %v604 = vld [vmem:[%s1 + $0xc10] sm:$0xff]
        %v605 = vld [vmem:[%s1 + $0xc18] sm:$0xff]
        %v606 = vld [vmem:[%s1 + $0xc20] sm:$0xff]
        %v607 = vld [vmem:[%s1 + $0xc28] sm:$0xff]
        %v608 = vld [vmem:[%s1 + $0xc30] sm:$0xff]
        %v609 = vld [vmem:[%s1 + $0xc38] sm:$0xff]
        %v610 = vld [vmem:[%s1 + $0xc40] sm:$0xff]
        %v611 = vld [vmem:[%s1 + $0xc48] sm:$0xff]
        %v612 = vld [vmem:[%s1 + $0xc50] sm:$0xff]
        %v613 = vld [vmem:[%s1 + $0xc58] sm:$0xff]
        %v614 = vld [vmem:[%s1 + $0xc60] sm:$0xff]
        %v615 = vld [vmem:[%s1 + $0xc68] sm:$0xff]
        %v616 = vld [vmem:[%s1 + $0xc70] sm:$0xff]
        %v617 = vld [vmem:[%s1 + $0xc78] sm:$0xff]
        %v618 = vld [vmem:[%s1 + $0xc80] sm:$0xff]
        %v619 = vld [vmem:[%s1 + $0xc88] sm:$0xff]
        %v620 = vld [vmem:[%s1 + $0xc90] sm:$0xff]
        %v621 = vld [vmem:[%s1 + $0xc98] sm:$0xff]
        %v622 = vld [vmem:[%s1 + $0xca0] sm:$0xff]
        %v623 = vld [vmem:[%s1 + $0xca8] sm:$0xff]
        %v624 = vld [vmem:[%s1 + $0xcb0] sm:$0xff]
        %v625 = vld [vmem:[%s1 + $0xcb8] sm:$0xff]
        %v626 = vld [vmem:[%s1 + $0xcc0] sm:$0xff]
        %v627 = vld [vmem:[%s1 + $0xcc8] sm:$0xff]
        %v628 = vld [vmem:[%s1 + $0xcd0] sm:$0xff]
        %v629 = vld [vmem:[%s1 + $0xcd8] sm:$0xff]
        %v630 = vld [vmem:[%s1 + $0xce0] sm:$0xff]
        %v631 = vld [vmem:[%s1 + $0xce8] sm:$0xff]
        %v632 = vld [vmem:[%s1 + $0xcf0] sm:$0xff]
        %v633 = vld [vmem:[%s1 + $0xcf8] sm:$0xff]
        %v634 = vld [vmem:[%s1 + $0xd00] sm:$0xff]
        %v635 = vld [vmem:[%s1 + $0xd08] sm:$0xff]
        %v636 = vld [vmem:[%s1 + $0xd10] sm:$0xff]
        %v637 = vld [vmem:[%s1 + $0xd18] sm:$0xff]
        %v638 = vld [vmem:[%s1 + $0xd20] sm:$0xff]
        %v639 = vld [vmem:[%s1 + $0xd28] sm:$0xff]
        %v640 = vld [vmem:[%s1 + $0xd30] sm:$0xff]
        %v641 = vld [vmem:[%s1 + $0xd38] sm:$0xff]
        %v642 = vld [vmem:[%s1 + $0xd40] sm:$0xff]
        %v643 = vld [vmem:[%s1 + $0xd48] sm:$0xff]
        %v644 = vld [vmem:[%s1 + $0xd50] sm:$0xff]
        %v645 = vld [vmem:[%s1 + $0xd58] sm:$0xff]
        %v646 = vld [vmem:[%s1 + $0xd60] sm:$0xff]
        %v647 = vld [vmem:[%s1 + $0xd68] sm:$0xff]
        %v648 = vld [vmem:[%s1 + $0xd70] sm:$0xff]
        %v649 = vld [vmem:[%s1 + $0xd78] sm:$0xff]
        %v650 = vld [vmem:[%s1 + $0xd80] sm:$0xff]
        %v651 = vld [vmem:[%s1 + $0xd88] sm:$0xff]
        %v652 = vld [vmem:[%s1 + $0xd90] sm:$0xff]
        %v653 = vld [vmem:[%s1 + $0xd98] sm:$0xff]
        %v654 = vld [vmem:[%s1 + $0xda0] sm:$0xff]
        %v655 = vld [vmem:[%s1 + $0xda8] sm:$0xff]
        %v656 = vld [vmem:[%s1 + $0xdb0] sm:$0xff]
        %v657 = vld [vmem:[%s1 + $0xdb8] sm:$0xff]
        %v658 = vld [vmem:[%s1 + $0xdc0] sm:$0xff]
        %v659 = vld [vmem:[%s1 + $0xdc8] sm:$0xff]
        %v660 = vld [vmem:[%s1 + $0xdd0] sm:$0xff]
        %v661 = vld [vmem:[%s1 + $0xdd8] sm:$0xff]
        %v662 = vld [vmem:[%s1 + $0xde0] sm:$0xff]
        %v663 = vld [vmem:[%s1 + $0xde8] sm:$0xff]
        %v664 = vld [vmem:[%s1 + $0xdf0] sm:$0xff]
        %v665 = vld [vmem:[%s1 + $0xdf8] sm:$0xff]
        %v666 = vld [vmem:[%s1 + $0xe00] sm:$0xff]
        %v667 = vld [vmem:[%s1 + $0xe08] sm:$0xff]
        %v668 = vld [vmem:[%s1 + $0xe10] sm:$0xff]
        %v669 = vld [vmem:[%s1 + $0xe18] sm:$0xff]
        %v670 = vld [vmem:[%s1 + $0xe20] sm:$0xff]
        %v671 = vld [vmem:[%s1 + $0xe28] sm:$0xff]
        %v672 = vld [vmem:[%s1 + $0xe30] sm:$0xff]
        %v673 = vld [vmem:[%s1 + $0xe38] sm:$0xff]
        %v674 = vld [vmem:[%s1 + $0xe40] sm:$0xff]
        %v675 = vld [vmem:[%s1 + $0xe48] sm:$0xff]
        %v676 = vld [vmem:[%s1 + $0xe50] sm:$0xff]
        %v677 = vld [vmem:[%s1 + $0xe58] sm:$0xff]
        %v678 = vld [vmem:[%s1 + $0xe60] sm:$0xff]
        %v679 = vld [vmem:[%s1 + $0xe68] sm:$0xff]
        %v680 = vld [vmem:[%s1 + $0xe70] sm:$0xff]
        %v681 = vld [vmem:[%s1 + $0xe78] sm:$0xff]
        %v682 = vld [vmem:[%s1 + $0xe80] sm:$0xff]
        %v683 = vld [vmem:[%s1 + $0xe88] sm:$0xff]
        %v684 = vld [vmem:[%s1 + $0xe90] sm:$0xff]
        %v685 = vld [vmem:[%s1 + $0xe98] sm:$0xff]
        %v686 = vld [vmem:[%s1 + $0xea0] sm:$0xff]
        %v687 = vld [vmem:[%s1 + $0xea8] sm:$0xff]
        %v688 = vld [vmem:[%s1 + $0xeb0] sm:$0xff]
        %v689 = vld [vmem:[%s1 + $0xeb8] sm:$0xff]
        %v690 = vld [vmem:[%s1 + $0xec0] sm:$0xff]
        %v691 = vld [vmem:[%s1 + $0xec8] sm:$0xff]
        %v692 = vld [vmem:[%s1 + $0xed0] sm:$0xff]
        %v693 = vld [vmem:[%s1 + $0xed8] sm:$0xff]
        %v694 = vld [vmem:[%s1 + $0xee0] sm:$0xff]
        %v695 = vld [vmem:[%s1 + $0xee8] sm:$0xff]
        %v696 = vld [vmem:[%s1 + $0xef0] sm:$0xff]
        %v697 = vld [vmem:[%s1 + $0xef8] sm:$0xff]
        %v698 = vld [vmem:[%s1 + $0xf00] sm:$0xff]
        %v699 = vld [vmem:[%s1 + $0xf08] sm:$0xff]
        %v700 = vld [vmem:[%s1 + $0xf10] sm:$0xff]
        %v701 = vld [vmem:[%s1 + $0xf18] sm:$0xff]
        %v702 = vld [vmem:[%s1 + $0xf20] sm:$0xff]
        %v703 = vld [vmem:[%s1 + $0xf28] sm:$0xff]
        %v704 = vld [vmem:[%s1 + $0xf30] sm:$0xff]
        %v705 = vld [vmem:[%s1 + $0xf38] sm:$0xff]
        %v706 = vld [vmem:[%s1 + $0xf40] sm:$0xff]
        %v707 = vld [vmem:[%s1 + $0xf48] sm:$0xff]
        %v708 = vld [vmem:[%s1 + $0xf50] sm:$0xff]
        %v709 = vld [vmem:[%s1 + $0xf58] sm:$0xff]
        %v710 = vld [vmem:[%s1 + $0xf60] sm:$0xff]
        %v711 = vld [vmem:[%s1 + $0xf68] sm:$0xff]
        %v712 = vld [vmem:[%s1 + $0xf70] sm:$0xff]
        %v713 = vld [vmem:[%s1 + $0xf78] sm:$0xff]
        %v714 = vld [vmem:[%s1 + $0xf80] sm:$0xff]
        %v715 = vld [vmem:[%s1 + $0xf88] sm:$0xff]
        %v716 = vld [vmem:[%s1 + $0xf90] sm:$0xff]
        %v717 = vld [vmem:[%s1 + $0xf98] sm:$0xff]
        %v718 = vld [vmem:[%s1 + $0xfa0] sm:$0xff]
        %v719 = vld [vmem:[%s1 + $0xfa8] sm:$0xff]
        %v720 = vld [vmem:[%s1 + $0xfb0] sm:$0xff]
        %v721 = vld [vmem:[%s1 + $0xfb8] sm:$0xff]
        %v722 = vld [vmem:[%s1 + $0xfc0] sm:$0xff]
        %v723 = vld [vmem:[%s1 + $0xfc8] sm:$0xff]
        %v724 = vld [vmem:[%s1 + $0xfd0] sm:$0xff]
        %v725 = vld [vmem:[%s1 + $0xfd8] sm:$0xff]
        %v726 = vld [vmem:[%s1 + $0xfe0] sm:$0xff]
        %v727 = vld [vmem:[%s1 + $0xfe8] sm:$0xff]
        %v728 = vld [vmem:[%s1 + $0xff0] sm:$0xff]
        %v729 = vld [vmem:[%s1 + $0xff8] sm:$0xff]
        %v730 = vld [vmem:[%s1 + $0x1000] sm:$0xff]
        %v731 = vld [vmem:[%s1 + $0x1008] sm:$0xff]
        %v732 = vld [vmem:[%s1 + $0x1010] sm:$0xff]
        %v733 = vld [vmem:[%s1 + $0x1018] sm:$0xff]
        %v734 = vld [vmem:[%s1 + $0x1020] sm:$0xff]
        %v735 = vld [vmem:[%s1 + $0x1028] sm:$0xff]
        %v736 = vld [vmem:[%s1 + $0x1030] sm:$0xff]
        %v737 = vld [vmem:[%s1 + $0x1038] sm:$0xff]
        %v738 = vld [vmem:[%s1 + $0x1040] sm:$0xff]
        %v739 = vld [vmem:[%s1 + $0x1048] sm:$0xff]
        %v740 = vld [vmem:[%s1 + $0x1050] sm:$0xff]
        %v741 = vld [vmem:[%s1 + $0x1058] sm:$0xff]
        %v742 = vld [vmem:[%s1 + $0x1060] sm:$0xff]
        %v743 = vld [vmem:[%s1 + $0x1068] sm:$0xff]
        %v744 = vld [vmem:[%s1 + $0x1070] sm:$0xff]
        %v745 = vld [vmem:[%s1 + $0x1078] sm:$0xff]
        %v746 = vld [vmem:[%s1 + $0x1080] sm:$0xff]
        %v747 = vld [vmem:[%s1 + $0x1088] sm:$0xff]
        %v748 = vld [vmem:[%s1 + $0x1090] sm:$0xff]
        %v749 = vld [vmem:[%s1 + $0x1098] sm:$0xff]
        %v750 = vld [vmem:[%s1 + $0x10a0] sm:$0xff]
        %v751 = vld [vmem:[%s1 + $0x10a8] sm:$0xff]
        %v752 = vld [vmem:[%s1 + $0x10b0] sm:$0xff]
        %v753 = vld [vmem:[%s1 + $0x10b8] sm:$0xff]
        %v754 = vld [vmem:[%s1 + $0x10c0] sm:$0xff]
        %v755 = vld [vmem:[%s1 + $0x10c8] sm:$0xff]
        %v756 = vld [vmem:[%s1 + $0x10d0] sm:$0xff]
        %v757 = vld [vmem:[%s1 + $0x10d8] sm:$0xff]
        %v758 = vld [vmem:[%s1 + $0x10e0] sm:$0xff]
        %v759 = vld [vmem:[%s1 + $0x10e8] sm:$0xff]
        %v760 = vld [vmem:[%s1 + $0x10f0] sm:$0xff]
        %v761 = vld [vmem:[%s1 + $0x10f8] sm:$0xff]
        %v762 = vld [vmem:[%s1 + $0x1100] sm:$0xff]
        %v763 = vld [vmem:[%s1 + $0x1108] sm:$0xff]
        %v764 = vld [vmem:[%s1 + $0x1110] sm:$0xff]
        %v765 = vld [vmem:[%s1 + $0x1118] sm:$0xff]
        %v766 = vld [vmem:[%s1 + $0x1120] sm:$0xff]
        %v767 = vld [vmem:[%s1 + $0x1128] sm:$0xff]
        %v768 = vld [vmem:[%s1 + $0x1130] sm:$0xff]
        %v769 = vld [vmem:[%s1 + $0x1138] sm:$0xff]
        %v770 = vld [vmem:[%s1 + $0x1140] sm:$0xff]
        %v771 = vld [vmem:[%s1 + $0x1148] sm:$0xff]
        %v772 = vld [vmem:[%s1 + $0x1150] sm:$0xff]
        %v773 = vld [vmem:[%s1 + $0x1158] sm:$0xff]
        %v774 = vld [vmem:[%s1 + $0x1160] sm:$0xff]
        %v775 = vld [vmem:[%s1 + $0x1168] sm:$0xff]
        %v776 = vld [vmem:[%s1 + $0x1170] sm:$0xff]
        %v777 = vld [vmem:[%s1 + $0x1178] sm:$0xff]
        %v778 = vld [vmem:[%s1 + $0x1180] sm:$0xff]
        %v779 = vld [vmem:[%s1 + $0x1188] sm:$0xff]
        %v780 = vld [vmem:[%s1 + $0x1190] sm:$0xff]
        %v781 = vld [vmem:[%s1 + $0x1198] sm:$0xff]
        %v782 = vld [vmem:[%s1 + $0x11a0] sm:$0xff]
        %v783 = vld [vmem:[%s1 + $0x11a8] sm:$0xff]
        %v784 = vld [vmem:[%s1 + $0x11b0] sm:$0xff]
        %v785 = vld [vmem:[%s1 + $0x11b8] sm:$0xff]
        %v786 = vld [vmem:[%s1 + $0x11c0] sm:$0xff]
        %v787 = vld [vmem:[%s1 + $0x11c8] sm:$0xff]
        %v788 = vld [vmem:[%s1 + $0x11d0] sm:$0xff]
        %v789 = vld [vmem:[%s1 + $0x11d8] sm:$0xff]
        %v790 = vld [vmem:[%s1 + $0x11e0] sm:$0xff]
        %v791 = vld [vmem:[%s1 + $0x11e8] sm:$0xff]
        %v792 = vld [vmem:[%s1 + $0x11f0] sm:$0xff]
        %v793 = vld [vmem:[%s1 + $0x11f8] sm:$0xff]
        %v794 = vld [vmem:[%s1 + $0x1200] sm:$0xff]
        %v795 = vld [vmem:[%s1 + $0x1208] sm:$0xff]
        %v796 = vld [vmem:[%s1 + $0x1210] sm:$0xff]
        %v797 = vld [vmem:[%s1 + $0x1218] sm:$0xff]
        %v798 = vld [vmem:[%s1 + $0x1220] sm:$0xff]
        %v799 = vld [vmem:[%s1 + $0x1228] sm:$0xff]
        %v800 = vld [vmem:[%s1 + $0x1230] sm:$0xff]
        %v801 = vld [vmem:[%s1 + $0x1238] sm:$0xff]
        %v802 = vld [vmem:[%s1 + $0x1240] sm:$0xff]
        %v803 = vld [vmem:[%s1 + $0x1248] sm:$0xff]
        %v804 = vld [vmem:[%s1 + $0x1250] sm:$0xff]
        %v805 = vld [vmem:[%s1 + $0x1258] sm:$0xff]
        %v806 = vld [vmem:[%s1 + $0x1260] sm:$0xff]
        %v807 = vld [vmem:[%s1 + $0x1268] sm:$0xff]
        %v808 = vld [vmem:[%s1 + $0x1270] sm:$0xff]
        %v809 = vld [vmem:[%s1 + $0x1278] sm:$0xff]
        %v810 = vld [vmem:[%s1 + $0x1280] sm:$0xff]
        %v811 = vld [vmem:[%s1 + $0x1288] sm:$0xff]
        %v812 = vld [vmem:[%s1 + $0x1290] sm:$0xff]
        %v813 = vld [vmem:[%s1 + $0x1298] sm:$0xff]
        %v814 = vld [vmem:[%s1 + $0x12a0] sm:$0xff]
        %v815 = vld [vmem:[%s1 + $0x12a8] sm:$0xff]
        %v816 = vld [vmem:[%s1 + $0x12b0] sm:$0xff]
        %v817 = vld [vmem:[%s1 + $0x12b8] sm:$0xff]
        %v818 = vld [vmem:[%s1 + $0x12c0] sm:$0xff]
        %v819 = vld [vmem:[%s1 + $0x12c8] sm:$0xff]
        %v820 = vld [vmem:[%s1 + $0x12d0] sm:$0xff]
        %v821 = vld [vmem:[%s1 + $0x12d8] sm:$0xff]
        %v822 = vld [vmem:[%s1 + $0x12e0] sm:$0xff]
        %v823 = vld [vmem:[%s1 + $0x12e8] sm:$0xff]
        %v824 = vld [vmem:[%s1 + $0x12f0] sm:$0xff]
        %v825 = vld [vmem:[%s1 + $0x12f8] sm:$0xff]
        %v826 = vld [vmem:[%s1 + $0x1300] sm:$0xff]
        %v827 = vld [vmem:[%s1 + $0x1308] sm:$0xff]
        %v828 = vld [vmem:[%s1 + $0x1310] sm:$0xff]
        %v829 = vld [vmem:[%s1 + $0x1318] sm:$0xff]
        %v830 = vld [vmem:[%s1 + $0x1320] sm:$0xff]
        %v831 = vld [vmem:[%s1 + $0x1328] sm:$0xff]
        %v832 = vld [vmem:[%s1 + $0x1330] sm:$0xff]
        %v833 = vld [vmem:[%s1 + $0x1338] sm:$0xff]
        %v834 = vld [vmem:[%s1 + $0x1340] sm:$0xff]
        %v835 = vld [vmem:[%s1 + $0x1348] sm:$0xff]
        %v836 = vld [vmem:[%s1 + $0x1350] sm:$0xff]
        %v837 = vld [vmem:[%s1 + $0x1358] sm:$0xff]
        %v838 = vld [vmem:[%s1 + $0x1360] sm:$0xff]
        %v839 = vld [vmem:[%s1 + $0x1368] sm:$0xff]
        %v840 = vld [vmem:[%s1 + $0x1370] sm:$0xff]
        %v841 = vld [vmem:[%s1 + $0x1378] sm:$0xff]
        %v842 = vld [vmem:[%s1 + $0x1380] sm:$0xff]
        %v843 = vld [vmem:[%s1 + $0x1388] sm:$0xff]
        %v844 = vld [vmem:[%s1 + $0x1390] sm:$0xff]
        %v845 = vld [vmem:[%s1 + $0x1398] sm:$0xff]
        %v846 = vld [vmem:[%s1 + $0x13a0] sm:$0xff]
        %v847 = vld [vmem:[%s1 + $0x13a8] sm:$0xff]
        %v848 = vld [vmem:[%s1 + $0x13b0] sm:$0xff]
        %v849 = vld [vmem:[%s1 + $0x13b8] sm:$0xff]
        %v850 = vld [vmem:[%s1 + $0x13c0] sm:$0xff]
        %v851 = vld [vmem:[%s1 + $0x13c8] sm:$0xff]
        %v852 = vld [vmem:[%s1 + $0x13d0] sm:$0xff]
        %v853 = vld [vmem:[%s1 + $0x13d8] sm:$0xff]
        %v854 = vld [vmem:[%s1 + $0x13e0] sm:$0xff]
        %v855 = vld [vmem:[%s1 + $0x13e8] sm:$0xff]
        %v856 = vld [vmem:[%s1 + $0x13f0] sm:$0xff]
        %v857 = vld [vmem:[%s1 + $0x13f8] sm:$0xff]
        %v858 = vld [vmem:[%s1 + $0x1400] sm:$0xff]
        %v859 = vld [vmem:[%s1 + $0x1408] sm:$0xff]
        %v860 = vld [vmem:[%s1 + $0x1410] sm:$0xff]
        %v861 = vld [vmem:[%s1 + $0x1418] sm:$0xff]
        %v862 = vld [vmem:[%s1 + $0x1420] sm:$0xff]
        %v863 = vld [vmem:[%s1 + $0x1428] sm:$0xff]
        %v864 = vld [vmem:[%s1 + $0x1430] sm:$0xff]
        %v865 = vld [vmem:[%s1 + $0x1438] sm:$0xff]
        %v866 = vld [vmem:[%s1 + $0x1440] sm:$0xff]
        %v867 = vld [vmem:[%s1 + $0x1448] sm:$0xff]
        %v868 = vld [vmem:[%s1 + $0x1450] sm:$0xff]
        %v869 = vld [vmem:[%s1 + $0x1458] sm:$0xff]
        %v870 = vld [vmem:[%s1 + $0x1460] sm:$0xff]
        %v871 = vld [vmem:[%s1 + $0x1468] sm:$0xff]
        %v872 = vld [vmem:[%s1 + $0x1470] sm:$0xff]
        %v873 = vld [vmem:[%s1 + $0x1478] sm:$0xff]
        %v874 = vld [vmem:[%s1 + $0x1480] sm:$0xff]
        %v875 = vld [vmem:[%s1 + $0x1488] sm:$0xff]
        %v876 = vld [vmem:[%s1 + $0x1490] sm:$0xff]
        %v877 = vld [vmem:[%s1 + $0x1498] sm:$0xff]
        %v878 = vld [vmem:[%s1 + $0x14a0] sm:$0xff]
        %v879 = vld [vmem:[%s1 + $0x14a8] sm:$0xff]
        %v880 = vld [vmem:[%s1 + $0x14b0] sm:$0xff]
        %v881 = vld [vmem:[%s1 + $0x14b8] sm:$0xff]
        %v882 = vld [vmem:[%s1 + $0x14c0] sm:$0xff]
        %v883 = vld [vmem:[%s1 + $0x14c8] sm:$0xff]
        %v884 = vld [vmem:[%s1 + $0x14d0] sm:$0xff]
        %v885 = vld [vmem:[%s1 + $0x14d8] sm:$0xff]
        %v886 = vld [vmem:[%s1 + $0x14e0] sm:$0xff]
        %v887 = vld [vmem:[%s1 + $0x14e8] sm:$0xff]
        %v888 = vld [vmem:[%s1 + $0x14f0] sm:$0xff]
        %v889 = vld [vmem:[%s1 + $0x14f8] sm:$0xff]
        %v890 = vld [vmem:[%s1 + $0x1500] sm:$0xff]
        %v891 = vld [vmem:[%s1 + $0x1508] sm:$0xff]
        %v892 = vld [vmem:[%s1 + $0x1510] sm:$0xff]
        %v893 = vld [vmem:[%s1 + $0x1518] sm:$0xff]
        %v894 = vld [vmem:[%s1 + $0x1520] sm:$0xff]
        %v895 = vld [vmem:[%s1 + $0x1528] sm:$0xff]
        %v896 = vld [vmem:[%s1 + $0x1530] sm:$0xff]
        %v897 = vld [vmem:[%s1 + $0x1538] sm:$0xff]
        %v898 = vld [vmem:[%s1 + $0x1540] sm:$0xff]
        %v899 = vld [vmem:[%s1 + $0x1548] sm:$0xff]
        %v900 = vld [vmem:[%s1 + $0x1550] sm:$0xff]
        %v901 = vld [vmem:[%s1 + $0x1558] sm:$0xff]
        %v902 = vld [vmem:[%s1 + $0x1560] sm:$0xff]
        %v903 = vld [vmem:[%s1 + $0x1568] sm:$0xff]
        %v904 = vld [vmem:[%s1 + $0x1570] sm:$0xff]
        %v905 = vld [vmem:[%s1 + $0x1578] sm:$0xff]
        %v906 = vld [vmem:[%s1 + $0x1580] sm:$0xff]
        %v907 = vld [vmem:[%s1 + $0x1588] sm:$0xff]
        %v908 = vld [vmem:[%s1 + $0x1590] sm:$0xff]
        %v909 = vld [vmem:[%s1 + $0x1598] sm:$0xff]
        %v910 = vld [vmem:[%s1 + $0x15a0] sm:$0xff]
        %v911 = vld [vmem:[%s1 + $0x15a8] sm:$0xff]
        %v912 = vld [vmem:[%s1 + $0x15b0] sm:$0xff]
        %v913 = vld [vmem:[%s1 + $0x15b8] sm:$0xff]
        %v914 = vld [vmem:[%s1 + $0x15c0] sm:$0xff]
        %v915 = vld [vmem:[%s1 + $0x15c8] sm:$0xff]
        %v916 = vld [vmem:[%s1 + $0x15d0] sm:$0xff]
        %v917 = vld [vmem:[%s1 + $0x15d8] sm:$0xff]
        %v918 = vld [vmem:[%s1 + $0x15e0] sm:$0xff]
        %v919 = vld [vmem:[%s1 + $0x15e8] sm:$0xff]
        %v920 = vld [vmem:[%s1 + $0x15f0] sm:$0xff]
        %v921 = vld [vmem:[%s1 + $0x15f8] sm:$0xff]
        %v922 = vld [vmem:[%s1 + $0x1600] sm:$0xff]
        %v923 = vld [vmem:[%s1 + $0x1608] sm:$0xff]
        %v924 = vld [vmem:[%s1 + $0x1610] sm:$0xff]
        %v925 = vld [vmem:[%s1 + $0x1618] sm:$0xff]
        %v926 = vld [vmem:[%s1 + $0x1620] sm:$0xff]
        %v927 = vld [vmem:[%s1 + $0x1628] sm:$0xff]
        %v928 = vld [vmem:[%s1 + $0x1630] sm:$0xff]
        %v929 = vld [vmem:[%s1 + $0x1638] sm:$0xff]
        %v930 = vld [vmem:[%s1 + $0x1640] sm:$0xff]
        %v931 = vld [vmem:[%s1 + $0x1648] sm:$0xff]
        %v932 = vld [vmem:[%s1 + $0x1650] sm:$0xff]
        %v933 = vld [vmem:[%s1 + $0x1658] sm:$0xff]
        %v934 = vld [vmem:[%s1 + $0x1660] sm:$0xff]
        %v935 = vld [vmem:[%s1 + $0x1668] sm:$0xff]
        %v936 = vld [vmem:[%s1 + $0x1670] sm:$0xff]
        %v937 = vld [vmem:[%s1 + $0x1678] sm:$0xff]
        %v938 = vld [vmem:[%s1 + $0x1680] sm:$0xff]
        %v939 = vld [vmem:[%s1 + $0x1688] sm:$0xff]
        %v940 = vld [vmem:[%s1 + $0x1690] sm:$0xff]
        %v941 = vld [vmem:[%s1 + $0x1698] sm:$0xff]
        %v942 = vld [vmem:[%s1 + $0x16a0] sm:$0xff]
        %v943 = vld [vmem:[%s1 + $0x16a8] sm:$0xff]
        %v944 = vld [vmem:[%s1 + $0x16b0] sm:$0xff]
        %v945 = vld [vmem:[%s1 + $0x16b8] sm:$0xff]
        %v946 = vld [vmem:[%s1 + $0x16c0] sm:$0xff]
        %v947 = vld [vmem:[%s1 + $0x16c8] sm:$0xff]
        %v948 = vld [vmem:[%s1 + $0x16d0] sm:$0xff]
        %v949 = vld [vmem:[%s1 + $0x16d8] sm:$0xff]
        %v950 = vld [vmem:[%s1 + $0x16e0] sm:$0xff]
        %v951 = vld [vmem:[%s1 + $0x16e8] sm:$0xff]
        %v952 = vld [vmem:[%s1 + $0x16f0] sm:$0xff]
        %v953 = vld [vmem:[%s1 + $0x16f8] sm:$0xff]
        %v954 = vld [vmem:[%s1 + $0x1700] sm:$0xff]
        %v955 = vld [vmem:[%s1 + $0x1708] sm:$0xff]
        %v956 = vld [vmem:[%s1 + $0x1710] sm:$0xff]
        %v957 = vld [vmem:[%s1 + $0x1718] sm:$0xff]
        %v958 = vld [vmem:[%s1 + $0x1720] sm:$0xff]
        %v959 = vld [vmem:[%s1 + $0x1728] sm:$0xff]
        %v960 = vld [vmem:[%s1 + $0x1730] sm:$0xff]
        %v961 = vld [vmem:[%s1 + $0x1738] sm:$0xff]
        %v962 = vld [vmem:[%s1 + $0x1740] sm:$0xff]
        %v963 = vld [vmem:[%s1 + $0x1748] sm:$0xff]
        %v964 = vld [vmem:[%s1 + $0x1750] sm:$0xff]
        %v965 = vld [vmem:[%s1 + $0x1758] sm:$0xff]
        %v966 = vld [vmem:[%s1 + $0x1760] sm:$0xff]
        %v967 = vld [vmem:[%s1 + $0x1768] sm:$0xff]
        %v968 = vld [vmem:[%s1 + $0x1770] sm:$0xff]
        %v969 = vld [vmem:[%s1 + $0x1778] sm:$0xff]
        %v970 = vld [vmem:[%s1 + $0x1780] sm:$0xff]
        %v971 = vld [vmem:[%s1 + $0x1788] sm:$0xff]
        %v972 = vld [vmem:[%s1 + $0x1790] sm:$0xff]
        %v973 = vld [vmem:[%s1 + $0x1798] sm:$0xff]
        %v974 = vld [vmem:[%s1 + $0x17a0] sm:$0xff]
        %v975 = vld [vmem:[%s1 + $0x17a8] sm:$0xff]
        %v976 = vld [vmem:[%s1 + $0x17b0] sm:$0xff]
        %v977 = vld [vmem:[%s1 + $0x17b8] sm:$0xff]
        %v978 = vld [vmem:[%s1 + $0x17c0] sm:$0xff]
        %v979 = vld [vmem:[%s1 + $0x17c8] sm:$0xff]
        %v980 = vld [vmem:[%s1 + $0x17d0] sm:$0xff]
        %v981 = vld [vmem:[%s1 + $0x17d8] sm:$0xff]
        %v982 = vld [vmem:[%s1 + $0x17e0] sm:$0xff]
        %v983 = vld [vmem:[%s1 + $0x17e8] sm:$0xff]
        %v984 = vld [vmem:[%s1 + $0x17f0] sm:$0xff]
        %v985 = vld [vmem:[%s1 + $0x17f8] sm:$0xff]
        %v986 = vld [vmem:[%s1 + $0x1800] sm:$0xff]
        %v987 = vld [vmem:[%s1 + $0x1808] sm:$0xff]
        %v988 = vld [vmem:[%s1 + $0x1810] sm:$0xff]
        %v989 = vld [vmem:[%s1 + $0x1818] sm:$0xff]
        %v990 = vld [vmem:[%s1 + $0x1820] sm:$0xff]
        %v991 = vld [vmem:[%s1 + $0x1828] sm:$0xff]
        %v992 = vld [vmem:[%s1 + $0x1830] sm:$0xff]
        %v993 = vld [vmem:[%s1 + $0x1838] sm:$0xff]
        %v994 = vld [vmem:[%s1 + $0x1840] sm:$0xff]
        %v995 = vld [vmem:[%s1 + $0x1848] sm:$0xff]
        %v996 = vld [vmem:[%s1 + $0x1850] sm:$0xff]
        %v997 = vld [vmem:[%s1 + $0x1858] sm:$0xff]
        %v998 = vld [vmem:[%s1 + $0x1860] sm:$0xff]
        %v999 = vld [vmem:[%s1 + $0x1868] sm:$0xff]
        %v1000 = vld [vmem:[%s1 + $0x1870] sm:$0xff]
        %v1001 = vld [vmem:[%s1 + $0x1878] sm:$0xff]
        %v1002 = vld [vmem:[%s2] sm:$0x1]
        %v1004 = vlaneseq
        %v1005 = vshrl.u32 %v1004, 7
        %v1006 = vsub.s32 0, %v1005
        %v1007 = vrot.slane %v1002, %v1006
        %1009 = vmatprep.subr.mxu0 0.0
        %1010 = vmatpush1.msra.mxu0 %v233
        %1011 = vmatprep.subr.mxu0 0.0
        %1012 = vmatpush1.msra.mxu0 %v232
        %1013 = vmatprep.subr.mxu0 0.0
        %1014 = vmatpush1.msra.mxu0 %v231
        %1015 = vmatprep.subr.mxu0 0.0
        %1016 = vmatpush1.msra.mxu0 %v230
        %1017 = vmatprep.subr.mxu0 0.0
        %1018 = vmatpush1.msra.mxu0 %v229
        %1019 = vmatprep.subr.mxu0 0.0
        %1020 = vmatpush1.msra.mxu0 %v228
        %1021 = vmatprep.subr.mxu0 0.0
        %1022 = vmatpush1.msra.mxu0 %v227
        %1023 = vmatprep.subr.mxu0 0.0
        %1024 = vmatpush1.msra.mxu0 %v226
        %1025 = vmatprep.subr.mxu0 0.0
        %1026 = vmatpush1.msra.mxu0 %v225
        %1027 = vmatprep.subr.mxu0 0.0
        %1028 = vmatpush1.msra.mxu0 %v224
        %1029 = vmatprep.subr.mxu0 0.0
        %1030 = vmatpush1.msra.mxu0 %v223
        %1031 = vmatprep.subr.mxu0 0.0
        %1032 = vmatpush1.msra.mxu0 %v222
        %1033 = vmatprep.subr.mxu0 0.0
        %1034 = vmatpush1.msra.mxu0 %v221
        %1035 = vmatprep.subr.mxu0 0.0
        %1036 = vmatpush1.msra.mxu0 %v220
        %1037 = vmatprep.subr.mxu0 0.0
        %1038 = vmatpush1.msra.mxu0 %v219
        %1039 = vmatprep.subr.mxu0 0.0
        %1040 = vmatpush1.msra.mxu0 %v218
        %1041 = vmatprep.subr.mxu0 0.0
        %1042 = vmatpush2.msra.mxu0 %v249
        %1043 = vmatprep.subr.mxu0 0.0
        %1044 = vmatpush2.msra.mxu0 %v248
        %1045 = vmatprep.subr.mxu0 0.0
        %1046 = vmatpush2.msra.mxu0 %v247
        %1047 = vmatprep.subr.mxu0 0.0
        %1048 = vmatpush2.msra.mxu0 %v246
        %1049 = vmatprep.subr.mxu0 0.0
        %1050 = vmatpush2.msra.mxu0 %v245
        %1051 = vmatprep.subr.mxu0 0.0
        %1052 = vmatpush2.msra.mxu0 %v244
        %1053 = vmatprep.subr.mxu0 0.0
        %1054 = vmatpush2.msra.mxu0 %v243
        %1055 = vmatprep.subr.mxu0 0.0
        %1056 = vmatpush2.msra.mxu0 %v242
        %1057 = vmatprep.subr.mxu0 0.0
        %1058 = vmatpush2.msra.mxu0 %v241
        %1059 = vmatprep.subr.mxu0 0.0
        %1060 = vmatpush2.msra.mxu0 %v240
        %1061 = vmatprep.subr.mxu0 0.0
        %1062 = vmatpush2.msra.mxu0 %v239
        %1063 = vmatprep.subr.mxu0 0.0
        %1064 = vmatpush2.msra.mxu0 %v238
        %1065 = vmatprep.subr.mxu0 0.0
        %1066 = vmatpush2.msra.mxu0 %v237
        %1067 = vmatprep.subr.mxu0 0.0
        %1068 = vmatpush2.msra.mxu0 %v236
        %1069 = vmatprep.subr.mxu0 0.0
        %1070 = vmatpush2.msra.mxu0 %v235
        %1071 = vmatprep.subr.mxu0 0.0
        %1072 = vmatpush2.msra.mxu0 %v234
        %1073 = vmatprep.mubr.f32.mxu0 %v170
        %1074 = vmatmul.mubr.f32.gmra.mxu0 %v169
        %v1075 = vpop.f32.mrf.mxu0
        %v1076 = vadd.f32 %v1007, %v1075
        %v1077 = vpop.f32.mrf.mxu0
        %1078 = vdwg.mxu0
        %1079 = vmatprep.subr.mxu0 0.0
        %1080 = vmatpush1.msra.mxu0 %v265
        %1081 = vmatprep.subr.mxu0 0.0
        %1082 = vmatpush1.msra.mxu0 %v264
        %1083 = vmatprep.subr.mxu0 0.0
        %1084 = vmatpush1.msra.mxu0 %v263
        %1085 = vmatprep.subr.mxu0 0.0
        %1086 = vmatpush1.msra.mxu0 %v262
        %1087 = vmatprep.subr.mxu0 0.0
        %1088 = vmatpush1.msra.mxu0 %v261
        %1089 = vmatprep.subr.mxu0 0.0
        %1090 = vmatpush1.msra.mxu0 %v260
        %1091 = vmatprep.subr.mxu0 0.0
        %1092 = vmatpush1.msra.mxu0 %v259
        %1093 = vmatprep.subr.mxu0 0.0
        %1094 = vmatpush1.msra.mxu0 %v258
        %1095 = vmatprep.subr.mxu0 0.0
        %1096 = vmatpush1.msra.mxu0 %v257
        %1097 = vmatprep.subr.mxu0 0.0
        %1098 = vmatpush1.msra.mxu0 %v256
        %1099 = vmatprep.subr.mxu0 0.0
        %1100 = vmatpush1.msra.mxu0 %v255
        %1101 = vmatprep.subr.mxu0 0.0
        %1102 = vmatpush1.msra.mxu0 %v254
        %1103 = vmatprep.subr.mxu0 0.0
        %1104 = vmatpush1.msra.mxu0 %v253
        %1105 = vmatprep.subr.mxu0 0.0
        %1106 = vmatpush1.msra.mxu0 %v252
        %1107 = vmatprep.subr.mxu0 0.0
        %1108 = vmatpush1.msra.mxu0 %v251
        %1109 = vmatprep.subr.mxu0 0.0
        %1110 = vmatpush1.msra.mxu0 %v250
        %1111 = vmatprep.subr.mxu0 0.0
        %1112 = vmatpush2.msra.mxu0 %v281
        %1113 = vmatprep.subr.mxu0 0.0
        %1114 = vmatpush2.msra.mxu0 %v280
        %1115 = vmatprep.subr.mxu0 0.0
        %1116 = vmatpush2.msra.mxu0 %v279
        %1117 = vmatprep.subr.mxu0 0.0
        %1118 = vmatpush2.msra.mxu0 %v278
        %1119 = vmatprep.subr.mxu0 0.0
        %1120 = vmatpush2.msra.mxu0 %v277
        %1121 = vmatprep.subr.mxu0 0.0
        %1122 = vmatpush2.msra.mxu0 %v276
        %1123 = vmatprep.subr.mxu0 0.0
        %1124 = vmatpush2.msra.mxu0 %v275
        %1125 = vmatprep.subr.mxu0 0.0
        %1126 = vmatpush2.msra.mxu0 %v274
        %1127 = vmatprep.subr.mxu0 0.0
        %1128 = vmatpush2.msra.mxu0 %v273
        %1129 = vmatprep.subr.mxu0 0.0
        %1130 = vmatpush2.msra.mxu0 %v272
        %1131 = vmatprep.subr.mxu0 0.0
        %1132 = vmatpush2.msra.mxu0 %v271
        %1133 = vmatprep.subr.mxu0 0.0
        %1134 = vmatpush2.msra.mxu0 %v270
        %1135 = vmatprep.subr.mxu0 0.0
        %1136 = vmatpush2.msra.mxu0 %v269
        %1137 = vmatprep.subr.mxu0 0.0
        %1138 = vmatpush2.msra.mxu0 %v268
        %1139 = vmatprep.subr.mxu0 0.0
        %1140 = vmatpush2.msra.mxu0 %v267
        %1141 = vmatprep.subr.mxu0 0.0
        %1142 = vmatpush2.msra.mxu0 %v266
        %1143 = vmatprep.mubr.f32.mxu0 %v172
        %1144 = vmatmul.mubr.f32.gmra.mxu0 %v171
        %v1145 = vpop.f32.mrf.mxu0
        %v1146 = vadd.f32 %v1076, %v1145
        %v1147 = vpop.f32.mrf.mxu0
        %1148 = vdwg.mxu0
        %1149 = vmatprep.subr.mxu0 0.0
        %1150 = vmatpush1.msra.mxu0 %v297
        %1151 = vmatprep.subr.mxu0 0.0
        %1152 = vmatpush1.msra.mxu0 %v296
        %1153 = vmatprep.subr.mxu0 0.0
        %1154 = vmatpush1.msra.mxu0 %v295
        %1155 = vmatprep.subr.mxu0 0.0
        %1156 = vmatpush1.msra.mxu0 %v294
        %1157 = vmatprep.subr.mxu0 0.0
        %1158 = vmatpush1.msra.mxu0 %v293
        %1159 = vmatprep.subr.mxu0 0.0
        %1160 = vmatpush1.msra.mxu0 %v292
        %1161 = vmatprep.subr.mxu0 0.0
        %1162 = vmatpush1.msra.mxu0 %v291
        %1163 = vmatprep.subr.mxu0 0.0
        %1164 = vmatpush1.msra.mxu0 %v290
        %1165 = vmatprep.subr.mxu0 0.0
        %1166 = vmatpush1.msra.mxu0 %v289
        %1167 = vmatprep.subr.mxu0 0.0
        %1168 = vmatpush1.msra.mxu0 %v288
        %1169 = vmatprep.subr.mxu0 0.0
        %1170 = vmatpush1.msra.mxu0 %v287
        %1171 = vmatprep.subr.mxu0 0.0
        %1172 = vmatpush1.msra.mxu0 %v286
        %1173 = vmatprep.subr.mxu0 0.0
        %1174 = vmatpush1.msra.mxu0 %v285
        %1175 = vmatprep.subr.mxu0 0.0
        %1176 = vmatpush1.msra.mxu0 %v284
        %1177 = vmatprep.subr.mxu0 0.0
        %1178 = vmatpush1.msra.mxu0 %v283
        %1179 = vmatprep.subr.mxu0 0.0
        %1180 = vmatpush1.msra.mxu0 %v282
        %1181 = vmatprep.subr.mxu0 0.0
        %1182 = vmatpush2.msra.mxu0 %v313
        %1183 = vmatprep.subr.mxu0 0.0
        %1184 = vmatpush2.msra.mxu0 %v312
        %1185 = vmatprep.subr.mxu0 0.0
        %1186 = vmatpush2.msra.mxu0 %v311
        %1187 = vmatprep.subr.mxu0 0.0
        %1188 = vmatpush2.msra.mxu0 %v310
        %1189 = vmatprep.subr.mxu0 0.0
        %1190 = vmatpush2.msra.mxu0 %v309
        %1191 = vmatprep.subr.mxu0 0.0
        %1192 = vmatpush2.msra.mxu0 %v308
        %1193 = vmatprep.subr.mxu0 0.0
        %1194 = vmatpush2.msra.mxu0 %v307
        %1195 = vmatprep.subr.mxu0 0.0
        %1196 = vmatpush2.msra.mxu0 %v306
        %1197 = vmatprep.subr.mxu0 0.0
        %1198 = vmatpush2.msra.mxu0 %v305
        %1199 = vmatprep.subr.mxu0 0.0
        %1200 = vmatpush2.msra.mxu0 %v304
        %1201 = vmatprep.subr.mxu0 0.0
        %1202 = vmatpush2.msra.mxu0 %v303
        %1203 = vmatprep.subr.mxu0 0.0
        %1204 = vmatpush2.msra.mxu0 %v302
        %1205 = vmatprep.subr.mxu0 0.0
        %1206 = vmatpush2.msra.mxu0 %v301
        %1207 = vmatprep.subr.mxu0 0.0
        %1208 = vmatpush2.msra.mxu0 %v300
        %1209 = vmatprep.subr.mxu0 0.0
        %1210 = vmatpush2.msra.mxu0 %v299
        %1211 = vmatprep.subr.mxu0 0.0
        %1212 = vmatpush2.msra.mxu0 %v298
        %1213 = vmatprep.mubr.f32.mxu0 %v174
        %1214 = vmatmul.mubr.f32.gmra.mxu0 %v173
        %v1215 = vpop.f32.mrf.mxu0
        %v1216 = vadd.f32 %v1146, %v1215
        %v1217 = vpop.f32.mrf.mxu0
        %1218 = vdwg.mxu0
        %1219 = vmatprep.subr.mxu0 0.0
        %1220 = vmatpush1.msra.mxu0 %v329
        %1221 = vmatprep.subr.mxu0 0.0
        %1222 = vmatpush1.msra.mxu0 %v328
        %1223 = vmatprep.subr.mxu0 0.0
        %1224 = vmatpush1.msra.mxu0 %v327
        %1225 = vmatprep.subr.mxu0 0.0
        %1226 = vmatpush1.msra.mxu0 %v326
        %1227 = vmatprep.subr.mxu0 0.0
        %1228 = vmatpush1.msra.mxu0 %v325
        %1229 = vmatprep.subr.mxu0 0.0
        %1230 = vmatpush1.msra.mxu0 %v324
        %1231 = vmatprep.subr.mxu0 0.0
        %1232 = vmatpush1.msra.mxu0 %v323
        %1233 = vmatprep.subr.mxu0 0.0
        %1234 = vmatpush1.msra.mxu0 %v322
        %1235 = vmatprep.subr.mxu0 0.0
        %1236 = vmatpush1.msra.mxu0 %v321
        %1237 = vmatprep.subr.mxu0 0.0
        %1238 = vmatpush1.msra.mxu0 %v320
        %1239 = vmatprep.subr.mxu0 0.0
        %1240 = vmatpush1.msra.mxu0 %v319
        %1241 = vmatprep.subr.mxu0 0.0
        %1242 = vmatpush1.msra.mxu0 %v318
        %1243 = vmatprep.subr.mxu0 0.0
        %1244 = vmatpush1.msra.mxu0 %v317
        %1245 = vmatprep.subr.mxu0 0.0
        %1246 = vmatpush1.msra.mxu0 %v316
        %1247 = vmatprep.subr.mxu0 0.0
        %1248 = vmatpush1.msra.mxu0 %v315
        %1249 = vmatprep.subr.mxu0 0.0
        %1250 = vmatpush1.msra.mxu0 %v314
        %1251 = vmatprep.subr.mxu0 0.0
        %1252 = vmatpush2.msra.mxu0 %v345
        %1253 = vmatprep.subr.mxu0 0.0
        %1254 = vmatpush2.msra.mxu0 %v344
        %1255 = vmatprep.subr.mxu0 0.0
        %1256 = vmatpush2.msra.mxu0 %v343
        %1257 = vmatprep.subr.mxu0 0.0
        %1258 = vmatpush2.msra.mxu0 %v342
        %1259 = vmatprep.subr.mxu0 0.0
        %1260 = vmatpush2.msra.mxu0 %v341
        %1261 = vmatprep.subr.mxu0 0.0
        %1262 = vmatpush2.msra.mxu0 %v340
        %1263 = vmatprep.subr.mxu0 0.0
        %1264 = vmatpush2.msra.mxu0 %v339
        %1265 = vmatprep.subr.mxu0 0.0
        %1266 = vmatpush2.msra.mxu0 %v338
        %1267 = vmatprep.subr.mxu0 0.0
        %1268 = vmatpush2.msra.mxu0 %v337
        %1269 = vmatprep.subr.mxu0 0.0
        %1270 = vmatpush2.msra.mxu0 %v336
        %1271 = vmatprep.subr.mxu0 0.0
        %1272 = vmatpush2.msra.mxu0 %v335
        %1273 = vmatprep.subr.mxu0 0.0
        %1274 = vmatpush2.msra.mxu0 %v334
        %1275 = vmatprep.subr.mxu0 0.0
        %1276 = vmatpush2.msra.mxu0 %v333
        %1277 = vmatprep.subr.mxu0 0.0
        %1278 = vmatpush2.msra.mxu0 %v332
        %1279 = vmatprep.subr.mxu0 0.0
        %1280 = vmatpush2.msra.mxu0 %v331
        %1281 = vmatprep.subr.mxu0 0.0
        %1282 = vmatpush2.msra.mxu0 %v330
        %1283 = vmatprep.mubr.f32.mxu0 %v176
        %1284 = vmatmul.mubr.f32.gmra.mxu0 %v175
        %v1285 = vpop.f32.mrf.mxu0
        %v1286 = vadd.f32 %v1216, %v1285
        %v1287 = vpop.f32.mrf.mxu0
        %1288 = vdwg.mxu0
        %1289 = vmatprep.subr.mxu0 0.0
        %1290 = vmatpush1.msra.mxu0 %v361
        %1291 = vmatprep.subr.mxu0 0.0
        %1292 = vmatpush1.msra.mxu0 %v360
        %1293 = vmatprep.subr.mxu0 0.0
        %1294 = vmatpush1.msra.mxu0 %v359
        %1295 = vmatprep.subr.mxu0 0.0
        %1296 = vmatpush1.msra.mxu0 %v358
        %1297 = vmatprep.subr.mxu0 0.0
        %1298 = vmatpush1.msra.mxu0 %v357
        %1299 = vmatprep.subr.mxu0 0.0
        %1300 = vmatpush1.msra.mxu0 %v356
        %1301 = vmatprep.subr.mxu0 0.0
        %1302 = vmatpush1.msra.mxu0 %v355
        %1303 = vmatprep.subr.mxu0 0.0
        %1304 = vmatpush1.msra.mxu0 %v354
        %1305 = vmatprep.subr.mxu0 0.0
        %1306 = vmatpush1.msra.mxu0 %v353
        %1307 = vmatprep.subr.mxu0 0.0
        %1308 = vmatpush1.msra.mxu0 %v352
        %1309 = vmatprep.subr.mxu0 0.0
        %1310 = vmatpush1.msra.mxu0 %v351
        %1311 = vmatprep.subr.mxu0 0.0
        %1312 = vmatpush1.msra.mxu0 %v350
        %1313 = vmatprep.subr.mxu0 0.0
        %1314 = vmatpush1.msra.mxu0 %v349
        %1315 = vmatprep.subr.mxu0 0.0
        %1316 = vmatpush1.msra.mxu0 %v348
        %1317 = vmatprep.subr.mxu0 0.0
        %1318 = vmatpush1.msra.mxu0 %v347
        %1319 = vmatprep.subr.mxu0 0.0
        %1320 = vmatpush1.msra.mxu0 %v346
        %1321 = vmatprep.subr.mxu0 0.0
        %1322 = vmatpush2.msra.mxu0 %v377
        %1323 = vmatprep.subr.mxu0 0.0
        %1324 = vmatpush2.msra.mxu0 %v376
        %1325 = vmatprep.subr.mxu0 0.0
        %1326 = vmatpush2.msra.mxu0 %v375
        %1327 = vmatprep.subr.mxu0 0.0
        %1328 = vmatpush2.msra.mxu0 %v374
        %1329 = vmatprep.subr.mxu0 0.0
        %1330 = vmatpush2.msra.mxu0 %v373
        %1331 = vmatprep.subr.mxu0 0.0
        %1332 = vmatpush2.msra.mxu0 %v372
        %1333 = vmatprep.subr.mxu0 0.0
        %1334 = vmatpush2.msra.mxu0 %v371
        %1335 = vmatprep.subr.mxu0 0.0
        %1336 = vmatpush2.msra.mxu0 %v370
        %1337 = vmatprep.subr.mxu0 0.0
        %1338 = vmatpush2.msra.mxu0 %v369
        %1339 = vmatprep.subr.mxu0 0.0
        %1340 = vmatpush2.msra.mxu0 %v368
        %1341 = vmatprep.subr.mxu0 0.0
        %1342 = vmatpush2.msra.mxu0 %v367
        %1343 = vmatprep.subr.mxu0 0.0
        %1344 = vmatpush2.msra.mxu0 %v366
        %1345 = vmatprep.subr.mxu0 0.0
        %1346 = vmatpush2.msra.mxu0 %v365
        %1347 = vmatprep.subr.mxu0 0.0
        %1348 = vmatpush2.msra.mxu0 %v364
        %1349 = vmatprep.subr.mxu0 0.0
        %1350 = vmatpush2.msra.mxu0 %v363
        %1351 = vmatprep.subr.mxu0 0.0
        %1352 = vmatpush2.msra.mxu0 %v362
        %1353 = vmatprep.mubr.f32.mxu0 %v178
        %1354 = vmatmul.mubr.f32.gmra.mxu0 %v177
        %v1355 = vpop.f32.mrf.mxu0
        %v1356 = vadd.f32 %v1286, %v1355
        %v1357 = vpop.f32.mrf.mxu0
        %1358 = vdwg.mxu0
        %1359 = vmatprep.subr.mxu0 0.0
        %1360 = vmatpush1.msra.mxu0 %v393
        %1361 = vmatprep.subr.mxu0 0.0
        %1362 = vmatpush1.msra.mxu0 %v392
        %1363 = vmatprep.subr.mxu0 0.0
        %1364 = vmatpush1.msra.mxu0 %v391
        %1365 = vmatprep.subr.mxu0 0.0
        %1366 = vmatpush1.msra.mxu0 %v390
        %1367 = vmatprep.subr.mxu0 0.0
        %1368 = vmatpush1.msra.mxu0 %v389
        %1369 = vmatprep.subr.mxu0 0.0
        %1370 = vmatpush1.msra.mxu0 %v388
        %1371 = vmatprep.subr.mxu0 0.0
        %1372 = vmatpush1.msra.mxu0 %v387
        %1373 = vmatprep.subr.mxu0 0.0
        %1374 = vmatpush1.msra.mxu0 %v386
        %1375 = vmatprep.subr.mxu0 0.0
        %1376 = vmatpush1.msra.mxu0 %v385
        %1377 = vmatprep.subr.mxu0 0.0
        %1378 = vmatpush1.msra.mxu0 %v384
        %1379 = vmatprep.subr.mxu0 0.0
        %1380 = vmatpush1.msra.mxu0 %v383
        %1381 = vmatprep.subr.mxu0 0.0
        %1382 = vmatpush1.msra.mxu0 %v382
        %1383 = vmatprep.subr.mxu0 0.0
        %1384 = vmatpush1.msra.mxu0 %v381
        %1385 = vmatprep.subr.mxu0 0.0
        %1386 = vmatpush1.msra.mxu0 %v380
        %1387 = vmatprep.subr.mxu0 0.0
        %1388 = vmatpush1.msra.mxu0 %v379
        %1389 = vmatprep.subr.mxu0 0.0
        %1390 = vmatpush1.msra.mxu0 %v378
        %1391 = vmatprep.subr.mxu0 0.0
        %1392 = vmatpush2.msra.mxu0 %v409
        %1393 = vmatprep.subr.mxu0 0.0
        %1394 = vmatpush2.msra.mxu0 %v408
        %1395 = vmatprep.subr.mxu0 0.0
        %1396 = vmatpush2.msra.mxu0 %v407
        %1397 = vmatprep.subr.mxu0 0.0
        %1398 = vmatpush2.msra.mxu0 %v406
        %1399 = vmatprep.subr.mxu0 0.0
        %1400 = vmatpush2.msra.mxu0 %v405
        %1401 = vmatprep.subr.mxu0 0.0
        %1402 = vmatpush2.msra.mxu0 %v404
        %1403 = vmatprep.subr.mxu0 0.0
        %1404 = vmatpush2.msra.mxu0 %v403
        %1405 = vmatprep.subr.mxu0 0.0
        %1406 = vmatpush2.msra.mxu0 %v402
        %1407 = vmatprep.subr.mxu0 0.0
        %1408 = vmatpush2.msra.mxu0 %v401
        %1409 = vmatprep.subr.mxu0 0.0
        %1410 = vmatpush2.msra.mxu0 %v400
        %1411 = vmatprep.subr.mxu0 0.0
        %1412 = vmatpush2.msra.mxu0 %v399
        %1413 = vmatprep.subr.mxu0 0.0
        %1414 = vmatpush2.msra.mxu0 %v398
        %1415 = vmatprep.subr.mxu0 0.0
        %1416 = vmatpush2.msra.mxu0 %v397
        %1417 = vmatprep.subr.mxu0 0.0
        %1418 = vmatpush2.msra.mxu0 %v396
        %1419 = vmatprep.subr.mxu0 0.0
        %1420 = vmatpush2.msra.mxu0 %v395
        %1421 = vmatprep.subr.mxu0 0.0
        %1422 = vmatpush2.msra.mxu0 %v394
        %1423 = vmatprep.mubr.f32.mxu0 %v180
        %1424 = vmatmul.mubr.f32.gmra.mxu0 %v179
        %v1425 = vpop.f32.mrf.mxu0
        %v1426 = vadd.f32 %v1356, %v1425
        %v1427 = vpop.f32.mrf.mxu0
        %1428 = vdwg.mxu0
        %1429 = vmatprep.subr.mxu0 0.0
        %1430 = vmatpush1.msra.mxu0 %v425
        %1431 = vmatprep.subr.mxu0 0.0
        %1432 = vmatpush1.msra.mxu0 %v424
        %1433 = vmatprep.subr.mxu0 0.0
        %1434 = vmatpush1.msra.mxu0 %v423
        %1435 = vmatprep.subr.mxu0 0.0
        %1436 = vmatpush1.msra.mxu0 %v422
        %1437 = vmatprep.subr.mxu0 0.0
        %1438 = vmatpush1.msra.mxu0 %v421
        %1439 = vmatprep.subr.mxu0 0.0
        %1440 = vmatpush1.msra.mxu0 %v420
        %1441 = vmatprep.subr.mxu0 0.0
        %1442 = vmatpush1.msra.mxu0 %v419
        %1443 = vmatprep.subr.mxu0 0.0
        %1444 = vmatpush1.msra.mxu0 %v418
        %1445 = vmatprep.subr.mxu0 0.0
        %1446 = vmatpush1.msra.mxu0 %v417
        %1447 = vmatprep.subr.mxu0 0.0
        %1448 = vmatpush1.msra.mxu0 %v416
        %1449 = vmatprep.subr.mxu0 0.0
        %1450 = vmatpush1.msra.mxu0 %v415
        %1451 = vmatprep.subr.mxu0 0.0
        %1452 = vmatpush1.msra.mxu0 %v414
        %1453 = vmatprep.subr.mxu0 0.0
        %1454 = vmatpush1.msra.mxu0 %v413
        %1455 = vmatprep.subr.mxu0 0.0
        %1456 = vmatpush1.msra.mxu0 %v412
        %1457 = vmatprep.subr.mxu0 0.0
        %1458 = vmatpush1.msra.mxu0 %v411
        %1459 = vmatprep.subr.mxu0 0.0
        %1460 = vmatpush1.msra.mxu0 %v410
        %1461 = vmatprep.subr.mxu0 0.0
        %1462 = vmatpush2.msra.mxu0 %v441
        %1463 = vmatprep.subr.mxu0 0.0
        %1464 = vmatpush2.msra.mxu0 %v440
        %1465 = vmatprep.subr.mxu0 0.0
        %1466 = vmatpush2.msra.mxu0 %v439
        %1467 = vmatprep.subr.mxu0 0.0
        %1468 = vmatpush2.msra.mxu0 %v438
        %1469 = vmatprep.subr.mxu0 0.0
        %1470 = vmatpush2.msra.mxu0 %v437
        %1471 = vmatprep.subr.mxu0 0.0
        %1472 = vmatpush2.msra.mxu0 %v436
        %1473 = vmatprep.subr.mxu0 0.0
        %1474 = vmatpush2.msra.mxu0 %v435
        %1475 = vmatprep.subr.mxu0 0.0
        %1476 = vmatpush2.msra.mxu0 %v434
        %1477 = vmatprep.subr.mxu0 0.0
        %1478 = vmatpush2.msra.mxu0 %v433
        %1479 = vmatprep.subr.mxu0 0.0
        %1480 = vmatpush2.msra.mxu0 %v432
        %1481 = vmatprep.subr.mxu0 0.0
        %1482 = vmatpush2.msra.mxu0 %v431
        %1483 = vmatprep.subr.mxu0 0.0
        %1484 = vmatpush2.msra.mxu0 %v430
        %1485 = vmatprep.subr.mxu0 0.0
        %1486 = vmatpush2.msra.mxu0 %v429
        %1487 = vmatprep.subr.mxu0 0.0
        %1488 = vmatpush2.msra.mxu0 %v428
        %1489 = vmatprep.subr.mxu0 0.0
        %1490 = vmatpush2.msra.mxu0 %v427
        %1491 = vmatprep.subr.mxu0 0.0
        %1492 = vmatpush2.msra.mxu0 %v426
        %1493 = vmatprep.mubr.f32.mxu0 %v182
        %1494 = vmatmul.mubr.f32.gmra.mxu0 %v181
        %v1495 = vpop.f32.mrf.mxu0
        %v1496 = vadd.f32 %v1426, %v1495
        %v1497 = vpop.f32.mrf.mxu0
        %1498 = vdwg.mxu0
        %1499 = vmatprep.subr.mxu0 0.0
        %1500 = vmatpush1.msra.mxu0 %v457
        %1501 = vmatprep.subr.mxu0 0.0
        %1502 = vmatpush1.msra.mxu0 %v456
        %1503 = vmatprep.subr.mxu0 0.0
        %1504 = vmatpush1.msra.mxu0 %v455
        %1505 = vmatprep.subr.mxu0 0.0
        %1506 = vmatpush1.msra.mxu0 %v454
        %1507 = vmatprep.subr.mxu0 0.0
        %1508 = vmatpush1.msra.mxu0 %v453
        %1509 = vmatprep.subr.mxu0 0.0
        %1510 = vmatpush1.msra.mxu0 %v452
        %1511 = vmatprep.subr.mxu0 0.0
        %1512 = vmatpush1.msra.mxu0 %v451
        %1513 = vmatprep.subr.mxu0 0.0
        %1514 = vmatpush1.msra.mxu0 %v450
        %1515 = vmatprep.subr.mxu0 0.0
        %1516 = vmatpush1.msra.mxu0 %v449
        %1517 = vmatprep.subr.mxu0 0.0
        %1518 = vmatpush1.msra.mxu0 %v448
        %1519 = vmatprep.subr.mxu0 0.0
        %1520 = vmatpush1.msra.mxu0 %v447
        %1521 = vmatprep.subr.mxu0 0.0
        %1522 = vmatpush1.msra.mxu0 %v446
        %1523 = vmatprep.subr.mxu0 0.0
        %1524 = vmatpush1.msra.mxu0 %v445
        %1525 = vmatprep.subr.mxu0 0.0
        %1526 = vmatpush1.msra.mxu0 %v444
        %1527 = vmatprep.subr.mxu0 0.0
        %1528 = vmatpush1.msra.mxu0 %v443
        %1529 = vmatprep.subr.mxu0 0.0
        %1530 = vmatpush1.msra.mxu0 %v442
        %1531 = vmatprep.subr.mxu0 0.0
        %1532 = vmatpush2.msra.mxu0 %v473
        %1533 = vmatprep.subr.mxu0 0.0
        %1534 = vmatpush2.msra.mxu0 %v472
        %1535 = vmatprep.subr.mxu0 0.0
        %1536 = vmatpush2.msra.mxu0 %v471
        %1537 = vmatprep.subr.mxu0 0.0
        %1538 = vmatpush2.msra.mxu0 %v470
        %1539 = vmatprep.subr.mxu0 0.0
        %1540 = vmatpush2.msra.mxu0 %v469
        %1541 = vmatprep.subr.mxu0 0.0
        %1542 = vmatpush2.msra.mxu0 %v468
        %1543 = vmatprep.subr.mxu0 0.0
        %1544 = vmatpush2.msra.mxu0 %v467
        %1545 = vmatprep.subr.mxu0 0.0
        %1546 = vmatpush2.msra.mxu0 %v466
        %1547 = vmatprep.subr.mxu0 0.0
        %1548 = vmatpush2.msra.mxu0 %v465
        %1549 = vmatprep.subr.mxu0 0.0
        %1550 = vmatpush2.msra.mxu0 %v464
        %1551 = vmatprep.subr.mxu0 0.0
        %1552 = vmatpush2.msra.mxu0 %v463
        %1553 = vmatprep.subr.mxu0 0.0
        %1554 = vmatpush2.msra.mxu0 %v462
        %1555 = vmatprep.subr.mxu0 0.0
        %1556 = vmatpush2.msra.mxu0 %v461
        %1557 = vmatprep.subr.mxu0 0.0
        %1558 = vmatpush2.msra.mxu0 %v460
        %1559 = vmatprep.subr.mxu0 0.0
        %1560 = vmatpush2.msra.mxu0 %v459
        %1561 = vmatprep.subr.mxu0 0.0
        %1562 = vmatpush2.msra.mxu0 %v458
        %1563 = vmatprep.mubr.f32.mxu0 %v184
        %1564 = vmatmul.mubr.f32.gmra.mxu0 %v183
        %v1565 = vpop.f32.mrf.mxu0
        %v1566 = vadd.f32 %v1496, %v1565
        %v1567 = vpop.f32.mrf.mxu0
        %1568 = vdwg.mxu0
        %1569 = vmatprep.subr.mxu0 0.0
        %1570 = vmatpush1.msra.mxu0 %v489
        %1571 = vmatprep.subr.mxu0 0.0
        %1572 = vmatpush1.msra.mxu0 %v488
        %1573 = vmatprep.subr.mxu0 0.0
        %1574 = vmatpush1.msra.mxu0 %v487
        %1575 = vmatprep.subr.mxu0 0.0
        %1576 = vmatpush1.msra.mxu0 %v486
        %1577 = vmatprep.subr.mxu0 0.0
        %1578 = vmatpush1.msra.mxu0 %v485
        %1579 = vmatprep.subr.mxu0 0.0
        %1580 = vmatpush1.msra.mxu0 %v484
        %1581 = vmatprep.subr.mxu0 0.0
        %1582 = vmatpush1.msra.mxu0 %v483
        %1583 = vmatprep.subr.mxu0 0.0
        %1584 = vmatpush1.msra.mxu0 %v482
        %1585 = vmatprep.subr.mxu0 0.0
        %1586 = vmatpush1.msra.mxu0 %v481
        %1587 = vmatprep.subr.mxu0 0.0
        %1588 = vmatpush1.msra.mxu0 %v480
        %1589 = vmatprep.subr.mxu0 0.0
        %1590 = vmatpush1.msra.mxu0 %v479
        %1591 = vmatprep.subr.mxu0 0.0
        %1592 = vmatpush1.msra.mxu0 %v478
        %1593 = vmatprep.subr.mxu0 0.0
        %1594 = vmatpush1.msra.mxu0 %v477
        %1595 = vmatprep.subr.mxu0 0.0
        %1596 = vmatpush1.msra.mxu0 %v476
        %1597 = vmatprep.subr.mxu0 0.0
        %1598 = vmatpush1.msra.mxu0 %v475
        %1599 = vmatprep.subr.mxu0 0.0
        %1600 = vmatpush1.msra.mxu0 %v474
        %1601 = vmatprep.subr.mxu0 0.0
        %1602 = vmatpush2.msra.mxu0 %v505
        %1603 = vmatprep.subr.mxu0 0.0
        %1604 = vmatpush2.msra.mxu0 %v504
        %1605 = vmatprep.subr.mxu0 0.0
        %1606 = vmatpush2.msra.mxu0 %v503
        %1607 = vmatprep.subr.mxu0 0.0
        %1608 = vmatpush2.msra.mxu0 %v502
        %1609 = vmatprep.subr.mxu0 0.0
        %1610 = vmatpush2.msra.mxu0 %v501
        %1611 = vmatprep.subr.mxu0 0.0
        %1612 = vmatpush2.msra.mxu0 %v500
        %1613 = vmatprep.subr.mxu0 0.0
        %1614 = vmatpush2.msra.mxu0 %v499
        %1615 = vmatprep.subr.mxu0 0.0
        %1616 = vmatpush2.msra.mxu0 %v498
        %1617 = vmatprep.subr.mxu0 0.0
        %1618 = vmatpush2.msra.mxu0 %v497
        %1619 = vmatprep.subr.mxu0 0.0
        %1620 = vmatpush2.msra.mxu0 %v496
        %1621 = vmatprep.subr.mxu0 0.0
        %1622 = vmatpush2.msra.mxu0 %v495
        %1623 = vmatprep.subr.mxu0 0.0
        %1624 = vmatpush2.msra.mxu0 %v494
        %1625 = vmatprep.subr.mxu0 0.0
        %1626 = vmatpush2.msra.mxu0 %v493
        %1627 = vmatprep.subr.mxu0 0.0
        %1628 = vmatpush2.msra.mxu0 %v492
        %1629 = vmatprep.subr.mxu0 0.0
        %1630 = vmatpush2.msra.mxu0 %v491
        %1631 = vmatprep.subr.mxu0 0.0
        %1632 = vmatpush2.msra.mxu0 %v490
        %1633 = vmatprep.mubr.f32.mxu0 %v186
        %1634 = vmatmul.mubr.f32.gmra.mxu0 %v185
        %v1635 = vpop.f32.mrf.mxu0
        %v1636 = vadd.f32 %v1566, %v1635
        %v1637 = vpop.f32.mrf.mxu0
        %1638 = vdwg.mxu0
        %1639 = vmatprep.subr.mxu0 0.0
        %1640 = vmatpush1.msra.mxu0 %v521
        %1641 = vmatprep.subr.mxu0 0.0
        %1642 = vmatpush1.msra.mxu0 %v520
        %1643 = vmatprep.subr.mxu0 0.0
        %1644 = vmatpush1.msra.mxu0 %v519
        %1645 = vmatprep.subr.mxu0 0.0
        %1646 = vmatpush1.msra.mxu0 %v518
        %1647 = vmatprep.subr.mxu0 0.0
        %1648 = vmatpush1.msra.mxu0 %v517
        %1649 = vmatprep.subr.mxu0 0.0
        %1650 = vmatpush1.msra.mxu0 %v516
        %1651 = vmatprep.subr.mxu0 0.0
        %1652 = vmatpush1.msra.mxu0 %v515
        %1653 = vmatprep.subr.mxu0 0.0
        %1654 = vmatpush1.msra.mxu0 %v514
        %1655 = vmatprep.subr.mxu0 0.0
        %1656 = vmatpush1.msra.mxu0 %v513
        %1657 = vmatprep.subr.mxu0 0.0
        %1658 = vmatpush1.msra.mxu0 %v512
        %1659 = vmatprep.subr.mxu0 0.0
        %1660 = vmatpush1.msra.mxu0 %v511
        %1661 = vmatprep.subr.mxu0 0.0
        %1662 = vmatpush1.msra.mxu0 %v510
        %1663 = vmatprep.subr.mxu0 0.0
        %1664 = vmatpush1.msra.mxu0 %v509
        %1665 = vmatprep.subr.mxu0 0.0
        %1666 = vmatpush1.msra.mxu0 %v508
        %1667 = vmatprep.subr.mxu0 0.0
        %1668 = vmatpush1.msra.mxu0 %v507
        %1669 = vmatprep.subr.mxu0 0.0
        %1670 = vmatpush1.msra.mxu0 %v506
        %1671 = vmatprep.subr.mxu0 0.0
        %1672 = vmatpush2.msra.mxu0 %v537
        %1673 = vmatprep.subr.mxu0 0.0
        %1674 = vmatpush2.msra.mxu0 %v536
        %1675 = vmatprep.subr.mxu0 0.0
        %1676 = vmatpush2.msra.mxu0 %v535
        %1677 = vmatprep.subr.mxu0 0.0
        %1678 = vmatpush2.msra.mxu0 %v534
        %1679 = vmatprep.subr.mxu0 0.0
        %1680 = vmatpush2.msra.mxu0 %v533
        %1681 = vmatprep.subr.mxu0 0.0
        %1682 = vmatpush2.msra.mxu0 %v532
        %1683 = vmatprep.subr.mxu0 0.0
        %1684 = vmatpush2.msra.mxu0 %v531
        %1685 = vmatprep.subr.mxu0 0.0
        %1686 = vmatpush2.msra.mxu0 %v530
        %1687 = vmatprep.subr.mxu0 0.0
        %1688 = vmatpush2.msra.mxu0 %v529
        %1689 = vmatprep.subr.mxu0 0.0
        %1690 = vmatpush2.msra.mxu0 %v528
        %1691 = vmatprep.subr.mxu0 0.0
        %1692 = vmatpush2.msra.mxu0 %v527
        %1693 = vmatprep.subr.mxu0 0.0
        %1694 = vmatpush2.msra.mxu0 %v526
        %1695 = vmatprep.subr.mxu0 0.0
        %1696 = vmatpush2.msra.mxu0 %v525
        %1697 = vmatprep.subr.mxu0 0.0
        %1698 = vmatpush2.msra.mxu0 %v524
        %1699 = vmatprep.subr.mxu0 0.0
        %1700 = vmatpush2.msra.mxu0 %v523
        %1701 = vmatprep.subr.mxu0 0.0
        %1702 = vmatpush2.msra.mxu0 %v522
        %1703 = vmatprep.mubr.f32.mxu0 %v188
        %1704 = vmatmul.mubr.f32.gmra.mxu0 %v187
        %v1705 = vpop.f32.mrf.mxu0
        %v1706 = vadd.f32 %v1636, %v1705
        %v1707 = vpop.f32.mrf.mxu0
        %1708 = vdwg.mxu0
        %1709 = vmatprep.subr.mxu0 0.0
        %1710 = vmatpush1.msra.mxu0 %v553
        %1711 = vmatprep.subr.mxu0 0.0
        %1712 = vmatpush1.msra.mxu0 %v552
        %1713 = vmatprep.subr.mxu0 0.0
        %1714 = vmatpush1.msra.mxu0 %v551
        %1715 = vmatprep.subr.mxu0 0.0
        %1716 = vmatpush1.msra.mxu0 %v550
        %1717 = vmatprep.subr.mxu0 0.0
        %1718 = vmatpush1.msra.mxu0 %v549
        %1719 = vmatprep.subr.mxu0 0.0
        %1720 = vmatpush1.msra.mxu0 %v548
        %1721 = vmatprep.subr.mxu0 0.0
        %1722 = vmatpush1.msra.mxu0 %v547
        %1723 = vmatprep.subr.mxu0 0.0
        %1724 = vmatpush1.msra.mxu0 %v546
        %1725 = vmatprep.subr.mxu0 0.0
        %1726 = vmatpush1.msra.mxu0 %v545
        %1727 = vmatprep.subr.mxu0 0.0
        %1728 = vmatpush1.msra.mxu0 %v544
        %1729 = vmatprep.subr.mxu0 0.0
        %1730 = vmatpush1.msra.mxu0 %v543
        %1731 = vmatprep.subr.mxu0 0.0
        %1732 = vmatpush1.msra.mxu0 %v542
        %1733 = vmatprep.subr.mxu0 0.0
        %1734 = vmatpush1.msra.mxu0 %v541
        %1735 = vmatprep.subr.mxu0 0.0
        %1736 = vmatpush1.msra.mxu0 %v540
        %1737 = vmatprep.subr.mxu0 0.0
        %1738 = vmatpush1.msra.mxu0 %v539
        %1739 = vmatprep.subr.mxu0 0.0
        %1740 = vmatpush1.msra.mxu0 %v538
        %1741 = vmatprep.subr.mxu0 0.0
        %1742 = vmatpush2.msra.mxu0 %v569
        %1743 = vmatprep.subr.mxu0 0.0
        %1744 = vmatpush2.msra.mxu0 %v568
        %1745 = vmatprep.subr.mxu0 0.0
        %1746 = vmatpush2.msra.mxu0 %v567
        %1747 = vmatprep.subr.mxu0 0.0
        %1748 = vmatpush2.msra.mxu0 %v566
        %1749 = vmatprep.subr.mxu0 0.0
        %1750 = vmatpush2.msra.mxu0 %v565
        %1751 = vmatprep.subr.mxu0 0.0
        %1752 = vmatpush2.msra.mxu0 %v564
        %1753 = vmatprep.subr.mxu0 0.0
        %1754 = vmatpush2.msra.mxu0 %v563
        %1755 = vmatprep.subr.mxu0 0.0
        %1756 = vmatpush2.msra.mxu0 %v562
        %1757 = vmatprep.subr.mxu0 0.0
        %1758 = vmatpush2.msra.mxu0 %v561
        %1759 = vmatprep.subr.mxu0 0.0
        %1760 = vmatpush2.msra.mxu0 %v560
        %1761 = vmatprep.subr.mxu0 0.0
        %1762 = vmatpush2.msra.mxu0 %v559
        %1763 = vmatprep.subr.mxu0 0.0
        %1764 = vmatpush2.msra.mxu0 %v558
        %1765 = vmatprep.subr.mxu0 0.0
        %1766 = vmatpush2.msra.mxu0 %v557
        %1767 = vmatprep.subr.mxu0 0.0
        %1768 = vmatpush2.msra.mxu0 %v556
        %1769 = vmatprep.subr.mxu0 0.0
        %1770 = vmatpush2.msra.mxu0 %v555
        %1771 = vmatprep.subr.mxu0 0.0
        %1772 = vmatpush2.msra.mxu0 %v554
        %1773 = vmatprep.mubr.f32.mxu0 %v190
        %1774 = vmatmul.mubr.f32.gmra.mxu0 %v189
        %v1775 = vpop.f32.mrf.mxu0
        %v1776 = vadd.f32 %v1706, %v1775
        %v1777 = vpop.f32.mrf.mxu0
        %1778 = vdwg.mxu0
        %1779 = vmatprep.subr.mxu0 0.0
        %1780 = vmatpush1.msra.mxu0 %v585
        %1781 = vmatprep.subr.mxu0 0.0
        %1782 = vmatpush1.msra.mxu0 %v584
        %1783 = vmatprep.subr.mxu0 0.0
        %1784 = vmatpush1.msra.mxu0 %v583
        %1785 = vmatprep.subr.mxu0 0.0
        %1786 = vmatpush1.msra.mxu0 %v582
        %1787 = vmatprep.subr.mxu0 0.0
        %1788 = vmatpush1.msra.mxu0 %v581
        %1789 = vmatprep.subr.mxu0 0.0
        %1790 = vmatpush1.msra.mxu0 %v580
        %1791 = vmatprep.subr.mxu0 0.0
        %1792 = vmatpush1.msra.mxu0 %v579
        %1793 = vmatprep.subr.mxu0 0.0
        %1794 = vmatpush1.msra.mxu0 %v578
        %1795 = vmatprep.subr.mxu0 0.0
        %1796 = vmatpush1.msra.mxu0 %v577
        %1797 = vmatprep.subr.mxu0 0.0
        %1798 = vmatpush1.msra.mxu0 %v576
        %1799 = vmatprep.subr.mxu0 0.0
        %1800 = vmatpush1.msra.mxu0 %v575
        %1801 = vmatprep.subr.mxu0 0.0
        %1802 = vmatpush1.msra.mxu0 %v574
        %1803 = vmatprep.subr.mxu0 0.0
        %1804 = vmatpush1.msra.mxu0 %v573
        %1805 = vmatprep.subr.mxu0 0.0
        %1806 = vmatpush1.msra.mxu0 %v572
        %1807 = vmatprep.subr.mxu0 0.0
        %1808 = vmatpush1.msra.mxu0 %v571
        %1809 = vmatprep.subr.mxu0 0.0
        %1810 = vmatpush1.msra.mxu0 %v570
        %1811 = vmatprep.subr.mxu0 0.0
        %1812 = vmatpush2.msra.mxu0 %v601
        %1813 = vmatprep.subr.mxu0 0.0
        %1814 = vmatpush2.msra.mxu0 %v600
        %1815 = vmatprep.subr.mxu0 0.0
        %1816 = vmatpush2.msra.mxu0 %v599
        %1817 = vmatprep.subr.mxu0 0.0
        %1818 = vmatpush2.msra.mxu0 %v598
        %1819 = vmatprep.subr.mxu0 0.0
        %1820 = vmatpush2.msra.mxu0 %v597
        %1821 = vmatprep.subr.mxu0 0.0
        %1822 = vmatpush2.msra.mxu0 %v596
        %1823 = vmatprep.subr.mxu0 0.0
        %1824 = vmatpush2.msra.mxu0 %v595
        %1825 = vmatprep.subr.mxu0 0.0
        %1826 = vmatpush2.msra.mxu0 %v594
        %1827 = vmatprep.subr.mxu0 0.0
        %1828 = vmatpush2.msra.mxu0 %v593
        %1829 = vmatprep.subr.mxu0 0.0
        %1830 = vmatpush2.msra.mxu0 %v592
        %1831 = vmatprep.subr.mxu0 0.0
        %1832 = vmatpush2.msra.mxu0 %v591
        %1833 = vmatprep.subr.mxu0 0.0
        %1834 = vmatpush2.msra.mxu0 %v590
        %1835 = vmatprep.subr.mxu0 0.0
        %1836 = vmatpush2.msra.mxu0 %v589
        %1837 = vmatprep.subr.mxu0 0.0
        %1838 = vmatpush2.msra.mxu0 %v588
        %1839 = vmatprep.subr.mxu0 0.0
        %1840 = vmatpush2.msra.mxu0 %v587
        %1841 = vmatprep.subr.mxu0 0.0
        %1842 = vmatpush2.msra.mxu0 %v586
        %1843 = vmatprep.mubr.f32.mxu0 %v192
        %1844 = vmatmul.mubr.f32.gmra.mxu0 %v191
        %v1845 = vpop.f32.mrf.mxu0
        %v1846 = vadd.f32 %v1776, %v1845
        %v1847 = vpop.f32.mrf.mxu0
        %1848 = vdwg.mxu0
        %1849 = vmatprep.subr.mxu0 0.0
        %1850 = vmatpush1.msra.mxu0 %v617
        %1851 = vmatprep.subr.mxu0 0.0
        %1852 = vmatpush1.msra.mxu0 %v616
        %1853 = vmatprep.subr.mxu0 0.0
        %1854 = vmatpush1.msra.mxu0 %v615
        %1855 = vmatprep.subr.mxu0 0.0
        %1856 = vmatpush1.msra.mxu0 %v614
        %1857 = vmatprep.subr.mxu0 0.0
        %1858 = vmatpush1.msra.mxu0 %v613
        %1859 = vmatprep.subr.mxu0 0.0
        %1860 = vmatpush1.msra.mxu0 %v612
        %1861 = vmatprep.subr.mxu0 0.0
        %1862 = vmatpush1.msra.mxu0 %v611
        %1863 = vmatprep.subr.mxu0 0.0
        %1864 = vmatpush1.msra.mxu0 %v610
        %1865 = vmatprep.subr.mxu0 0.0
        %1866 = vmatpush1.msra.mxu0 %v609
        %1867 = vmatprep.subr.mxu0 0.0
        %1868 = vmatpush1.msra.mxu0 %v608
        %1869 = vmatprep.subr.mxu0 0.0
        %1870 = vmatpush1.msra.mxu0 %v607
        %1871 = vmatprep.subr.mxu0 0.0
        %1872 = vmatpush1.msra.mxu0 %v606
        %1873 = vmatprep.subr.mxu0 0.0
        %1874 = vmatpush1.msra.mxu0 %v605
        %1875 = vmatprep.subr.mxu0 0.0
        %1876 = vmatpush1.msra.mxu0 %v604
        %1877 = vmatprep.subr.mxu0 0.0
        %1878 = vmatpush1.msra.mxu0 %v603
        %1879 = vmatprep.subr.mxu0 0.0
        %1880 = vmatpush1.msra.mxu0 %v602
        %1881 = vmatprep.subr.mxu0 0.0
        %1882 = vmatpush2.msra.mxu0 %v633
        %1883 = vmatprep.subr.mxu0 0.0
        %1884 = vmatpush2.msra.mxu0 %v632
        %1885 = vmatprep.subr.mxu0 0.0
        %1886 = vmatpush2.msra.mxu0 %v631
        %1887 = vmatprep.subr.mxu0 0.0
        %1888 = vmatpush2.msra.mxu0 %v630
        %1889 = vmatprep.subr.mxu0 0.0
        %1890 = vmatpush2.msra.mxu0 %v629
        %1891 = vmatprep.subr.mxu0 0.0
        %1892 = vmatpush2.msra.mxu0 %v628
        %1893 = vmatprep.subr.mxu0 0.0
        %1894 = vmatpush2.msra.mxu0 %v627
        %1895 = vmatprep.subr.mxu0 0.0
        %1896 = vmatpush2.msra.mxu0 %v626
        %1897 = vmatprep.subr.mxu0 0.0
        %1898 = vmatpush2.msra.mxu0 %v625
        %1899 = vmatprep.subr.mxu0 0.0
        %1900 = vmatpush2.msra.mxu0 %v624
        %1901 = vmatprep.subr.mxu0 0.0
        %1902 = vmatpush2.msra.mxu0 %v623
        %1903 = vmatprep.subr.mxu0 0.0
        %1904 = vmatpush2.msra.mxu0 %v622
        %1905 = vmatprep.subr.mxu0 0.0
        %1906 = vmatpush2.msra.mxu0 %v621
        %1907 = vmatprep.subr.mxu0 0.0
        %1908 = vmatpush2.msra.mxu0 %v620
        %1909 = vmatprep.subr.mxu0 0.0
        %1910 = vmatpush2.msra.mxu0 %v619
        %1911 = vmatprep.subr.mxu0 0.0
        %1912 = vmatpush2.msra.mxu0 %v618
        %1913 = vmatprep.mubr.f32.mxu0 %v194
        %1914 = vmatmul.mubr.f32.gmra.mxu0 %v193
        %v1915 = vpop.f32.mrf.mxu0
        %v1916 = vadd.f32 %v1846, %v1915
        %v1917 = vpop.f32.mrf.mxu0
        %1918 = vdwg.mxu0
        %1919 = vmatprep.subr.mxu0 0.0
        %1920 = vmatpush1.msra.mxu0 %v649
        %1921 = vmatprep.subr.mxu0 0.0
        %1922 = vmatpush1.msra.mxu0 %v648
        %1923 = vmatprep.subr.mxu0 0.0
        %1924 = vmatpush1.msra.mxu0 %v647
        %1925 = vmatprep.subr.mxu0 0.0
        %1926 = vmatpush1.msra.mxu0 %v646
        %1927 = vmatprep.subr.mxu0 0.0
        %1928 = vmatpush1.msra.mxu0 %v645
        %1929 = vmatprep.subr.mxu0 0.0
        %1930 = vmatpush1.msra.mxu0 %v644
        %1931 = vmatprep.subr.mxu0 0.0
        %1932 = vmatpush1.msra.mxu0 %v643
        %1933 = vmatprep.subr.mxu0 0.0
        %1934 = vmatpush1.msra.mxu0 %v642
        %1935 = vmatprep.subr.mxu0 0.0
        %1936 = vmatpush1.msra.mxu0 %v641
        %1937 = vmatprep.subr.mxu0 0.0
        %1938 = vmatpush1.msra.mxu0 %v640
        %1939 = vmatprep.subr.mxu0 0.0
        %1940 = vmatpush1.msra.mxu0 %v639
        %1941 = vmatprep.subr.mxu0 0.0
        %1942 = vmatpush1.msra.mxu0 %v638
        %1943 = vmatprep.subr.mxu0 0.0
        %1944 = vmatpush1.msra.mxu0 %v637
        %1945 = vmatprep.subr.mxu0 0.0
        %1946 = vmatpush1.msra.mxu0 %v636
        %1947 = vmatprep.subr.mxu0 0.0
        %1948 = vmatpush1.msra.mxu0 %v635
        %1949 = vmatprep.subr.mxu0 0.0
        %1950 = vmatpush1.msra.mxu0 %v634
        %1951 = vmatprep.subr.mxu0 0.0
        %1952 = vmatpush2.msra.mxu0 %v665
        %1953 = vmatprep.subr.mxu0 0.0
        %1954 = vmatpush2.msra.mxu0 %v664
        %1955 = vmatprep.subr.mxu0 0.0
        %1956 = vmatpush2.msra.mxu0 %v663
        %1957 = vmatprep.subr.mxu0 0.0
        %1958 = vmatpush2.msra.mxu0 %v662
        %1959 = vmatprep.subr.mxu0 0.0
        %1960 = vmatpush2.msra.mxu0 %v661
        %1961 = vmatprep.subr.mxu0 0.0
        %1962 = vmatpush2.msra.mxu0 %v660
        %1963 = vmatprep.subr.mxu0 0.0
        %1964 = vmatpush2.msra.mxu0 %v659
        %1965 = vmatprep.subr.mxu0 0.0
        %1966 = vmatpush2.msra.mxu0 %v658
        %1967 = vmatprep.subr.mxu0 0.0
        %1968 = vmatpush2.msra.mxu0 %v657
        %1969 = vmatprep.subr.mxu0 0.0
        %1970 = vmatpush2.msra.mxu0 %v656
        %1971 = vmatprep.subr.mxu0 0.0
        %1972 = vmatpush2.msra.mxu0 %v655
        %1973 = vmatprep.subr.mxu0 0.0
        %1974 = vmatpush2.msra.mxu0 %v654
        %1975 = vmatprep.subr.mxu0 0.0
        %1976 = vmatpush2.msra.mxu0 %v653
        %1977 = vmatprep.subr.mxu0 0.0
        %1978 = vmatpush2.msra.mxu0 %v652
        %1979 = vmatprep.subr.mxu0 0.0
        %1980 = vmatpush2.msra.mxu0 %v651
        %1981 = vmatprep.subr.mxu0 0.0
        %1982 = vmatpush2.msra.mxu0 %v650
        %1983 = vmatprep.mubr.f32.mxu0 %v196
        %1984 = vmatmul.mubr.f32.gmra.mxu0 %v195
        %v1985 = vpop.f32.mrf.mxu0
        %v1986 = vadd.f32 %v1916, %v1985
        %v1987 = vpop.f32.mrf.mxu0
        %1988 = vdwg.mxu0
        %1989 = vmatprep.subr.mxu0 0.0
        %1990 = vmatpush1.msra.mxu0 %v681
        %1991 = vmatprep.subr.mxu0 0.0
        %1992 = vmatpush1.msra.mxu0 %v680
        %1993 = vmatprep.subr.mxu0 0.0
        %1994 = vmatpush1.msra.mxu0 %v679
        %1995 = vmatprep.subr.mxu0 0.0
        %1996 = vmatpush1.msra.mxu0 %v678
        %1997 = vmatprep.subr.mxu0 0.0
        %1998 = vmatpush1.msra.mxu0 %v677
        %1999 = vmatprep.subr.mxu0 0.0
        %2000 = vmatpush1.msra.mxu0 %v676
        %2001 = vmatprep.subr.mxu0 0.0
        %2002 = vmatpush1.msra.mxu0 %v675
        %2003 = vmatprep.subr.mxu0 0.0
        %2004 = vmatpush1.msra.mxu0 %v674
        %2005 = vmatprep.subr.mxu0 0.0
        %2006 = vmatpush1.msra.mxu0 %v673
        %2007 = vmatprep.subr.mxu0 0.0
        %2008 = vmatpush1.msra.mxu0 %v672
        %2009 = vmatprep.subr.mxu0 0.0
        %2010 = vmatpush1.msra.mxu0 %v671
        %2011 = vmatprep.subr.mxu0 0.0
        %2012 = vmatpush1.msra.mxu0 %v670
        %2013 = vmatprep.subr.mxu0 0.0
        %2014 = vmatpush1.msra.mxu0 %v669
        %2015 = vmatprep.subr.mxu0 0.0
        %2016 = vmatpush1.msra.mxu0 %v668
        %2017 = vmatprep.subr.mxu0 0.0
        %2018 = vmatpush1.msra.mxu0 %v667
        %2019 = vmatprep.subr.mxu0 0.0
        %2020 = vmatpush1.msra.mxu0 %v666
        %2021 = vmatprep.subr.mxu0 0.0
        %2022 = vmatpush2.msra.mxu0 %v697
        %2023 = vmatprep.subr.mxu0 0.0
        %2024 = vmatpush2.msra.mxu0 %v696
        %2025 = vmatprep.subr.mxu0 0.0
        %2026 = vmatpush2.msra.mxu0 %v695
        %2027 = vmatprep.subr.mxu0 0.0
        %2028 = vmatpush2.msra.mxu0 %v694
        %2029 = vmatprep.subr.mxu0 0.0
        %2030 = vmatpush2.msra.mxu0 %v693
        %2031 = vmatprep.subr.mxu0 0.0
        %2032 = vmatpush2.msra.mxu0 %v692
        %2033 = vmatprep.subr.mxu0 0.0
        %2034 = vmatpush2.msra.mxu0 %v691
        %2035 = vmatprep.subr.mxu0 0.0
        %2036 = vmatpush2.msra.mxu0 %v690
        %2037 = vmatprep.subr.mxu0 0.0
        %2038 = vmatpush2.msra.mxu0 %v689
        %2039 = vmatprep.subr.mxu0 0.0
        %2040 = vmatpush2.msra.mxu0 %v688
        %2041 = vmatprep.subr.mxu0 0.0
        %2042 = vmatpush2.msra.mxu0 %v687
        %2043 = vmatprep.subr.mxu0 0.0
        %2044 = vmatpush2.msra.mxu0 %v686
        %2045 = vmatprep.subr.mxu0 0.0
        %2046 = vmatpush2.msra.mxu0 %v685
        %2047 = vmatprep.subr.mxu0 0.0
        %2048 = vmatpush2.msra.mxu0 %v684
        %2049 = vmatprep.subr.mxu0 0.0
        %2050 = vmatpush2.msra.mxu0 %v683
        %2051 = vmatprep.subr.mxu0 0.0
        %2052 = vmatpush2.msra.mxu0 %v682
        %2053 = vmatprep.mubr.f32.mxu0 %v198
        %2054 = vmatmul.mubr.f32.gmra.mxu0 %v197
        %v2055 = vpop.f32.mrf.mxu0
        %v2056 = vadd.f32 %v1986, %v2055
        %v2057 = vpop.f32.mrf.mxu0
        %2058 = vdwg.mxu0
        %2059 = vmatprep.subr.mxu0 0.0
        %2060 = vmatpush1.msra.mxu0 %v713
        %2061 = vmatprep.subr.mxu0 0.0
        %2062 = vmatpush1.msra.mxu0 %v712
        %2063 = vmatprep.subr.mxu0 0.0
        %2064 = vmatpush1.msra.mxu0 %v711
        %2065 = vmatprep.subr.mxu0 0.0
        %2066 = vmatpush1.msra.mxu0 %v710
        %2067 = vmatprep.subr.mxu0 0.0
        %2068 = vmatpush1.msra.mxu0 %v709
        %2069 = vmatprep.subr.mxu0 0.0
        %2070 = vmatpush1.msra.mxu0 %v708
        %2071 = vmatprep.subr.mxu0 0.0
        %2072 = vmatpush1.msra.mxu0 %v707
        %2073 = vmatprep.subr.mxu0 0.0
        %2074 = vmatpush1.msra.mxu0 %v706
        %2075 = vmatprep.subr.mxu0 0.0
        %2076 = vmatpush1.msra.mxu0 %v705
        %2077 = vmatprep.subr.mxu0 0.0
        %2078 = vmatpush1.msra.mxu0 %v704
        %2079 = vmatprep.subr.mxu0 0.0
        %2080 = vmatpush1.msra.mxu0 %v703
        %2081 = vmatprep.subr.mxu0 0.0
        %2082 = vmatpush1.msra.mxu0 %v702
        %2083 = vmatprep.subr.mxu0 0.0
        %2084 = vmatpush1.msra.mxu0 %v701
        %2085 = vmatprep.subr.mxu0 0.0
        %2086 = vmatpush1.msra.mxu0 %v700
        %2087 = vmatprep.subr.mxu0 0.0
        %2088 = vmatpush1.msra.mxu0 %v699
        %2089 = vmatprep.subr.mxu0 0.0
        %2090 = vmatpush1.msra.mxu0 %v698
        %2091 = vmatprep.subr.mxu0 0.0
        %2092 = vmatpush2.msra.mxu0 %v729
        %2093 = vmatprep.subr.mxu0 0.0
        %2094 = vmatpush2.msra.mxu0 %v728
        %2095 = vmatprep.subr.mxu0 0.0
        %2096 = vmatpush2.msra.mxu0 %v727
        %2097 = vmatprep.subr.mxu0 0.0
        %2098 = vmatpush2.msra.mxu0 %v726
        %2099 = vmatprep.subr.mxu0 0.0
        %2100 = vmatpush2.msra.mxu0 %v725
        %2101 = vmatprep.subr.mxu0 0.0
        %2102 = vmatpush2.msra.mxu0 %v724
        %2103 = vmatprep.subr.mxu0 0.0
        %2104 = vmatpush2.msra.mxu0 %v723
        %2105 = vmatprep.subr.mxu0 0.0
        %2106 = vmatpush2.msra.mxu0 %v722
        %2107 = vmatprep.subr.mxu0 0.0
        %2108 = vmatpush2.msra.mxu0 %v721
        %2109 = vmatprep.subr.mxu0 0.0
        %2110 = vmatpush2.msra.mxu0 %v720
        %2111 = vmatprep.subr.mxu0 0.0
        %2112 = vmatpush2.msra.mxu0 %v719
        %2113 = vmatprep.subr.mxu0 0.0
        %2114 = vmatpush2.msra.mxu0 %v718
        %2115 = vmatprep.subr.mxu0 0.0
        %2116 = vmatpush2.msra.mxu0 %v717
        %2117 = vmatprep.subr.mxu0 0.0
        %2118 = vmatpush2.msra.mxu0 %v716
        %2119 = vmatprep.subr.mxu0 0.0
        %2120 = vmatpush2.msra.mxu0 %v715
        %2121 = vmatprep.subr.mxu0 0.0
        %2122 = vmatpush2.msra.mxu0 %v714
        %2123 = vmatprep.mubr.f32.mxu0 %v200
        %2124 = vmatmul.mubr.f32.gmra.mxu0 %v199
        %v2125 = vpop.f32.mrf.mxu0
        %v2126 = vadd.f32 %v2056, %v2125
        %v2127 = vpop.f32.mrf.mxu0
        %2128 = vdwg.mxu0
        %2129 = vmatprep.subr.mxu0 0.0
        %2130 = vmatpush1.msra.mxu0 %v745
        %2131 = vmatprep.subr.mxu0 0.0
        %2132 = vmatpush1.msra.mxu0 %v744
        %2133 = vmatprep.subr.mxu0 0.0
        %2134 = vmatpush1.msra.mxu0 %v743
        %2135 = vmatprep.subr.mxu0 0.0
        %2136 = vmatpush1.msra.mxu0 %v742
        %2137 = vmatprep.subr.mxu0 0.0
        %2138 = vmatpush1.msra.mxu0 %v741
        %2139 = vmatprep.subr.mxu0 0.0
        %2140 = vmatpush1.msra.mxu0 %v740
        %2141 = vmatprep.subr.mxu0 0.0
        %2142 = vmatpush1.msra.mxu0 %v739
        %2143 = vmatprep.subr.mxu0 0.0
        %2144 = vmatpush1.msra.mxu0 %v738
        %2145 = vmatprep.subr.mxu0 0.0
        %2146 = vmatpush1.msra.mxu0 %v737
        %2147 = vmatprep.subr.mxu0 0.0
        %2148 = vmatpush1.msra.mxu0 %v736
        %2149 = vmatprep.subr.mxu0 0.0
        %2150 = vmatpush1.msra.mxu0 %v735
        %2151 = vmatprep.subr.mxu0 0.0
        %2152 = vmatpush1.msra.mxu0 %v734
        %2153 = vmatprep.subr.mxu0 0.0
        %2154 = vmatpush1.msra.mxu0 %v733
        %2155 = vmatprep.subr.mxu0 0.0
        %2156 = vmatpush1.msra.mxu0 %v732
        %2157 = vmatprep.subr.mxu0 0.0
        %2158 = vmatpush1.msra.mxu0 %v731
        %2159 = vmatprep.subr.mxu0 0.0
        %2160 = vmatpush1.msra.mxu0 %v730
        %2161 = vmatprep.subr.mxu0 0.0
        %2162 = vmatpush2.msra.mxu0 %v761
        %2163 = vmatprep.subr.mxu0 0.0
        %2164 = vmatpush2.msra.mxu0 %v760
        %2165 = vmatprep.subr.mxu0 0.0
        %2166 = vmatpush2.msra.mxu0 %v759
        %2167 = vmatprep.subr.mxu0 0.0
        %2168 = vmatpush2.msra.mxu0 %v758
        %2169 = vmatprep.subr.mxu0 0.0
        %2170 = vmatpush2.msra.mxu0 %v757
        %2171 = vmatprep.subr.mxu0 0.0
        %2172 = vmatpush2.msra.mxu0 %v756
        %2173 = vmatprep.subr.mxu0 0.0
        %2174 = vmatpush2.msra.mxu0 %v755
        %2175 = vmatprep.subr.mxu0 0.0
        %2176 = vmatpush2.msra.mxu0 %v754
        %2177 = vmatprep.subr.mxu0 0.0
        %2178 = vmatpush2.msra.mxu0 %v753
        %2179 = vmatprep.subr.mxu0 0.0
        %2180 = vmatpush2.msra.mxu0 %v752
        %2181 = vmatprep.subr.mxu0 0.0
        %2182 = vmatpush2.msra.mxu0 %v751
        %2183 = vmatprep.subr.mxu0 0.0
        %2184 = vmatpush2.msra.mxu0 %v750
        %2185 = vmatprep.subr.mxu0 0.0
        %2186 = vmatpush2.msra.mxu0 %v749
        %2187 = vmatprep.subr.mxu0 0.0
        %2188 = vmatpush2.msra.mxu0 %v748
        %2189 = vmatprep.subr.mxu0 0.0
        %2190 = vmatpush2.msra.mxu0 %v747
        %2191 = vmatprep.subr.mxu0 0.0
        %2192 = vmatpush2.msra.mxu0 %v746
        %2193 = vmatprep.mubr.f32.mxu0 %v202
        %2194 = vmatmul.mubr.f32.gmra.mxu0 %v201
        %v2195 = vpop.f32.mrf.mxu0
        %v2196 = vadd.f32 %v2126, %v2195
        %v2197 = vpop.f32.mrf.mxu0
        %2198 = vdwg.mxu0
        %2199 = vmatprep.subr.mxu0 0.0
        %2200 = vmatpush1.msra.mxu0 %v777
        %2201 = vmatprep.subr.mxu0 0.0
        %2202 = vmatpush1.msra.mxu0 %v776
        %2203 = vmatprep.subr.mxu0 0.0
        %2204 = vmatpush1.msra.mxu0 %v775
        %2205 = vmatprep.subr.mxu0 0.0
        %2206 = vmatpush1.msra.mxu0 %v774
        %2207 = vmatprep.subr.mxu0 0.0
        %2208 = vmatpush1.msra.mxu0 %v773
        %2209 = vmatprep.subr.mxu0 0.0
        %2210 = vmatpush1.msra.mxu0 %v772
        %2211 = vmatprep.subr.mxu0 0.0
        %2212 = vmatpush1.msra.mxu0 %v771
        %2213 = vmatprep.subr.mxu0 0.0
        %2214 = vmatpush1.msra.mxu0 %v770
        %2215 = vmatprep.subr.mxu0 0.0
        %2216 = vmatpush1.msra.mxu0 %v769
        %2217 = vmatprep.subr.mxu0 0.0
        %2218 = vmatpush1.msra.mxu0 %v768
        %2219 = vmatprep.subr.mxu0 0.0
        %2220 = vmatpush1.msra.mxu0 %v767
        %2221 = vmatprep.subr.mxu0 0.0
        %2222 = vmatpush1.msra.mxu0 %v766
        %2223 = vmatprep.subr.mxu0 0.0
        %2224 = vmatpush1.msra.mxu0 %v765
        %2225 = vmatprep.subr.mxu0 0.0
        %2226 = vmatpush1.msra.mxu0 %v764
        %2227 = vmatprep.subr.mxu0 0.0
        %2228 = vmatpush1.msra.mxu0 %v763
        %2229 = vmatprep.subr.mxu0 0.0
        %2230 = vmatpush1.msra.mxu0 %v762
        %2231 = vmatprep.subr.mxu0 0.0
        %2232 = vmatpush2.msra.mxu0 %v793
        %2233 = vmatprep.subr.mxu0 0.0
        %2234 = vmatpush2.msra.mxu0 %v792
        %2235 = vmatprep.subr.mxu0 0.0
        %2236 = vmatpush2.msra.mxu0 %v791
        %2237 = vmatprep.subr.mxu0 0.0
        %2238 = vmatpush2.msra.mxu0 %v790
        %2239 = vmatprep.subr.mxu0 0.0
        %2240 = vmatpush2.msra.mxu0 %v789
        %2241 = vmatprep.subr.mxu0 0.0
        %2242 = vmatpush2.msra.mxu0 %v788
        %2243 = vmatprep.subr.mxu0 0.0
        %2244 = vmatpush2.msra.mxu0 %v787
        %2245 = vmatprep.subr.mxu0 0.0
        %2246 = vmatpush2.msra.mxu0 %v786
        %2247 = vmatprep.subr.mxu0 0.0
        %2248 = vmatpush2.msra.mxu0 %v785
        %2249 = vmatprep.subr.mxu0 0.0
        %2250 = vmatpush2.msra.mxu0 %v784
        %2251 = vmatprep.subr.mxu0 0.0
        %2252 = vmatpush2.msra.mxu0 %v783
        %2253 = vmatprep.subr.mxu0 0.0
        %2254 = vmatpush2.msra.mxu0 %v782
        %2255 = vmatprep.subr.mxu0 0.0
        %2256 = vmatpush2.msra.mxu0 %v781
        %2257 = vmatprep.subr.mxu0 0.0
        %2258 = vmatpush2.msra.mxu0 %v780
        %2259 = vmatprep.subr.mxu0 0.0
        %2260 = vmatpush2.msra.mxu0 %v779
        %2261 = vmatprep.subr.mxu0 0.0
        %2262 = vmatpush2.msra.mxu0 %v778
        %2263 = vmatprep.mubr.f32.mxu0 %v204
        %2264 = vmatmul.mubr.f32.gmra.mxu0 %v203
        %v2265 = vpop.f32.mrf.mxu0
        %v2266 = vadd.f32 %v2196, %v2265
        %v2267 = vpop.f32.mrf.mxu0
        %2268 = vdwg.mxu0
        %2269 = vmatprep.subr.mxu0 0.0
        %2270 = vmatpush1.msra.mxu0 %v809
        %2271 = vmatprep.subr.mxu0 0.0
        %2272 = vmatpush1.msra.mxu0 %v808
        %2273 = vmatprep.subr.mxu0 0.0
        %2274 = vmatpush1.msra.mxu0 %v807
        %2275 = vmatprep.subr.mxu0 0.0
        %2276 = vmatpush1.msra.mxu0 %v806
        %2277 = vmatprep.subr.mxu0 0.0
        %2278 = vmatpush1.msra.mxu0 %v805
        %2279 = vmatprep.subr.mxu0 0.0
        %2280 = vmatpush1.msra.mxu0 %v804
        %2281 = vmatprep.subr.mxu0 0.0
        %2282 = vmatpush1.msra.mxu0 %v803
        %2283 = vmatprep.subr.mxu0 0.0
        %2284 = vmatpush1.msra.mxu0 %v802
        %2285 = vmatprep.subr.mxu0 0.0
        %2286 = vmatpush1.msra.mxu0 %v801
        %2287 = vmatprep.subr.mxu0 0.0
        %2288 = vmatpush1.msra.mxu0 %v800
        %2289 = vmatprep.subr.mxu0 0.0
        %2290 = vmatpush1.msra.mxu0 %v799
        %2291 = vmatprep.subr.mxu0 0.0
        %2292 = vmatpush1.msra.mxu0 %v798
        %2293 = vmatprep.subr.mxu0 0.0
        %2294 = vmatpush1.msra.mxu0 %v797
        %2295 = vmatprep.subr.mxu0 0.0
        %2296 = vmatpush1.msra.mxu0 %v796
        %2297 = vmatprep.subr.mxu0 0.0
        %2298 = vmatpush1.msra.mxu0 %v795
        %2299 = vmatprep.subr.mxu0 0.0
        %2300 = vmatpush1.msra.mxu0 %v794
        %2301 = vmatprep.subr.mxu0 0.0
        %2302 = vmatpush2.msra.mxu0 %v825
        %2303 = vmatprep.subr.mxu0 0.0
        %2304 = vmatpush2.msra.mxu0 %v824
        %2305 = vmatprep.subr.mxu0 0.0
        %2306 = vmatpush2.msra.mxu0 %v823
        %2307 = vmatprep.subr.mxu0 0.0
        %2308 = vmatpush2.msra.mxu0 %v822
        %2309 = vmatprep.subr.mxu0 0.0
        %2310 = vmatpush2.msra.mxu0 %v821
        %2311 = vmatprep.subr.mxu0 0.0
        %2312 = vmatpush2.msra.mxu0 %v820
        %2313 = vmatprep.subr.mxu0 0.0
        %2314 = vmatpush2.msra.mxu0 %v819
        %2315 = vmatprep.subr.mxu0 0.0
        %2316 = vmatpush2.msra.mxu0 %v818
        %2317 = vmatprep.subr.mxu0 0.0
        %2318 = vmatpush2.msra.mxu0 %v817
        %2319 = vmatprep.subr.mxu0 0.0
        %2320 = vmatpush2.msra.mxu0 %v816
        %2321 = vmatprep.subr.mxu0 0.0
        %2322 = vmatpush2.msra.mxu0 %v815
        %2323 = vmatprep.subr.mxu0 0.0
        %2324 = vmatpush2.msra.mxu0 %v814
        %2325 = vmatprep.subr.mxu0 0.0
        %2326 = vmatpush2.msra.mxu0 %v813
        %2327 = vmatprep.subr.mxu0 0.0
        %2328 = vmatpush2.msra.mxu0 %v812
        %2329 = vmatprep.subr.mxu0 0.0
        %2330 = vmatpush2.msra.mxu0 %v811
        %2331 = vmatprep.subr.mxu0 0.0
        %2332 = vmatpush2.msra.mxu0 %v810
        %2333 = vmatprep.mubr.f32.mxu0 %v206
        %2334 = vmatmul.mubr.f32.gmra.mxu0 %v205
        %v2335 = vpop.f32.mrf.mxu0
        %v2336 = vadd.f32 %v2266, %v2335
        %v2337 = vpop.f32.mrf.mxu0
        %2338 = vdwg.mxu0
        %2339 = vmatprep.subr.mxu0 0.0
        %2340 = vmatpush1.msra.mxu0 %v841
        %2341 = vmatprep.subr.mxu0 0.0
        %2342 = vmatpush1.msra.mxu0 %v840
        %2343 = vmatprep.subr.mxu0 0.0
        %2344 = vmatpush1.msra.mxu0 %v839
        %2345 = vmatprep.subr.mxu0 0.0
        %2346 = vmatpush1.msra.mxu0 %v838
        %2347 = vmatprep.subr.mxu0 0.0
        %2348 = vmatpush1.msra.mxu0 %v837
        %2349 = vmatprep.subr.mxu0 0.0
        %2350 = vmatpush1.msra.mxu0 %v836
        %2351 = vmatprep.subr.mxu0 0.0
        %2352 = vmatpush1.msra.mxu0 %v835
        %2353 = vmatprep.subr.mxu0 0.0
        %2354 = vmatpush1.msra.mxu0 %v834
        %2355 = vmatprep.subr.mxu0 0.0
        %2356 = vmatpush1.msra.mxu0 %v833
        %2357 = vmatprep.subr.mxu0 0.0
        %2358 = vmatpush1.msra.mxu0 %v832
        %2359 = vmatprep.subr.mxu0 0.0
        %2360 = vmatpush1.msra.mxu0 %v831
        %2361 = vmatprep.subr.mxu0 0.0
        %2362 = vmatpush1.msra.mxu0 %v830
        %2363 = vmatprep.subr.mxu0 0.0
        %2364 = vmatpush1.msra.mxu0 %v829
        %2365 = vmatprep.subr.mxu0 0.0
        %2366 = vmatpush1.msra.mxu0 %v828
        %2367 = vmatprep.subr.mxu0 0.0
        %2368 = vmatpush1.msra.mxu0 %v827
        %2369 = vmatprep.subr.mxu0 0.0
        %2370 = vmatpush1.msra.mxu0 %v826
        %2371 = vmatprep.subr.mxu0 0.0
        %2372 = vmatpush2.msra.mxu0 %v857
        %2373 = vmatprep.subr.mxu0 0.0
        %2374 = vmatpush2.msra.mxu0 %v856
        %2375 = vmatprep.subr.mxu0 0.0
        %2376 = vmatpush2.msra.mxu0 %v855
        %2377 = vmatprep.subr.mxu0 0.0
        %2378 = vmatpush2.msra.mxu0 %v854
        %2379 = vmatprep.subr.mxu0 0.0
        %2380 = vmatpush2.msra.mxu0 %v853
        %2381 = vmatprep.subr.mxu0 0.0
        %2382 = vmatpush2.msra.mxu0 %v852
        %2383 = vmatprep.subr.mxu0 0.0
        %2384 = vmatpush2.msra.mxu0 %v851
        %2385 = vmatprep.subr.mxu0 0.0
        %2386 = vmatpush2.msra.mxu0 %v850
        %2387 = vmatprep.subr.mxu0 0.0
        %2388 = vmatpush2.msra.mxu0 %v849
        %2389 = vmatprep.subr.mxu0 0.0
        %2390 = vmatpush2.msra.mxu0 %v848
        %2391 = vmatprep.subr.mxu0 0.0
        %2392 = vmatpush2.msra.mxu0 %v847
        %2393 = vmatprep.subr.mxu0 0.0
        %2394 = vmatpush2.msra.mxu0 %v846
        %2395 = vmatprep.subr.mxu0 0.0
        %2396 = vmatpush2.msra.mxu0 %v845
        %2397 = vmatprep.subr.mxu0 0.0
        %2398 = vmatpush2.msra.mxu0 %v844
        %2399 = vmatprep.subr.mxu0 0.0
        %2400 = vmatpush2.msra.mxu0 %v843
        %2401 = vmatprep.subr.mxu0 0.0
        %2402 = vmatpush2.msra.mxu0 %v842
        %2403 = vmatprep.mubr.f32.mxu0 %v208
        %2404 = vmatmul.mubr.f32.gmra.mxu0 %v207
        %v2405 = vpop.f32.mrf.mxu0
        %v2406 = vadd.f32 %v2336, %v2405
        %v2407 = vpop.f32.mrf.mxu0
        %2408 = vdwg.mxu0
        %2409 = vmatprep.subr.mxu0 0.0
        %2410 = vmatpush1.msra.mxu0 %v873
        %2411 = vmatprep.subr.mxu0 0.0
        %2412 = vmatpush1.msra.mxu0 %v872
        %2413 = vmatprep.subr.mxu0 0.0
        %2414 = vmatpush1.msra.mxu0 %v871
        %2415 = vmatprep.subr.mxu0 0.0
        %2416 = vmatpush1.msra.mxu0 %v870
        %2417 = vmatprep.subr.mxu0 0.0
        %2418 = vmatpush1.msra.mxu0 %v869
        %2419 = vmatprep.subr.mxu0 0.0
        %2420 = vmatpush1.msra.mxu0 %v868
        %2421 = vmatprep.subr.mxu0 0.0
        %2422 = vmatpush1.msra.mxu0 %v867
        %2423 = vmatprep.subr.mxu0 0.0
        %2424 = vmatpush1.msra.mxu0 %v866
        %2425 = vmatprep.subr.mxu0 0.0
        %2426 = vmatpush1.msra.mxu0 %v865
        %2427 = vmatprep.subr.mxu0 0.0
        %2428 = vmatpush1.msra.mxu0 %v864
        %2429 = vmatprep.subr.mxu0 0.0
        %2430 = vmatpush1.msra.mxu0 %v863
        %2431 = vmatprep.subr.mxu0 0.0
        %2432 = vmatpush1.msra.mxu0 %v862
        %2433 = vmatprep.subr.mxu0 0.0
        %2434 = vmatpush1.msra.mxu0 %v861
        %2435 = vmatprep.subr.mxu0 0.0
        %2436 = vmatpush1.msra.mxu0 %v860
        %2437 = vmatprep.subr.mxu0 0.0
        %2438 = vmatpush1.msra.mxu0 %v859
        %2439 = vmatprep.subr.mxu0 0.0
        %2440 = vmatpush1.msra.mxu0 %v858
        %2441 = vmatprep.subr.mxu0 0.0
        %2442 = vmatpush2.msra.mxu0 %v889
        %2443 = vmatprep.subr.mxu0 0.0
        %2444 = vmatpush2.msra.mxu0 %v888
        %2445 = vmatprep.subr.mxu0 0.0
        %2446 = vmatpush2.msra.mxu0 %v887
        %2447 = vmatprep.subr.mxu0 0.0
        %2448 = vmatpush2.msra.mxu0 %v886
        %2449 = vmatprep.subr.mxu0 0.0
        %2450 = vmatpush2.msra.mxu0 %v885
        %2451 = vmatprep.subr.mxu0 0.0
        %2452 = vmatpush2.msra.mxu0 %v884
        %2453 = vmatprep.subr.mxu0 0.0
        %2454 = vmatpush2.msra.mxu0 %v883
        %2455 = vmatprep.subr.mxu0 0.0
        %2456 = vmatpush2.msra.mxu0 %v882
        %2457 = vmatprep.subr.mxu0 0.0
        %2458 = vmatpush2.msra.mxu0 %v881
        %2459 = vmatprep.subr.mxu0 0.0
        %2460 = vmatpush2.msra.mxu0 %v880
        %2461 = vmatprep.subr.mxu0 0.0
        %2462 = vmatpush2.msra.mxu0 %v879
        %2463 = vmatprep.subr.mxu0 0.0
        %2464 = vmatpush2.msra.mxu0 %v878
        %2465 = vmatprep.subr.mxu0 0.0
        %2466 = vmatpush2.msra.mxu0 %v877
        %2467 = vmatprep.subr.mxu0 0.0
        %2468 = vmatpush2.msra.mxu0 %v876
        %2469 = vmatprep.subr.mxu0 0.0
        %2470 = vmatpush2.msra.mxu0 %v875
        %2471 = vmatprep.subr.mxu0 0.0
        %2472 = vmatpush2.msra.mxu0 %v874
        %2473 = vmatprep.mubr.f32.mxu0 %v210
        %2474 = vmatmul.mubr.f32.gmra.mxu0 %v209
        %v2475 = vpop.f32.mrf.mxu0
        %v2476 = vadd.f32 %v2406, %v2475
        %v2477 = vpop.f32.mrf.mxu0
        %2478 = vdwg.mxu0
        %2479 = vmatprep.subr.mxu0 0.0
        %2480 = vmatpush1.msra.mxu0 %v905
        %2481 = vmatprep.subr.mxu0 0.0
        %2482 = vmatpush1.msra.mxu0 %v904
        %2483 = vmatprep.subr.mxu0 0.0
        %2484 = vmatpush1.msra.mxu0 %v903
        %2485 = vmatprep.subr.mxu0 0.0
        %2486 = vmatpush1.msra.mxu0 %v902
        %2487 = vmatprep.subr.mxu0 0.0
        %2488 = vmatpush1.msra.mxu0 %v901
        %2489 = vmatprep.subr.mxu0 0.0
        %2490 = vmatpush1.msra.mxu0 %v900
        %2491 = vmatprep.subr.mxu0 0.0
        %2492 = vmatpush1.msra.mxu0 %v899
        %2493 = vmatprep.subr.mxu0 0.0
        %2494 = vmatpush1.msra.mxu0 %v898
        %2495 = vmatprep.subr.mxu0 0.0
        %2496 = vmatpush1.msra.mxu0 %v897
        %2497 = vmatprep.subr.mxu0 0.0
        %2498 = vmatpush1.msra.mxu0 %v896
        %2499 = vmatprep.subr.mxu0 0.0
        %2500 = vmatpush1.msra.mxu0 %v895
        %2501 = vmatprep.subr.mxu0 0.0
        %2502 = vmatpush1.msra.mxu0 %v894
        %2503 = vmatprep.subr.mxu0 0.0
        %2504 = vmatpush1.msra.mxu0 %v893
        %2505 = vmatprep.subr.mxu0 0.0
        %2506 = vmatpush1.msra.mxu0 %v892
        %2507 = vmatprep.subr.mxu0 0.0
        %2508 = vmatpush1.msra.mxu0 %v891
        %2509 = vmatprep.subr.mxu0 0.0
        %2510 = vmatpush1.msra.mxu0 %v890
        %2511 = vmatprep.subr.mxu0 0.0
        %2512 = vmatpush2.msra.mxu0 %v921
        %2513 = vmatprep.subr.mxu0 0.0
        %2514 = vmatpush2.msra.mxu0 %v920
        %2515 = vmatprep.subr.mxu0 0.0
        %2516 = vmatpush2.msra.mxu0 %v919
        %2517 = vmatprep.subr.mxu0 0.0
        %2518 = vmatpush2.msra.mxu0 %v918
        %2519 = vmatprep.subr.mxu0 0.0
        %2520 = vmatpush2.msra.mxu0 %v917
        %2521 = vmatprep.subr.mxu0 0.0
        %2522 = vmatpush2.msra.mxu0 %v916
        %2523 = vmatprep.subr.mxu0 0.0
        %2524 = vmatpush2.msra.mxu0 %v915
        %2525 = vmatprep.subr.mxu0 0.0
        %2526 = vmatpush2.msra.mxu0 %v914
        %2527 = vmatprep.subr.mxu0 0.0
        %2528 = vmatpush2.msra.mxu0 %v913
        %2529 = vmatprep.subr.mxu0 0.0
        %2530 = vmatpush2.msra.mxu0 %v912
        %2531 = vmatprep.subr.mxu0 0.0
        %2532 = vmatpush2.msra.mxu0 %v911
        %2533 = vmatprep.subr.mxu0 0.0
        %2534 = vmatpush2.msra.mxu0 %v910
        %2535 = vmatprep.subr.mxu0 0.0
        %2536 = vmatpush2.msra.mxu0 %v909
        %2537 = vmatprep.subr.mxu0 0.0
        %2538 = vmatpush2.msra.mxu0 %v908
        %2539 = vmatprep.subr.mxu0 0.0
        %2540 = vmatpush2.msra.mxu0 %v907
        %2541 = vmatprep.subr.mxu0 0.0
        %2542 = vmatpush2.msra.mxu0 %v906
        %2543 = vmatprep.mubr.f32.mxu0 %v212
        %2544 = vmatmul.mubr.f32.gmra.mxu0 %v211
        %v2545 = vpop.f32.mrf.mxu0
        %v2546 = vadd.f32 %v2476, %v2545
        %v2547 = vpop.f32.mrf.mxu0
        %2548 = vdwg.mxu0
        %2549 = vmatprep.subr.mxu0 0.0
        %2550 = vmatpush1.msra.mxu0 %v937
        %2551 = vmatprep.subr.mxu0 0.0
        %2552 = vmatpush1.msra.mxu0 %v936
        %2553 = vmatprep.subr.mxu0 0.0
        %2554 = vmatpush1.msra.mxu0 %v935
        %2555 = vmatprep.subr.mxu0 0.0
        %2556 = vmatpush1.msra.mxu0 %v934
        %2557 = vmatprep.subr.mxu0 0.0
        %2558 = vmatpush1.msra.mxu0 %v933
        %2559 = vmatprep.subr.mxu0 0.0
        %2560 = vmatpush1.msra.mxu0 %v932
        %2561 = vmatprep.subr.mxu0 0.0
        %2562 = vmatpush1.msra.mxu0 %v931
        %2563 = vmatprep.subr.mxu0 0.0
        %2564 = vmatpush1.msra.mxu0 %v930
        %2565 = vmatprep.subr.mxu0 0.0
        %2566 = vmatpush1.msra.mxu0 %v929
        %2567 = vmatprep.subr.mxu0 0.0
        %2568 = vmatpush1.msra.mxu0 %v928
        %2569 = vmatprep.subr.mxu0 0.0
        %2570 = vmatpush1.msra.mxu0 %v927
        %2571 = vmatprep.subr.mxu0 0.0
        %2572 = vmatpush1.msra.mxu0 %v926
        %2573 = vmatprep.subr.mxu0 0.0
        %2574 = vmatpush1.msra.mxu0 %v925
        %2575 = vmatprep.subr.mxu0 0.0
        %2576 = vmatpush1.msra.mxu0 %v924
        %2577 = vmatprep.subr.mxu0 0.0
        %2578 = vmatpush1.msra.mxu0 %v923
        %2579 = vmatprep.subr.mxu0 0.0
        %2580 = vmatpush1.msra.mxu0 %v922
        %2581 = vmatprep.subr.mxu0 0.0
        %2582 = vmatpush2.msra.mxu0 %v953
        %2583 = vmatprep.subr.mxu0 0.0
        %2584 = vmatpush2.msra.mxu0 %v952
        %2585 = vmatprep.subr.mxu0 0.0
        %2586 = vmatpush2.msra.mxu0 %v951
        %2587 = vmatprep.subr.mxu0 0.0
        %2588 = vmatpush2.msra.mxu0 %v950
        %2589 = vmatprep.subr.mxu0 0.0
        %2590 = vmatpush2.msra.mxu0 %v949
        %2591 = vmatprep.subr.mxu0 0.0
        %2592 = vmatpush2.msra.mxu0 %v948
        %2593 = vmatprep.subr.mxu0 0.0
        %2594 = vmatpush2.msra.mxu0 %v947
        %2595 = vmatprep.subr.mxu0 0.0
        %2596 = vmatpush2.msra.mxu0 %v946
        %2597 = vmatprep.subr.mxu0 0.0
        %2598 = vmatpush2.msra.mxu0 %v945
        %2599 = vmatprep.subr.mxu0 0.0
        %2600 = vmatpush2.msra.mxu0 %v944
        %2601 = vmatprep.subr.mxu0 0.0
        %2602 = vmatpush2.msra.mxu0 %v943
        %2603 = vmatprep.subr.mxu0 0.0
        %2604 = vmatpush2.msra.mxu0 %v942
        %2605 = vmatprep.subr.mxu0 0.0
        %2606 = vmatpush2.msra.mxu0 %v941
        %2607 = vmatprep.subr.mxu0 0.0
        %2608 = vmatpush2.msra.mxu0 %v940
        %2609 = vmatprep.subr.mxu0 0.0
        %2610 = vmatpush2.msra.mxu0 %v939
        %2611 = vmatprep.subr.mxu0 0.0
        %2612 = vmatpush2.msra.mxu0 %v938
        %2613 = vmatprep.mubr.f32.mxu0 %v214
        %2614 = vmatmul.mubr.f32.gmra.mxu0 %v213
        %v2615 = vpop.f32.mrf.mxu0
        %v2616 = vadd.f32 %v2546, %v2615
        %v2617 = vpop.f32.mrf.mxu0
        %2618 = vdwg.mxu0
        %2619 = vmatprep.subr.mxu0 0.0
        %2620 = vmatpush1.msra.mxu0 %v969
        %2621 = vmatprep.subr.mxu0 0.0
        %2622 = vmatpush1.msra.mxu0 %v968
        %2623 = vmatprep.subr.mxu0 0.0
        %2624 = vmatpush1.msra.mxu0 %v967
        %2625 = vmatprep.subr.mxu0 0.0
        %2626 = vmatpush1.msra.mxu0 %v966
        %2627 = vmatprep.subr.mxu0 0.0
        %2628 = vmatpush1.msra.mxu0 %v965
        %2629 = vmatprep.subr.mxu0 0.0
        %2630 = vmatpush1.msra.mxu0 %v964
        %2631 = vmatprep.subr.mxu0 0.0
        %2632 = vmatpush1.msra.mxu0 %v963
        %2633 = vmatprep.subr.mxu0 0.0
        %2634 = vmatpush1.msra.mxu0 %v962
        %2635 = vmatprep.subr.mxu0 0.0
        %2636 = vmatpush1.msra.mxu0 %v961
        %2637 = vmatprep.subr.mxu0 0.0
        %2638 = vmatpush1.msra.mxu0 %v960
        %2639 = vmatprep.subr.mxu0 0.0
        %2640 = vmatpush1.msra.mxu0 %v959
        %2641 = vmatprep.subr.mxu0 0.0
        %2642 = vmatpush1.msra.mxu0 %v958
        %2643 = vmatprep.subr.mxu0 0.0
        %2644 = vmatpush1.msra.mxu0 %v957
        %2645 = vmatprep.subr.mxu0 0.0
        %2646 = vmatpush1.msra.mxu0 %v956
        %2647 = vmatprep.subr.mxu0 0.0
        %2648 = vmatpush1.msra.mxu0 %v955
        %2649 = vmatprep.subr.mxu0 0.0
        %2650 = vmatpush1.msra.mxu0 %v954
        %2651 = vmatprep.subr.mxu0 0.0
        %2652 = vmatpush2.msra.mxu0 %v985
        %2653 = vmatprep.subr.mxu0 0.0
        %2654 = vmatpush2.msra.mxu0 %v984
        %2655 = vmatprep.subr.mxu0 0.0
        %2656 = vmatpush2.msra.mxu0 %v983
        %2657 = vmatprep.subr.mxu0 0.0
        %2658 = vmatpush2.msra.mxu0 %v982
        %2659 = vmatprep.subr.mxu0 0.0
        %2660 = vmatpush2.msra.mxu0 %v981
        %2661 = vmatprep.subr.mxu0 0.0
        %2662 = vmatpush2.msra.mxu0 %v980
        %2663 = vmatprep.subr.mxu0 0.0
        %2664 = vmatpush2.msra.mxu0 %v979
        %2665 = vmatprep.subr.mxu0 0.0
        %2666 = vmatpush2.msra.mxu0 %v978
        %2667 = vmatprep.subr.mxu0 0.0
        %2668 = vmatpush2.msra.mxu0 %v977
        %2669 = vmatprep.subr.mxu0 0.0
        %2670 = vmatpush2.msra.mxu0 %v976
        %2671 = vmatprep.subr.mxu0 0.0
        %2672 = vmatpush2.msra.mxu0 %v975
        %2673 = vmatprep.subr.mxu0 0.0
        %2674 = vmatpush2.msra.mxu0 %v974
        %2675 = vmatprep.subr.mxu0 0.0
        %2676 = vmatpush2.msra.mxu0 %v973
        %2677 = vmatprep.subr.mxu0 0.0
        %2678 = vmatpush2.msra.mxu0 %v972
        %2679 = vmatprep.subr.mxu0 0.0
        %2680 = vmatpush2.msra.mxu0 %v971
        %2681 = vmatprep.subr.mxu0 0.0
        %2682 = vmatpush2.msra.mxu0 %v970
        %2683 = vmatprep.mubr.f32.mxu0 %v216
        %2684 = vmatmul.mubr.f32.gmra.mxu0 %v215
        %v2685 = vpop.f32.mrf.mxu0
        %v2686 = vadd.f32 %v2616, %v2685
        %v2687 = vpop.f32.mrf.mxu0
        %2688 = vdwg.mxu0
        %2689 = vmatprep.subr.mxu0 0.0
        %2690 = vmatpush1.msra.mxu0 %v1001
        %2691 = vmatprep.subr.mxu0 0.0
        %2692 = vmatpush1.msra.mxu0 %v1000
        %2693 = vmatprep.subr.mxu0 0.0
        %2694 = vmatpush1.msra.mxu0 %v999
        %2695 = vmatprep.subr.mxu0 0.0
        %2696 = vmatpush1.msra.mxu0 %v998
        %2697 = vmatprep.subr.mxu0 0.0
        %2698 = vmatpush1.msra.mxu0 %v997
        %2699 = vmatprep.subr.mxu0 0.0
        %2700 = vmatpush1.msra.mxu0 %v996
        %2701 = vmatprep.subr.mxu0 0.0
        %2702 = vmatpush1.msra.mxu0 %v995
        %2703 = vmatprep.subr.mxu0 0.0
        %2704 = vmatpush1.msra.mxu0 %v994
        %2705 = vmatprep.subr.mxu0 0.0
        %2706 = vmatpush1.msra.mxu0 %v993
        %2707 = vmatprep.subr.mxu0 0.0
        %2708 = vmatpush1.msra.mxu0 %v992
        %2709 = vmatprep.subr.mxu0 0.0
        %2710 = vmatpush1.msra.mxu0 %v991
        %2711 = vmatprep.subr.mxu0 0.0
        %2712 = vmatpush1.msra.mxu0 %v990
        %2713 = vmatprep.subr.mxu0 0.0
        %2714 = vmatpush1.msra.mxu0 %v989
        %2715 = vmatprep.subr.mxu0 0.0
        %2716 = vmatpush1.msra.mxu0 %v988
        %2717 = vmatprep.subr.mxu0 0.0
        %2718 = vmatpush1.msra.mxu0 %v987
        %2719 = vmatprep.subr.mxu0 0.0
        %2720 = vmatpush1.msra.mxu0 %v986
        %2721 = vmatprep.subr.mxu0 0.0
        %2722 = vmatpush2.msra.mxu0 0.0
        %2723 = vmatprep.subr.mxu0 0.0
        %2724 = vmatpush2.msra.mxu0 0.0
        %2725 = vmatprep.subr.mxu0 0.0
        %2726 = vmatpush2.msra.mxu0 0.0
        %2727 = vmatprep.subr.mxu0 0.0
        %2728 = vmatpush2.msra.mxu0 0.0
        %2729 = vmatprep.subr.mxu0 0.0
        %2730 = vmatpush2.msra.mxu0 0.0
        %2731 = vmatprep.subr.mxu0 0.0
        %2732 = vmatpush2.msra.mxu0 0.0
        %2733 = vmatprep.subr.mxu0 0.0
        %2734 = vmatpush2.msra.mxu0 0.0
        %2735 = vmatprep.subr.mxu0 0.0
        %2736 = vmatpush2.msra.mxu0 0.0
        %2737 = vmatprep.subr.mxu0 0.0
        %2738 = vmatpush2.msra.mxu0 0.0
        %2739 = vmatprep.subr.mxu0 0.0
        %2740 = vmatpush2.msra.mxu0 0.0
        %2741 = vmatprep.subr.mxu0 0.0
        %2742 = vmatpush2.msra.mxu0 0.0
        %2743 = vmatprep.subr.mxu0 0.0
        %2744 = vmatpush2.msra.mxu0 0.0
        %2745 = vmatprep.subr.mxu0 0.0
        %2746 = vmatpush2.msra.mxu0 0.0
        %2747 = vmatprep.subr.mxu0 0.0
        %2748 = vmatpush2.msra.mxu0 0.0
        %2749 = vmatprep.subr.mxu0 0.0
        %2750 = vmatpush2.msra.mxu0 0.0
        %2751 = vmatprep.subr.mxu0 0.0
        %2752 = vmatpush2.msra.mxu0 0.0
        %2753 = vmatprep.mubr.f32.mxu0 0.0
        %2754 = vmatmul.mubr.f32.gmra.mxu0 %v217
        %v2755 = vpop.f32.mrf.mxu0
        %v2756 = vadd.f32 %v2686, %v2755
        %v2757 = vpop.f32.mrf.mxu0
        %2758 = vdwg.mxu0
        %2759 = vst [vmem:[%s163] sm:$0xff] %v2756
        %s2760 = sand.u32 %s93, 1
        %s2761 = scalar_lea.sflag [#allocation3], %s2760
        %s2762 = sand.u32 %s93, 1
        %s2763 = smul.addr %s2762, 8
        %s2764 = scalar_lea.vmem [#allocation2], %s2763
        // Predicated region
        $region33: #{residual_net_forward.3} parent=31 // pred_check
          %p2765 = pneg %p103
        $region34: #{residual_net_forward.3} parent=31 // pred_check_branch
          %2767 = sbr.rel (%p2765) target = $region36
        $region35: #{residual_net_forward.3} parent=31 // pred_region
          %s2769 = ssub.s32 128, 128
          %2770 = vsyncadd %s2761, %s2769
          %s2771 = smul.addr %s17, 128
          %s2772 = scalar_lea.hbm %s3, %s2771
          %s2774 = sshll.u32 %s2764, 4
          %s2775 = int_to_ptr.vmem [resolvable:$true] %s2774
          %2777 = dma.vmem_to_hbm [thread:$0]  %s2775, 128, %s2772, %s2761
        $region36: #{residual_net_forward.3} parent=31 // pred_fallthru
          _
      $region32: #{residual_net_forward.3} parent=5 // pred_fallthru
        _
      %p2778 = scmp.le.s32.totalorder 2, %s12
      // Predicated region
      $region37: #{residual_net_forward.3} parent=5 // pred_check
        %p2779 = pneg %p2778
      $region38: #{residual_net_forward.3} parent=5 // pred_check_branch
        %2781 = sbr.rel (%p2779) target = $region40
      $region39: #{residual_net_forward.3} parent=5 // pred_region
        %s2782 = ssub.s32 %s12, 2
        // Predicated region
        $region41: #{residual_net_forward.3} parent=39 // pred_check
          %p2783 = pneg %p109
        $region42: #{residual_net_forward.3} parent=39 // pred_check_branch
          %2785 = sbr.rel (%p2783) target = $region44
        $region43: #{residual_net_forward.3} parent=39 // pred_region
          %s2786 = sand.u32 %s94, 1
          %s2787 = scalar_lea.sflag [#allocation3], %s2786
          %s2788 = sand.u32 %s94, 1
          %s2789 = smul.addr %s2788, 8
          %s2790 = scalar_lea.vmem [#allocation2], %s2789
          %2791 = dma.done %s2787, 128
        $region44: #{residual_net_forward.3} parent=39 // pred_fallthru
          _
      $region40: #{residual_net_forward.3} parent=5 // pred_fallthru
        _
    $region6: #{residual_net_forward.3} parent=1 // loop_footer
      %s16 = sadd.s32 1, %s12
    $region7: #{residual_net_forward.3} parent=1 // loop_footer_branch
      %11 = sbr.rel target = $region3
    $region8: #{residual_net_forward.3} parent=1 // loop_exit
      _
    %2792 = vsyncpa [#allocation3], 1
    %s2793 = scalar_lea.sflag [#allocation3], 1
    %2794 = vsyncpa %s2793, 1

</llo_original>
